<compile_context>
chip_gen: v7x
topology: tpu7x:2x2x1
jax: 0.10.0
libtpu: 0.0.40
codegen_flags: <defaults>
</compile_context>

<pallas_src>
import numpy as np
import jax
import jax.numpy as jnp
from jax.experimental import pallas as pl
from jax.experimental.pallas import tpu as pltpu


# ------------------------------------------------------------------ kernel ---

def _zero_halo(pad_ref, p, H, W):
    """Zero only the halo border of a (H+2p, W+2p, C) scratch buffer.

    The interior is fully overwritten every grid step, so the border is the only
    part that must be (re)initialized; this is also safe when the batch grid axis
    is sharded across TensorCores."""
    Hp, Wp, C = pad_ref.shape
    dt = pad_ref.dtype
    pad_ref[0:p, :, :] = jnp.zeros((p, Wp, C), dt)                  # top rows
    pad_ref[p + H:Hp, :, :] = jnp.zeros((Hp - (p + H), Wp, C), dt)  # bottom rows
    pad_ref[p:p + H, 0:p, :] = jnp.zeros((H, p, C), dt)             # left cols
    pad_ref[p:p + H, p + W:Wp, :] = jnp.zeros((H, Wp - (p + W), C), dt)  # right cols


def srcnn_kernel(x_ref, w1_ref, b1_ref, a1_ref, ab1_ref,
                 w2_ref, b2_ref, a2_ref, ab2_ref,
                 w3_ref, b3_ref, out_ref,
                 pad1, pad2, pad3):
    _, H, W, cin = x_ref.shape
    cout = out_ref.shape[3]

    # Re-zero only the halo borders (cheap); interiors are overwritten below.
    _zero_halo(pad1, 4, H, W)
    _zero_halo(pad2, 2, H, W)
    _zero_halo(pad3, 2, H, W)

    # ---------------- conv1: 9x9, pad 4, ReLU, AdaptiveFM(64) -----------------
    pad1[4:4 + H, 4:4 + W, :] = x_ref[0]

    # im2col along kx (K += cin per tap), then along ky -> one K = 81*cin matmul.
    bx1 = jnp.concatenate([pad1[:, kx:kx + W, :] for kx in range(9)],
                          axis=-1)                                   # (H+8, W, 9*cin)
    lhs1 = jnp.concatenate([bx1[ky:ky + H] for ky in range(9)],
                           axis=-1)                                  # (H, W, 81*cin)
    f = jnp.dot(lhs1.reshape(H * W, 9 * 9 * cin), w1_ref[...],
                preferred_element_type=jnp.float32)
    f = jnp.maximum(f + b1_ref[...], 0.0)
    # AdaptiveFM folded:  f <- f @ (gamma*A + I) + gamma*b   (residual included in I)
    f = jnp.dot(f, a1_ref[...], preferred_element_type=jnp.float32) + ab1_ref[...]

    # write directly into conv2's padded scratch interior
    pad2[2:2 + H, 2:2 + W, :] = f.reshape(H, W, 64)

    # ---------------- conv2: 5x5, pad 2, ReLU, AdaptiveFM(32) -----------------
    bx2 = jnp.concatenate([pad2[:, kx:kx + W, :] for kx in range(5)],
                          axis=-1)                                   # (H+4, W, 320)
    acc = jnp.zeros((H * W, 32), jnp.float32)
    for ky in range(5):                                              # K = 320 per matmul
        acc = acc + jnp.dot(bx2[ky:ky + H].reshape(H * W, 5 * 64), w2_ref[ky],
                            preferred_element_type=jnp.float32)
    f = jnp.maximum(acc + b2_ref[...], 0.0)
    f = jnp.dot(f, a2_ref[...], preferred_element_type=jnp.float32) + ab2_ref[...]

    pad3[2:2 + H, 2:2 + W, :] = f.reshape(H, W, 32)

    # ---------------- conv3: 5x5, pad 2 (no ReLU) ------------------------------
    bx3 = jnp.concatenate([pad3[:, kx:kx + W, :] for kx in range(5)],
                          axis=-1)                                   # (H+4, W, 160)
    acc = jnp.zeros((H * W, cout), jnp.float32)
    for ky in range(5):                                              # K = 160 per matmul
        acc = acc + jnp.dot(bx3[ky:ky + H].reshape(H * W, 5 * 32), w3_ref[ky],
                            preferred_element_type=jnp.float32)
    out_ref[0] = (acc + b3_ref[...]).reshape(H, W, cout).astype(out_ref.dtype)


# -------------------------------------------------------------------- glue ---

def bicubic_matrix(in_size, scale):
    """PyTorch upsample_bicubic2d weights (align_corners=False, A=-0.75) as a dense
    (out, in) interpolation matrix with border clamping."""
    A = -0.75

    def c1(t):  # |x| <= 1
        return ((A + 2.0) * t - (A + 3.0)) * t * t + 1.0

    def c2(t):  # 1 < |x| < 2
        return ((A * t - 5.0 * A) * t + 8.0 * A) * t - 4.0 * A

    out_size = int(in_size * scale)
    W = np.zeros((out_size, in_size), dtype=np.float32)
    for i in range(out_size):
        src = (i + 0.5) / scale - 0.5
        i0 = int(np.floor(src))
        t = src - i0
        coeffs = [c2(t + 1.0), c1(t), c1(1.0 - t), c2(2.0 - t)]
        for k, w in enumerate(coeffs):
            idx = min(max(i0 - 1 + k, 0), in_size - 1)
            W[i, idx] += w
    return jnp.asarray(W)


def grouped1x1_to_dense(w):
    """Conv2d(C, C, 1, groups=C//2) weight (C, 2, 1, 1) -> dense (Cin, Cout)."""
    w = np.asarray(w)
    C = w.shape[0]
    groups = C // 2
    dense = np.zeros((C, C), np.float32)
    for g in range(groups):
        for oc in range(2):
            for ic in range(2):
                dense[g * 2 + ic, g * 2 + oc] = w[g * 2 + oc, ic, 0, 0]
    return jnp.asarray(dense)


def _upsample_bicubic_nhwc(x_nchw, scale):
    N, C, H, W = x_nchw.shape
    Wh = bicubic_matrix(H, scale)
    Ww = bicubic_matrix(W, scale)
    up = jnp.einsum('oh,nchw->ncow', Wh, x_nchw, precision=jax.lax.Precision.HIGHEST)
    up = jnp.einsum('pw,ncow->nopc', Ww, up, precision=jax.lax.Precision.HIGHEST)
    return up  # NHWC


def srcnn_forward(x_nchw, num, params, scale):
    N, C, H, W = x_nchw.shape
    Hu, Wu = H * scale, W * scale
    cin = cout = C

    x_nhwc = _upsample_bicubic_nhwc(x_nchw, scale).astype(jnp.float32)

    # ---- trace-time weight packing / folding (tiny XLA ops) ----
    w1f = params['w1'].reshape(9 * 9 * cin, 64)          # K ordering (ky, kx, ci)
    w2f = params['w2'].reshape(5, 5 * 64, 32)            # per-ky K ordering (kx, ci)
    w3f = params['w3'].reshape(5, 5 * 32, cout)
    g1 = params['g1'][num][0, 0]
    g2 = params['g2'][num][0, 0]
    a1 = g1 * params['aw1'][num] + jnp.eye(64, dtype=jnp.float32)
    ab1 = g1 * params['ab1'][num]
    a2 = g2 * params['aw2'][num] + jnp.eye(32, dtype=jnp.float32)
    ab2 = g2 * params['ab2'][num]

    args = (x_nhwc,
            w1f, params['b1'], a1, ab1,
            w2f, params['b2'], a2, ab2,
            w3f, params['b3'])

    def full(shape):
        n = len(shape)
        return pl.BlockSpec(shape, lambda i, _n=n: (0,) * _n)

    in_specs = [
        pl.BlockSpec((1, Hu, Wu, cin), lambda i: (i, 0, 0, 0)),
        full((9 * 9 * cin, 64)), full((1, 64)),
        full((64, 64)), full((1, 64)),
        full((5, 5 * 64, 32)), full((1, 32)),
        full((32, 32)), full((1, 32)),
        full((5, 5 * 32, cout)), full((1, cout)),
    ]
    out_specs = pl.BlockSpec((1, Hu, Wu, cout), lambda i: (i, 0, 0, 0))

    out_nhwc = pl.pallas_call(
        srcnn_kernel,
        out_shape=jax.ShapeDtypeStruct((N, Hu, Wu, cout), jnp.float32),
        grid=(N,),
        in_specs=in_specs,
        out_specs=out_specs,
        scratch_shapes=[
            pltpu.VMEM((Hu + 8, Wu + 8, cin), jnp.float32),   # conv1 padded input
            pltpu.VMEM((Hu + 4, Wu + 4, 64), jnp.float32),    # conv2 padded input
            pltpu.VMEM((Hu + 4, Wu + 4, 32), jnp.float32),    # conv3 padded input
        ],
        compiler_params=pltpu.CompilerParams(
            dimension_semantics=("parallel",),                # batch -> both TCs on v7x
            vmem_limit_bytes=64 * 1024 * 1024),
    )(*args)
    return jnp.transpose(out_nhwc, (0, 3, 1, 2))


# --------------------------------------------------------------- reference ---

def srcnn_reference(x_nchw, num, params, scale):
    x = _upsample_bicubic_nhwc(x_nchw, scale)

    def conv(x, w_hwio, b, pad):
        y = jax.lax.conv_general_dilated(
            x, w_hwio, window_strides=(1, 1),
            padding=((pad, pad), (pad, pad)),
            dimension_numbers=('NHWC', 'HWIO', 'NHWC'),
            precision=jax.lax.Precision.HIGHEST)
        return y + b.reshape(1, 1, 1, -1)

    f = jax.nn.relu(conv(x, params['w1'], params['b1'], 4))
    t = jnp.einsum('nhwc,cd->nhwd', f, params['aw1'][num],
                   precision=jax.lax.Precision.HIGHEST) + params['ab1'][num].reshape(1, 1, 1, -1)
    f = t * params['g1'][num][0, 0] + f
    f = jax.nn.relu(conv(f, params['w2'], params['b2'], 2))
    t = jnp.einsum('nhwc,cd->nhwd', f, params['aw2'][num],
                   precision=jax.lax.Precision.HIGHEST) + params['ab2'][num].reshape(1, 1, 1, -1)
    f = t * params['g2'][num][0, 0] + f
    f = conv(f, params['w3'], params['b3'], 2)
    return jnp.transpose(f, (0, 3, 1, 2))


# ------------------------------------------------------------------ params ---

def init_params(key, n_colors, segnum):
    ks = jax.random.split(key, 8)

    def conv_w(k, cout, cin, ksz, s=0.05):
        return s * jax.random.normal(k, (cout, cin, ksz, ksz), jnp.float32)

    w1 = conv_w(ks[0], 64, n_colors, 9)
    b1 = 0.01 * jax.random.normal(ks[1], (64,), jnp.float32)
    w2 = conv_w(ks[2], 32, 64, 5)
    b2 = 0.01 * jax.random.normal(ks[3], (32,), jnp.float32)
    w3 = conv_w(ks[4], n_colors, 32, 5)
    b3 = 0.01 * jax.random.normal(ks[5], (n_colors,), jnp.float32)

    # AdaptiveFM params for each of the `segnum` modules.
    # Note: the module __init__ sets gamma = 0; we use deterministic nonzero
    # gammas so the AdaptiveFM path is actually exercised.
    aw1, ab1, g1, aw2, ab2, g2 = [], [], [], [], [], []
    for s in range(segnum):
        k = jax.random.fold_in(ks[6], s)
        ka, kb, kc, kd = jax.random.split(k, 4)
        aw1.append(grouped1x1_to_dense(0.1 * jax.random.normal(ka, (64, 2, 1, 1), jnp.float32)))
        ab1.append(0.01 * jax.random.normal(kb, (1, 64), jnp.float32))
        aw2.append(grouped1x1_to_dense(0.1 * jax.random.normal(kc, (32, 2, 1, 1), jnp.float32)))
        ab2.append(0.01 * jax.random.normal(kd, (1, 32), jnp.float32))
        g1.append(jnp.full((1, 1), 0.25 + 0.1 * s, jnp.float32))
        g2.append(jnp.full((1, 1), -0.15 + 0.05 * s, jnp.float32))

    return dict(
        w1=jnp.transpose(w1, (2, 3, 1, 0)), b1=b1.reshape(1, 64),      # HWIO
        w2=jnp.transpose(w2, (2, 3, 1, 0)), b2=b2.reshape(1, 32),
        w3=jnp.transpose(w3, (2, 3, 1, 0)), b3=b3.reshape(1, n_colors),
        aw1=aw1, ab1=ab1, g1=g1, aw2=aw2, ab2=ab2, g2=g2)


# -------------------------------------------------------------------- main ---

if __name__ == "__main__":
    n_colors, scale, segnum, num = 3, 2, 2, 1
    N, H, W = 2, 8, 8

    key = jax.random.PRNGKey(0)
    kx, kp = jax.random.split(key)
    x = jax.random.normal(kx, (N, n_colors, H, W), jnp.float32)
    params = init_params(kp, n_colors, segnum)

    out = srcnn_forward(x, num, params, scale)
    out = jax.block_until_ready(out)
    assert out.shape == (N, n_colors, H * scale, W * scale)

    ref = jax.block_until_ready(srcnn_reference(x, num, params, scale))
    np.testing.assert_allclose(np.asarray(out), np.asarray(ref), rtol=5e-3, atol=5e-3)

    print("KERNEL_OK")
</pallas_src>

<mosaic_0001>
module attributes {stable_mosaic.version = 11 : i64} {
  func.func @srcnn_kernel(%arg0: i32, %arg1: memref<1x16x16x3xf32, #tpu.memory_space<vmem>>, %arg2: memref<243x64xf32, #tpu.memory_space<vmem>>, %arg3: memref<1x64xf32, #tpu.memory_space<vmem>>, %arg4: memref<64x64xf32, #tpu.memory_space<vmem>>, %arg5: memref<1x64xf32, #tpu.memory_space<vmem>>, %arg6: memref<5x320x32xf32, #tpu.memory_space<vmem>>, %arg7: memref<1x32xf32, #tpu.memory_space<vmem>>, %arg8: memref<32x32xf32, #tpu.memory_space<vmem>>, %arg9: memref<1x32xf32, #tpu.memory_space<vmem>>, %arg10: memref<5x160x3xf32, #tpu.memory_space<vmem>>, %arg11: memref<1x3xf32, #tpu.memory_space<vmem>>, %arg12: memref<1x16x16x3xf32, #tpu.memory_space<vmem>>, %arg13: memref<24x24x3xf32, #tpu.memory_space<vmem>>, %arg14: memref<20x20x64xf32, #tpu.memory_space<vmem>>, %arg15: memref<20x20x32xf32, #tpu.memory_space<vmem>>) attributes {dimension_semantics = [#tpu.dimension_semantics<parallel>], iteration_bounds = array<i64: 2>, scalar_prefetch = 0 : i64, scratch_operands = 3 : i64, tpu.core_type = #tpu.core_type<tc>, window_params = [{transform_indices = @transform_0, window_bounds = array<i64: 1, 16, 16, 3>}, {pipeline_mode = #tpu.pipeline_mode<synchronous>, transform_indices = @transform_1, window_bounds = array<i64: 243, 64>}, {pipeline_mode = #tpu.pipeline_mode<synchronous>, transform_indices = @transform_2, window_bounds = array<i64: 1, 64>}, {pipeline_mode = #tpu.pipeline_mode<synchronous>, transform_indices = @transform_3, window_bounds = array<i64: 64, 64>}, {pipeline_mode = #tpu.pipeline_mode<synchronous>, transform_indices = @transform_4, window_bounds = array<i64: 1, 64>}, {pipeline_mode = #tpu.pipeline_mode<synchronous>, transform_indices = @transform_5, window_bounds = array<i64: 5, 320, 32>}, {pipeline_mode = #tpu.pipeline_mode<synchronous>, transform_indices = @transform_6, window_bounds = array<i64: 1, 32>}, {pipeline_mode = #tpu.pipeline_mode<synchronous>, transform_indices = @transform_7, window_bounds = array<i64: 32, 32>}, {pipeline_mode = #tpu.pipeline_mode<synchronous>, transform_indices = @transform_8, window_bounds = array<i64: 1, 32>}, {pipeline_mode = #tpu.pipeline_mode<synchronous>, transform_indices = @transform_9, window_bounds = array<i64: 5, 160, 3>}, {pipeline_mode = #tpu.pipeline_mode<synchronous>, transform_indices = @transform_10, window_bounds = array<i64: 1, 3>}, {transform_indices = @transform_11, window_bounds = array<i64: 1, 16, 16, 3>}]} {
    %cst = arith.constant 0.000000e+00 : f32
    %0 = vector.broadcast %cst : f32 to vector<4x24x3xf32>
    %c0 = arith.constant 0 : index
    %c0_0 = arith.constant 0 : index
    %c0_1 = arith.constant 0 : index
    %1 = vector.load %arg13[%c0, %c0_0, %c0_1] : memref<24x24x3xf32, #tpu.memory_space<vmem>>, vector<4x24x3xf32>
    tpu.vector_store %arg13[%c0, %c0_0, %c0_1], %0 {strides = array<i32>} : memref<24x24x3xf32, #tpu.memory_space<vmem>>, vector<4x24x3xf32>,
    %cst_2 = arith.constant 0.000000e+00 : f32
    %2 = vector.broadcast %cst_2 : f32 to vector<4x24x3xf32>
    %c20 = arith.constant 20 : index
    %c0_3 = arith.constant 0 : index
    %c0_4 = arith.constant 0 : index
    %3 = vector.load %arg13[%c20, %c0_3, %c0_4] : memref<24x24x3xf32, #tpu.memory_space<vmem>>, vector<4x24x3xf32>
    tpu.vector_store %arg13[%c20, %c0_3, %c0_4], %2 {strides = array<i32>} : memref<24x24x3xf32, #tpu.memory_space<vmem>>, vector<4x24x3xf32>,
    %cst_5 = arith.constant 0.000000e+00 : f32
    %4 = vector.broadcast %cst_5 : f32 to vector<16x4x3xf32>
    %c4 = arith.constant 4 : index
    %c0_6 = arith.constant 0 : index
    %c0_7 = arith.constant 0 : index
    %5 = vector.load %arg13[%c4, %c0_6, %c0_7] : memref<24x24x3xf32, #tpu.memory_space<vmem>>, vector<16x4x3xf32>
    tpu.vector_store %arg13[%c4, %c0_6, %c0_7], %4 {strides = array<i32>} : memref<24x24x3xf32, #tpu.memory_space<vmem>>, vector<16x4x3xf32>,
    %cst_8 = arith.constant 0.000000e+00 : f32
    %6 = vector.broadcast %cst_8 : f32 to vector<16x4x3xf32>
    %c4_9 = arith.constant 4 : index
    %c20_10 = arith.constant 20 : index
    %c0_11 = arith.constant 0 : index
    %7 = vector.load %arg13[%c4_9, %c20_10, %c0_11] : memref<24x24x3xf32, #tpu.memory_space<vmem>>, vector<16x4x3xf32>
    tpu.vector_store %arg13[%c4_9, %c20_10, %c0_11], %6 {strides = array<i32>} : memref<24x24x3xf32, #tpu.memory_space<vmem>>, vector<16x4x3xf32>,
    %cst_12 = arith.constant 0.000000e+00 : f32
    %8 = vector.broadcast %cst_12 : f32 to vector<2x20x64xf32>
    %c0_13 = arith.constant 0 : index
    %c0_14 = arith.constant 0 : index
    %c0_15 = arith.constant 0 : index
    %9 = vector.load %arg14[%c0_13, %c0_14, %c0_15] : memref<20x20x64xf32, #tpu.memory_space<vmem>>, vector<2x20x64xf32>
    tpu.vector_store %arg14[%c0_13, %c0_14, %c0_15], %8 {strides = array<i32>} : memref<20x20x64xf32, #tpu.memory_space<vmem>>, vector<2x20x64xf32>,
    %cst_16 = arith.constant 0.000000e+00 : f32
    %10 = vector.broadcast %cst_16 : f32 to vector<2x20x64xf32>
    %c18 = arith.constant 18 : index
    %c0_17 = arith.constant 0 : index
    %c0_18 = arith.constant 0 : index
    %11 = vector.load %arg14[%c18, %c0_17, %c0_18] : memref<20x20x64xf32, #tpu.memory_space<vmem>>, vector<2x20x64xf32>
    tpu.vector_store %arg14[%c18, %c0_17, %c0_18], %10 {strides = array<i32>} : memref<20x20x64xf32, #tpu.memory_space<vmem>>, vector<2x20x64xf32>,
    %cst_19 = arith.constant 0.000000e+00 : f32
    %12 = vector.broadcast %cst_19 : f32 to vector<16x2x64xf32>
    %c2 = arith.constant 2 : index
    %c0_20 = arith.constant 0 : index
    %c0_21 = arith.constant 0 : index
    %13 = vector.load %arg14[%c2, %c0_20, %c0_21] : memref<20x20x64xf32, #tpu.memory_space<vmem>>, vector<16x2x64xf32>
    tpu.vector_store %arg14[%c2, %c0_20, %c0_21], %12 {strides = array<i32>} : memref<20x20x64xf32, #tpu.memory_space<vmem>>, vector<16x2x64xf32>,
    %cst_22 = arith.constant 0.000000e+00 : f32
    %14 = vector.broadcast %cst_22 : f32 to vector<16x2x64xf32>
    %c2_23 = arith.constant 2 : index
    %c18_24 = arith.constant 18 : index
    %c0_25 = arith.constant 0 : index
    %15 = vector.load %arg14[%c2_23, %c18_24, %c0_25] : memref<20x20x64xf32, #tpu.memory_space<vmem>>, vector<16x2x64xf32>
    tpu.vector_store %arg14[%c2_23, %c18_24, %c0_25], %14 {strides = array<i32>} : memref<20x20x64xf32, #tpu.memory_space<vmem>>, vector<16x2x64xf32>,
    %cst_26 = arith.constant 0.000000e+00 : f32
    %16 = vector.broadcast %cst_26 : f32 to vector<2x20x32xf32>
    %c0_27 = arith.constant 0 : index
    %c0_28 = arith.constant 0 : index
    %c0_29 = arith.constant 0 : index
    %17 = vector.load %arg15[%c0_27, %c0_28, %c0_29] : memref<20x20x32xf32, #tpu.memory_space<vmem>>, vector<2x20x32xf32>
    tpu.vector_store %arg15[%c0_27, %c0_28, %c0_29], %16 {strides = array<i32>} : memref<20x20x32xf32, #tpu.memory_space<vmem>>, vector<2x20x32xf32>,
    %cst_30 = arith.constant 0.000000e+00 : f32
    %18 = vector.broadcast %cst_30 : f32 to vector<2x20x32xf32>
    %c18_31 = arith.constant 18 : index
    %c0_32 = arith.constant 0 : index
    %c0_33 = arith.constant 0 : index
    %19 = vector.load %arg15[%c18_31, %c0_32, %c0_33] : memref<20x20x32xf32, #tpu.memory_space<vmem>>, vector<2x20x32xf32>
    tpu.vector_store %arg15[%c18_31, %c0_32, %c0_33], %18 {strides = array<i32>} : memref<20x20x32xf32, #tpu.memory_space<vmem>>, vector<2x20x32xf32>,
    %cst_34 = arith.constant 0.000000e+00 : f32
    %20 = vector.broadcast %cst_34 : f32 to vector<16x2x32xf32>
    %c2_35 = arith.constant 2 : index
    %c0_36 = arith.constant 0 : index
    %c0_37 = arith.constant 0 : index
    %21 = vector.load %arg15[%c2_35, %c0_36, %c0_37] : memref<20x20x32xf32, #tpu.memory_space<vmem>>, vector<16x2x32xf32>
    tpu.vector_store %arg15[%c2_35, %c0_36, %c0_37], %20 {strides = array<i32>} : memref<20x20x32xf32, #tpu.memory_space<vmem>>, vector<16x2x32xf32>,
    %cst_38 = arith.constant 0.000000e+00 : f32
    %22 = vector.broadcast %cst_38 : f32 to vector<16x2x32xf32>
    %c2_39 = arith.constant 2 : index
    %c18_40 = arith.constant 18 : index
    %c0_41 = arith.constant 0 : index
    %23 = vector.load %arg15[%c2_39, %c18_40, %c0_41] : memref<20x20x32xf32, #tpu.memory_space<vmem>>, vector<16x2x32xf32>
    tpu.vector_store %arg15[%c2_39, %c18_40, %c0_41], %22 {strides = array<i32>} : memref<20x20x32xf32, #tpu.memory_space<vmem>>, vector<16x2x32xf32>,
    %c0_42 = arith.constant 0 : index
    %c0_43 = arith.constant 0 : index
    %c0_44 = arith.constant 0 : index
    %c0_45 = arith.constant 0 : index
    %24 = vector.load %arg1[%c0_42, %c0_43, %c0_44, %c0_45] : memref<1x16x16x3xf32, #tpu.memory_space<vmem>>, vector<1x16x16x3xf32>
    %25 = vector.shape_cast %24 : vector<1x16x16x3xf32> to vector<16x16x3xf32>
    %c4_46 = arith.constant 4 : index
    %c4_47 = arith.constant 4 : index
    %c0_48 = arith.constant 0 : index
    %26 = vector.load %arg13[%c4_46, %c4_47, %c0_48] : memref<24x24x3xf32, #tpu.memory_space<vmem>>, vector<16x16x3xf32>
    tpu.vector_store %arg13[%c4_46, %c4_47, %c0_48], %25 {strides = array<i32>} : memref<24x24x3xf32, #tpu.memory_space<vmem>>, vector<16x16x3xf32>,
    %c0_49 = arith.constant 0 : index
    %c0_50 = arith.constant 0 : index
    %c0_51 = arith.constant 0 : index
    %27 = vector.load %arg13[%c0_49, %c0_50, %c0_51] : memref<24x24x3xf32, #tpu.memory_space<vmem>>, vector<24x16x3xf32>
    %c0_52 = arith.constant 0 : index
    %c1 = arith.constant 1 : index
    %c0_53 = arith.constant 0 : index
    %28 = vector.load %arg13[%c0_52, %c1, %c0_53] : memref<24x24x3xf32, #tpu.memory_space<vmem>>, vector<24x16x3xf32>
    %c0_54 = arith.constant 0 : index
    %c2_55 = arith.constant 2 : index
    %c0_56 = arith.constant 0 : index
    %29 = vector.load %arg13[%c0_54, %c2_55, %c0_56] : memref<24x24x3xf32, #tpu.memory_space<vmem>>, vector<24x16x3xf32>
    %c0_57 = arith.constant 0 : index
    %c3 = arith.constant 3 : index
    %c0_58 = arith.constant 0 : index
    %30 = vector.load %arg13[%c0_57, %c3, %c0_58] : memref<24x24x3xf32, #tpu.memory_space<vmem>>, vector<24x16x3xf32>
    %c0_59 = arith.constant 0 : index
    %c4_60 = arith.constant 4 : index
    %c0_61 = arith.constant 0 : index
    %31 = vector.load %arg13[%c0_59, %c4_60, %c0_61] : memref<24x24x3xf32, #tpu.memory_space<vmem>>, vector<24x16x3xf32>
    %c0_62 = arith.constant 0 : index
    %c5 = arith.constant 5 : index
    %c0_63 = arith.constant 0 : index
    %32 = vector.load %arg13[%c0_62, %c5, %c0_63] : memref<24x24x3xf32, #tpu.memory_space<vmem>>, vector<24x16x3xf32>
    %c0_64 = arith.constant 0 : index
    %c6 = arith.constant 6 : index
    %c0_65 = arith.constant 0 : index
    %33 = vector.load %arg13[%c0_64, %c6, %c0_65] : memref<24x24x3xf32, #tpu.memory_space<vmem>>, vector<24x16x3xf32>
    %c0_66 = arith.constant 0 : index
    %c7 = arith.constant 7 : index
    %c0_67 = arith.constant 0 : index
    %34 = vector.load %arg13[%c0_66, %c7, %c0_67] : memref<24x24x3xf32, #tpu.memory_space<vmem>>, vector<24x16x3xf32>
    %c0_68 = arith.constant 0 : index
    %c8 = arith.constant 8 : index
    %c0_69 = arith.constant 0 : index
    %35 = vector.load %arg13[%c0_68, %c8, %c0_69] : memref<24x24x3xf32, #tpu.memory_space<vmem>>, vector<24x16x3xf32>
    %36 = tpu.concatenate %27, %28, %29, %30, %31, %32, %33, %34, %35 in 2 : vector<24x16x3xf32>, vector<24x16x3xf32>, vector<24x16x3xf32>, vector<24x16x3xf32>, vector<24x16x3xf32>, vector<24x16x3xf32>, vector<24x16x3xf32>, vector<24x16x3xf32>, vector<24x16x3xf32> -> vector<24x16x27xf32>
    %37 = vector.extract_strided_slice %36 {offsets = [0, 0, 0], sizes = [16, 16, 27], strides = [1, 1, 1]} : vector<24x16x27xf32> to vector<16x16x27xf32>
    %38 = vector.extract_strided_slice %36 {offsets = [1, 0, 0], sizes = [16, 16, 27], strides = [1, 1, 1]} : vector<24x16x27xf32> to vector<16x16x27xf32>
    %39 = vector.extract_strided_slice %36 {offsets = [2, 0, 0], sizes = [16, 16, 27], strides = [1, 1, 1]} : vector<24x16x27xf32> to vector<16x16x27xf32>
    %40 = vector.extract_strided_slice %36 {offsets = [3, 0, 0], sizes = [16, 16, 27], strides = [1, 1, 1]} : vector<24x16x27xf32> to vector<16x16x27xf32>
    %41 = vector.extract_strided_slice %36 {offsets = [4, 0, 0], sizes = [16, 16, 27], strides = [1, 1, 1]} : vector<24x16x27xf32> to vector<16x16x27xf32>
    %42 = vector.extract_strided_slice %36 {offsets = [5, 0, 0], sizes = [16, 16, 27], strides = [1, 1, 1]} : vector<24x16x27xf32> to vector<16x16x27xf32>
    %43 = vector.extract_strided_slice %36 {offsets = [6, 0, 0], sizes = [16, 16, 27], strides = [1, 1, 1]} : vector<24x16x27xf32> to vector<16x16x27xf32>
    %44 = vector.extract_strided_slice %36 {offsets = [7, 0, 0], sizes = [16, 16, 27], strides = [1, 1, 1]} : vector<24x16x27xf32> to vector<16x16x27xf32>
    %45 = vector.extract_strided_slice %36 {offsets = [8, 0, 0], sizes = [16, 16, 27], strides = [1, 1, 1]} : vector<24x16x27xf32> to vector<16x16x27xf32>
    %46 = tpu.concatenate %37, %38, %39, %40, %41, %42, %43, %44, %45 in 2 : vector<16x16x27xf32>, vector<16x16x27xf32>, vector<16x16x27xf32>, vector<16x16x27xf32>, vector<16x16x27xf32>, vector<16x16x27xf32>, vector<16x16x27xf32>, vector<16x16x27xf32>, vector<16x16x27xf32> -> vector<16x16x243xf32>
    %47 = vector.shape_cast %46 : vector<16x16x243xf32> to vector<256x243xf32>
    %c0_70 = arith.constant 0 : index
    %c0_71 = arith.constant 0 : index
    %48 = vector.load %arg2[%c0_70, %c0_71] : memref<243x64xf32, #tpu.memory_space<vmem>>, vector<243x64xf32>
    %cst_72 = arith.constant dense<0.000000e+00> : vector<256x64xf32>
    %49 = tpu.matmul %47, %48, %cst_72 {dimension_numbers = #tpu.dot_dimension_numbers<[1], [0], [0], [1], [0, 0, 1, 1], [], []>} : vector<256x243xf32>, vector<243x64xf32>, vector<256x64xf32> -> vector<256x64xf32>
    %c0_73 = arith.constant 0 : index
    %c0_74 = arith.constant 0 : index
    %50 = vector.load %arg3[%c0_73, %c0_74] : memref<1x64xf32, #tpu.memory_space<vmem>>, vector<1x64xf32>
    %51 = vector.broadcast %50 : vector<1x64xf32> to vector<256x64xf32>
    %52 = arith.addf %49, %51 : vector<256x64xf32>
    %cst_75 = arith.constant 0.000000e+00 : f32
    %53 = vector.broadcast %cst_75 : f32 to vector<256x64xf32>
    %54 = arith.maximumf %52, %53 : vector<256x64xf32>
    %c0_76 = arith.constant 0 : index
    %c0_77 = arith.constant 0 : index
    %55 = vector.load %arg4[%c0_76, %c0_77] : memref<64x64xf32, #tpu.memory_space<vmem>>, vector<64x64xf32>
    %cst_78 = arith.constant dense<0.000000e+00> : vector<256x64xf32>
    %56 = tpu.matmul %54, %55, %cst_78 {dimension_numbers = #tpu.dot_dimension_numbers<[1], [0], [0], [1], [0, 0, 1, 1], [], []>} : vector<256x64xf32>, vector<64x64xf32>, vector<256x64xf32> -> vector<256x64xf32>
    %c0_79 = arith.constant 0 : index
    %c0_80 = arith.constant 0 : index
    %57 = vector.load %arg5[%c0_79, %c0_80] : memref<1x64xf32, #tpu.memory_space<vmem>>, vector<1x64xf32>
    %58 = vector.broadcast %57 : vector<1x64xf32> to vector<256x64xf32>
    %59 = arith.addf %56, %58 : vector<256x64xf32>
    %60 = vector.shape_cast %59 : vector<256x64xf32> to vector<16x16x64xf32>
    %c2_81 = arith.constant 2 : index
    %c2_82 = arith.constant 2 : index
    %c0_83 = arith.constant 0 : index
    %61 = vector.load %arg14[%c2_81, %c2_82, %c0_83] : memref<20x20x64xf32, #tpu.memory_space<vmem>>, vector<16x16x64xf32>
    tpu.vector_store %arg14[%c2_81, %c2_82, %c0_83], %60 {strides = array<i32>} : memref<20x20x64xf32, #tpu.memory_space<vmem>>, vector<16x16x64xf32>,
    %c0_84 = arith.constant 0 : index
    %c0_85 = arith.constant 0 : index
    %c0_86 = arith.constant 0 : index
    %62 = vector.load %arg14[%c0_84, %c0_85, %c0_86] : memref<20x20x64xf32, #tpu.memory_space<vmem>>, vector<20x16x64xf32>
    %c0_87 = arith.constant 0 : index
    %c1_88 = arith.constant 1 : index
    %c0_89 = arith.constant 0 : index
    %63 = vector.load %arg14[%c0_87, %c1_88, %c0_89] : memref<20x20x64xf32, #tpu.memory_space<vmem>>, vector<20x16x64xf32>
    %c0_90 = arith.constant 0 : index
    %c2_91 = arith.constant 2 : index
    %c0_92 = arith.constant 0 : index
    %64 = vector.load %arg14[%c0_90, %c2_91, %c0_92] : memref<20x20x64xf32, #tpu.memory_space<vmem>>, vector<20x16x64xf32>
    %c0_93 = arith.constant 0 : index
    %c3_94 = arith.constant 3 : index
    %c0_95 = arith.constant 0 : index
    %65 = vector.load %arg14[%c0_93, %c3_94, %c0_95] : memref<20x20x64xf32, #tpu.memory_space<vmem>>, vector<20x16x64xf32>
    %c0_96 = arith.constant 0 : index
    %c4_97 = arith.constant 4 : index
    %c0_98 = arith.constant 0 : index
    %66 = vector.load %arg14[%c0_96, %c4_97, %c0_98] : memref<20x20x64xf32, #tpu.memory_space<vmem>>, vector<20x16x64xf32>
    %67 = tpu.concatenate %62, %63, %64, %65, %66 in 2 : vector<20x16x64xf32>, vector<20x16x64xf32>, vector<20x16x64xf32>, vector<20x16x64xf32>, vector<20x16x64xf32> -> vector<20x16x320xf32>
    %cst_99 = arith.constant 0.000000e+00 : f32
    %68 = vector.broadcast %cst_99 : f32 to vector<256x32xf32>
    %69 = vector.extract_strided_slice %67 {offsets = [0, 0, 0], sizes = [16, 16, 320], strides = [1, 1, 1]} : vector<20x16x320xf32> to vector<16x16x320xf32>
    %70 = vector.shape_cast %69 : vector<16x16x320xf32> to vector<256x320xf32>
    %c0_100 = arith.constant 0 : index
    %c0_101 = arith.constant 0 : index
    %c0_102 = arith.constant 0 : index
    %71 = vector.load %arg6[%c0_100, %c0_101, %c0_102] : memref<5x320x32xf32, #tpu.memory_space<vmem>>, vector<1x320x32xf32>
    %72 = vector.shape_cast %71 : vector<1x320x32xf32> to vector<320x32xf32>
    %cst_103 = arith.constant dense<0.000000e+00> : vector<256x32xf32>
    %73 = tpu.matmul %70, %72, %cst_103 {dimension_numbers = #tpu.dot_dimension_numbers<[1], [0], [0], [1], [0, 0, 1, 1], [], []>} : vector<256x320xf32>, vector<320x32xf32>, vector<256x32xf32> -> vector<256x32xf32>
    %74 = arith.addf %68, %73 : vector<256x32xf32>
    %75 = vector.extract_strided_slice %67 {offsets = [1, 0, 0], sizes = [16, 16, 320], strides = [1, 1, 1]} : vector<20x16x320xf32> to vector<16x16x320xf32>
    %76 = vector.shape_cast %75 : vector<16x16x320xf32> to vector<256x320xf32>
    %c1_104 = arith.constant 1 : index
    %c0_105 = arith.constant 0 : index
    %c0_106 = arith.constant 0 : index
    %77 = vector.load %arg6[%c1_104, %c0_105, %c0_106] : memref<5x320x32xf32, #tpu.memory_space<vmem>>, vector<1x320x32xf32>
    %78 = vector.shape_cast %77 : vector<1x320x32xf32> to vector<320x32xf32>
    %cst_107 = arith.constant dense<0.000000e+00> : vector<256x32xf32>
    %79 = tpu.matmul %76, %78, %cst_107 {dimension_numbers = #tpu.dot_dimension_numbers<[1], [0], [0], [1], [0, 0, 1, 1], [], []>} : vector<256x320xf32>, vector<320x32xf32>, vector<256x32xf32> -> vector<256x32xf32>
    %80 = arith.addf %74, %79 : vector<256x32xf32>
    %81 = vector.extract_strided_slice %67 {offsets = [2, 0, 0], sizes = [16, 16, 320], strides = [1, 1, 1]} : vector<20x16x320xf32> to vector<16x16x320xf32>
    %82 = vector.shape_cast %81 : vector<16x16x320xf32> to vector<256x320xf32>
    %c2_108 = arith.constant 2 : index
    %c0_109 = arith.constant 0 : index
    %c0_110 = arith.constant 0 : index
    %83 = vector.load %arg6[%c2_108, %c0_109, %c0_110] : memref<5x320x32xf32, #tpu.memory_space<vmem>>, vector<1x320x32xf32>
    %84 = vector.shape_cast %83 : vector<1x320x32xf32> to vector<320x32xf32>
    %cst_111 = arith.constant dense<0.000000e+00> : vector<256x32xf32>
    %85 = tpu.matmul %82, %84, %cst_111 {dimension_numbers = #tpu.dot_dimension_numbers<[1], [0], [0], [1], [0, 0, 1, 1], [], []>} : vector<256x320xf32>, vector<320x32xf32>, vector<256x32xf32> -> vector<256x32xf32>
    %86 = arith.addf %80, %85 : vector<256x32xf32>
    %87 = vector.extract_strided_slice %67 {offsets = [3, 0, 0], sizes = [16, 16, 320], strides = [1, 1, 1]} : vector<20x16x320xf32> to vector<16x16x320xf32>
    %88 = vector.shape_cast %87 : vector<16x16x320xf32> to vector<256x320xf32>
    %c3_112 = arith.constant 3 : index
    %c0_113 = arith.constant 0 : index
    %c0_114 = arith.constant 0 : index
    %89 = vector.load %arg6[%c3_112, %c0_113, %c0_114] : memref<5x320x32xf32, #tpu.memory_space<vmem>>, vector<1x320x32xf32>
    %90 = vector.shape_cast %89 : vector<1x320x32xf32> to vector<320x32xf32>
    %cst_115 = arith.constant dense<0.000000e+00> : vector<256x32xf32>
    %91 = tpu.matmul %88, %90, %cst_115 {dimension_numbers = #tpu.dot_dimension_numbers<[1], [0], [0], [1], [0, 0, 1, 1], [], []>} : vector<256x320xf32>, vector<320x32xf32>, vector<256x32xf32> -> vector<256x32xf32>
    %92 = arith.addf %86, %91 : vector<256x32xf32>
    %93 = vector.extract_strided_slice %67 {offsets = [4, 0, 0], sizes = [16, 16, 320], strides = [1, 1, 1]} : vector<20x16x320xf32> to vector<16x16x320xf32>
    %94 = vector.shape_cast %93 : vector<16x16x320xf32> to vector<256x320xf32>
    %c4_116 = arith.constant 4 : index
    %c0_117 = arith.constant 0 : index
    %c0_118 = arith.constant 0 : index
    %95 = vector.load %arg6[%c4_116, %c0_117, %c0_118] : memref<5x320x32xf32, #tpu.memory_space<vmem>>, vector<1x320x32xf32>
    %96 = vector.shape_cast %95 : vector<1x320x32xf32> to vector<320x32xf32>
    %cst_119 = arith.constant dense<0.000000e+00> : vector<256x32xf32>
    %97 = tpu.matmul %94, %96, %cst_119 {dimension_numbers = #tpu.dot_dimension_numbers<[1], [0], [0], [1], [0, 0, 1, 1], [], []>} : vector<256x320xf32>, vector<320x32xf32>, vector<256x32xf32> -> vector<256x32xf32>
    %98 = arith.addf %92, %97 : vector<256x32xf32>
    %c0_120 = arith.constant 0 : index
    %c0_121 = arith.constant 0 : index
    %99 = vector.load %arg7[%c0_120, %c0_121] : memref<1x32xf32, #tpu.memory_space<vmem>>, vector<1x32xf32>
    %100 = vector.broadcast %99 : vector<1x32xf32> to vector<256x32xf32>
    %101 = arith.addf %98, %100 : vector<256x32xf32>
    %cst_122 = arith.constant 0.000000e+00 : f32
    %102 = vector.broadcast %cst_122 : f32 to vector<256x32xf32>
    %103 = arith.maximumf %101, %102 : vector<256x32xf32>
    %c0_123 = arith.constant 0 : index
    %c0_124 = arith.constant 0 : index
    %104 = vector.load %arg8[%c0_123, %c0_124] : memref<32x32xf32, #tpu.memory_space<vmem>>, vector<32x32xf32>
    %cst_125 = arith.constant dense<0.000000e+00> : vector<256x32xf32>
    %105 = tpu.matmul %103, %104, %cst_125 {dimension_numbers = #tpu.dot_dimension_numbers<[1], [0], [0], [1], [0, 0, 1, 1], [], []>} : vector<256x32xf32>, vector<32x32xf32>, vector<256x32xf32> -> vector<256x32xf32>
    %c0_126 = arith.constant 0 : index
    %c0_127 = arith.constant 0 : index
    %106 = vector.load %arg9[%c0_126, %c0_127] : memref<1x32xf32, #tpu.memory_space<vmem>>, vector<1x32xf32>
    %107 = vector.broadcast %106 : vector<1x32xf32> to vector<256x32xf32>
    %108 = arith.addf %105, %107 : vector<256x32xf32>
    %109 = vector.shape_cast %108 : vector<256x32xf32> to vector<16x16x32xf32>
    %c2_128 = arith.constant 2 : index
    %c2_129 = arith.constant 2 : index
    %c0_130 = arith.constant 0 : index
    %110 = vector.load %arg15[%c2_128, %c2_129, %c0_130] : memref<20x20x32xf32, #tpu.memory_space<vmem>>, vector<16x16x32xf32>
    tpu.vector_store %arg15[%c2_128, %c2_129, %c0_130], %109 {strides = array<i32>} : memref<20x20x32xf32, #tpu.memory_space<vmem>>, vector<16x16x32xf32>,
    %c0_131 = arith.constant 0 : index
    %c0_132 = arith.constant 0 : index
    %c0_133 = arith.constant 0 : index
    %111 = vector.load %arg15[%c0_131, %c0_132, %c0_133] : memref<20x20x32xf32, #tpu.memory_space<vmem>>, vector<20x16x32xf32>
    %c0_134 = arith.constant 0 : index
    %c1_135 = arith.constant 1 : index
    %c0_136 = arith.constant 0 : index
    %112 = vector.load %arg15[%c0_134, %c1_135, %c0_136] : memref<20x20x32xf32, #tpu.memory_space<vmem>>, vector<20x16x32xf32>
    %c0_137 = arith.constant 0 : index
    %c2_138 = arith.constant 2 : index
    %c0_139 = arith.constant 0 : index
    %113 = vector.load %arg15[%c0_137, %c2_138, %c0_139] : memref<20x20x32xf32, #tpu.memory_space<vmem>>, vector<20x16x32xf32>
    %c0_140 = arith.constant 0 : index
    %c3_141 = arith.constant 3 : index
    %c0_142 = arith.constant 0 : index
    %114 = vector.load %arg15[%c0_140, %c3_141, %c0_142] : memref<20x20x32xf32, #tpu.memory_space<vmem>>, vector<20x16x32xf32>
    %c0_143 = arith.constant 0 : index
    %c4_144 = arith.constant 4 : index
    %c0_145 = arith.constant 0 : index
    %115 = vector.load %arg15[%c0_143, %c4_144, %c0_145] : memref<20x20x32xf32, #tpu.memory_space<vmem>>, vector<20x16x32xf32>
    %116 = tpu.concatenate %111, %112, %113, %114, %115 in 2 : vector<20x16x32xf32>, vector<20x16x32xf32>, vector<20x16x32xf32>, vector<20x16x32xf32>, vector<20x16x32xf32> -> vector<20x16x160xf32>
    %cst_146 = arith.constant 0.000000e+00 : f32
    %117 = vector.broadcast %cst_146 : f32 to vector<256x3xf32>
    %118 = vector.extract_strided_slice %116 {offsets = [0, 0, 0], sizes = [16, 16, 160], strides = [1, 1, 1]} : vector<20x16x160xf32> to vector<16x16x160xf32>
    %119 = vector.shape_cast %118 : vector<16x16x160xf32> to vector<256x160xf32>
    %c0_147 = arith.constant 0 : index
    %c0_148 = arith.constant 0 : index
    %c0_149 = arith.constant 0 : index
    %120 = vector.load %arg10[%c0_147, %c0_148, %c0_149] : memref<5x160x3xf32, #tpu.memory_space<vmem>>, vector<1x160x3xf32>
    %121 = vector.shape_cast %120 : vector<1x160x3xf32> to vector<160x3xf32>
    %cst_150 = arith.constant dense<0.000000e+00> : vector<256x3xf32>
    %122 = tpu.matmul %119, %121, %cst_150 {dimension_numbers = #tpu.dot_dimension_numbers<[1], [0], [0], [1], [0, 0, 1, 1], [], []>} : vector<256x160xf32>, vector<160x3xf32>, vector<256x3xf32> -> vector<256x3xf32>
    %123 = arith.addf %117, %122 : vector<256x3xf32>
    %124 = vector.extract_strided_slice %116 {offsets = [1, 0, 0], sizes = [16, 16, 160], strides = [1, 1, 1]} : vector<20x16x160xf32> to vector<16x16x160xf32>
    %125 = vector.shape_cast %124 : vector<16x16x160xf32> to vector<256x160xf32>
    %c1_151 = arith.constant 1 : index
    %c0_152 = arith.constant 0 : index
    %c0_153 = arith.constant 0 : index
    %126 = vector.load %arg10[%c1_151, %c0_152, %c0_153] : memref<5x160x3xf32, #tpu.memory_space<vmem>>, vector<1x160x3xf32>
    %127 = vector.shape_cast %126 : vector<1x160x3xf32> to vector<160x3xf32>
    %cst_154 = arith.constant dense<0.000000e+00> : vector<256x3xf32>
    %128 = tpu.matmul %125, %127, %cst_154 {dimension_numbers = #tpu.dot_dimension_numbers<[1], [0], [0], [1], [0, 0, 1, 1], [], []>} : vector<256x160xf32>, vector<160x3xf32>, vector<256x3xf32> -> vector<256x3xf32>
    %129 = arith.addf %123, %128 : vector<256x3xf32>
    %130 = vector.extract_strided_slice %116 {offsets = [2, 0, 0], sizes = [16, 16, 160], strides = [1, 1, 1]} : vector<20x16x160xf32> to vector<16x16x160xf32>
    %131 = vector.shape_cast %130 : vector<16x16x160xf32> to vector<256x160xf32>
    %c2_155 = arith.constant 2 : index
    %c0_156 = arith.constant 0 : index
    %c0_157 = arith.constant 0 : index
    %132 = vector.load %arg10[%c2_155, %c0_156, %c0_157] : memref<5x160x3xf32, #tpu.memory_space<vmem>>, vector<1x160x3xf32>
    %133 = vector.shape_cast %132 : vector<1x160x3xf32> to vector<160x3xf32>
    %cst_158 = arith.constant dense<0.000000e+00> : vector<256x3xf32>
    %134 = tpu.matmul %131, %133, %cst_158 {dimension_numbers = #tpu.dot_dimension_numbers<[1], [0], [0], [1], [0, 0, 1, 1], [], []>} : vector<256x160xf32>, vector<160x3xf32>, vector<256x3xf32> -> vector<256x3xf32>
    %135 = arith.addf %129, %134 : vector<256x3xf32>
    %136 = vector.extract_strided_slice %116 {offsets = [3, 0, 0], sizes = [16, 16, 160], strides = [1, 1, 1]} : vector<20x16x160xf32> to vector<16x16x160xf32>
    %137 = vector.shape_cast %136 : vector<16x16x160xf32> to vector<256x160xf32>
    %c3_159 = arith.constant 3 : index
    %c0_160 = arith.constant 0 : index
    %c0_161 = arith.constant 0 : index
    %138 = vector.load %arg10[%c3_159, %c0_160, %c0_161] : memref<5x160x3xf32, #tpu.memory_space<vmem>>, vector<1x160x3xf32>
    %139 = vector.shape_cast %138 : vector<1x160x3xf32> to vector<160x3xf32>
    %cst_162 = arith.constant dense<0.000000e+00> : vector<256x3xf32>
    %140 = tpu.matmul %137, %139, %cst_162 {dimension_numbers = #tpu.dot_dimension_numbers<[1], [0], [0], [1], [0, 0, 1, 1], [], []>} : vector<256x160xf32>, vector<160x3xf32>, vector<256x3xf32> -> vector<256x3xf32>
    %141 = arith.addf %135, %140 : vector<256x3xf32>
    %142 = vector.extract_strided_slice %116 {offsets = [4, 0, 0], sizes = [16, 16, 160], strides = [1, 1, 1]} : vector<20x16x160xf32> to vector<16x16x160xf32>
    %143 = vector.shape_cast %142 : vector<16x16x160xf32> to vector<256x160xf32>
    %c4_163 = arith.constant 4 : index
    %c0_164 = arith.constant 0 : index
    %c0_165 = arith.constant 0 : index
    %144 = vector.load %arg10[%c4_163, %c0_164, %c0_165] : memref<5x160x3xf32, #tpu.memory_space<vmem>>, vector<1x160x3xf32>
    %145 = vector.shape_cast %144 : vector<1x160x3xf32> to vector<160x3xf32>
    %cst_166 = arith.constant dense<0.000000e+00> : vector<256x3xf32>
    %146 = tpu.matmul %143, %145, %cst_166 {dimension_numbers = #tpu.dot_dimension_numbers<[1], [0], [0], [1], [0, 0, 1, 1], [], []>} : vector<256x160xf32>, vector<160x3xf32>, vector<256x3xf32> -> vector<256x3xf32>
    %147 = arith.addf %141, %146 : vector<256x3xf32>
    %c0_167 = arith.constant 0 : index
    %c0_168 = arith.constant 0 : index
    %148 = vector.load %arg11[%c0_167, %c0_168] : memref<1x3xf32, #tpu.memory_space<vmem>>, vector<1x3xf32>
    %149 = vector.broadcast %148 : vector<1x3xf32> to vector<256x3xf32>
    %150 = arith.addf %147, %149 : vector<256x3xf32>
    %151 = vector.shape_cast %150 : vector<256x3xf32> to vector<16x16x3xf32>
    %c0_169 = arith.constant 0 : index
    %c0_170 = arith.constant 0 : index
    %c0_171 = arith.constant 0 : index
    %c0_172 = arith.constant 0 : index
    %152 = vector.load %arg12[%c0_169, %c0_170, %c0_171, %c0_172] : memref<1x16x16x3xf32, #tpu.memory_space<vmem>>, vector<1x16x16x3xf32>
    %153 = vector.shape_cast %152 : vector<1x16x16x3xf32> to vector<16x16x3xf32>
    %154 = vector.shape_cast %151 : vector<16x16x3xf32> to vector<1x16x16x3xf32>
    tpu.vector_store %arg12[%c0_169, %c0_170, %c0_171, %c0_172], %154 {strides = array<i32>} : memref<1x16x16x3xf32, #tpu.memory_space<vmem>>, vector<1x16x16x3xf32>,
    return
  }
  func.func @transform_0(%arg0: i32) -> (i32, i32, i32, i32) {
    %c0_i32 = arith.constant 0 : i32
    %c0_i32_0 = arith.constant 0 : i32
    %c0_i32_1 = arith.constant 0 : i32
    %c0_i32_2 = arith.constant 0 : i32
    return %arg0, %c0_i32, %c0_i32_0, %c0_i32_1 : i32, i32, i32, i32
  }
  func.func @transform_1(%arg0: i32) -> (i32, i32) {
    %c0_i32 = arith.constant 0 : i32
    %c0_i32_0 = arith.constant 0 : i32
    %c0_i32_1 = arith.constant 0 : i32
    return %c0_i32, %c0_i32_0 : i32, i32
  }
  func.func @transform_2(%arg0: i32) -> (i32, i32) {
    %c0_i32 = arith.constant 0 : i32
    %c0_i32_0 = arith.constant 0 : i32
    %c0_i32_1 = arith.constant 0 : i32
    return %c0_i32, %c0_i32_0 : i32, i32
  }
  func.func @transform_3(%arg0: i32) -> (i32, i32) {
    %c0_i32 = arith.constant 0 : i32
    %c0_i32_0 = arith.constant 0 : i32
    %c0_i32_1 = arith.constant 0 : i32
    return %c0_i32, %c0_i32_0 : i32, i32
  }
  func.func @transform_4(%arg0: i32) -> (i32, i32) {
    %c0_i32 = arith.constant 0 : i32
    %c0_i32_0 = arith.constant 0 : i32
    %c0_i32_1 = arith.constant 0 : i32
    return %c0_i32, %c0_i32_0 : i32, i32
  }
  func.func @transform_5(%arg0: i32) -> (i32, i32, i32) {
    %c0_i32 = arith.constant 0 : i32
    %c0_i32_0 = arith.constant 0 : i32
    %c0_i32_1 = arith.constant 0 : i32
    %c0_i32_2 = arith.constant 0 : i32
    return %c0_i32, %c0_i32_0, %c0_i32_1 : i32, i32, i32
  }
  func.func @transform_6(%arg0: i32) -> (i32, i32) {
    %c0_i32 = arith.constant 0 : i32
    %c0_i32_0 = arith.constant 0 : i32
    %c0_i32_1 = arith.constant 0 : i32
    return %c0_i32, %c0_i32_0 : i32, i32
  }
  func.func @transform_7(%arg0: i32) -> (i32, i32) {
    %c0_i32 = arith.constant 0 : i32
    %c0_i32_0 = arith.constant 0 : i32
    %c0_i32_1 = arith.constant 0 : i32
    return %c0_i32, %c0_i32_0 : i32, i32
  }
  func.func @transform_8(%arg0: i32) -> (i32, i32) {
    %c0_i32 = arith.constant 0 : i32
    %c0_i32_0 = arith.constant 0 : i32
    %c0_i32_1 = arith.constant 0 : i32
    return %c0_i32, %c0_i32_0 : i32, i32
  }
  func.func @transform_9(%arg0: i32) -> (i32, i32, i32) {
    %c0_i32 = arith.constant 0 : i32
    %c0_i32_0 = arith.constant 0 : i32
    %c0_i32_1 = arith.constant 0 : i32
    %c0_i32_2 = arith.constant 0 : i32
    return %c0_i32, %c0_i32_0, %c0_i32_1 : i32, i32, i32
  }
  func.func @transform_10(%arg0: i32) -> (i32, i32) {
    %c0_i32 = arith.constant 0 : i32
    %c0_i32_0 = arith.constant 0 : i32
    %c0_i32_1 = arith.constant 0 : i32
    return %c0_i32, %c0_i32_0 : i32, i32
  }
  func.func @transform_11(%arg0: i32) -> (i32, i32, i32, i32) {
    %c0_i32 = arith.constant 0 : i32
    %c0_i32_0 = arith.constant 0 : i32
    %c0_i32_1 = arith.constant 0 : i32
    %c0_i32_2 = arith.constant 0 : i32
    return %arg0, %c0_i32, %c0_i32_0, %c0_i32_1 : i32, i32, i32, i32
  }
}

</mosaic_0001>

<llo_original>
// kernel: tpu_custom_call.1
$region0: #{tpu_custom_call.1}
  #allocation0 [shape = 'u32[]', space=smem, size = 0x4, offset = 0x4, fixed_abs, tag = 'smem constant byte address 0x4 - core index']
  #allocation1 [shape = 'u32[144,128]{1,0:T(1,128)}', space=vmem, size = 0x12000, scoped, tag = 'internal scratch']
  #allocation2 [shape = 'f32[24,24,3]{2,1,0:T(8,128)}', space=vmem, size = 0x48000, scoped, tag = 'scratch operand']
  #allocation3 [shape = 'f32[20,20,64]{2,1,0:T(8,128)}', space=vmem, size = 0x3c000, scoped, tag = 'scratch operand']
  #allocation4 [shape = 'f32[20,20,32]{2,1,0:T(8,128)}', space=vmem, size = 0x3c000, scoped, tag = 'scratch operand']
  %s0 = inlined_call_operand.hbm [shape: f32[2,16,16,3], index: 0, kind: input, shape index: {}]
  %s1 = inlined_call_operand.hbm [shape: f32[243,64], index: 1, kind: input, shape index: {}]
  %s2 = inlined_call_operand.hbm [shape: f32[1,64], index: 2, kind: input, shape index: {}]
  %s3 = inlined_call_operand.hbm [shape: f32[64,64], index: 3, kind: input, shape index: {}]
  %s4 = inlined_call_operand.hbm [shape: f32[1,64], index: 4, kind: input, shape index: {}]
  %s5 = inlined_call_operand.hbm [shape: f32[5,320,32], index: 5, kind: input, shape index: {}]
  %s6 = inlined_call_operand.hbm [shape: f32[1,32], index: 6, kind: input, shape index: {}]
  %s7 = inlined_call_operand.hbm [shape: f32[32,32], index: 7, kind: input, shape index: {}]
  %s8 = inlined_call_operand.hbm [shape: f32[1,32], index: 8, kind: input, shape index: {}]
  %s9 = inlined_call_operand.hbm [shape: f32[5,160,3], index: 9, kind: input, shape index: {}]
  %s10 = inlined_call_operand.hbm [shape: f32[1,3], index: 10, kind: input, shape index: {}]
  %s11 = inlined_call_operand.hbm [shape: f32[2,16,16,3], index: 11, kind: output, shape index: {}]
  %s12 = sld [smem:[#allocation0]]
  $region121: #{tpu_custom_call.1} parent=0
    _
  %s14 = ssub.s32 1, %s12
  %s15 = scalar_select 0, %s14, %s12
  $region1: #{tpu_custom_call.1} parent=0
    #allocation5 [shape = 'u8[262144]{0}', space=vmem, size = 0x40000, scoped, tag = 'input window, operand 0']
    #allocation6 [shape = 's32[2]{0}', space=sflag, size = 0x8, scoped, tag = 'scoped memory for tpu_custom_call.1']
    #allocation7 [shape = 's32[2]{0}', space=sflag, size = 0x8, scoped, tag = 'scoped memory for tpu_custom_call.1']
    #allocation8 [shape = 'u8[126976]{0}', space=vmem, size = 0x1f000, scoped, tag = 'input window, operand 1, single buffered']
    #allocation9 [shape = 's32[1]{0}', space=sflag, size = 0x4, scoped, tag = 'scoped memory for tpu_custom_call.1']
    #allocation10 [shape = 'u8[512]{0}', space=vmem, size = 0x400, scoped, tag = 'input window, operand 2, single buffered']
    #allocation11 [shape = 'u8[32768]{0}', space=vmem, size = 0x8000, scoped, tag = 'input window, operand 3, single buffered']
    #allocation12 [shape = 's32[1]{0}', space=sflag, size = 0x4, scoped, tag = 'scoped memory for tpu_custom_call.1']
    #allocation13 [shape = 'u8[512]{0}', space=vmem, size = 0x400, scoped, tag = 'input window, operand 4, single buffered']
    #allocation14 [shape = 'u8[819200]{0}', space=vmem, size = 0xc8000, scoped, tag = 'input window, operand 5, single buffered']
    #allocation15 [shape = 's32[1]{0}', space=sflag, size = 0x4, scoped, tag = 'scoped memory for tpu_custom_call.1']
    #allocation16 [shape = 'u8[512]{0}', space=vmem, size = 0x400, scoped, tag = 'input window, operand 6, single buffered']
    #allocation17 [shape = 'u8[16384]{0}', space=vmem, size = 0x4000, scoped, tag = 'input window, operand 7, single buffered']
    #allocation18 [shape = 's32[1]{0}', space=sflag, size = 0x4, scoped, tag = 'scoped memory for tpu_custom_call.1']
    #allocation19 [shape = 'u8[512]{0}', space=vmem, size = 0x400, scoped, tag = 'input window, operand 8, single buffered']
    #allocation20 [shape = 'u8[409600]{0}', space=vmem, size = 0x64000, scoped, tag = 'input window, operand 9, single buffered']
    #allocation21 [shape = 's32[1]{0}', space=sflag, size = 0x4, scoped, tag = 'scoped memory for tpu_custom_call.1']
    #allocation22 [shape = 'u8[512]{0}', space=vmem, size = 0x400, scoped, tag = 'input window, operand 10, single buffered']
    #allocation23 [shape = 'u8[262144]{0}', space=vmem, size = 0x40000, scoped, tag = 'output window, operand 0']
    %16 = vsyncpa [#allocation6], 0
    %s17 = scalar_lea.sflag [#allocation6], 1
    %18 = vsyncpa %s17, 0
    %19 = vsyncpa [#allocation9], 0
    %20 = vsyncpa [#allocation12], 0
    %21 = vsyncpa [#allocation15], 0
    %22 = vsyncpa [#allocation18], 0
    %23 = vsyncpa [#allocation21], 0
    %24 = vsyncpa [#allocation7], 0
    %s25 = scalar_lea.sflag [#allocation7], 1
    %26 = vsyncpa %s25, 0
    loop: start=0, step=1, limit=4
    $region2: #{tpu_custom_call.1} parent=1 // loop_pre_header
      _
    $region3: #{tpu_custom_call.1} parent=1 // loop_header
      %s28 = sphi 0, %s32
      %p29 = scmp.ge.s32.totalorder %s28, 4
      %s38 = sphi 0, %s40
      %s41 = sphi 0, %s38
      %s42 = sphi 0, %s41
      %s58 = sphi 0, %s42
      %s62 = sphi 0, %s62
      %s64 = sphi 0, %s62
      %s65 = sphi 0, %s64
      %s79 = sphi 0, %s65
      %s83 = sphi 0, %s83
      %s85 = sphi 0, %s83
      %s86 = sphi 0, %s85
      %s100 = sphi 0, %s86
      %s104 = sphi 0, %s104
      %s106 = sphi 0, %s104
      %s107 = sphi 0, %s106
      %s121 = sphi 0, %s107
      %s125 = sphi 0, %s125
      %s127 = sphi 0, %s125
      %s128 = sphi 0, %s127
      %s142 = sphi 0, %s128
      %s146 = sphi 0, %s146
      %s148 = sphi 0, %s146
      %s149 = sphi 0, %s148
      %s163 = sphi 0, %s149
      %s167 = sphi 0, %s167
      %s169 = sphi 0, %s167
      %s170 = sphi 0, %s169
      %s184 = sphi 0, %s170
      %s188 = sphi 0, %s188
      %s190 = sphi 0, %s188
      %s191 = sphi 0, %s190
      %s205 = sphi 0, %s191
      %s209 = sphi 0, %s209
      %s211 = sphi 0, %s209
      %s212 = sphi 0, %s211
      %s226 = sphi 0, %s212
      %s230 = sphi 0, %s230
      %s232 = sphi 0, %s230
      %s233 = sphi 0, %s232
      %s247 = sphi 0, %s233
      %s251 = sphi 0, %s251
      %s253 = sphi 0, %s251
      %s254 = sphi 0, %s253
      %s268 = sphi 0, %s254
      %s274 = sphi 0, %s276
      %s277 = sphi 0, %s274
      %s278 = sphi 0, %s277
      %s294 = sphi 0, %s278
    $region4: #{tpu_custom_call.1} parent=1 // loop_header_branch
      %31 = sbr.rel (%p29) target = $region8
    $region5: #{tpu_custom_call.1} parent=1 // loop_body
      %s33 = ssub.s32 %s28, 1
      %s34 = ssub.s32 %s28, 2
      %s35 = sadd.s32 %s28, 1
      %s36 = ssub.s32 %s28, %s35
      %p37 = scmp.eq.s32.totalorder %s36, 0
      %s39 = sadd.s32 %s38, 1
      %s40 = scalar_select %p37, %s38, %s39
      %p43 = pneg %p37
      %p44 = scmp.eq.s32.totalorder %s28, 1
      %p45 = por %p43, %p44
      %p46 = scmp.ne.s32.totalorder %s38, %s41
      %p47 = scmp.eq.s32.totalorder %s28, 0
      %p48 = por %p46, %p47
      %p49 = scmp.ne.s32.totalorder %s38, %s41
      %p50 = scmp.eq.s32.totalorder %s33, 1
      %p51 = por %p49, %p50
      %p52 = scmp.ne.s32.totalorder %s41, %s42
      %p53 = scmp.eq.s32.totalorder %s33, 0
      %p54 = por %p52, %p53
      %p55 = scmp.ne.s32.totalorder %s41, %s42
      %p56 = scmp.eq.s32.totalorder %s34, 1
      %p57 = por %p55, %p56
      %p59 = scmp.ne.s32.totalorder %s42, %s58
      %p60 = scmp.eq.s32.totalorder %s34, 0
      %p61 = por %p59, %p60
      %s63 = sadd.s32 %s62, 1
      %p66 = scmp.eq.s32.totalorder %s28, 1
      %p67 = scmp.ne.s32.totalorder %s62, %s64
      %p68 = scmp.eq.s32.totalorder %s28, 0
      %p69 = por %p67, %p68
      %p70 = scmp.ne.s32.totalorder %s62, %s64
      %p71 = scmp.eq.s32.totalorder %s33, 1
      %p72 = por %p70, %p71
      %p73 = scmp.ne.s32.totalorder %s64, %s65
      %p74 = scmp.eq.s32.totalorder %s33, 0
      %p75 = por %p73, %p74
      %p76 = scmp.ne.s32.totalorder %s64, %s65
      %p77 = scmp.eq.s32.totalorder %s34, 1
      %p78 = por %p76, %p77
      %p80 = scmp.ne.s32.totalorder %s65, %s79
      %p81 = scmp.eq.s32.totalorder %s34, 0
      %p82 = por %p80, %p81
      %s84 = sadd.s32 %s83, 1
      %p87 = scmp.eq.s32.totalorder %s28, 1
      %p88 = scmp.ne.s32.totalorder %s83, %s85
      %p89 = scmp.eq.s32.totalorder %s28, 0
      %p90 = por %p88, %p89
      %p91 = scmp.ne.s32.totalorder %s83, %s85
      %p92 = scmp.eq.s32.totalorder %s33, 1
      %p93 = por %p91, %p92
      %p94 = scmp.ne.s32.totalorder %s85, %s86
      %p95 = scmp.eq.s32.totalorder %s33, 0
      %p96 = por %p94, %p95
      %p97 = scmp.ne.s32.totalorder %s85, %s86
      %p98 = scmp.eq.s32.totalorder %s34, 1
      %p99 = por %p97, %p98
      %p101 = scmp.ne.s32.totalorder %s86, %s100
      %p102 = scmp.eq.s32.totalorder %s34, 0
      %p103 = por %p101, %p102
      %s105 = sadd.s32 %s104, 1
      %p108 = scmp.eq.s32.totalorder %s28, 1
      %p109 = scmp.ne.s32.totalorder %s104, %s106
      %p110 = scmp.eq.s32.totalorder %s28, 0
      %p111 = por %p109, %p110
      %p112 = scmp.ne.s32.totalorder %s104, %s106
      %p113 = scmp.eq.s32.totalorder %s33, 1
      %p114 = por %p112, %p113
      %p115 = scmp.ne.s32.totalorder %s106, %s107
      %p116 = scmp.eq.s32.totalorder %s33, 0
      %p117 = por %p115, %p116
      %p118 = scmp.ne.s32.totalorder %s106, %s107
      %p119 = scmp.eq.s32.totalorder %s34, 1
      %p120 = por %p118, %p119
      %p122 = scmp.ne.s32.totalorder %s107, %s121
      %p123 = scmp.eq.s32.totalorder %s34, 0
      %p124 = por %p122, %p123
      %s126 = sadd.s32 %s125, 1
      %p129 = scmp.eq.s32.totalorder %s28, 1
      %p130 = scmp.ne.s32.totalorder %s125, %s127
      %p131 = scmp.eq.s32.totalorder %s28, 0
      %p132 = por %p130, %p131
      %p133 = scmp.ne.s32.totalorder %s125, %s127
      %p134 = scmp.eq.s32.totalorder %s33, 1
      %p135 = por %p133, %p134
      %p136 = scmp.ne.s32.totalorder %s127, %s128
      %p137 = scmp.eq.s32.totalorder %s33, 0
      %p138 = por %p136, %p137
      %p139 = scmp.ne.s32.totalorder %s127, %s128
      %p140 = scmp.eq.s32.totalorder %s34, 1
      %p141 = por %p139, %p140
      %p143 = scmp.ne.s32.totalorder %s128, %s142
      %p144 = scmp.eq.s32.totalorder %s34, 0
      %p145 = por %p143, %p144
      %s147 = sadd.s32 %s146, 1
      %p150 = scmp.eq.s32.totalorder %s28, 1
      %p151 = scmp.ne.s32.totalorder %s146, %s148
      %p152 = scmp.eq.s32.totalorder %s28, 0
      %p153 = por %p151, %p152
      %p154 = scmp.ne.s32.totalorder %s146, %s148
      %p155 = scmp.eq.s32.totalorder %s33, 1
      %p156 = por %p154, %p155
      %p157 = scmp.ne.s32.totalorder %s148, %s149
      %p158 = scmp.eq.s32.totalorder %s33, 0
      %p159 = por %p157, %p158
      %p160 = scmp.ne.s32.totalorder %s148, %s149
      %p161 = scmp.eq.s32.totalorder %s34, 1
      %p162 = por %p160, %p161
      %p164 = scmp.ne.s32.totalorder %s149, %s163
      %p165 = scmp.eq.s32.totalorder %s34, 0
      %p166 = por %p164, %p165
      %s168 = sadd.s32 %s167, 1
      %p171 = scmp.eq.s32.totalorder %s28, 1
      %p172 = scmp.ne.s32.totalorder %s167, %s169
      %p173 = scmp.eq.s32.totalorder %s28, 0
      %p174 = por %p172, %p173
      %p175 = scmp.ne.s32.totalorder %s167, %s169
      %p176 = scmp.eq.s32.totalorder %s33, 1
      %p177 = por %p175, %p176
      %p178 = scmp.ne.s32.totalorder %s169, %s170
      %p179 = scmp.eq.s32.totalorder %s33, 0
      %p180 = por %p178, %p179
      %p181 = scmp.ne.s32.totalorder %s169, %s170
      %p182 = scmp.eq.s32.totalorder %s34, 1
      %p183 = por %p181, %p182
      %p185 = scmp.ne.s32.totalorder %s170, %s184
      %p186 = scmp.eq.s32.totalorder %s34, 0
      %p187 = por %p185, %p186
      %s189 = sadd.s32 %s188, 1
      %p192 = scmp.eq.s32.totalorder %s28, 1
      %p193 = scmp.ne.s32.totalorder %s188, %s190
      %p194 = scmp.eq.s32.totalorder %s28, 0
      %p195 = por %p193, %p194
      %p196 = scmp.ne.s32.totalorder %s188, %s190
      %p197 = scmp.eq.s32.totalorder %s33, 1
      %p198 = por %p196, %p197
      %p199 = scmp.ne.s32.totalorder %s190, %s191
      %p200 = scmp.eq.s32.totalorder %s33, 0
      %p201 = por %p199, %p200
      %p202 = scmp.ne.s32.totalorder %s190, %s191
      %p203 = scmp.eq.s32.totalorder %s34, 1
      %p204 = por %p202, %p203
      %p206 = scmp.ne.s32.totalorder %s191, %s205
      %p207 = scmp.eq.s32.totalorder %s34, 0
      %p208 = por %p206, %p207
      %s210 = sadd.s32 %s209, 1
      %p213 = scmp.eq.s32.totalorder %s28, 1
      %p214 = scmp.ne.s32.totalorder %s209, %s211
      %p215 = scmp.eq.s32.totalorder %s28, 0
      %p216 = por %p214, %p215
      %p217 = scmp.ne.s32.totalorder %s209, %s211
      %p218 = scmp.eq.s32.totalorder %s33, 1
      %p219 = por %p217, %p218
      %p220 = scmp.ne.s32.totalorder %s211, %s212
      %p221 = scmp.eq.s32.totalorder %s33, 0
      %p222 = por %p220, %p221
      %p223 = scmp.ne.s32.totalorder %s211, %s212
      %p224 = scmp.eq.s32.totalorder %s34, 1
      %p225 = por %p223, %p224
      %p227 = scmp.ne.s32.totalorder %s212, %s226
      %p228 = scmp.eq.s32.totalorder %s34, 0
      %p229 = por %p227, %p228
      %s231 = sadd.s32 %s230, 1
      %p234 = scmp.eq.s32.totalorder %s28, 1
      %p235 = scmp.ne.s32.totalorder %s230, %s232
      %p236 = scmp.eq.s32.totalorder %s28, 0
      %p237 = por %p235, %p236
      %p238 = scmp.ne.s32.totalorder %s230, %s232
      %p239 = scmp.eq.s32.totalorder %s33, 1
      %p240 = por %p238, %p239
      %p241 = scmp.ne.s32.totalorder %s232, %s233
      %p242 = scmp.eq.s32.totalorder %s33, 0
      %p243 = por %p241, %p242
      %p244 = scmp.ne.s32.totalorder %s232, %s233
      %p245 = scmp.eq.s32.totalorder %s34, 1
      %p246 = por %p244, %p245
      %p248 = scmp.ne.s32.totalorder %s233, %s247
      %p249 = scmp.eq.s32.totalorder %s34, 0
      %p250 = por %p248, %p249
      %s252 = sadd.s32 %s251, 1
      %p255 = scmp.eq.s32.totalorder %s28, 1
      %p256 = scmp.ne.s32.totalorder %s251, %s253
      %p257 = scmp.eq.s32.totalorder %s28, 0
      %p258 = por %p256, %p257
      %p259 = scmp.ne.s32.totalorder %s251, %s253
      %p260 = scmp.eq.s32.totalorder %s33, 1
      %p261 = por %p259, %p260
      %p262 = scmp.ne.s32.totalorder %s253, %s254
      %p263 = scmp.eq.s32.totalorder %s33, 0
      %p264 = por %p262, %p263
      %p265 = scmp.ne.s32.totalorder %s253, %s254
      %p266 = scmp.eq.s32.totalorder %s34, 1
      %p267 = por %p265, %p266
      %p269 = scmp.ne.s32.totalorder %s254, %s268
      %p270 = scmp.eq.s32.totalorder %s34, 0
      %p271 = por %p269, %p270
      %s272 = ssub.s32 %s28, %s35
      %p273 = scmp.eq.s32.totalorder %s272, 0
      %s275 = sadd.s32 %s274, 1
      %s276 = scalar_select %p273, %s274, %s275
      %p279 = pneg %p273
      %p280 = scmp.eq.s32.totalorder %s28, 1
      %p281 = por %p279, %p280
      %p282 = scmp.ne.s32.totalorder %s274, %s277
      %p283 = scmp.eq.s32.totalorder %s28, 0
      %p284 = por %p282, %p283
      %p285 = scmp.ne.s32.totalorder %s274, %s277
      %p286 = scmp.eq.s32.totalorder %s33, 1
      %p287 = por %p285, %p286
      %p288 = scmp.ne.s32.totalorder %s277, %s278
      %p289 = scmp.eq.s32.totalorder %s33, 0
      %p290 = por %p288, %p289
      %p291 = scmp.ne.s32.totalorder %s277, %s278
      %p292 = scmp.eq.s32.totalorder %s34, 1
      %p293 = por %p291, %p292
      %p295 = scmp.ne.s32.totalorder %s278, %s294
      %p296 = scmp.eq.s32.totalorder %s34, 0
      %p297 = por %p295, %p296
      %p298 = scmp.le.s32.totalorder 1, %s28
      %p299 = scmp.lt.s32.totalorder %s28, 3
      %p300 = pnand %p298, %p299
      %p301 = pneg %p300
      // Predicated region
      $region9: #{tpu_custom_call.1} parent=5 // pred_check
        _
      $region10: #{tpu_custom_call.1} parent=5 // pred_check_branch
        %303 = sbr.rel (%p300) target = $region12
      $region11: #{tpu_custom_call.1} parent=5 // pred_region
        %s304 = ssub.s32 %s28, 1
        // Predicated region
        $region13: #{tpu_custom_call.1} parent=11 // pred_check
          %p305 = pneg %p75
        $region14: #{tpu_custom_call.1} parent=11 // pred_check_branch
          %307 = sbr.rel (%p305) target = $region16
        $region15: #{tpu_custom_call.1} parent=11 // pred_region
          %s309 = ssub.s32 3968, 3968
          %310 = vsyncadd [#allocation9], %s309
          %s311 = sshll.u32 [#allocation8], 4
          %s312 = int_to_ptr.vmem [resolvable:$true] %s311
          %317 = dma.hbm_to_vmem [thread:$0]  %s1, 3968, %s312, [#allocation9], 128, 128, 8
        $region16: #{tpu_custom_call.1} parent=11 // pred_fallthru
          _
        // Predicated region
        $region17: #{tpu_custom_call.1} parent=11 // pred_check
          %p318 = pneg %p96
        $region18: #{tpu_custom_call.1} parent=11 // pred_check_branch
          %320 = sbr.rel (%p318) target = $region20
        $region19: #{tpu_custom_call.1} parent=11 // pred_region
          %s322 = ssub.s32 16, 16
          %323 = vsyncadd [#allocation9], %s322
          %s325 = sshll.u32 [#allocation10], 4
          %s326 = int_to_ptr.vmem [resolvable:$true] %s325
          %328 = dma.hbm_to_vmem [thread:$0]  %s2, 16, %s326, [#allocation9]
        $region20: #{tpu_custom_call.1} parent=11 // pred_fallthru
          _
        // Predicated region
        $region21: #{tpu_custom_call.1} parent=11 // pred_check
          %p329 = pneg %p117
        $region22: #{tpu_custom_call.1} parent=11 // pred_check_branch
          %331 = sbr.rel (%p329) target = $region24
        $region23: #{tpu_custom_call.1} parent=11 // pred_region
          %s333 = ssub.s32 1024, 1024
          %334 = vsyncadd [#allocation12], %s333
          %s335 = sshll.u32 [#allocation11], 4
          %s336 = int_to_ptr.vmem [resolvable:$true] %s335
          %341 = dma.hbm_to_vmem [thread:$0]  %s3, 1024, %s336, [#allocation12], 128, 128, 8
        $region24: #{tpu_custom_call.1} parent=11 // pred_fallthru
          _
        // Predicated region
        $region25: #{tpu_custom_call.1} parent=11 // pred_check
          %p342 = pneg %p138
        $region26: #{tpu_custom_call.1} parent=11 // pred_check_branch
          %344 = sbr.rel (%p342) target = $region28
        $region27: #{tpu_custom_call.1} parent=11 // pred_region
          %s346 = ssub.s32 16, 16
          %347 = vsyncadd [#allocation12], %s346
          %s349 = sshll.u32 [#allocation13], 4
          %s350 = int_to_ptr.vmem [resolvable:$true] %s349
          %352 = dma.hbm_to_vmem [thread:$0]  %s4, 16, %s350, [#allocation12]
        $region28: #{tpu_custom_call.1} parent=11 // pred_fallthru
          _
        // Predicated region
        $region29: #{tpu_custom_call.1} parent=11 // pred_check
          %p353 = pneg %p159
        $region30: #{tpu_custom_call.1} parent=11 // pred_check_branch
          %355 = sbr.rel (%p353) target = $region32
        $region31: #{tpu_custom_call.1} parent=11 // pred_region
          %s357 = ssub.s32 25600, 25600
          %358 = vsyncadd [#allocation15], %s357
          %s359 = sshll.u32 [#allocation14], 4
          %s360 = int_to_ptr.vmem [resolvable:$true] %s359
          %365 = dma.hbm_to_vmem [thread:$0]  %s5, 25600, %s360, [#allocation15], 128, 128, 8
        $region32: #{tpu_custom_call.1} parent=11 // pred_fallthru
          _
        // Predicated region
        $region33: #{tpu_custom_call.1} parent=11 // pred_check
          %p366 = pneg %p180
        $region34: #{tpu_custom_call.1} parent=11 // pred_check_branch
          %368 = sbr.rel (%p366) target = $region36
        $region35: #{tpu_custom_call.1} parent=11 // pred_region
          %s370 = ssub.s32 16, 16
          %371 = vsyncadd [#allocation15], %s370
          %s373 = sshll.u32 [#allocation16], 4
          %s374 = int_to_ptr.vmem [resolvable:$true] %s373
          %376 = dma.hbm_to_vmem [thread:$0]  %s6, 16, %s374, [#allocation15]
        $region36: #{tpu_custom_call.1} parent=11 // pred_fallthru
          _
        // Predicated region
        $region37: #{tpu_custom_call.1} parent=11 // pred_check
          %p377 = pneg %p201
        $region38: #{tpu_custom_call.1} parent=11 // pred_check_branch
          %379 = sbr.rel (%p377) target = $region40
        $region39: #{tpu_custom_call.1} parent=11 // pred_region
          %s381 = ssub.s32 512, 512
          %382 = vsyncadd [#allocation18], %s381
          %s383 = sshll.u32 [#allocation17], 4
          %s384 = int_to_ptr.vmem [resolvable:$true] %s383
          %389 = dma.hbm_to_vmem [thread:$0]  %s7, 512, %s384, [#allocation18], 128, 128, 8
        $region40: #{tpu_custom_call.1} parent=11 // pred_fallthru
          _
        // Predicated region
        $region41: #{tpu_custom_call.1} parent=11 // pred_check
          %p390 = pneg %p222
        $region42: #{tpu_custom_call.1} parent=11 // pred_check_branch
          %392 = sbr.rel (%p390) target = $region44
        $region43: #{tpu_custom_call.1} parent=11 // pred_region
          %s394 = ssub.s32 16, 16
          %395 = vsyncadd [#allocation18], %s394
          %s397 = sshll.u32 [#allocation19], 4
          %s398 = int_to_ptr.vmem [resolvable:$true] %s397
          %400 = dma.hbm_to_vmem [thread:$0]  %s8, 16, %s398, [#allocation18]
        $region44: #{tpu_custom_call.1} parent=11 // pred_fallthru
          _
        // Predicated region
        $region45: #{tpu_custom_call.1} parent=11 // pred_check
          %p401 = pneg %p243
        $region46: #{tpu_custom_call.1} parent=11 // pred_check_branch
          %403 = sbr.rel (%p401) target = $region48
        $region47: #{tpu_custom_call.1} parent=11 // pred_region
          %s405 = ssub.s32 12800, 12800
          %406 = vsyncadd [#allocation21], %s405
          %s407 = sshll.u32 [#allocation20], 4
          %s408 = int_to_ptr.vmem [resolvable:$true] %s407
          %413 = dma.hbm_to_vmem [thread:$0]  %s9, 12800, %s408, [#allocation21], 128, 128, 8
        $region48: #{tpu_custom_call.1} parent=11 // pred_fallthru
          _
        // Predicated region
        $region49: #{tpu_custom_call.1} parent=11 // pred_check
          %p414 = pneg %p264
        $region50: #{tpu_custom_call.1} parent=11 // pred_check_branch
          %416 = sbr.rel (%p414) target = $region52
        $region51: #{tpu_custom_call.1} parent=11 // pred_region
          %s418 = ssub.s32 16, 16
          %419 = vsyncadd [#allocation21], %s418
          %s421 = sshll.u32 [#allocation22], 4
          %s422 = int_to_ptr.vmem [resolvable:$true] %s421
          %424 = dma.hbm_to_vmem [thread:$0]  %s10, 16, %s422, [#allocation21]
        $region52: #{tpu_custom_call.1} parent=11 // pred_fallthru
          _
      $region12: #{tpu_custom_call.1} parent=5 // pred_fallthru
        _
      %p425 = scmp.lt.s32.totalorder %s28, 2
      // Predicated region
      $region53: #{tpu_custom_call.1} parent=5 // pred_check
        %p426 = pneg %p425
      $region54: #{tpu_custom_call.1} parent=5 // pred_check_branch
        %428 = sbr.rel (%p426) target = $region56
      $region55: #{tpu_custom_call.1} parent=5 // pred_region
        // Predicated region
        $region57: #{tpu_custom_call.1} parent=55 // pred_check
          %p429 = pneg %p48
        $region58: #{tpu_custom_call.1} parent=55 // pred_check_branch
          %431 = sbr.rel (%p429) target = $region60
        $region59: #{tpu_custom_call.1} parent=55 // pred_region
          %s432 = sand.u32 %s38, 1
          %s433 = scalar_lea.sflag [#allocation6], %s432
          %s434 = sand.u32 %s38, 1
          %s435 = smul.addr %s434, 256
          %s436 = scalar_lea.vmem [#allocation5], %s435
          %s438 = ssub.s32 4096, 4096
          %439 = vsyncadd %s433, %s438
          %s440 = smul.addr %s28, 32
          %s441 = smul.addr %s440, 128
          %s442 = scalar_lea.hbm %s0, %s441
          %s443 = sshll.u32 %s436, 4
          %s444 = int_to_ptr.vmem [resolvable:$true] %s443
          %449 = dma.hbm_to_vmem [thread:$0]  %s442, 4096, %s444, %s433, 128, 128, 8
        $region60: #{tpu_custom_call.1} parent=55 // pred_fallthru
          _
      $region56: #{tpu_custom_call.1} parent=5 // pred_fallthru
        _
      %p450 = scmp.le.s32.totalorder 1, %s28
      %p451 = scmp.lt.s32.totalorder %s28, 3
      %p452 = pnand %p450, %p451
      %p453 = pneg %p452
      // Predicated region
      $region61: #{tpu_custom_call.1} parent=5 // pred_check
        _
      $region62: #{tpu_custom_call.1} parent=5 // pred_check_branch
        %455 = sbr.rel (%p452) target = $region64
      $region63: #{tpu_custom_call.1} parent=5 // pred_region
        %s456 = ssub.s32 %s28, 1
        %s457 = sand.u32 %s41, 1
        %s458 = scalar_lea.sflag [#allocation6], %s457
        %s459 = sand.u32 %s41, 1
        %s460 = smul.addr %s459, 256
        %s461 = scalar_lea.vmem [#allocation5], %s460
        // Predicated region
        $region65: #{tpu_custom_call.1} parent=63 // pred_check
          %p462 = pneg %p54
        $region66: #{tpu_custom_call.1} parent=63 // pred_check_branch
          %464 = sbr.rel (%p462) target = $region68
        $region67: #{tpu_custom_call.1} parent=63 // pred_region
          %465 = dma.done %s458, 4096
        $region68: #{tpu_custom_call.1} parent=63 // pred_fallthru
          _
        // Predicated region
        $region69: #{tpu_custom_call.1} parent=63 // pred_check
          %p466 = pneg %p75
        $region70: #{tpu_custom_call.1} parent=63 // pred_check_branch
          %468 = sbr.rel (%p466) target = $region72
        $region71: #{tpu_custom_call.1} parent=63 // pred_region
          %469 = dma.done [#allocation9], 3968
        $region72: #{tpu_custom_call.1} parent=63 // pred_fallthru
          _
        // Predicated region
        $region73: #{tpu_custom_call.1} parent=63 // pred_check
          %p470 = pneg %p96
        $region74: #{tpu_custom_call.1} parent=63 // pred_check_branch
          %472 = sbr.rel (%p470) target = $region76
        $region75: #{tpu_custom_call.1} parent=63 // pred_region
          %473 = dma.done [#allocation9], 16
        $region76: #{tpu_custom_call.1} parent=63 // pred_fallthru
          _
        // Predicated region
        $region77: #{tpu_custom_call.1} parent=63 // pred_check
          %p474 = pneg %p117
        $region78: #{tpu_custom_call.1} parent=63 // pred_check_branch
          %476 = sbr.rel (%p474) target = $region80
        $region79: #{tpu_custom_call.1} parent=63 // pred_region
          %477 = dma.done [#allocation12], 1024
        $region80: #{tpu_custom_call.1} parent=63 // pred_fallthru
          _
        // Predicated region
        $region81: #{tpu_custom_call.1} parent=63 // pred_check
          %p478 = pneg %p138
        $region82: #{tpu_custom_call.1} parent=63 // pred_check_branch
          %480 = sbr.rel (%p478) target = $region84
        $region83: #{tpu_custom_call.1} parent=63 // pred_region
          %481 = dma.done [#allocation12], 16
        $region84: #{tpu_custom_call.1} parent=63 // pred_fallthru
          _
        // Predicated region
        $region85: #{tpu_custom_call.1} parent=63 // pred_check
          %p482 = pneg %p159
        $region86: #{tpu_custom_call.1} parent=63 // pred_check_branch
          %484 = sbr.rel (%p482) target = $region88
        $region87: #{tpu_custom_call.1} parent=63 // pred_region
          %485 = dma.done [#allocation15], 25600
        $region88: #{tpu_custom_call.1} parent=63 // pred_fallthru
          _
        // Predicated region
        $region89: #{tpu_custom_call.1} parent=63 // pred_check
          %p486 = pneg %p180
        $region90: #{tpu_custom_call.1} parent=63 // pred_check_branch
          %488 = sbr.rel (%p486) target = $region92
        $region91: #{tpu_custom_call.1} parent=63 // pred_region
          %489 = dma.done [#allocation15], 16
        $region92: #{tpu_custom_call.1} parent=63 // pred_fallthru
          _
        // Predicated region
        $region93: #{tpu_custom_call.1} parent=63 // pred_check
          %p490 = pneg %p201
        $region94: #{tpu_custom_call.1} parent=63 // pred_check_branch
          %492 = sbr.rel (%p490) target = $region96
        $region95: #{tpu_custom_call.1} parent=63 // pred_region
          %493 = dma.done [#allocation18], 512
        $region96: #{tpu_custom_call.1} parent=63 // pred_fallthru
          _
        // Predicated region
        $region97: #{tpu_custom_call.1} parent=63 // pred_check
          %p494 = pneg %p222
        $region98: #{tpu_custom_call.1} parent=63 // pred_check_branch
          %496 = sbr.rel (%p494) target = $region100
        $region99: #{tpu_custom_call.1} parent=63 // pred_region
          %497 = dma.done [#allocation18], 16
        $region100: #{tpu_custom_call.1} parent=63 // pred_fallthru
          _
        // Predicated region
        $region101: #{tpu_custom_call.1} parent=63 // pred_check
          %p498 = pneg %p243
        $region102: #{tpu_custom_call.1} parent=63 // pred_check_branch
          %500 = sbr.rel (%p498) target = $region104
        $region103: #{tpu_custom_call.1} parent=63 // pred_region
          %501 = dma.done [#allocation21], 12800
        $region104: #{tpu_custom_call.1} parent=63 // pred_fallthru
          _
        // Predicated region
        $region105: #{tpu_custom_call.1} parent=63 // pred_check
          %p502 = pneg %p264
        $region106: #{tpu_custom_call.1} parent=63 // pred_check_branch
          %504 = sbr.rel (%p502) target = $region108
        $region107: #{tpu_custom_call.1} parent=63 // pred_region
          %505 = dma.done [#allocation21], 16
        $region108: #{tpu_custom_call.1} parent=63 // pred_fallthru
          _
        %s506 = sand.u32 %s41, 1
        %s507 = scalar_lea.sflag [#allocation6], %s506
        %s508 = sand.u32 %s41, 1
        %s509 = smul.addr %s508, 256
        %s510 = scalar_lea.vmem [#allocation5], %s509
        %p511 = pneg %p54
        %p512 = pneg %p51
        %p513 = pneg %p75
        %p514 = pneg %p72
        %p515 = pneg %p96
        %p516 = pneg %p93
        %p517 = pneg %p117
        %p518 = pneg %p114
        %p519 = pneg %p138
        %p520 = pneg %p135
        %p521 = pneg %p159
        %p522 = pneg %p156
        %p523 = pneg %p180
        %p524 = pneg %p177
        %p525 = pneg %p201
        %p526 = pneg %p198
        %p527 = pneg %p222
        %p528 = pneg %p219
        %p529 = pneg %p243
        %p530 = pneg %p240
        %p531 = pneg %p264
        %p532 = pneg %p261
        %p533 = pneg %p290
        %p534 = pneg %p287
        %s535 = sand.u32 %s277, 1
        %s536 = scalar_lea.sflag [#allocation7], %s535
        %s537 = sand.u32 %s277, 1
        %s538 = smul.addr %s537, 256
        %s539 = scalar_lea.vmem [#allocation23], %s538
        %vm540 = vcmask 23552
        %541 = vst.msk [vmem:[#allocation2] sm:$0xff] %vm540, 0.0
        %542 = vst.msk [vmem:[#allocation2 + $0x8] sm:$0xff] %vm540, 0.0
        %543 = vst.msk [vmem:[#allocation2 + $0x10] sm:$0xff] %vm540, 0.0
        %544 = vst.msk [vmem:[#allocation2 + $0x18] sm:$0xff] %vm540, 0.0
        %545 = vst.msk [vmem:[#allocation2 + $0x20] sm:$0xff] %vm540, 0.0
        %546 = vst.msk [vmem:[#allocation2 + $0x28] sm:$0xff] %vm540, 0.0
        %547 = vst.msk [vmem:[#allocation2 + $0x30] sm:$0xff] %vm540, 0.0
        %548 = vst.msk [vmem:[#allocation2 + $0x38] sm:$0xff] %vm540, 0.0
        %549 = vst.msk [vmem:[#allocation2 + $0x40] sm:$0xff] %vm540, 0.0
        %550 = vst.msk [vmem:[#allocation2 + $0x48] sm:$0xff] %vm540, 0.0
        %551 = vst.msk [vmem:[#allocation2 + $0x50] sm:$0xff] %vm540, 0.0
        %552 = vst.msk [vmem:[#allocation2 + $0x58] sm:$0xff] %vm540, 0.0
        %s553 = scalar_lea.vmem [#allocation2], 480
        %554 = vst.msk [vmem:[%s553] sm:$0xff] %vm540, 0.0
        %555 = vst.msk [vmem:[%s553 + $0x8] sm:$0xff] %vm540, 0.0
        %556 = vst.msk [vmem:[%s553 + $0x10] sm:$0xff] %vm540, 0.0
        %557 = vst.msk [vmem:[%s553 + $0x18] sm:$0xff] %vm540, 0.0
        %558 = vst.msk [vmem:[%s553 + $0x20] sm:$0xff] %vm540, 0.0
        %559 = vst.msk [vmem:[%s553 + $0x28] sm:$0xff] %vm540, 0.0
        %560 = vst.msk [vmem:[%s553 + $0x30] sm:$0xff] %vm540, 0.0
        %561 = vst.msk [vmem:[%s553 + $0x38] sm:$0xff] %vm540, 0.0
        %562 = vst.msk [vmem:[%s553 + $0x40] sm:$0xff] %vm540, 0.0
        %563 = vst.msk [vmem:[%s553 + $0x48] sm:$0xff] %vm540, 0.0
        %564 = vst.msk [vmem:[%s553 + $0x50] sm:$0xff] %vm540, 0.0
        %565 = vst.msk [vmem:[%s553 + $0x58] sm:$0xff] %vm540, 0.0
        %s566 = scalar_lea.vmem [#allocation2], 96
        %vm567 = vcmask 19456
        %568 = vst.msk [vmem:[%s566] sm:$0xf] %vm567, 0.0
        %569 = vst.msk [vmem:[%s566 + $0x18] sm:$0xf] %vm567, 0.0
        %570 = vst.msk [vmem:[%s566 + $0x30] sm:$0xf] %vm567, 0.0
        %571 = vst.msk [vmem:[%s566 + $0x48] sm:$0xf] %vm567, 0.0
        %572 = vst.msk [vmem:[%s566 + $0x60] sm:$0xf] %vm567, 0.0
        %573 = vst.msk [vmem:[%s566 + $0x78] sm:$0xf] %vm567, 0.0
        %574 = vst.msk [vmem:[%s566 + $0x90] sm:$0xf] %vm567, 0.0
        %575 = vst.msk [vmem:[%s566 + $0xa8] sm:$0xf] %vm567, 0.0
        %576 = vst.msk [vmem:[%s566 + $0xc0] sm:$0xf] %vm567, 0.0
        %577 = vst.msk [vmem:[%s566 + $0xd8] sm:$0xf] %vm567, 0.0
        %578 = vst.msk [vmem:[%s566 + $0xf0] sm:$0xf] %vm567, 0.0
        %579 = vst.msk [vmem:[%s566 + $0x108] sm:$0xf] %vm567, 0.0
        %580 = vst.msk [vmem:[%s566 + $0x120] sm:$0xf] %vm567, 0.0
        %581 = vst.msk [vmem:[%s566 + $0x138] sm:$0xf] %vm567, 0.0
        %582 = vst.msk [vmem:[%s566 + $0x150] sm:$0xf] %vm567, 0.0
        %583 = vst.msk [vmem:[%s566 + $0x168] sm:$0xf] %vm567, 0.0
        %584 = vst.msk [vmem:[%s566 + $0x14] sm:$0xf] %vm567, 0.0
        %585 = vst.msk [vmem:[%s566 + $0x2c] sm:$0xf] %vm567, 0.0
        %586 = vst.msk [vmem:[%s566 + $0x44] sm:$0xf] %vm567, 0.0
        %587 = vst.msk [vmem:[%s566 + $0x5c] sm:$0xf] %vm567, 0.0
        %588 = vst.msk [vmem:[%s566 + $0x74] sm:$0xf] %vm567, 0.0
        %589 = vst.msk [vmem:[%s566 + $0x8c] sm:$0xf] %vm567, 0.0
        %590 = vst.msk [vmem:[%s566 + $0xa4] sm:$0xf] %vm567, 0.0
        %591 = vst.msk [vmem:[%s566 + $0xbc] sm:$0xf] %vm567, 0.0
        %592 = vst.msk [vmem:[%s566 + $0xd4] sm:$0xf] %vm567, 0.0
        %593 = vst.msk [vmem:[%s566 + $0xec] sm:$0xf] %vm567, 0.0
        %594 = vst.msk [vmem:[%s566 + $0x104] sm:$0xf] %vm567, 0.0
        %595 = vst.msk [vmem:[%s566 + $0x11c] sm:$0xf] %vm567, 0.0
        %596 = vst.msk [vmem:[%s566 + $0x134] sm:$0xf] %vm567, 0.0
        %597 = vst.msk [vmem:[%s566 + $0x14c] sm:$0xf] %vm567, 0.0
        %598 = vst.msk [vmem:[%s566 + $0x164] sm:$0xf] %vm567, 0.0
        %599 = vst.msk [vmem:[%s566 + $0x17c] sm:$0xf] %vm567, 0.0
        %vm600 = vcmask 523264
        %601 = vst.msk [vmem:[#allocation3] sm:$0xff] %vm600, 0.0
        %602 = vst.msk [vmem:[#allocation3 + $0x8] sm:$0xff] %vm600, 0.0
        %vm603 = vcmask 519168
        %604 = vst.msk [vmem:[#allocation3 + $0x10] sm:$0xf] %vm603, 0.0
        %605 = vst.msk [vmem:[#allocation3 + $0x18] sm:$0xff] %vm600, 0.0
        %606 = vst.msk [vmem:[#allocation3 + $0x20] sm:$0xff] %vm600, 0.0
        %607 = vst.msk [vmem:[#allocation3 + $0x28] sm:$0xf] %vm603, 0.0
        %s608 = scalar_lea.vmem [#allocation3], 432
        %609 = vst.msk [vmem:[%s608] sm:$0xff] %vm600, 0.0
        %610 = vst.msk [vmem:[%s608 + $0x8] sm:$0xff] %vm600, 0.0
        %611 = vst.msk [vmem:[%s608 + $0x10] sm:$0xf] %vm603, 0.0
        %612 = vst.msk [vmem:[%s608 + $0x18] sm:$0xff] %vm600, 0.0
        %613 = vst.msk [vmem:[%s608 + $0x20] sm:$0xff] %vm600, 0.0
        %614 = vst.msk [vmem:[%s608 + $0x28] sm:$0xf] %vm603, 0.0
        %s615 = scalar_lea.vmem [#allocation3], 48
        %vm616 = vcmask 517120
        %617 = vst.msk [vmem:[%s615] sm:$0x3] %vm616, 0.0
        %618 = vst.msk [vmem:[%s615 + $0x18] sm:$0x3] %vm616, 0.0
        %619 = vst.msk [vmem:[%s615 + $0x30] sm:$0x3] %vm616, 0.0
        %620 = vst.msk [vmem:[%s615 + $0x48] sm:$0x3] %vm616, 0.0
        %621 = vst.msk [vmem:[%s615 + $0x60] sm:$0x3] %vm616, 0.0
        %622 = vst.msk [vmem:[%s615 + $0x78] sm:$0x3] %vm616, 0.0
        %623 = vst.msk [vmem:[%s615 + $0x90] sm:$0x3] %vm616, 0.0
        %624 = vst.msk [vmem:[%s615 + $0xa8] sm:$0x3] %vm616, 0.0
        %625 = vst.msk [vmem:[%s615 + $0xc0] sm:$0x3] %vm616, 0.0
        %626 = vst.msk [vmem:[%s615 + $0xd8] sm:$0x3] %vm616, 0.0
        %627 = vst.msk [vmem:[%s615 + $0xf0] sm:$0x3] %vm616, 0.0
        %628 = vst.msk [vmem:[%s615 + $0x108] sm:$0x3] %vm616, 0.0
        %629 = vst.msk [vmem:[%s615 + $0x120] sm:$0x3] %vm616, 0.0
        %630 = vst.msk [vmem:[%s615 + $0x138] sm:$0x3] %vm616, 0.0
        %631 = vst.msk [vmem:[%s615 + $0x150] sm:$0x3] %vm616, 0.0
        %632 = vst.msk [vmem:[%s615 + $0x168] sm:$0x3] %vm616, 0.0
        %633 = vst.msk [vmem:[%s615 + $0x12] sm:$0x3] %vm616, 0.0
        %634 = vst.msk [vmem:[%s615 + $0x2a] sm:$0x3] %vm616, 0.0
        %635 = vst.msk [vmem:[%s615 + $0x42] sm:$0x3] %vm616, 0.0
        %636 = vst.msk [vmem:[%s615 + $0x5a] sm:$0x3] %vm616, 0.0
        %637 = vst.msk [vmem:[%s615 + $0x72] sm:$0x3] %vm616, 0.0
        %638 = vst.msk [vmem:[%s615 + $0x8a] sm:$0x3] %vm616, 0.0
        %639 = vst.msk [vmem:[%s615 + $0xa2] sm:$0x3] %vm616, 0.0
        %640 = vst.msk [vmem:[%s615 + $0xba] sm:$0x3] %vm616, 0.0
        %641 = vst.msk [vmem:[%s615 + $0xd2] sm:$0x3] %vm616, 0.0
        %642 = vst.msk [vmem:[%s615 + $0xea] sm:$0x3] %vm616, 0.0
        %643 = vst.msk [vmem:[%s615 + $0x102] sm:$0x3] %vm616, 0.0
        %644 = vst.msk [vmem:[%s615 + $0x11a] sm:$0x3] %vm616, 0.0
        %645 = vst.msk [vmem:[%s615 + $0x132] sm:$0x3] %vm616, 0.0
        %646 = vst.msk [vmem:[%s615 + $0x14a] sm:$0x3] %vm616, 0.0
        %647 = vst.msk [vmem:[%s615 + $0x162] sm:$0x3] %vm616, 0.0
        %648 = vst.msk [vmem:[%s615 + $0x17a] sm:$0x3] %vm616, 0.0
        %vm649 = vcmask 261120
        %650 = vst.msk [vmem:[#allocation4] sm:$0xff] %vm649, 0.0
        %651 = vst.msk [vmem:[#allocation4 + $0x8] sm:$0xff] %vm649, 0.0
        %vm652 = vcmask 257024
        %653 = vst.msk [vmem:[#allocation4 + $0x10] sm:$0xf] %vm652, 0.0
        %654 = vst.msk [vmem:[#allocation4 + $0x18] sm:$0xff] %vm649, 0.0
        %655 = vst.msk [vmem:[#allocation4 + $0x20] sm:$0xff] %vm649, 0.0
        %656 = vst.msk [vmem:[#allocation4 + $0x28] sm:$0xf] %vm652, 0.0
        %s657 = scalar_lea.vmem [#allocation4], 432
        %658 = vst.msk [vmem:[%s657] sm:$0xff] %vm649, 0.0
        %659 = vst.msk [vmem:[%s657 + $0x8] sm:$0xff] %vm649, 0.0
        %660 = vst.msk [vmem:[%s657 + $0x10] sm:$0xf] %vm652, 0.0
        %661 = vst.msk [vmem:[%s657 + $0x18] sm:$0xff] %vm649, 0.0
        %662 = vst.msk [vmem:[%s657 + $0x20] sm:$0xff] %vm649, 0.0
        %663 = vst.msk [vmem:[%s657 + $0x28] sm:$0xf] %vm652, 0.0
        %s664 = scalar_lea.vmem [#allocation4], 48
        %vm665 = vcmask 254976
        %666 = vst.msk [vmem:[%s664] sm:$0x3] %vm665, 0.0
        %667 = vst.msk [vmem:[%s664 + $0x18] sm:$0x3] %vm665, 0.0
        %668 = vst.msk [vmem:[%s664 + $0x30] sm:$0x3] %vm665, 0.0
        %669 = vst.msk [vmem:[%s664 + $0x48] sm:$0x3] %vm665, 0.0
        %670 = vst.msk [vmem:[%s664 + $0x60] sm:$0x3] %vm665, 0.0
        %671 = vst.msk [vmem:[%s664 + $0x78] sm:$0x3] %vm665, 0.0
        %672 = vst.msk [vmem:[%s664 + $0x90] sm:$0x3] %vm665, 0.0
        %673 = vst.msk [vmem:[%s664 + $0xa8] sm:$0x3] %vm665, 0.0
        %674 = vst.msk [vmem:[%s664 + $0xc0] sm:$0x3] %vm665, 0.0
        %675 = vst.msk [vmem:[%s664 + $0xd8] sm:$0x3] %vm665, 0.0
        %676 = vst.msk [vmem:[%s664 + $0xf0] sm:$0x3] %vm665, 0.0
        %677 = vst.msk [vmem:[%s664 + $0x108] sm:$0x3] %vm665, 0.0
        %678 = vst.msk [vmem:[%s664 + $0x120] sm:$0x3] %vm665, 0.0
        %679 = vst.msk [vmem:[%s664 + $0x138] sm:$0x3] %vm665, 0.0
        %680 = vst.msk [vmem:[%s664 + $0x150] sm:$0x3] %vm665, 0.0
        %681 = vst.msk [vmem:[%s664 + $0x168] sm:$0x3] %vm665, 0.0
        %682 = vst.msk [vmem:[%s664 + $0x12] sm:$0x3] %vm665, 0.0
        %683 = vst.msk [vmem:[%s664 + $0x2a] sm:$0x3] %vm665, 0.0
        %684 = vst.msk [vmem:[%s664 + $0x42] sm:$0x3] %vm665, 0.0
        %685 = vst.msk [vmem:[%s664 + $0x5a] sm:$0x3] %vm665, 0.0
        %686 = vst.msk [vmem:[%s664 + $0x72] sm:$0x3] %vm665, 0.0
        %687 = vst.msk [vmem:[%s664 + $0x8a] sm:$0x3] %vm665, 0.0
        %688 = vst.msk [vmem:[%s664 + $0xa2] sm:$0x3] %vm665, 0.0
        %689 = vst.msk [vmem:[%s664 + $0xba] sm:$0x3] %vm665, 0.0
        %690 = vst.msk [vmem:[%s664 + $0xd2] sm:$0x3] %vm665, 0.0
        %691 = vst.msk [vmem:[%s664 + $0xea] sm:$0x3] %vm665, 0.0
        %692 = vst.msk [vmem:[%s664 + $0x102] sm:$0x3] %vm665, 0.0
        %693 = vst.msk [vmem:[%s664 + $0x11a] sm:$0x3] %vm665, 0.0
        %694 = vst.msk [vmem:[%s664 + $0x132] sm:$0x3] %vm665, 0.0
        %695 = vst.msk [vmem:[%s664 + $0x14a] sm:$0x3] %vm665, 0.0
        %696 = vst.msk [vmem:[%s664 + $0x162] sm:$0x3] %vm665, 0.0
        %697 = vst.msk [vmem:[%s664 + $0x17a] sm:$0x3] %vm665, 0.0
        %v698 = vld [vmem:[%s461] sm:$0xff]
        %v699 = vld [vmem:[%s461 + $0x8] sm:$0xff]
        %v700 = vld [vmem:[%s461 + $0x10] sm:$0xff]
        %v701 = vld [vmem:[%s461 + $0x18] sm:$0xff]
        %v702 = vld [vmem:[%s461 + $0x20] sm:$0xff]
        %v703 = vld [vmem:[%s461 + $0x28] sm:$0xff]
        %v704 = vld [vmem:[%s461 + $0x30] sm:$0xff]
        %v705 = vld [vmem:[%s461 + $0x38] sm:$0xff]
        %v706 = vld [vmem:[%s461 + $0x40] sm:$0xff]
        %v707 = vld [vmem:[%s461 + $0x48] sm:$0xff]
        %v708 = vld [vmem:[%s461 + $0x50] sm:$0xff]
        %v709 = vld [vmem:[%s461 + $0x58] sm:$0xff]
        %v710 = vld [vmem:[%s461 + $0x60] sm:$0xff]
        %v711 = vld [vmem:[%s461 + $0x68] sm:$0xff]
        %v712 = vld [vmem:[%s461 + $0x70] sm:$0xff]
        %v713 = vld [vmem:[%s461 + $0x78] sm:$0xff]
        %v714 = vld [vmem:[%s461 + $0x80] sm:$0xff]
        %v715 = vld [vmem:[%s461 + $0x88] sm:$0xff]
        %v716 = vld [vmem:[%s461 + $0x90] sm:$0xff]
        %v717 = vld [vmem:[%s461 + $0x98] sm:$0xff]
        %v718 = vld [vmem:[%s461 + $0xa0] sm:$0xff]
        %v719 = vld [vmem:[%s461 + $0xa8] sm:$0xff]
        %v720 = vld [vmem:[%s461 + $0xb0] sm:$0xff]
        %v721 = vld [vmem:[%s461 + $0xb8] sm:$0xff]
        %v722 = vld [vmem:[%s461 + $0xc0] sm:$0xff]
        %v723 = vld [vmem:[%s461 + $0xc8] sm:$0xff]
        %v724 = vld [vmem:[%s461 + $0xd0] sm:$0xff]
        %v725 = vld [vmem:[%s461 + $0xd8] sm:$0xff]
        %v726 = vld [vmem:[%s461 + $0xe0] sm:$0xff]
        %v727 = vld [vmem:[%s461 + $0xe8] sm:$0xff]
        %v728 = vld [vmem:[%s461 + $0xf0] sm:$0xff]
        %v729 = vld [vmem:[%s461 + $0xf8] sm:$0xff]
        %730 = vst.msk [vmem:[%s566 + $0x4] sm:$0xff] %vm540, %v698
        %731 = vst.msk [vmem:[%s566 + $0xc] sm:$0xff] %vm540, %v699
        %732 = vst.msk [vmem:[%s566 + $0x1c] sm:$0xff] %vm540, %v700
        %733 = vst.msk [vmem:[%s566 + $0x24] sm:$0xff] %vm540, %v701
        %734 = vst.msk [vmem:[%s566 + $0x34] sm:$0xff] %vm540, %v702
        %735 = vst.msk [vmem:[%s566 + $0x3c] sm:$0xff] %vm540, %v703
        %736 = vst.msk [vmem:[%s566 + $0x4c] sm:$0xff] %vm540, %v704
        %737 = vst.msk [vmem:[%s566 + $0x54] sm:$0xff] %vm540, %v705
        %738 = vst.msk [vmem:[%s566 + $0x64] sm:$0xff] %vm540, %v706
        %739 = vst.msk [vmem:[%s566 + $0x6c] sm:$0xff] %vm540, %v707
        %740 = vst.msk [vmem:[%s566 + $0x7c] sm:$0xff] %vm540, %v708
        %741 = vst.msk [vmem:[%s566 + $0x84] sm:$0xff] %vm540, %v709
        %742 = vst.msk [vmem:[%s566 + $0x94] sm:$0xff] %vm540, %v710
        %743 = vst.msk [vmem:[%s566 + $0x9c] sm:$0xff] %vm540, %v711
        %744 = vst.msk [vmem:[%s566 + $0xac] sm:$0xff] %vm540, %v712
        %745 = vst.msk [vmem:[%s566 + $0xb4] sm:$0xff] %vm540, %v713
        %746 = vst.msk [vmem:[%s566 + $0xc4] sm:$0xff] %vm540, %v714
        %747 = vst.msk [vmem:[%s566 + $0xcc] sm:$0xff] %vm540, %v715
        %748 = vst.msk [vmem:[%s566 + $0xdc] sm:$0xff] %vm540, %v716
        %749 = vst.msk [vmem:[%s566 + $0xe4] sm:$0xff] %vm540, %v717
        %750 = vst.msk [vmem:[%s566 + $0xf4] sm:$0xff] %vm540, %v718
        %751 = vst.msk [vmem:[%s566 + $0xfc] sm:$0xff] %vm540, %v719
        %752 = vst.msk [vmem:[%s566 + $0x10c] sm:$0xff] %vm540, %v720
        %753 = vst.msk [vmem:[%s566 + $0x114] sm:$0xff] %vm540, %v721
        %754 = vst.msk [vmem:[%s566 + $0x124] sm:$0xff] %vm540, %v722
        %755 = vst.msk [vmem:[%s566 + $0x12c] sm:$0xff] %vm540, %v723
        %756 = vst.msk [vmem:[%s566 + $0x13c] sm:$0xff] %vm540, %v724
        %757 = vst.msk [vmem:[%s566 + $0x144] sm:$0xff] %vm540, %v725
        %758 = vst.msk [vmem:[%s566 + $0x154] sm:$0xff] %vm540, %v726
        %759 = vst.msk [vmem:[%s566 + $0x15c] sm:$0xff] %vm540, %v727
        %760 = vst.msk [vmem:[%s566 + $0x16c] sm:$0xff] %vm540, %v728
        %761 = vst.msk [vmem:[%s566 + $0x174] sm:$0xff] %vm540, %v729
        %v762 = vld [vmem:[#allocation2] sm:$0xff]
        %v763 = vld [vmem:[#allocation2 + $0x8] sm:$0xff]
        %v764 = vld [vmem:[#allocation2 + $0x18] sm:$0xff]
        %v765 = vld [vmem:[#allocation2 + $0x20] sm:$0xff]
        %v766 = vld [vmem:[#allocation2 + $0x30] sm:$0xff]
        %v767 = vld [vmem:[#allocation2 + $0x38] sm:$0xff]
        %v768 = vld [vmem:[#allocation2 + $0x48] sm:$0xff]
        %v769 = vld [vmem:[#allocation2 + $0x50] sm:$0xff]
        %v770 = vld [vmem:[#allocation2 + $0x60] sm:$0xff]
        %v771 = vld [vmem:[#allocation2 + $0x68] sm:$0xff]
        %v772 = vld [vmem:[#allocation2 + $0x78] sm:$0xff]
        %v773 = vld [vmem:[#allocation2 + $0x80] sm:$0xff]
        %v774 = vld [vmem:[#allocation2 + $0x90] sm:$0xff]
        %v775 = vld [vmem:[#allocation2 + $0x98] sm:$0xff]
        %v776 = vld [vmem:[#allocation2 + $0xa8] sm:$0xff]
        %v777 = vld [vmem:[#allocation2 + $0xb0] sm:$0xff]
        %v778 = vld [vmem:[#allocation2 + $0xc0] sm:$0xff]
        %v779 = vld [vmem:[#allocation2 + $0xc8] sm:$0xff]
        %v780 = vld [vmem:[#allocation2 + $0xd8] sm:$0xff]
        %v781 = vld [vmem:[#allocation2 + $0xe0] sm:$0xff]
        %v782 = vld [vmem:[#allocation2 + $0xf0] sm:$0xff]
        %v783 = vld [vmem:[#allocation2 + $0xf8] sm:$0xff]
        %v784 = vld [vmem:[#allocation2 + $0x108] sm:$0xff]
        %v785 = vld [vmem:[#allocation2 + $0x110] sm:$0xff]
        %v786 = vld [vmem:[#allocation2 + $0x120] sm:$0xff]
        %v787 = vld [vmem:[#allocation2 + $0x128] sm:$0xff]
        %v788 = vld [vmem:[#allocation2 + $0x138] sm:$0xff]
        %v789 = vld [vmem:[#allocation2 + $0x140] sm:$0xff]
        %v790 = vld [vmem:[#allocation2 + $0x150] sm:$0xff]
        %v791 = vld [vmem:[#allocation2 + $0x158] sm:$0xff]
        %v792 = vld [vmem:[#allocation2 + $0x168] sm:$0xff]
        %v793 = vld [vmem:[#allocation2 + $0x170] sm:$0xff]
        %v794 = vld [vmem:[#allocation2 + $0x180] sm:$0xff]
        %v795 = vld [vmem:[#allocation2 + $0x188] sm:$0xff]
        %v796 = vld [vmem:[#allocation2 + $0x198] sm:$0xff]
        %v797 = vld [vmem:[#allocation2 + $0x1a0] sm:$0xff]
        %v798 = vld [vmem:[#allocation2 + $0x1b0] sm:$0xff]
        %v799 = vld [vmem:[#allocation2 + $0x1b8] sm:$0xff]
        %v800 = vld [vmem:[#allocation2 + $0x1c8] sm:$0xff]
        %v801 = vld [vmem:[#allocation2 + $0x1d0] sm:$0xff]
        %v802 = vld [vmem:[#allocation2 + $0x1e0] sm:$0xff]
        %v803 = vld [vmem:[#allocation2 + $0x1e8] sm:$0xff]
        %v804 = vld [vmem:[#allocation2 + $0x1f8] sm:$0xff]
        %v805 = vld [vmem:[#allocation2 + $0x200] sm:$0xff]
        %v806 = vld [vmem:[#allocation2 + $0x210] sm:$0xff]
        %v807 = vld [vmem:[#allocation2 + $0x218] sm:$0xff]
        %v808 = vld [vmem:[#allocation2 + $0x228] sm:$0xff]
        %v809 = vld [vmem:[#allocation2 + $0x230] sm:$0xff]
        %v810 = vld [vmem:[#allocation2 + $0x1] sm:$0xff]
        %v811 = vld [vmem:[#allocation2 + $0x9] sm:$0xff]
        %v812 = vld [vmem:[#allocation2 + $0x19] sm:$0xff]
        %v813 = vld [vmem:[#allocation2 + $0x21] sm:$0xff]
        %v814 = vld [vmem:[#allocation2 + $0x31] sm:$0xff]
        %v815 = vld [vmem:[#allocation2 + $0x39] sm:$0xff]
        %v816 = vld [vmem:[#allocation2 + $0x49] sm:$0xff]
        %v817 = vld [vmem:[#allocation2 + $0x51] sm:$0xff]
        %v818 = vld [vmem:[#allocation2 + $0x61] sm:$0xff]
        %v819 = vld [vmem:[#allocation2 + $0x69] sm:$0xff]
        %v820 = vld [vmem:[#allocation2 + $0x79] sm:$0xff]
        %v821 = vld [vmem:[#allocation2 + $0x81] sm:$0xff]
        %v822 = vld [vmem:[#allocation2 + $0x91] sm:$0xff]
        %v823 = vld [vmem:[#allocation2 + $0x99] sm:$0xff]
        %v824 = vld [vmem:[#allocation2 + $0xa9] sm:$0xff]
        %v825 = vld [vmem:[#allocation2 + $0xb1] sm:$0xff]
        %v826 = vld [vmem:[#allocation2 + $0xc1] sm:$0xff]
        %v827 = vld [vmem:[#allocation2 + $0xc9] sm:$0xff]
        %v828 = vld [vmem:[#allocation2 + $0xd9] sm:$0xff]
        %v829 = vld [vmem:[#allocation2 + $0xe1] sm:$0xff]
        %v830 = vld [vmem:[#allocation2 + $0xf1] sm:$0xff]
        %v831 = vld [vmem:[#allocation2 + $0xf9] sm:$0xff]
        %v832 = vld [vmem:[#allocation2 + $0x109] sm:$0xff]
        %v833 = vld [vmem:[#allocation2 + $0x111] sm:$0xff]
        %v834 = vld [vmem:[#allocation2 + $0x121] sm:$0xff]
        %v835 = vld [vmem:[#allocation2 + $0x129] sm:$0xff]
        %v836 = vld [vmem:[#allocation2 + $0x139] sm:$0xff]
        %v837 = vld [vmem:[#allocation2 + $0x141] sm:$0xff]
        %v838 = vld [vmem:[#allocation2 + $0x151] sm:$0xff]
        %v839 = vld [vmem:[#allocation2 + $0x159] sm:$0xff]
        %v840 = vld [vmem:[#allocation2 + $0x169] sm:$0xff]
        %v841 = vld [vmem:[#allocation2 + $0x171] sm:$0xff]
        %v842 = vld [vmem:[#allocation2 + $0x181] sm:$0xff]
        %v843 = vld [vmem:[#allocation2 + $0x189] sm:$0xff]
        %v844 = vld [vmem:[#allocation2 + $0x199] sm:$0xff]
        %v845 = vld [vmem:[#allocation2 + $0x1a1] sm:$0xff]
        %v846 = vld [vmem:[#allocation2 + $0x1b1] sm:$0xff]
        %v847 = vld [vmem:[#allocation2 + $0x1b9] sm:$0xff]
        %v848 = vld [vmem:[#allocation2 + $0x1c9] sm:$0xff]
        %v849 = vld [vmem:[#allocation2 + $0x1d1] sm:$0xff]
        %v850 = vld [vmem:[#allocation2 + $0x1e1] sm:$0xff]
        %v851 = vld [vmem:[#allocation2 + $0x1e9] sm:$0xff]
        %v852 = vld [vmem:[#allocation2 + $0x1f9] sm:$0xff]
        %v853 = vld [vmem:[#allocation2 + $0x201] sm:$0xff]
        %v854 = vld [vmem:[#allocation2 + $0x211] sm:$0xff]
        %v855 = vld [vmem:[#allocation2 + $0x219] sm:$0xff]
        %v856 = vld [vmem:[#allocation2 + $0x229] sm:$0xff]
        %v857 = vld [vmem:[#allocation2 + $0x231] sm:$0xff]
        %v858 = vld [vmem:[#allocation2 + $0x2] sm:$0xff]
        %v859 = vld [vmem:[#allocation2 + $0xa] sm:$0xff]
        %v860 = vld [vmem:[#allocation2 + $0x1a] sm:$0xff]
        %v861 = vld [vmem:[#allocation2 + $0x22] sm:$0xff]
        %v862 = vld [vmem:[#allocation2 + $0x32] sm:$0xff]
        %v863 = vld [vmem:[#allocation2 + $0x3a] sm:$0xff]
        %v864 = vld [vmem:[#allocation2 + $0x4a] sm:$0xff]
        %v865 = vld [vmem:[#allocation2 + $0x52] sm:$0xff]
        %v866 = vld [vmem:[#allocation2 + $0x62] sm:$0xff]
        %v867 = vld [vmem:[#allocation2 + $0x6a] sm:$0xff]
        %v868 = vld [vmem:[#allocation2 + $0x7a] sm:$0xff]
        %v869 = vld [vmem:[#allocation2 + $0x82] sm:$0xff]
        %v870 = vld [vmem:[#allocation2 + $0x92] sm:$0xff]
        %v871 = vld [vmem:[#allocation2 + $0x9a] sm:$0xff]
        %v872 = vld [vmem:[#allocation2 + $0xaa] sm:$0xff]
        %v873 = vld [vmem:[#allocation2 + $0xb2] sm:$0xff]
        %v874 = vld [vmem:[#allocation2 + $0xc2] sm:$0xff]
        %v875 = vld [vmem:[#allocation2 + $0xca] sm:$0xff]
        %v876 = vld [vmem:[#allocation2 + $0xda] sm:$0xff]
        %v877 = vld [vmem:[#allocation2 + $0xe2] sm:$0xff]
        %v878 = vld [vmem:[#allocation2 + $0xf2] sm:$0xff]
        %v879 = vld [vmem:[#allocation2 + $0xfa] sm:$0xff]
        %v880 = vld [vmem:[#allocation2 + $0x10a] sm:$0xff]
        %v881 = vld [vmem:[#allocation2 + $0x112] sm:$0xff]
        %v882 = vld [vmem:[#allocation2 + $0x122] sm:$0xff]
        %v883 = vld [vmem:[#allocation2 + $0x12a] sm:$0xff]
        %v884 = vld [vmem:[#allocation2 + $0x13a] sm:$0xff]
        %v885 = vld [vmem:[#allocation2 + $0x142] sm:$0xff]
        %v886 = vld [vmem:[#allocation2 + $0x152] sm:$0xff]
        %v887 = vld [vmem:[#allocation2 + $0x15a] sm:$0xff]
        %v888 = vld [vmem:[#allocation2 + $0x16a] sm:$0xff]
        %v889 = vld [vmem:[#allocation2 + $0x172] sm:$0xff]
        %v890 = vld [vmem:[#allocation2 + $0x182] sm:$0xff]
        %v891 = vld [vmem:[#allocation2 + $0x18a] sm:$0xff]
        %v892 = vld [vmem:[#allocation2 + $0x19a] sm:$0xff]
        %v893 = vld [vmem:[#allocation2 + $0x1a2] sm:$0xff]
        %v894 = vld [vmem:[#allocation2 + $0x1b2] sm:$0xff]
        %v895 = vld [vmem:[#allocation2 + $0x1ba] sm:$0xff]
        %v896 = vld [vmem:[#allocation2 + $0x1ca] sm:$0xff]
        %v897 = vld [vmem:[#allocation2 + $0x1d2] sm:$0xff]
        %v898 = vld [vmem:[#allocation2 + $0x1e2] sm:$0xff]
        %v899 = vld [vmem:[#allocation2 + $0x1ea] sm:$0xff]
        %v900 = vld [vmem:[#allocation2 + $0x1fa] sm:$0xff]
        %v901 = vld [vmem:[#allocation2 + $0x202] sm:$0xff]
        %v902 = vld [vmem:[#allocation2 + $0x212] sm:$0xff]
        %v903 = vld [vmem:[#allocation2 + $0x21a] sm:$0xff]
        %v904 = vld [vmem:[#allocation2 + $0x22a] sm:$0xff]
        %v905 = vld [vmem:[#allocation2 + $0x232] sm:$0xff]
        %v906 = vld [vmem:[#allocation2 + $0x3] sm:$0xff]
        %v907 = vld [vmem:[#allocation2 + $0xb] sm:$0xff]
        %v908 = vld [vmem:[#allocation2 + $0x1b] sm:$0xff]
        %v909 = vld [vmem:[#allocation2 + $0x23] sm:$0xff]
        %v910 = vld [vmem:[#allocation2 + $0x33] sm:$0xff]
        %v911 = vld [vmem:[#allocation2 + $0x3b] sm:$0xff]
        %v912 = vld [vmem:[#allocation2 + $0x4b] sm:$0xff]
        %v913 = vld [vmem:[#allocation2 + $0x53] sm:$0xff]
        %v914 = vld [vmem:[#allocation2 + $0x63] sm:$0xff]
        %v915 = vld [vmem:[#allocation2 + $0x6b] sm:$0xff]
        %v916 = vld [vmem:[#allocation2 + $0x7b] sm:$0xff]
        %v917 = vld [vmem:[#allocation2 + $0x83] sm:$0xff]
        %v918 = vld [vmem:[#allocation2 + $0x93] sm:$0xff]
        %v919 = vld [vmem:[#allocation2 + $0x9b] sm:$0xff]
        %v920 = vld [vmem:[#allocation2 + $0xab] sm:$0xff]
        %v921 = vld [vmem:[#allocation2 + $0xb3] sm:$0xff]
        %v922 = vld [vmem:[#allocation2 + $0xc3] sm:$0xff]
        %v923 = vld [vmem:[#allocation2 + $0xcb] sm:$0xff]
        %v924 = vld [vmem:[#allocation2 + $0xdb] sm:$0xff]
        %v925 = vld [vmem:[#allocation2 + $0xe3] sm:$0xff]
        %v926 = vld [vmem:[#allocation2 + $0xf3] sm:$0xff]
        %v927 = vld [vmem:[#allocation2 + $0xfb] sm:$0xff]
        %v928 = vld [vmem:[#allocation2 + $0x10b] sm:$0xff]
        %v929 = vld [vmem:[#allocation2 + $0x113] sm:$0xff]
        %v930 = vld [vmem:[#allocation2 + $0x123] sm:$0xff]
        %v931 = vld [vmem:[#allocation2 + $0x12b] sm:$0xff]
        %v932 = vld [vmem:[#allocation2 + $0x13b] sm:$0xff]
        %v933 = vld [vmem:[#allocation2 + $0x143] sm:$0xff]
        %v934 = vld [vmem:[#allocation2 + $0x153] sm:$0xff]
        %v935 = vld [vmem:[#allocation2 + $0x15b] sm:$0xff]
        %v936 = vld [vmem:[#allocation2 + $0x16b] sm:$0xff]
        %v937 = vld [vmem:[#allocation2 + $0x173] sm:$0xff]
        %v938 = vld [vmem:[#allocation2 + $0x183] sm:$0xff]
        %v939 = vld [vmem:[#allocation2 + $0x18b] sm:$0xff]
        %v940 = vld [vmem:[#allocation2 + $0x19b] sm:$0xff]
        %v941 = vld [vmem:[#allocation2 + $0x1a3] sm:$0xff]
        %v942 = vld [vmem:[#allocation2 + $0x1b3] sm:$0xff]
        %v943 = vld [vmem:[#allocation2 + $0x1bb] sm:$0xff]
        %v944 = vld [vmem:[#allocation2 + $0x1cb] sm:$0xff]
        %v945 = vld [vmem:[#allocation2 + $0x1d3] sm:$0xff]
        %v946 = vld [vmem:[#allocation2 + $0x1e3] sm:$0xff]
        %v947 = vld [vmem:[#allocation2 + $0x1eb] sm:$0xff]
        %v948 = vld [vmem:[#allocation2 + $0x1fb] sm:$0xff]
        %v949 = vld [vmem:[#allocation2 + $0x203] sm:$0xff]
        %v950 = vld [vmem:[#allocation2 + $0x213] sm:$0xff]
        %v951 = vld [vmem:[#allocation2 + $0x21b] sm:$0xff]
        %v952 = vld [vmem:[#allocation2 + $0x22b] sm:$0xff]
        %v953 = vld [vmem:[#allocation2 + $0x233] sm:$0xff]
        %v954 = vld [vmem:[#allocation2 + $0x4] sm:$0xff]
        %v955 = vld [vmem:[#allocation2 + $0xc] sm:$0xff]
        %v956 = vld [vmem:[#allocation2 + $0x1c] sm:$0xff]
        %v957 = vld [vmem:[#allocation2 + $0x24] sm:$0xff]
        %v958 = vld [vmem:[#allocation2 + $0x34] sm:$0xff]
        %v959 = vld [vmem:[#allocation2 + $0x3c] sm:$0xff]
        %v960 = vld [vmem:[#allocation2 + $0x4c] sm:$0xff]
        %v961 = vld [vmem:[#allocation2 + $0x54] sm:$0xff]
        %v962 = vld [vmem:[#allocation2 + $0x64] sm:$0xff]
        %v963 = vld [vmem:[#allocation2 + $0x6c] sm:$0xff]
        %v964 = vld [vmem:[#allocation2 + $0x7c] sm:$0xff]
        %v965 = vld [vmem:[#allocation2 + $0x84] sm:$0xff]
        %v966 = vld [vmem:[#allocation2 + $0x94] sm:$0xff]
        %v967 = vld [vmem:[#allocation2 + $0x9c] sm:$0xff]
        %v968 = vld [vmem:[#allocation2 + $0xac] sm:$0xff]
        %v969 = vld [vmem:[#allocation2 + $0xb4] sm:$0xff]
        %v970 = vld [vmem:[#allocation2 + $0xc4] sm:$0xff]
        %v971 = vld [vmem:[#allocation2 + $0xcc] sm:$0xff]
        %v972 = vld [vmem:[#allocation2 + $0xdc] sm:$0xff]
        %v973 = vld [vmem:[#allocation2 + $0xe4] sm:$0xff]
        %v974 = vld [vmem:[#allocation2 + $0xf4] sm:$0xff]
        %v975 = vld [vmem:[#allocation2 + $0xfc] sm:$0xff]
        %v976 = vld [vmem:[#allocation2 + $0x10c] sm:$0xff]
        %v977 = vld [vmem:[#allocation2 + $0x114] sm:$0xff]
        %v978 = vld [vmem:[#allocation2 + $0x124] sm:$0xff]
        %v979 = vld [vmem:[#allocation2 + $0x12c] sm:$0xff]
        %v980 = vld [vmem:[#allocation2 + $0x13c] sm:$0xff]
        %v981 = vld [vmem:[#allocation2 + $0x144] sm:$0xff]
        %v982 = vld [vmem:[#allocation2 + $0x154] sm:$0xff]
        %v983 = vld [vmem:[#allocation2 + $0x15c] sm:$0xff]
        %v984 = vld [vmem:[#allocation2 + $0x16c] sm:$0xff]
        %v985 = vld [vmem:[#allocation2 + $0x174] sm:$0xff]
        %v986 = vld [vmem:[#allocation2 + $0x184] sm:$0xff]
        %v987 = vld [vmem:[#allocation2 + $0x18c] sm:$0xff]
        %v988 = vld [vmem:[#allocation2 + $0x19c] sm:$0xff]
        %v989 = vld [vmem:[#allocation2 + $0x1a4] sm:$0xff]
        %v990 = vld [vmem:[#allocation2 + $0x1b4] sm:$0xff]
        %v991 = vld [vmem:[#allocation2 + $0x1bc] sm:$0xff]
        %v992 = vld [vmem:[#allocation2 + $0x1cc] sm:$0xff]
        %v993 = vld [vmem:[#allocation2 + $0x1d4] sm:$0xff]
        %v994 = vld [vmem:[#allocation2 + $0x1e4] sm:$0xff]
        %v995 = vld [vmem:[#allocation2 + $0x1ec] sm:$0xff]
        %v996 = vld [vmem:[#allocation2 + $0x1fc] sm:$0xff]
        %v997 = vld [vmem:[#allocation2 + $0x204] sm:$0xff]
        %v998 = vld [vmem:[#allocation2 + $0x214] sm:$0xff]
        %v999 = vld [vmem:[#allocation2 + $0x21c] sm:$0xff]
        %v1000 = vld [vmem:[#allocation2 + $0x22c] sm:$0xff]
        %v1001 = vld [vmem:[#allocation2 + $0x234] sm:$0xff]
        %v1002 = vld [vmem:[#allocation2 + $0x5] sm:$0xff]
        %v1003 = vld [vmem:[#allocation2 + $0xd] sm:$0xff]
        %v1004 = vld [vmem:[#allocation2 + $0x1d] sm:$0xff]
        %v1005 = vld [vmem:[#allocation2 + $0x25] sm:$0xff]
        %v1006 = vld [vmem:[#allocation2 + $0x35] sm:$0xff]
        %v1007 = vld [vmem:[#allocation2 + $0x3d] sm:$0xff]
        %v1008 = vld [vmem:[#allocation2 + $0x4d] sm:$0xff]
        %v1009 = vld [vmem:[#allocation2 + $0x55] sm:$0xff]
        %v1010 = vld [vmem:[#allocation2 + $0x65] sm:$0xff]
        %v1011 = vld [vmem:[#allocation2 + $0x6d] sm:$0xff]
        %v1012 = vld [vmem:[#allocation2 + $0x7d] sm:$0xff]
        %v1013 = vld [vmem:[#allocation2 + $0x85] sm:$0xff]
        %v1014 = vld [vmem:[#allocation2 + $0x95] sm:$0xff]
        %v1015 = vld [vmem:[#allocation2 + $0x9d] sm:$0xff]
        %v1016 = vld [vmem:[#allocation2 + $0xad] sm:$0xff]
        %v1017 = vld [vmem:[#allocation2 + $0xb5] sm:$0xff]
        %v1018 = vld [vmem:[#allocation2 + $0xc5] sm:$0xff]
        %v1019 = vld [vmem:[#allocation2 + $0xcd] sm:$0xff]
        %v1020 = vld [vmem:[#allocation2 + $0xdd] sm:$0xff]
        %v1021 = vld [vmem:[#allocation2 + $0xe5] sm:$0xff]
        %v1022 = vld [vmem:[#allocation2 + $0xf5] sm:$0xff]
        %v1023 = vld [vmem:[#allocation2 + $0xfd] sm:$0xff]
        %v1024 = vld [vmem:[#allocation2 + $0x10d] sm:$0xff]
        %v1025 = vld [vmem:[#allocation2 + $0x115] sm:$0xff]
        %v1026 = vld [vmem:[#allocation2 + $0x125] sm:$0xff]
        %v1027 = vld [vmem:[#allocation2 + $0x12d] sm:$0xff]
        %v1028 = vld [vmem:[#allocation2 + $0x13d] sm:$0xff]
        %v1029 = vld [vmem:[#allocation2 + $0x145] sm:$0xff]
        %v1030 = vld [vmem:[#allocation2 + $0x155] sm:$0xff]
        %v1031 = vld [vmem:[#allocation2 + $0x15d] sm:$0xff]
        %v1032 = vld [vmem:[#allocation2 + $0x16d] sm:$0xff]
        %v1033 = vld [vmem:[#allocation2 + $0x175] sm:$0xff]
        %v1034 = vld [vmem:[#allocation2 + $0x185] sm:$0xff]
        %v1035 = vld [vmem:[#allocation2 + $0x18d] sm:$0xff]
        %v1036 = vld [vmem:[#allocation2 + $0x19d] sm:$0xff]
        %v1037 = vld [vmem:[#allocation2 + $0x1a5] sm:$0xff]
        %v1038 = vld [vmem:[#allocation2 + $0x1b5] sm:$0xff]
        %v1039 = vld [vmem:[#allocation2 + $0x1bd] sm:$0xff]
        %v1040 = vld [vmem:[#allocation2 + $0x1cd] sm:$0xff]
        %v1041 = vld [vmem:[#allocation2 + $0x1d5] sm:$0xff]
        %v1042 = vld [vmem:[#allocation2 + $0x1e5] sm:$0xff]
        %v1043 = vld [vmem:[#allocation2 + $0x1ed] sm:$0xff]
        %v1044 = vld [vmem:[#allocation2 + $0x1fd] sm:$0xff]
        %v1045 = vld [vmem:[#allocation2 + $0x205] sm:$0xff]
        %v1046 = vld [vmem:[#allocation2 + $0x215] sm:$0xff]
        %v1047 = vld [vmem:[#allocation2 + $0x21d] sm:$0xff]
        %v1048 = vld [vmem:[#allocation2 + $0x22d] sm:$0xff]
        %v1049 = vld [vmem:[#allocation2 + $0x235] sm:$0xff]
        %v1050 = vld [vmem:[#allocation2 + $0x6] sm:$0xff]
        %v1051 = vld [vmem:[#allocation2 + $0xe] sm:$0xff]
        %v1052 = vld [vmem:[#allocation2 + $0x1e] sm:$0xff]
        %v1053 = vld [vmem:[#allocation2 + $0x26] sm:$0xff]
        %v1054 = vld [vmem:[#allocation2 + $0x36] sm:$0xff]
        %v1055 = vld [vmem:[#allocation2 + $0x3e] sm:$0xff]
        %v1056 = vld [vmem:[#allocation2 + $0x4e] sm:$0xff]
        %v1057 = vld [vmem:[#allocation2 + $0x56] sm:$0xff]
        %v1058 = vld [vmem:[#allocation2 + $0x66] sm:$0xff]
        %v1059 = vld [vmem:[#allocation2 + $0x6e] sm:$0xff]
        %v1060 = vld [vmem:[#allocation2 + $0x7e] sm:$0xff]
        %v1061 = vld [vmem:[#allocation2 + $0x86] sm:$0xff]
        %v1062 = vld [vmem:[#allocation2 + $0x96] sm:$0xff]
        %v1063 = vld [vmem:[#allocation2 + $0x9e] sm:$0xff]
        %v1064 = vld [vmem:[#allocation2 + $0xae] sm:$0xff]
        %v1065 = vld [vmem:[#allocation2 + $0xb6] sm:$0xff]
        %v1066 = vld [vmem:[#allocation2 + $0xc6] sm:$0xff]
        %v1067 = vld [vmem:[#allocation2 + $0xce] sm:$0xff]
        %v1068 = vld [vmem:[#allocation2 + $0xde] sm:$0xff]
        %v1069 = vld [vmem:[#allocation2 + $0xe6] sm:$0xff]
        %v1070 = vld [vmem:[#allocation2 + $0xf6] sm:$0xff]
        %v1071 = vld [vmem:[#allocation2 + $0xfe] sm:$0xff]
        %v1072 = vld [vmem:[#allocation2 + $0x10e] sm:$0xff]
        %v1073 = vld [vmem:[#allocation2 + $0x116] sm:$0xff]
        %v1074 = vld [vmem:[#allocation2 + $0x126] sm:$0xff]
        %v1075 = vld [vmem:[#allocation2 + $0x12e] sm:$0xff]
        %v1076 = vld [vmem:[#allocation2 + $0x13e] sm:$0xff]
        %v1077 = vld [vmem:[#allocation2 + $0x146] sm:$0xff]
        %v1078 = vld [vmem:[#allocation2 + $0x156] sm:$0xff]
        %v1079 = vld [vmem:[#allocation2 + $0x15e] sm:$0xff]
        %v1080 = vld [vmem:[#allocation2 + $0x16e] sm:$0xff]
        %v1081 = vld [vmem:[#allocation2 + $0x176] sm:$0xff]
        %v1082 = vld [vmem:[#allocation2 + $0x186] sm:$0xff]
        %v1083 = vld [vmem:[#allocation2 + $0x18e] sm:$0xff]
        %v1084 = vld [vmem:[#allocation2 + $0x19e] sm:$0xff]
        %v1085 = vld [vmem:[#allocation2 + $0x1a6] sm:$0xff]
        %v1086 = vld [vmem:[#allocation2 + $0x1b6] sm:$0xff]
        %v1087 = vld [vmem:[#allocation2 + $0x1be] sm:$0xff]
        %v1088 = vld [vmem:[#allocation2 + $0x1ce] sm:$0xff]
        %v1089 = vld [vmem:[#allocation2 + $0x1d6] sm:$0xff]
        %v1090 = vld [vmem:[#allocation2 + $0x1e6] sm:$0xff]
        %v1091 = vld [vmem:[#allocation2 + $0x1ee] sm:$0xff]
        %v1092 = vld [vmem:[#allocation2 + $0x1fe] sm:$0xff]
        %v1093 = vld [vmem:[#allocation2 + $0x206] sm:$0xff]
        %v1094 = vld [vmem:[#allocation2 + $0x216] sm:$0xff]
        %v1095 = vld [vmem:[#allocation2 + $0x21e] sm:$0xff]
        %v1096 = vld [vmem:[#allocation2 + $0x22e] sm:$0xff]
        %v1097 = vld [vmem:[#allocation2 + $0x236] sm:$0xff]
        %v1098 = vld [vmem:[#allocation2 + $0x7] sm:$0xff]
        %v1099 = vld [vmem:[#allocation2 + $0xf] sm:$0xff]
        %v1100 = vld [vmem:[#allocation2 + $0x1f] sm:$0xff]
        %v1101 = vld [vmem:[#allocation2 + $0x27] sm:$0xff]
        %v1102 = vld [vmem:[#allocation2 + $0x37] sm:$0xff]
        %v1103 = vld [vmem:[#allocation2 + $0x3f] sm:$0xff]
        %v1104 = vld [vmem:[#allocation2 + $0x4f] sm:$0xff]
        %v1105 = vld [vmem:[#allocation2 + $0x57] sm:$0xff]
        %v1106 = vld [vmem:[#allocation2 + $0x67] sm:$0xff]
        %v1107 = vld [vmem:[#allocation2 + $0x6f] sm:$0xff]
        %v1108 = vld [vmem:[#allocation2 + $0x7f] sm:$0xff]
        %v1109 = vld [vmem:[#allocation2 + $0x87] sm:$0xff]
        %v1110 = vld [vmem:[#allocation2 + $0x97] sm:$0xff]
        %v1111 = vld [vmem:[#allocation2 + $0x9f] sm:$0xff]
        %v1112 = vld [vmem:[#allocation2 + $0xaf] sm:$0xff]
        %v1113 = vld [vmem:[#allocation2 + $0xb7] sm:$0xff]
        %v1114 = vld [vmem:[#allocation2 + $0xc7] sm:$0xff]
        %v1115 = vld [vmem:[#allocation2 + $0xcf] sm:$0xff]
        %v1116 = vld [vmem:[#allocation2 + $0xdf] sm:$0xff]
        %v1117 = vld [vmem:[#allocation2 + $0xe7] sm:$0xff]
        %v1118 = vld [vmem:[#allocation2 + $0xf7] sm:$0xff]
        %v1119 = vld [vmem:[#allocation2 + $0xff] sm:$0xff]
        %v1120 = vld [vmem:[#allocation2 + $0x10f] sm:$0xff]
        %v1121 = vld [vmem:[#allocation2 + $0x117] sm:$0xff]
        %v1122 = vld [vmem:[#allocation2 + $0x127] sm:$0xff]
        %v1123 = vld [vmem:[#allocation2 + $0x12f] sm:$0xff]
        %v1124 = vld [vmem:[#allocation2 + $0x13f] sm:$0xff]
        %v1125 = vld [vmem:[#allocation2 + $0x147] sm:$0xff]
        %v1126 = vld [vmem:[#allocation2 + $0x157] sm:$0xff]
        %v1127 = vld [vmem:[#allocation2 + $0x15f] sm:$0xff]
        %v1128 = vld [vmem:[#allocation2 + $0x16f] sm:$0xff]
        %v1129 = vld [vmem:[#allocation2 + $0x177] sm:$0xff]
        %v1130 = vld [vmem:[#allocation2 + $0x187] sm:$0xff]
        %v1131 = vld [vmem:[#allocation2 + $0x18f] sm:$0xff]
        %v1132 = vld [vmem:[#allocation2 + $0x19f] sm:$0xff]
        %v1133 = vld [vmem:[#allocation2 + $0x1a7] sm:$0xff]
        %v1134 = vld [vmem:[#allocation2 + $0x1b7] sm:$0xff]
        %v1135 = vld [vmem:[#allocation2 + $0x1bf] sm:$0xff]
        %v1136 = vld [vmem:[#allocation2 + $0x1cf] sm:$0xff]
        %v1137 = vld [vmem:[#allocation2 + $0x1d7] sm:$0xff]
        %v1138 = vld [vmem:[#allocation2 + $0x1e7] sm:$0xff]
        %v1139 = vld [vmem:[#allocation2 + $0x1ef] sm:$0xff]
        %v1140 = vld [vmem:[#allocation2 + $0x1ff] sm:$0xff]
        %v1141 = vld [vmem:[#allocation2 + $0x207] sm:$0xff]
        %v1142 = vld [vmem:[#allocation2 + $0x217] sm:$0xff]
        %v1143 = vld [vmem:[#allocation2 + $0x21f] sm:$0xff]
        %v1144 = vld [vmem:[#allocation2 + $0x22f] sm:$0xff]
        %v1145 = vld [vmem:[#allocation2 + $0x237] sm:$0xff]
        %v1146 = vld [vmem:[#allocation2 + $0x10] sm:$0xff]
        %v1147 = vld [vmem:[#allocation2 + $0x28] sm:$0xff]
        %v1148 = vld [vmem:[#allocation2 + $0x40] sm:$0xff]
        %v1149 = vld [vmem:[#allocation2 + $0x58] sm:$0xff]
        %v1150 = vld [vmem:[#allocation2 + $0x70] sm:$0xff]
        %v1151 = vld [vmem:[#allocation2 + $0x88] sm:$0xff]
        %v1152 = vld [vmem:[#allocation2 + $0xa0] sm:$0xff]
        %v1153 = vld [vmem:[#allocation2 + $0xb8] sm:$0xff]
        %v1154 = vld [vmem:[#allocation2 + $0xd0] sm:$0xff]
        %v1155 = vld [vmem:[#allocation2 + $0xe8] sm:$0xff]
        %v1156 = vld [vmem:[#allocation2 + $0x100] sm:$0xff]
        %v1157 = vld [vmem:[#allocation2 + $0x118] sm:$0xff]
        %v1158 = vld [vmem:[#allocation2 + $0x130] sm:$0xff]
        %v1159 = vld [vmem:[#allocation2 + $0x148] sm:$0xff]
        %v1160 = vld [vmem:[#allocation2 + $0x160] sm:$0xff]
        %v1161 = vld [vmem:[#allocation2 + $0x178] sm:$0xff]
        %v1162 = vld [vmem:[#allocation2 + $0x190] sm:$0xff]
        %v1163 = vld [vmem:[#allocation2 + $0x1a8] sm:$0xff]
        %v1164 = vld [vmem:[#allocation2 + $0x1c0] sm:$0xff]
        %v1165 = vld [vmem:[#allocation2 + $0x1d8] sm:$0xff]
        %v1166 = vld [vmem:[#allocation2 + $0x1f0] sm:$0xff]
        %v1167 = vld [vmem:[#allocation2 + $0x208] sm:$0xff]
        %v1168 = vld [vmem:[#allocation2 + $0x220] sm:$0xff]
        %v1169 = vld [vmem:[#allocation2 + $0x238] sm:$0xff]
        %1218 = vrot.lane.b32.xlu0 %v810, 3
        %v1219 = vpop.permute.xlu0 %1218
        %1220 = vrot.lane.b32.xlu0 %v811, 3
        %v1221 = vpop.permute.xlu0 %1220
        %1222 = vrot.lane.b32.xlu0 %v812, 3
        %v1223 = vpop.permute.xlu0 %1222
        %1224 = vrot.lane.b32.xlu0 %v813, 3
        %v1225 = vpop.permute.xlu0 %1224
        %1226 = vrot.lane.b32.xlu0 %v814, 3
        %v1227 = vpop.permute.xlu0 %1226
        %1228 = vrot.lane.b32.xlu0 %v815, 3
        %v1229 = vpop.permute.xlu0 %1228
        %1230 = vrot.lane.b32.xlu0 %v816, 3
        %v1231 = vpop.permute.xlu0 %1230
        %1232 = vrot.lane.b32.xlu0 %v817, 3
        %v1233 = vpop.permute.xlu0 %1232
        %1234 = vrot.lane.b32.xlu0 %v818, 3
        %v1235 = vpop.permute.xlu0 %1234
        %1236 = vrot.lane.b32.xlu0 %v819, 3
        %v1237 = vpop.permute.xlu0 %1236
        %1238 = vrot.lane.b32.xlu0 %v820, 3
        %v1239 = vpop.permute.xlu0 %1238
        %1240 = vrot.lane.b32.xlu0 %v821, 3
        %v1241 = vpop.permute.xlu0 %1240
        %1242 = vrot.lane.b32.xlu0 %v822, 3
        %v1243 = vpop.permute.xlu0 %1242
        %1244 = vrot.lane.b32.xlu0 %v823, 3
        %v1245 = vpop.permute.xlu0 %1244
        %1246 = vrot.lane.b32.xlu0 %v824, 3
        %v1247 = vpop.permute.xlu0 %1246
        %1248 = vrot.lane.b32.xlu0 %v825, 3
        %v1249 = vpop.permute.xlu0 %1248
        %1250 = vrot.lane.b32.xlu0 %v826, 3
        %v1251 = vpop.permute.xlu0 %1250
        %1252 = vrot.lane.b32.xlu0 %v827, 3
        %v1253 = vpop.permute.xlu0 %1252
        %1254 = vrot.lane.b32.xlu0 %v828, 3
        %v1255 = vpop.permute.xlu0 %1254
        %1256 = vrot.lane.b32.xlu0 %v829, 3
        %v1257 = vpop.permute.xlu0 %1256
        %1258 = vrot.lane.b32.xlu0 %v830, 3
        %v1259 = vpop.permute.xlu0 %1258
        %1260 = vrot.lane.b32.xlu0 %v831, 3
        %v1261 = vpop.permute.xlu0 %1260
        %1262 = vrot.lane.b32.xlu0 %v832, 3
        %v1263 = vpop.permute.xlu0 %1262
        %1264 = vrot.lane.b32.xlu0 %v833, 3
        %v1265 = vpop.permute.xlu0 %1264
        %1266 = vrot.lane.b32.xlu0 %v834, 3
        %v1267 = vpop.permute.xlu0 %1266
        %1268 = vrot.lane.b32.xlu0 %v835, 3
        %v1269 = vpop.permute.xlu0 %1268
        %1270 = vrot.lane.b32.xlu0 %v836, 3
        %v1271 = vpop.permute.xlu0 %1270
        %1272 = vrot.lane.b32.xlu0 %v837, 3
        %v1273 = vpop.permute.xlu0 %1272
        %1274 = vrot.lane.b32.xlu0 %v838, 3
        %v1275 = vpop.permute.xlu0 %1274
        %1276 = vrot.lane.b32.xlu0 %v839, 3
        %v1277 = vpop.permute.xlu0 %1276
        %1278 = vrot.lane.b32.xlu0 %v840, 3
        %v1279 = vpop.permute.xlu0 %1278
        %1280 = vrot.lane.b32.xlu0 %v841, 3
        %v1281 = vpop.permute.xlu0 %1280
        %1282 = vrot.lane.b32.xlu0 %v842, 3
        %v1283 = vpop.permute.xlu0 %1282
        %1284 = vrot.lane.b32.xlu0 %v843, 3
        %v1285 = vpop.permute.xlu0 %1284
        %1286 = vrot.lane.b32.xlu0 %v844, 3
        %v1287 = vpop.permute.xlu0 %1286
        %1288 = vrot.lane.b32.xlu0 %v845, 3
        %v1289 = vpop.permute.xlu0 %1288
        %1290 = vrot.lane.b32.xlu0 %v846, 3
        %v1291 = vpop.permute.xlu0 %1290
        %1292 = vrot.lane.b32.xlu0 %v847, 3
        %v1293 = vpop.permute.xlu0 %1292
        %1294 = vrot.lane.b32.xlu0 %v848, 3
        %v1295 = vpop.permute.xlu0 %1294
        %1296 = vrot.lane.b32.xlu0 %v849, 3
        %v1297 = vpop.permute.xlu0 %1296
        %1298 = vrot.lane.b32.xlu0 %v850, 3
        %v1299 = vpop.permute.xlu0 %1298
        %1300 = vrot.lane.b32.xlu0 %v851, 3
        %v1301 = vpop.permute.xlu0 %1300
        %1302 = vrot.lane.b32.xlu0 %v852, 3
        %v1303 = vpop.permute.xlu0 %1302
        %1304 = vrot.lane.b32.xlu0 %v853, 3
        %v1305 = vpop.permute.xlu0 %1304
        %1306 = vrot.lane.b32.xlu0 %v854, 3
        %v1307 = vpop.permute.xlu0 %1306
        %1308 = vrot.lane.b32.xlu0 %v855, 3
        %v1309 = vpop.permute.xlu0 %1308
        %1310 = vrot.lane.b32.xlu0 %v856, 3
        %v1311 = vpop.permute.xlu0 %1310
        %1312 = vrot.lane.b32.xlu0 %v857, 3
        %v1313 = vpop.permute.xlu0 %1312
        %1410 = vrot.lane.b32.xlu0 %v858, 6
        %v1411 = vpop.permute.xlu0 %1410
        %1412 = vrot.lane.b32.xlu0 %v859, 6
        %v1413 = vpop.permute.xlu0 %1412
        %1414 = vrot.lane.b32.xlu0 %v860, 6
        %v1415 = vpop.permute.xlu0 %1414
        %1416 = vrot.lane.b32.xlu0 %v861, 6
        %v1417 = vpop.permute.xlu0 %1416
        %1418 = vrot.lane.b32.xlu0 %v862, 6
        %v1419 = vpop.permute.xlu0 %1418
        %1420 = vrot.lane.b32.xlu0 %v863, 6
        %v1421 = vpop.permute.xlu0 %1420
        %1422 = vrot.lane.b32.xlu0 %v864, 6
        %v1423 = vpop.permute.xlu0 %1422
        %1424 = vrot.lane.b32.xlu0 %v865, 6
        %v1425 = vpop.permute.xlu0 %1424
        %1426 = vrot.lane.b32.xlu0 %v866, 6
        %v1427 = vpop.permute.xlu0 %1426
        %1428 = vrot.lane.b32.xlu0 %v867, 6
        %v1429 = vpop.permute.xlu0 %1428
        %1430 = vrot.lane.b32.xlu0 %v868, 6
        %v1431 = vpop.permute.xlu0 %1430
        %1432 = vrot.lane.b32.xlu0 %v869, 6
        %v1433 = vpop.permute.xlu0 %1432
        %1434 = vrot.lane.b32.xlu0 %v870, 6
        %v1435 = vpop.permute.xlu0 %1434
        %1436 = vrot.lane.b32.xlu0 %v871, 6
        %v1437 = vpop.permute.xlu0 %1436
        %1438 = vrot.lane.b32.xlu0 %v872, 6
        %v1439 = vpop.permute.xlu0 %1438
        %1440 = vrot.lane.b32.xlu0 %v873, 6
        %v1441 = vpop.permute.xlu0 %1440
        %1442 = vrot.lane.b32.xlu0 %v874, 6
        %v1443 = vpop.permute.xlu0 %1442
        %1444 = vrot.lane.b32.xlu0 %v875, 6
        %v1445 = vpop.permute.xlu0 %1444
        %1446 = vrot.lane.b32.xlu0 %v876, 6
        %v1447 = vpop.permute.xlu0 %1446
        %1448 = vrot.lane.b32.xlu0 %v877, 6
        %v1449 = vpop.permute.xlu0 %1448
        %1450 = vrot.lane.b32.xlu0 %v878, 6
        %v1451 = vpop.permute.xlu0 %1450
        %1452 = vrot.lane.b32.xlu0 %v879, 6
        %v1453 = vpop.permute.xlu0 %1452
        %1454 = vrot.lane.b32.xlu0 %v880, 6
        %v1455 = vpop.permute.xlu0 %1454
        %1456 = vrot.lane.b32.xlu0 %v881, 6
        %v1457 = vpop.permute.xlu0 %1456
        %1458 = vrot.lane.b32.xlu0 %v882, 6
        %v1459 = vpop.permute.xlu0 %1458
        %1460 = vrot.lane.b32.xlu0 %v883, 6
        %v1461 = vpop.permute.xlu0 %1460
        %1462 = vrot.lane.b32.xlu0 %v884, 6
        %v1463 = vpop.permute.xlu0 %1462
        %1464 = vrot.lane.b32.xlu0 %v885, 6
        %v1465 = vpop.permute.xlu0 %1464
        %1466 = vrot.lane.b32.xlu0 %v886, 6
        %v1467 = vpop.permute.xlu0 %1466
        %1468 = vrot.lane.b32.xlu0 %v887, 6
        %v1469 = vpop.permute.xlu0 %1468
        %1470 = vrot.lane.b32.xlu0 %v888, 6
        %v1471 = vpop.permute.xlu0 %1470
        %1472 = vrot.lane.b32.xlu0 %v889, 6
        %v1473 = vpop.permute.xlu0 %1472
        %1474 = vrot.lane.b32.xlu0 %v890, 6
        %v1475 = vpop.permute.xlu0 %1474
        %1476 = vrot.lane.b32.xlu0 %v891, 6
        %v1477 = vpop.permute.xlu0 %1476
        %1478 = vrot.lane.b32.xlu0 %v892, 6
        %v1479 = vpop.permute.xlu0 %1478
        %1480 = vrot.lane.b32.xlu0 %v893, 6
        %v1481 = vpop.permute.xlu0 %1480
        %1482 = vrot.lane.b32.xlu0 %v894, 6
        %v1483 = vpop.permute.xlu0 %1482
        %1484 = vrot.lane.b32.xlu0 %v895, 6
        %v1485 = vpop.permute.xlu0 %1484
        %1486 = vrot.lane.b32.xlu0 %v896, 6
        %v1487 = vpop.permute.xlu0 %1486
        %1488 = vrot.lane.b32.xlu0 %v897, 6
        %v1489 = vpop.permute.xlu0 %1488
        %1490 = vrot.lane.b32.xlu0 %v898, 6
        %v1491 = vpop.permute.xlu0 %1490
        %1492 = vrot.lane.b32.xlu0 %v899, 6
        %v1493 = vpop.permute.xlu0 %1492
        %1494 = vrot.lane.b32.xlu0 %v900, 6
        %v1495 = vpop.permute.xlu0 %1494
        %1496 = vrot.lane.b32.xlu0 %v901, 6
        %v1497 = vpop.permute.xlu0 %1496
        %1498 = vrot.lane.b32.xlu0 %v902, 6
        %v1499 = vpop.permute.xlu0 %1498
        %1500 = vrot.lane.b32.xlu0 %v903, 6
        %v1501 = vpop.permute.xlu0 %1500
        %1502 = vrot.lane.b32.xlu0 %v904, 6
        %v1503 = vpop.permute.xlu0 %1502
        %1504 = vrot.lane.b32.xlu0 %v905, 6
        %v1505 = vpop.permute.xlu0 %1504
        %1602 = vrot.lane.b32.xlu0 %v906, 9
        %v1603 = vpop.permute.xlu0 %1602
        %1604 = vrot.lane.b32.xlu0 %v907, 9
        %v1605 = vpop.permute.xlu0 %1604
        %1606 = vrot.lane.b32.xlu0 %v908, 9
        %v1607 = vpop.permute.xlu0 %1606
        %1608 = vrot.lane.b32.xlu0 %v909, 9
        %v1609 = vpop.permute.xlu0 %1608
        %1610 = vrot.lane.b32.xlu0 %v910, 9
        %v1611 = vpop.permute.xlu0 %1610
        %1612 = vrot.lane.b32.xlu0 %v911, 9
        %v1613 = vpop.permute.xlu0 %1612
        %1614 = vrot.lane.b32.xlu0 %v912, 9
        %v1615 = vpop.permute.xlu0 %1614
        %1616 = vrot.lane.b32.xlu0 %v913, 9
        %v1617 = vpop.permute.xlu0 %1616
        %1618 = vrot.lane.b32.xlu0 %v914, 9
        %v1619 = vpop.permute.xlu0 %1618
        %1620 = vrot.lane.b32.xlu0 %v915, 9
        %v1621 = vpop.permute.xlu0 %1620
        %1622 = vrot.lane.b32.xlu0 %v916, 9
        %v1623 = vpop.permute.xlu0 %1622
        %1624 = vrot.lane.b32.xlu0 %v917, 9
        %v1625 = vpop.permute.xlu0 %1624
        %1626 = vrot.lane.b32.xlu0 %v918, 9
        %v1627 = vpop.permute.xlu0 %1626
        %1628 = vrot.lane.b32.xlu0 %v919, 9
        %v1629 = vpop.permute.xlu0 %1628
        %1630 = vrot.lane.b32.xlu0 %v920, 9
        %v1631 = vpop.permute.xlu0 %1630
        %1632 = vrot.lane.b32.xlu0 %v921, 9
        %v1633 = vpop.permute.xlu0 %1632
        %1634 = vrot.lane.b32.xlu0 %v922, 9
        %v1635 = vpop.permute.xlu0 %1634
        %1636 = vrot.lane.b32.xlu0 %v923, 9
        %v1637 = vpop.permute.xlu0 %1636
        %1638 = vrot.lane.b32.xlu0 %v924, 9
        %v1639 = vpop.permute.xlu0 %1638
        %1640 = vrot.lane.b32.xlu0 %v925, 9
        %v1641 = vpop.permute.xlu0 %1640
        %1642 = vrot.lane.b32.xlu0 %v926, 9
        %v1643 = vpop.permute.xlu0 %1642
        %1644 = vrot.lane.b32.xlu0 %v927, 9
        %v1645 = vpop.permute.xlu0 %1644
        %1646 = vrot.lane.b32.xlu0 %v928, 9
        %v1647 = vpop.permute.xlu0 %1646
        %1648 = vrot.lane.b32.xlu0 %v929, 9
        %v1649 = vpop.permute.xlu0 %1648
        %1650 = vrot.lane.b32.xlu0 %v930, 9
        %v1651 = vpop.permute.xlu0 %1650
        %1652 = vrot.lane.b32.xlu0 %v931, 9
        %v1653 = vpop.permute.xlu0 %1652
        %1654 = vrot.lane.b32.xlu0 %v932, 9
        %v1655 = vpop.permute.xlu0 %1654
        %1656 = vrot.lane.b32.xlu0 %v933, 9
        %v1657 = vpop.permute.xlu0 %1656
        %1658 = vrot.lane.b32.xlu0 %v934, 9
        %v1659 = vpop.permute.xlu0 %1658
        %1660 = vrot.lane.b32.xlu0 %v935, 9
        %v1661 = vpop.permute.xlu0 %1660
        %1662 = vrot.lane.b32.xlu0 %v936, 9
        %v1663 = vpop.permute.xlu0 %1662
        %1664 = vrot.lane.b32.xlu0 %v937, 9
        %v1665 = vpop.permute.xlu0 %1664
        %1666 = vrot.lane.b32.xlu0 %v938, 9
        %v1667 = vpop.permute.xlu0 %1666
        %1668 = vrot.lane.b32.xlu0 %v939, 9
        %v1669 = vpop.permute.xlu0 %1668
        %1670 = vrot.lane.b32.xlu0 %v940, 9
        %v1671 = vpop.permute.xlu0 %1670
        %1672 = vrot.lane.b32.xlu0 %v941, 9
        %v1673 = vpop.permute.xlu0 %1672
        %1674 = vrot.lane.b32.xlu0 %v942, 9
        %v1675 = vpop.permute.xlu0 %1674
        %1676 = vrot.lane.b32.xlu0 %v943, 9
        %v1677 = vpop.permute.xlu0 %1676
        %1678 = vrot.lane.b32.xlu0 %v944, 9
        %v1679 = vpop.permute.xlu0 %1678
        %1680 = vrot.lane.b32.xlu0 %v945, 9
        %v1681 = vpop.permute.xlu0 %1680
        %1682 = vrot.lane.b32.xlu0 %v946, 9
        %v1683 = vpop.permute.xlu0 %1682
        %1684 = vrot.lane.b32.xlu0 %v947, 9
        %v1685 = vpop.permute.xlu0 %1684
        %1686 = vrot.lane.b32.xlu0 %v948, 9
        %v1687 = vpop.permute.xlu0 %1686
        %1688 = vrot.lane.b32.xlu0 %v949, 9
        %v1689 = vpop.permute.xlu0 %1688
        %1690 = vrot.lane.b32.xlu0 %v950, 9
        %v1691 = vpop.permute.xlu0 %1690
        %1692 = vrot.lane.b32.xlu0 %v951, 9
        %v1693 = vpop.permute.xlu0 %1692
        %1694 = vrot.lane.b32.xlu0 %v952, 9
        %v1695 = vpop.permute.xlu0 %1694
        %1696 = vrot.lane.b32.xlu0 %v953, 9
        %v1697 = vpop.permute.xlu0 %1696
        %1794 = vrot.lane.b32.xlu0 %v954, 12
        %v1795 = vpop.permute.xlu0 %1794
        %1796 = vrot.lane.b32.xlu0 %v955, 12
        %v1797 = vpop.permute.xlu0 %1796
        %1798 = vrot.lane.b32.xlu0 %v956, 12
        %v1799 = vpop.permute.xlu0 %1798
        %1800 = vrot.lane.b32.xlu0 %v957, 12
        %v1801 = vpop.permute.xlu0 %1800
        %1802 = vrot.lane.b32.xlu0 %v958, 12
        %v1803 = vpop.permute.xlu0 %1802
        %1804 = vrot.lane.b32.xlu0 %v959, 12
        %v1805 = vpop.permute.xlu0 %1804
        %1806 = vrot.lane.b32.xlu0 %v960, 12
        %v1807 = vpop.permute.xlu0 %1806
        %1808 = vrot.lane.b32.xlu0 %v961, 12
        %v1809 = vpop.permute.xlu0 %1808
        %1810 = vrot.lane.b32.xlu0 %v962, 12
        %v1811 = vpop.permute.xlu0 %1810
        %1812 = vrot.lane.b32.xlu0 %v963, 12
        %v1813 = vpop.permute.xlu0 %1812
        %1814 = vrot.lane.b32.xlu0 %v964, 12
        %v1815 = vpop.permute.xlu0 %1814
        %1816 = vrot.lane.b32.xlu0 %v965, 12
        %v1817 = vpop.permute.xlu0 %1816
        %1818 = vrot.lane.b32.xlu0 %v966, 12
        %v1819 = vpop.permute.xlu0 %1818
        %1820 = vrot.lane.b32.xlu0 %v967, 12
        %v1821 = vpop.permute.xlu0 %1820
        %1822 = vrot.lane.b32.xlu0 %v968, 12
        %v1823 = vpop.permute.xlu0 %1822
        %1824 = vrot.lane.b32.xlu0 %v969, 12
        %v1825 = vpop.permute.xlu0 %1824
        %1826 = vrot.lane.b32.xlu0 %v970, 12
        %v1827 = vpop.permute.xlu0 %1826
        %1828 = vrot.lane.b32.xlu0 %v971, 12
        %v1829 = vpop.permute.xlu0 %1828
        %1830 = vrot.lane.b32.xlu0 %v972, 12
        %v1831 = vpop.permute.xlu0 %1830
        %1832 = vrot.lane.b32.xlu0 %v973, 12
        %v1833 = vpop.permute.xlu0 %1832
        %1834 = vrot.lane.b32.xlu0 %v974, 12
        %v1835 = vpop.permute.xlu0 %1834
        %1836 = vrot.lane.b32.xlu0 %v975, 12
        %v1837 = vpop.permute.xlu0 %1836
        %1838 = vrot.lane.b32.xlu0 %v976, 12
        %v1839 = vpop.permute.xlu0 %1838
        %1840 = vrot.lane.b32.xlu0 %v977, 12
        %v1841 = vpop.permute.xlu0 %1840
        %1842 = vrot.lane.b32.xlu0 %v978, 12
        %v1843 = vpop.permute.xlu0 %1842
        %1844 = vrot.lane.b32.xlu0 %v979, 12
        %v1845 = vpop.permute.xlu0 %1844
        %1846 = vrot.lane.b32.xlu0 %v980, 12
        %v1847 = vpop.permute.xlu0 %1846
        %1848 = vrot.lane.b32.xlu0 %v981, 12
        %v1849 = vpop.permute.xlu0 %1848
        %1850 = vrot.lane.b32.xlu0 %v982, 12
        %v1851 = vpop.permute.xlu0 %1850
        %1852 = vrot.lane.b32.xlu0 %v983, 12
        %v1853 = vpop.permute.xlu0 %1852
        %1854 = vrot.lane.b32.xlu0 %v984, 12
        %v1855 = vpop.permute.xlu0 %1854
        %1856 = vrot.lane.b32.xlu0 %v985, 12
        %v1857 = vpop.permute.xlu0 %1856
        %1858 = vrot.lane.b32.xlu0 %v986, 12
        %v1859 = vpop.permute.xlu0 %1858
        %1860 = vrot.lane.b32.xlu0 %v987, 12
        %v1861 = vpop.permute.xlu0 %1860
        %1862 = vrot.lane.b32.xlu0 %v988, 12
        %v1863 = vpop.permute.xlu0 %1862
        %1864 = vrot.lane.b32.xlu0 %v989, 12
        %v1865 = vpop.permute.xlu0 %1864
        %1866 = vrot.lane.b32.xlu0 %v990, 12
        %v1867 = vpop.permute.xlu0 %1866
        %1868 = vrot.lane.b32.xlu0 %v991, 12
        %v1869 = vpop.permute.xlu0 %1868
        %1870 = vrot.lane.b32.xlu0 %v992, 12
        %v1871 = vpop.permute.xlu0 %1870
        %1872 = vrot.lane.b32.xlu0 %v993, 12
        %v1873 = vpop.permute.xlu0 %1872
        %1874 = vrot.lane.b32.xlu0 %v994, 12
        %v1875 = vpop.permute.xlu0 %1874
        %1876 = vrot.lane.b32.xlu0 %v995, 12
        %v1877 = vpop.permute.xlu0 %1876
        %1878 = vrot.lane.b32.xlu0 %v996, 12
        %v1879 = vpop.permute.xlu0 %1878
        %1880 = vrot.lane.b32.xlu0 %v997, 12
        %v1881 = vpop.permute.xlu0 %1880
        %1882 = vrot.lane.b32.xlu0 %v998, 12
        %v1883 = vpop.permute.xlu0 %1882
        %1884 = vrot.lane.b32.xlu0 %v999, 12
        %v1885 = vpop.permute.xlu0 %1884
        %1886 = vrot.lane.b32.xlu0 %v1000, 12
        %v1887 = vpop.permute.xlu0 %1886
        %1888 = vrot.lane.b32.xlu0 %v1001, 12
        %v1889 = vpop.permute.xlu0 %1888
        %1986 = vrot.lane.b32.xlu0 %v1002, 15
        %v1987 = vpop.permute.xlu0 %1986
        %1988 = vrot.lane.b32.xlu0 %v1003, 15
        %v1989 = vpop.permute.xlu0 %1988
        %1990 = vrot.lane.b32.xlu0 %v1004, 15
        %v1991 = vpop.permute.xlu0 %1990
        %1992 = vrot.lane.b32.xlu0 %v1005, 15
        %v1993 = vpop.permute.xlu0 %1992
        %1994 = vrot.lane.b32.xlu0 %v1006, 15
        %v1995 = vpop.permute.xlu0 %1994
        %1996 = vrot.lane.b32.xlu0 %v1007, 15
        %v1997 = vpop.permute.xlu0 %1996
        %1998 = vrot.lane.b32.xlu0 %v1008, 15
        %v1999 = vpop.permute.xlu0 %1998
        %2000 = vrot.lane.b32.xlu0 %v1009, 15
        %v2001 = vpop.permute.xlu0 %2000
        %2002 = vrot.lane.b32.xlu0 %v1010, 15
        %v2003 = vpop.permute.xlu0 %2002
        %2004 = vrot.lane.b32.xlu0 %v1011, 15
        %v2005 = vpop.permute.xlu0 %2004
        %2006 = vrot.lane.b32.xlu0 %v1012, 15
        %v2007 = vpop.permute.xlu0 %2006
        %2008 = vrot.lane.b32.xlu0 %v1013, 15
        %v2009 = vpop.permute.xlu0 %2008
        %2010 = vrot.lane.b32.xlu0 %v1014, 15
        %v2011 = vpop.permute.xlu0 %2010
        %2012 = vrot.lane.b32.xlu0 %v1015, 15
        %v2013 = vpop.permute.xlu0 %2012
        %2014 = vrot.lane.b32.xlu0 %v1016, 15
        %v2015 = vpop.permute.xlu0 %2014
        %2016 = vrot.lane.b32.xlu0 %v1017, 15
        %v2017 = vpop.permute.xlu0 %2016
        %2018 = vrot.lane.b32.xlu0 %v1018, 15
        %v2019 = vpop.permute.xlu0 %2018
        %2020 = vrot.lane.b32.xlu0 %v1019, 15
        %v2021 = vpop.permute.xlu0 %2020
        %2022 = vrot.lane.b32.xlu0 %v1020, 15
        %v2023 = vpop.permute.xlu0 %2022
        %2024 = vrot.lane.b32.xlu0 %v1021, 15
        %v2025 = vpop.permute.xlu0 %2024
        %2026 = vrot.lane.b32.xlu0 %v1022, 15
        %v2027 = vpop.permute.xlu0 %2026
        %2028 = vrot.lane.b32.xlu0 %v1023, 15
        %v2029 = vpop.permute.xlu0 %2028
        %2030 = vrot.lane.b32.xlu0 %v1024, 15
        %v2031 = vpop.permute.xlu0 %2030
        %2032 = vrot.lane.b32.xlu0 %v1025, 15
        %v2033 = vpop.permute.xlu0 %2032
        %2034 = vrot.lane.b32.xlu0 %v1026, 15
        %v2035 = vpop.permute.xlu0 %2034
        %2036 = vrot.lane.b32.xlu0 %v1027, 15
        %v2037 = vpop.permute.xlu0 %2036
        %2038 = vrot.lane.b32.xlu0 %v1028, 15
        %v2039 = vpop.permute.xlu0 %2038
        %2040 = vrot.lane.b32.xlu0 %v1029, 15
        %v2041 = vpop.permute.xlu0 %2040
        %2042 = vrot.lane.b32.xlu0 %v1030, 15
        %v2043 = vpop.permute.xlu0 %2042
        %2044 = vrot.lane.b32.xlu0 %v1031, 15
        %v2045 = vpop.permute.xlu0 %2044
        %2046 = vrot.lane.b32.xlu0 %v1032, 15
        %v2047 = vpop.permute.xlu0 %2046
        %2048 = vrot.lane.b32.xlu0 %v1033, 15
        %v2049 = vpop.permute.xlu0 %2048
        %2050 = vrot.lane.b32.xlu0 %v1034, 15
        %v2051 = vpop.permute.xlu0 %2050
        %2052 = vrot.lane.b32.xlu0 %v1035, 15
        %v2053 = vpop.permute.xlu0 %2052
        %2054 = vrot.lane.b32.xlu0 %v1036, 15
        %v2055 = vpop.permute.xlu0 %2054
        %2056 = vrot.lane.b32.xlu0 %v1037, 15
        %v2057 = vpop.permute.xlu0 %2056
        %2058 = vrot.lane.b32.xlu0 %v1038, 15
        %v2059 = vpop.permute.xlu0 %2058
        %2060 = vrot.lane.b32.xlu0 %v1039, 15
        %v2061 = vpop.permute.xlu0 %2060
        %2062 = vrot.lane.b32.xlu0 %v1040, 15
        %v2063 = vpop.permute.xlu0 %2062
        %2064 = vrot.lane.b32.xlu0 %v1041, 15
        %v2065 = vpop.permute.xlu0 %2064
        %2066 = vrot.lane.b32.xlu0 %v1042, 15
        %v2067 = vpop.permute.xlu0 %2066
        %2068 = vrot.lane.b32.xlu0 %v1043, 15
        %v2069 = vpop.permute.xlu0 %2068
        %2070 = vrot.lane.b32.xlu0 %v1044, 15
        %v2071 = vpop.permute.xlu0 %2070
        %2072 = vrot.lane.b32.xlu0 %v1045, 15
        %v2073 = vpop.permute.xlu0 %2072
        %2074 = vrot.lane.b32.xlu0 %v1046, 15
        %v2075 = vpop.permute.xlu0 %2074
        %2076 = vrot.lane.b32.xlu0 %v1047, 15
        %v2077 = vpop.permute.xlu0 %2076
        %2078 = vrot.lane.b32.xlu0 %v1048, 15
        %v2079 = vpop.permute.xlu0 %2078
        %2080 = vrot.lane.b32.xlu0 %v1049, 15
        %v2081 = vpop.permute.xlu0 %2080
        %2178 = vrot.lane.b32.xlu0 %v1050, 18
        %v2179 = vpop.permute.xlu0 %2178
        %2180 = vrot.lane.b32.xlu0 %v1051, 18
        %v2181 = vpop.permute.xlu0 %2180
        %2182 = vrot.lane.b32.xlu0 %v1052, 18
        %v2183 = vpop.permute.xlu0 %2182
        %2184 = vrot.lane.b32.xlu0 %v1053, 18
        %v2185 = vpop.permute.xlu0 %2184
        %2186 = vrot.lane.b32.xlu0 %v1054, 18
        %v2187 = vpop.permute.xlu0 %2186
        %2188 = vrot.lane.b32.xlu0 %v1055, 18
        %v2189 = vpop.permute.xlu0 %2188
        %2190 = vrot.lane.b32.xlu0 %v1056, 18
        %v2191 = vpop.permute.xlu0 %2190
        %2192 = vrot.lane.b32.xlu0 %v1057, 18
        %v2193 = vpop.permute.xlu0 %2192
        %2194 = vrot.lane.b32.xlu0 %v1058, 18
        %v2195 = vpop.permute.xlu0 %2194
        %2196 = vrot.lane.b32.xlu0 %v1059, 18
        %v2197 = vpop.permute.xlu0 %2196
        %2198 = vrot.lane.b32.xlu0 %v1060, 18
        %v2199 = vpop.permute.xlu0 %2198
        %2200 = vrot.lane.b32.xlu0 %v1061, 18
        %v2201 = vpop.permute.xlu0 %2200
        %2202 = vrot.lane.b32.xlu0 %v1062, 18
        %v2203 = vpop.permute.xlu0 %2202
        %2204 = vrot.lane.b32.xlu0 %v1063, 18
        %v2205 = vpop.permute.xlu0 %2204
        %2206 = vrot.lane.b32.xlu0 %v1064, 18
        %v2207 = vpop.permute.xlu0 %2206
        %2208 = vrot.lane.b32.xlu0 %v1065, 18
        %v2209 = vpop.permute.xlu0 %2208
        %2210 = vrot.lane.b32.xlu0 %v1066, 18
        %v2211 = vpop.permute.xlu0 %2210
        %2212 = vrot.lane.b32.xlu0 %v1067, 18
        %v2213 = vpop.permute.xlu0 %2212
        %2214 = vrot.lane.b32.xlu0 %v1068, 18
        %v2215 = vpop.permute.xlu0 %2214
        %2216 = vrot.lane.b32.xlu0 %v1069, 18
        %v2217 = vpop.permute.xlu0 %2216
        %2218 = vrot.lane.b32.xlu0 %v1070, 18
        %v2219 = vpop.permute.xlu0 %2218
        %2220 = vrot.lane.b32.xlu0 %v1071, 18
        %v2221 = vpop.permute.xlu0 %2220
        %2222 = vrot.lane.b32.xlu0 %v1072, 18
        %v2223 = vpop.permute.xlu0 %2222
        %2224 = vrot.lane.b32.xlu0 %v1073, 18
        %v2225 = vpop.permute.xlu0 %2224
        %2226 = vrot.lane.b32.xlu0 %v1074, 18
        %v2227 = vpop.permute.xlu0 %2226
        %2228 = vrot.lane.b32.xlu0 %v1075, 18
        %v2229 = vpop.permute.xlu0 %2228
        %2230 = vrot.lane.b32.xlu0 %v1076, 18
        %v2231 = vpop.permute.xlu0 %2230
        %2232 = vrot.lane.b32.xlu0 %v1077, 18
        %v2233 = vpop.permute.xlu0 %2232
        %2234 = vrot.lane.b32.xlu0 %v1078, 18
        %v2235 = vpop.permute.xlu0 %2234
        %2236 = vrot.lane.b32.xlu0 %v1079, 18
        %v2237 = vpop.permute.xlu0 %2236
        %2238 = vrot.lane.b32.xlu0 %v1080, 18
        %v2239 = vpop.permute.xlu0 %2238
        %2240 = vrot.lane.b32.xlu0 %v1081, 18
        %v2241 = vpop.permute.xlu0 %2240
        %2242 = vrot.lane.b32.xlu0 %v1082, 18
        %v2243 = vpop.permute.xlu0 %2242
        %2244 = vrot.lane.b32.xlu0 %v1083, 18
        %v2245 = vpop.permute.xlu0 %2244
        %2246 = vrot.lane.b32.xlu0 %v1084, 18
        %v2247 = vpop.permute.xlu0 %2246
        %2248 = vrot.lane.b32.xlu0 %v1085, 18
        %v2249 = vpop.permute.xlu0 %2248
        %2250 = vrot.lane.b32.xlu0 %v1086, 18
        %v2251 = vpop.permute.xlu0 %2250
        %2252 = vrot.lane.b32.xlu0 %v1087, 18
        %v2253 = vpop.permute.xlu0 %2252
        %2254 = vrot.lane.b32.xlu0 %v1088, 18
        %v2255 = vpop.permute.xlu0 %2254
        %2256 = vrot.lane.b32.xlu0 %v1089, 18
        %v2257 = vpop.permute.xlu0 %2256
        %2258 = vrot.lane.b32.xlu0 %v1090, 18
        %v2259 = vpop.permute.xlu0 %2258
        %2260 = vrot.lane.b32.xlu0 %v1091, 18
        %v2261 = vpop.permute.xlu0 %2260
        %2262 = vrot.lane.b32.xlu0 %v1092, 18
        %v2263 = vpop.permute.xlu0 %2262
        %2264 = vrot.lane.b32.xlu0 %v1093, 18
        %v2265 = vpop.permute.xlu0 %2264
        %2266 = vrot.lane.b32.xlu0 %v1094, 18
        %v2267 = vpop.permute.xlu0 %2266
        %2268 = vrot.lane.b32.xlu0 %v1095, 18
        %v2269 = vpop.permute.xlu0 %2268
        %2270 = vrot.lane.b32.xlu0 %v1096, 18
        %v2271 = vpop.permute.xlu0 %2270
        %2272 = vrot.lane.b32.xlu0 %v1097, 18
        %v2273 = vpop.permute.xlu0 %2272
        %2370 = vrot.lane.b32.xlu0 %v1098, 21
        %v2371 = vpop.permute.xlu0 %2370
        %2372 = vrot.lane.b32.xlu0 %v1099, 21
        %v2373 = vpop.permute.xlu0 %2372
        %2374 = vrot.lane.b32.xlu0 %v1100, 21
        %v2375 = vpop.permute.xlu0 %2374
        %2376 = vrot.lane.b32.xlu0 %v1101, 21
        %v2377 = vpop.permute.xlu0 %2376
        %2378 = vrot.lane.b32.xlu0 %v1102, 21
        %v2379 = vpop.permute.xlu0 %2378
        %2380 = vrot.lane.b32.xlu0 %v1103, 21
        %v2381 = vpop.permute.xlu0 %2380
        %2382 = vrot.lane.b32.xlu0 %v1104, 21
        %v2383 = vpop.permute.xlu0 %2382
        %2384 = vrot.lane.b32.xlu0 %v1105, 21
        %v2385 = vpop.permute.xlu0 %2384
        %2386 = vrot.lane.b32.xlu0 %v1106, 21
        %v2387 = vpop.permute.xlu0 %2386
        %2388 = vrot.lane.b32.xlu0 %v1107, 21
        %v2389 = vpop.permute.xlu0 %2388
        %2390 = vrot.lane.b32.xlu0 %v1108, 21
        %v2391 = vpop.permute.xlu0 %2390
        %2392 = vrot.lane.b32.xlu0 %v1109, 21
        %v2393 = vpop.permute.xlu0 %2392
        %2394 = vrot.lane.b32.xlu0 %v1110, 21
        %v2395 = vpop.permute.xlu0 %2394
        %2396 = vrot.lane.b32.xlu0 %v1111, 21
        %v2397 = vpop.permute.xlu0 %2396
        %2398 = vrot.lane.b32.xlu0 %v1112, 21
        %v2399 = vpop.permute.xlu0 %2398
        %2400 = vrot.lane.b32.xlu0 %v1113, 21
        %v2401 = vpop.permute.xlu0 %2400
        %2402 = vrot.lane.b32.xlu0 %v1114, 21
        %v2403 = vpop.permute.xlu0 %2402
        %2404 = vrot.lane.b32.xlu0 %v1115, 21
        %v2405 = vpop.permute.xlu0 %2404
        %2406 = vrot.lane.b32.xlu0 %v1116, 21
        %v2407 = vpop.permute.xlu0 %2406
        %2408 = vrot.lane.b32.xlu0 %v1117, 21
        %v2409 = vpop.permute.xlu0 %2408
        %2410 = vrot.lane.b32.xlu0 %v1118, 21
        %v2411 = vpop.permute.xlu0 %2410
        %2412 = vrot.lane.b32.xlu0 %v1119, 21
        %v2413 = vpop.permute.xlu0 %2412
        %2414 = vrot.lane.b32.xlu0 %v1120, 21
        %v2415 = vpop.permute.xlu0 %2414
        %2416 = vrot.lane.b32.xlu0 %v1121, 21
        %v2417 = vpop.permute.xlu0 %2416
        %2418 = vrot.lane.b32.xlu0 %v1122, 21
        %v2419 = vpop.permute.xlu0 %2418
        %2420 = vrot.lane.b32.xlu0 %v1123, 21
        %v2421 = vpop.permute.xlu0 %2420
        %2422 = vrot.lane.b32.xlu0 %v1124, 21
        %v2423 = vpop.permute.xlu0 %2422
        %2424 = vrot.lane.b32.xlu0 %v1125, 21
        %v2425 = vpop.permute.xlu0 %2424
        %2426 = vrot.lane.b32.xlu0 %v1126, 21
        %v2427 = vpop.permute.xlu0 %2426
        %2428 = vrot.lane.b32.xlu0 %v1127, 21
        %v2429 = vpop.permute.xlu0 %2428
        %2430 = vrot.lane.b32.xlu0 %v1128, 21
        %v2431 = vpop.permute.xlu0 %2430
        %2432 = vrot.lane.b32.xlu0 %v1129, 21
        %v2433 = vpop.permute.xlu0 %2432
        %2434 = vrot.lane.b32.xlu0 %v1130, 21
        %v2435 = vpop.permute.xlu0 %2434
        %2436 = vrot.lane.b32.xlu0 %v1131, 21
        %v2437 = vpop.permute.xlu0 %2436
        %2438 = vrot.lane.b32.xlu0 %v1132, 21
        %v2439 = vpop.permute.xlu0 %2438
        %2440 = vrot.lane.b32.xlu0 %v1133, 21
        %v2441 = vpop.permute.xlu0 %2440
        %2442 = vrot.lane.b32.xlu0 %v1134, 21
        %v2443 = vpop.permute.xlu0 %2442
        %2444 = vrot.lane.b32.xlu0 %v1135, 21
        %v2445 = vpop.permute.xlu0 %2444
        %2446 = vrot.lane.b32.xlu0 %v1136, 21
        %v2447 = vpop.permute.xlu0 %2446
        %2448 = vrot.lane.b32.xlu0 %v1137, 21
        %v2449 = vpop.permute.xlu0 %2448
        %2450 = vrot.lane.b32.xlu0 %v1138, 21
        %v2451 = vpop.permute.xlu0 %2450
        %2452 = vrot.lane.b32.xlu0 %v1139, 21
        %v2453 = vpop.permute.xlu0 %2452
        %2454 = vrot.lane.b32.xlu0 %v1140, 21
        %v2455 = vpop.permute.xlu0 %2454
        %2456 = vrot.lane.b32.xlu0 %v1141, 21
        %v2457 = vpop.permute.xlu0 %2456
        %2458 = vrot.lane.b32.xlu0 %v1142, 21
        %v2459 = vpop.permute.xlu0 %2458
        %2460 = vrot.lane.b32.xlu0 %v1143, 21
        %v2461 = vpop.permute.xlu0 %2460
        %2462 = vrot.lane.b32.xlu0 %v1144, 21
        %v2463 = vpop.permute.xlu0 %2462
        %2464 = vrot.lane.b32.xlu0 %v1145, 21
        %v2465 = vpop.permute.xlu0 %2464
        %2562 = vrot.lane.b32.xlu0 %v763, 24
        %v2563 = vpop.permute.xlu0 %2562
        %2564 = vrot.lane.b32.xlu0 %v1146, 24
        %v2565 = vpop.permute.xlu0 %2564
        %2566 = vrot.lane.b32.xlu0 %v765, 24
        %v2567 = vpop.permute.xlu0 %2566
        %2568 = vrot.lane.b32.xlu0 %v1147, 24
        %v2569 = vpop.permute.xlu0 %2568
        %2570 = vrot.lane.b32.xlu0 %v767, 24
        %v2571 = vpop.permute.xlu0 %2570
        %2572 = vrot.lane.b32.xlu0 %v1148, 24
        %v2573 = vpop.permute.xlu0 %2572
        %2574 = vrot.lane.b32.xlu0 %v769, 24
        %v2575 = vpop.permute.xlu0 %2574
        %2576 = vrot.lane.b32.xlu0 %v1149, 24
        %v2577 = vpop.permute.xlu0 %2576
        %2578 = vrot.lane.b32.xlu0 %v771, 24
        %v2579 = vpop.permute.xlu0 %2578
        %2580 = vrot.lane.b32.xlu0 %v1150, 24
        %v2581 = vpop.permute.xlu0 %2580
        %2582 = vrot.lane.b32.xlu0 %v773, 24
        %v2583 = vpop.permute.xlu0 %2582
        %2584 = vrot.lane.b32.xlu0 %v1151, 24
        %v2585 = vpop.permute.xlu0 %2584
        %2586 = vrot.lane.b32.xlu0 %v775, 24
        %v2587 = vpop.permute.xlu0 %2586
        %2588 = vrot.lane.b32.xlu0 %v1152, 24
        %v2589 = vpop.permute.xlu0 %2588
        %2590 = vrot.lane.b32.xlu0 %v777, 24
        %v2591 = vpop.permute.xlu0 %2590
        %2592 = vrot.lane.b32.xlu0 %v1153, 24
        %v2593 = vpop.permute.xlu0 %2592
        %2594 = vrot.lane.b32.xlu0 %v779, 24
        %v2595 = vpop.permute.xlu0 %2594
        %2596 = vrot.lane.b32.xlu0 %v1154, 24
        %v2597 = vpop.permute.xlu0 %2596
        %2598 = vrot.lane.b32.xlu0 %v781, 24
        %v2599 = vpop.permute.xlu0 %2598
        %2600 = vrot.lane.b32.xlu0 %v1155, 24
        %v2601 = vpop.permute.xlu0 %2600
        %2602 = vrot.lane.b32.xlu0 %v783, 24
        %v2603 = vpop.permute.xlu0 %2602
        %2604 = vrot.lane.b32.xlu0 %v1156, 24
        %v2605 = vpop.permute.xlu0 %2604
        %2606 = vrot.lane.b32.xlu0 %v785, 24
        %v2607 = vpop.permute.xlu0 %2606
        %2608 = vrot.lane.b32.xlu0 %v1157, 24
        %v2609 = vpop.permute.xlu0 %2608
        %2610 = vrot.lane.b32.xlu0 %v787, 24
        %v2611 = vpop.permute.xlu0 %2610
        %2612 = vrot.lane.b32.xlu0 %v1158, 24
        %v2613 = vpop.permute.xlu0 %2612
        %2614 = vrot.lane.b32.xlu0 %v789, 24
        %v2615 = vpop.permute.xlu0 %2614
        %2616 = vrot.lane.b32.xlu0 %v1159, 24
        %v2617 = vpop.permute.xlu0 %2616
        %2618 = vrot.lane.b32.xlu0 %v791, 24
        %v2619 = vpop.permute.xlu0 %2618
        %2620 = vrot.lane.b32.xlu0 %v1160, 24
        %v2621 = vpop.permute.xlu0 %2620
        %2622 = vrot.lane.b32.xlu0 %v793, 24
        %v2623 = vpop.permute.xlu0 %2622
        %2624 = vrot.lane.b32.xlu0 %v1161, 24
        %v2625 = vpop.permute.xlu0 %2624
        %2626 = vrot.lane.b32.xlu0 %v795, 24
        %v2627 = vpop.permute.xlu0 %2626
        %2628 = vrot.lane.b32.xlu0 %v1162, 24
        %v2629 = vpop.permute.xlu0 %2628
        %2630 = vrot.lane.b32.xlu0 %v797, 24
        %v2631 = vpop.permute.xlu0 %2630
        %2632 = vrot.lane.b32.xlu0 %v1163, 24
        %v2633 = vpop.permute.xlu0 %2632
        %2634 = vrot.lane.b32.xlu0 %v799, 24
        %v2635 = vpop.permute.xlu0 %2634
        %2636 = vrot.lane.b32.xlu0 %v1164, 24
        %v2637 = vpop.permute.xlu0 %2636
        %2638 = vrot.lane.b32.xlu0 %v801, 24
        %v2639 = vpop.permute.xlu0 %2638
        %2640 = vrot.lane.b32.xlu0 %v1165, 24
        %v2641 = vpop.permute.xlu0 %2640
        %2642 = vrot.lane.b32.xlu0 %v803, 24
        %v2643 = vpop.permute.xlu0 %2642
        %2644 = vrot.lane.b32.xlu0 %v1166, 24
        %v2645 = vpop.permute.xlu0 %2644
        %2646 = vrot.lane.b32.xlu0 %v805, 24
        %v2647 = vpop.permute.xlu0 %2646
        %2648 = vrot.lane.b32.xlu0 %v1167, 24
        %v2649 = vpop.permute.xlu0 %2648
        %2650 = vrot.lane.b32.xlu0 %v807, 24
        %v2651 = vpop.permute.xlu0 %2650
        %2652 = vrot.lane.b32.xlu0 %v1168, 24
        %v2653 = vpop.permute.xlu0 %2652
        %2654 = vrot.lane.b32.xlu0 %v809, 24
        %v2655 = vpop.permute.xlu0 %2654
        %2656 = vrot.lane.b32.xlu0 %v1169, 24
        %v2657 = vpop.permute.xlu0 %2656
        %v2706 = vsel %vm540, %v762, %v1219
        %v2707 = vsel %vm540, %v763, %v1221
        %v2708 = vsel %vm540, %v764, %v1223
        %v2709 = vsel %vm540, %v765, %v1225
        %v2710 = vsel %vm540, %v766, %v1227
        %v2711 = vsel %vm540, %v767, %v1229
        %v2712 = vsel %vm540, %v768, %v1231
        %v2713 = vsel %vm540, %v769, %v1233
        %v2714 = vsel %vm540, %v770, %v1235
        %v2715 = vsel %vm540, %v771, %v1237
        %v2716 = vsel %vm540, %v772, %v1239
        %v2717 = vsel %vm540, %v773, %v1241
        %v2718 = vsel %vm540, %v774, %v1243
        %v2719 = vsel %vm540, %v775, %v1245
        %v2720 = vsel %vm540, %v776, %v1247
        %v2721 = vsel %vm540, %v777, %v1249
        %v2722 = vsel %vm540, %v778, %v1251
        %v2723 = vsel %vm540, %v779, %v1253
        %v2724 = vsel %vm540, %v780, %v1255
        %v2725 = vsel %vm540, %v781, %v1257
        %v2726 = vsel %vm540, %v782, %v1259
        %v2727 = vsel %vm540, %v783, %v1261
        %v2728 = vsel %vm540, %v784, %v1263
        %v2729 = vsel %vm540, %v785, %v1265
        %v2730 = vsel %vm540, %v786, %v1267
        %v2731 = vsel %vm540, %v787, %v1269
        %v2732 = vsel %vm540, %v788, %v1271
        %v2733 = vsel %vm540, %v789, %v1273
        %v2734 = vsel %vm540, %v790, %v1275
        %v2735 = vsel %vm540, %v791, %v1277
        %v2736 = vsel %vm540, %v792, %v1279
        %v2737 = vsel %vm540, %v793, %v1281
        %v2738 = vsel %vm540, %v794, %v1283
        %v2739 = vsel %vm540, %v795, %v1285
        %v2740 = vsel %vm540, %v796, %v1287
        %v2741 = vsel %vm540, %v797, %v1289
        %v2742 = vsel %vm540, %v798, %v1291
        %v2743 = vsel %vm540, %v799, %v1293
        %v2744 = vsel %vm540, %v800, %v1295
        %v2745 = vsel %vm540, %v801, %v1297
        %v2746 = vsel %vm540, %v802, %v1299
        %v2747 = vsel %vm540, %v803, %v1301
        %v2748 = vsel %vm540, %v804, %v1303
        %v2749 = vsel %vm540, %v805, %v1305
        %v2750 = vsel %vm540, %v806, %v1307
        %v2751 = vsel %vm540, %v807, %v1309
        %v2752 = vsel %vm540, %v808, %v1311
        %v2753 = vsel %vm540, %v809, %v1313
        %vm2754 = vcmask 48128
        %v2755 = vsel %vm2754, %v2706, %v1411
        %v2756 = vsel %vm2754, %v2707, %v1413
        %v2757 = vsel %vm2754, %v2708, %v1415
        %v2758 = vsel %vm2754, %v2709, %v1417
        %v2759 = vsel %vm2754, %v2710, %v1419
        %v2760 = vsel %vm2754, %v2711, %v1421
        %v2761 = vsel %vm2754, %v2712, %v1423
        %v2762 = vsel %vm2754, %v2713, %v1425
        %v2763 = vsel %vm2754, %v2714, %v1427
        %v2764 = vsel %vm2754, %v2715, %v1429
        %v2765 = vsel %vm2754, %v2716, %v1431
        %v2766 = vsel %vm2754, %v2717, %v1433
        %v2767 = vsel %vm2754, %v2718, %v1435
        %v2768 = vsel %vm2754, %v2719, %v1437
        %v2769 = vsel %vm2754, %v2720, %v1439
        %v2770 = vsel %vm2754, %v2721, %v1441
        %v2771 = vsel %vm2754, %v2722, %v1443
        %v2772 = vsel %vm2754, %v2723, %v1445
        %v2773 = vsel %vm2754, %v2724, %v1447
        %v2774 = vsel %vm2754, %v2725, %v1449
        %v2775 = vsel %vm2754, %v2726, %v1451
        %v2776 = vsel %vm2754, %v2727, %v1453
        %v2777 = vsel %vm2754, %v2728, %v1455
        %v2778 = vsel %vm2754, %v2729, %v1457
        %v2779 = vsel %vm2754, %v2730, %v1459
        %v2780 = vsel %vm2754, %v2731, %v1461
        %v2781 = vsel %vm2754, %v2732, %v1463
        %v2782 = vsel %vm2754, %v2733, %v1465
        %v2783 = vsel %vm2754, %v2734, %v1467
        %v2784 = vsel %vm2754, %v2735, %v1469
        %v2785 = vsel %vm2754, %v2736, %v1471
        %v2786 = vsel %vm2754, %v2737, %v1473
        %v2787 = vsel %vm2754, %v2738, %v1475
        %v2788 = vsel %vm2754, %v2739, %v1477
        %v2789 = vsel %vm2754, %v2740, %v1479
        %v2790 = vsel %vm2754, %v2741, %v1481
        %v2791 = vsel %vm2754, %v2742, %v1483
        %v2792 = vsel %vm2754, %v2743, %v1485
        %v2793 = vsel %vm2754, %v2744, %v1487
        %v2794 = vsel %vm2754, %v2745, %v1489
        %v2795 = vsel %vm2754, %v2746, %v1491
        %v2796 = vsel %vm2754, %v2747, %v1493
        %v2797 = vsel %vm2754, %v2748, %v1495
        %v2798 = vsel %vm2754, %v2749, %v1497
        %v2799 = vsel %vm2754, %v2750, %v1499
        %v2800 = vsel %vm2754, %v2751, %v1501
        %v2801 = vsel %vm2754, %v2752, %v1503
        %v2802 = vsel %vm2754, %v2753, %v1505
        %vm2803 = vcmask 72704
        %v2804 = vsel %vm2803, %v2755, %v1603
        %v2805 = vsel %vm2803, %v2756, %v1605
        %v2806 = vsel %vm2803, %v2757, %v1607
        %v2807 = vsel %vm2803, %v2758, %v1609
        %v2808 = vsel %vm2803, %v2759, %v1611
        %v2809 = vsel %vm2803, %v2760, %v1613
        %v2810 = vsel %vm2803, %v2761, %v1615
        %v2811 = vsel %vm2803, %v2762, %v1617
        %v2812 = vsel %vm2803, %v2763, %v1619
        %v2813 = vsel %vm2803, %v2764, %v1621
        %v2814 = vsel %vm2803, %v2765, %v1623
        %v2815 = vsel %vm2803, %v2766, %v1625
        %v2816 = vsel %vm2803, %v2767, %v1627
        %v2817 = vsel %vm2803, %v2768, %v1629
        %v2818 = vsel %vm2803, %v2769, %v1631
        %v2819 = vsel %vm2803, %v2770, %v1633
        %v2820 = vsel %vm2803, %v2771, %v1635
        %v2821 = vsel %vm2803, %v2772, %v1637
        %v2822 = vsel %vm2803, %v2773, %v1639
        %v2823 = vsel %vm2803, %v2774, %v1641
        %v2824 = vsel %vm2803, %v2775, %v1643
        %v2825 = vsel %vm2803, %v2776, %v1645
        %v2826 = vsel %vm2803, %v2777, %v1647
        %v2827 = vsel %vm2803, %v2778, %v1649
        %v2828 = vsel %vm2803, %v2779, %v1651
        %v2829 = vsel %vm2803, %v2780, %v1653
        %v2830 = vsel %vm2803, %v2781, %v1655
        %v2831 = vsel %vm2803, %v2782, %v1657
        %v2832 = vsel %vm2803, %v2783, %v1659
        %v2833 = vsel %vm2803, %v2784, %v1661
        %v2834 = vsel %vm2803, %v2785, %v1663
        %v2835 = vsel %vm2803, %v2786, %v1665
        %v2836 = vsel %vm2803, %v2787, %v1667
        %v2837 = vsel %vm2803, %v2788, %v1669
        %v2838 = vsel %vm2803, %v2789, %v1671
        %v2839 = vsel %vm2803, %v2790, %v1673
        %v2840 = vsel %vm2803, %v2791, %v1675
        %v2841 = vsel %vm2803, %v2792, %v1677
        %v2842 = vsel %vm2803, %v2793, %v1679
        %v2843 = vsel %vm2803, %v2794, %v1681
        %v2844 = vsel %vm2803, %v2795, %v1683
        %v2845 = vsel %vm2803, %v2796, %v1685
        %v2846 = vsel %vm2803, %v2797, %v1687
        %v2847 = vsel %vm2803, %v2798, %v1689
        %v2848 = vsel %vm2803, %v2799, %v1691
        %v2849 = vsel %vm2803, %v2800, %v1693
        %v2850 = vsel %vm2803, %v2801, %v1695
        %v2851 = vsel %vm2803, %v2802, %v1697
        %vm2852 = vcmask 97280
        %v2853 = vsel %vm2852, %v2804, %v1795
        %v2854 = vsel %vm2852, %v2805, %v1797
        %v2855 = vsel %vm2852, %v2806, %v1799
        %v2856 = vsel %vm2852, %v2807, %v1801
        %v2857 = vsel %vm2852, %v2808, %v1803
        %v2858 = vsel %vm2852, %v2809, %v1805
        %v2859 = vsel %vm2852, %v2810, %v1807
        %v2860 = vsel %vm2852, %v2811, %v1809
        %v2861 = vsel %vm2852, %v2812, %v1811
        %v2862 = vsel %vm2852, %v2813, %v1813
        %v2863 = vsel %vm2852, %v2814, %v1815
        %v2864 = vsel %vm2852, %v2815, %v1817
        %v2865 = vsel %vm2852, %v2816, %v1819
        %v2866 = vsel %vm2852, %v2817, %v1821
        %v2867 = vsel %vm2852, %v2818, %v1823
        %v2868 = vsel %vm2852, %v2819, %v1825
        %v2869 = vsel %vm2852, %v2820, %v1827
        %v2870 = vsel %vm2852, %v2821, %v1829
        %v2871 = vsel %vm2852, %v2822, %v1831
        %v2872 = vsel %vm2852, %v2823, %v1833
        %v2873 = vsel %vm2852, %v2824, %v1835
        %v2874 = vsel %vm2852, %v2825, %v1837
        %v2875 = vsel %vm2852, %v2826, %v1839
        %v2876 = vsel %vm2852, %v2827, %v1841
        %v2877 = vsel %vm2852, %v2828, %v1843
        %v2878 = vsel %vm2852, %v2829, %v1845
        %v2879 = vsel %vm2852, %v2830, %v1847
        %v2880 = vsel %vm2852, %v2831, %v1849
        %v2881 = vsel %vm2852, %v2832, %v1851
        %v2882 = vsel %vm2852, %v2833, %v1853
        %v2883 = vsel %vm2852, %v2834, %v1855
        %v2884 = vsel %vm2852, %v2835, %v1857
        %v2885 = vsel %vm2852, %v2836, %v1859
        %v2886 = vsel %vm2852, %v2837, %v1861
        %v2887 = vsel %vm2852, %v2838, %v1863
        %v2888 = vsel %vm2852, %v2839, %v1865
        %v2889 = vsel %vm2852, %v2840, %v1867
        %v2890 = vsel %vm2852, %v2841, %v1869
        %v2891 = vsel %vm2852, %v2842, %v1871
        %v2892 = vsel %vm2852, %v2843, %v1873
        %v2893 = vsel %vm2852, %v2844, %v1875
        %v2894 = vsel %vm2852, %v2845, %v1877
        %v2895 = vsel %vm2852, %v2846, %v1879
        %v2896 = vsel %vm2852, %v2847, %v1881
        %v2897 = vsel %vm2852, %v2848, %v1883
        %v2898 = vsel %vm2852, %v2849, %v1885
        %v2899 = vsel %vm2852, %v2850, %v1887
        %v2900 = vsel %vm2852, %v2851, %v1889
        %vm2901 = vcmask 121856
        %v2902 = vsel %vm2901, %v2853, %v1987
        %v2903 = vsel %vm2901, %v2854, %v1989
        %v2904 = vsel %vm2901, %v2855, %v1991
        %v2905 = vsel %vm2901, %v2856, %v1993
        %v2906 = vsel %vm2901, %v2857, %v1995
        %v2907 = vsel %vm2901, %v2858, %v1997
        %v2908 = vsel %vm2901, %v2859, %v1999
        %v2909 = vsel %vm2901, %v2860, %v2001
        %v2910 = vsel %vm2901, %v2861, %v2003
        %v2911 = vsel %vm2901, %v2862, %v2005
        %v2912 = vsel %vm2901, %v2863, %v2007
        %v2913 = vsel %vm2901, %v2864, %v2009
        %v2914 = vsel %vm2901, %v2865, %v2011
        %v2915 = vsel %vm2901, %v2866, %v2013
        %v2916 = vsel %vm2901, %v2867, %v2015
        %v2917 = vsel %vm2901, %v2868, %v2017
        %v2918 = vsel %vm2901, %v2869, %v2019
        %v2919 = vsel %vm2901, %v2870, %v2021
        %v2920 = vsel %vm2901, %v2871, %v2023
        %v2921 = vsel %vm2901, %v2872, %v2025
        %v2922 = vsel %vm2901, %v2873, %v2027
        %v2923 = vsel %vm2901, %v2874, %v2029
        %v2924 = vsel %vm2901, %v2875, %v2031
        %v2925 = vsel %vm2901, %v2876, %v2033
        %v2926 = vsel %vm2901, %v2877, %v2035
        %v2927 = vsel %vm2901, %v2878, %v2037
        %v2928 = vsel %vm2901, %v2879, %v2039
        %v2929 = vsel %vm2901, %v2880, %v2041
        %v2930 = vsel %vm2901, %v2881, %v2043
        %v2931 = vsel %vm2901, %v2882, %v2045
        %v2932 = vsel %vm2901, %v2883, %v2047
        %v2933 = vsel %vm2901, %v2884, %v2049
        %v2934 = vsel %vm2901, %v2885, %v2051
        %v2935 = vsel %vm2901, %v2886, %v2053
        %v2936 = vsel %vm2901, %v2887, %v2055
        %v2937 = vsel %vm2901, %v2888, %v2057
        %v2938 = vsel %vm2901, %v2889, %v2059
        %v2939 = vsel %vm2901, %v2890, %v2061
        %v2940 = vsel %vm2901, %v2891, %v2063
        %v2941 = vsel %vm2901, %v2892, %v2065
        %v2942 = vsel %vm2901, %v2893, %v2067
        %v2943 = vsel %vm2901, %v2894, %v2069
        %v2944 = vsel %vm2901, %v2895, %v2071
        %v2945 = vsel %vm2901, %v2896, %v2073
        %v2946 = vsel %vm2901, %v2897, %v2075
        %v2947 = vsel %vm2901, %v2898, %v2077
        %v2948 = vsel %vm2901, %v2899, %v2079
        %v2949 = vsel %vm2901, %v2900, %v2081
        %vm2950 = vcmask 146432
        %v2951 = vsel %vm2950, %v2902, %v2179
        %v2952 = vsel %vm2950, %v2903, %v2181
        %v2953 = vsel %vm2950, %v2904, %v2183
        %v2954 = vsel %vm2950, %v2905, %v2185
        %v2955 = vsel %vm2950, %v2906, %v2187
        %v2956 = vsel %vm2950, %v2907, %v2189
        %v2957 = vsel %vm2950, %v2908, %v2191
        %v2958 = vsel %vm2950, %v2909, %v2193
        %v2959 = vsel %vm2950, %v2910, %v2195
        %v2960 = vsel %vm2950, %v2911, %v2197
        %v2961 = vsel %vm2950, %v2912, %v2199
        %v2962 = vsel %vm2950, %v2913, %v2201
        %v2963 = vsel %vm2950, %v2914, %v2203
        %v2964 = vsel %vm2950, %v2915, %v2205
        %v2965 = vsel %vm2950, %v2916, %v2207
        %v2966 = vsel %vm2950, %v2917, %v2209
        %v2967 = vsel %vm2950, %v2918, %v2211
        %v2968 = vsel %vm2950, %v2919, %v2213
        %v2969 = vsel %vm2950, %v2920, %v2215
        %v2970 = vsel %vm2950, %v2921, %v2217
        %v2971 = vsel %vm2950, %v2922, %v2219
        %v2972 = vsel %vm2950, %v2923, %v2221
        %v2973 = vsel %vm2950, %v2924, %v2223
        %v2974 = vsel %vm2950, %v2925, %v2225
        %v2975 = vsel %vm2950, %v2926, %v2227
        %v2976 = vsel %vm2950, %v2927, %v2229
        %v2977 = vsel %vm2950, %v2928, %v2231
        %v2978 = vsel %vm2950, %v2929, %v2233
        %v2979 = vsel %vm2950, %v2930, %v2235
        %v2980 = vsel %vm2950, %v2931, %v2237
        %v2981 = vsel %vm2950, %v2932, %v2239
        %v2982 = vsel %vm2950, %v2933, %v2241
        %v2983 = vsel %vm2950, %v2934, %v2243
        %v2984 = vsel %vm2950, %v2935, %v2245
        %v2985 = vsel %vm2950, %v2936, %v2247
        %v2986 = vsel %vm2950, %v2937, %v2249
        %v2987 = vsel %vm2950, %v2938, %v2251
        %v2988 = vsel %vm2950, %v2939, %v2253
        %v2989 = vsel %vm2950, %v2940, %v2255
        %v2990 = vsel %vm2950, %v2941, %v2257
        %v2991 = vsel %vm2950, %v2942, %v2259
        %v2992 = vsel %vm2950, %v2943, %v2261
        %v2993 = vsel %vm2950, %v2944, %v2263
        %v2994 = vsel %vm2950, %v2945, %v2265
        %v2995 = vsel %vm2950, %v2946, %v2267
        %v2996 = vsel %vm2950, %v2947, %v2269
        %v2997 = vsel %vm2950, %v2948, %v2271
        %v2998 = vsel %vm2950, %v2949, %v2273
        %vm2999 = vcmask 171008
        %v3000 = vsel %vm2999, %v2951, %v2371
        %v3001 = vsel %vm2999, %v2952, %v2373
        %v3002 = vsel %vm2999, %v2953, %v2375
        %v3003 = vsel %vm2999, %v2954, %v2377
        %v3004 = vsel %vm2999, %v2955, %v2379
        %v3005 = vsel %vm2999, %v2956, %v2381
        %v3006 = vsel %vm2999, %v2957, %v2383
        %v3007 = vsel %vm2999, %v2958, %v2385
        %v3008 = vsel %vm2999, %v2959, %v2387
        %v3009 = vsel %vm2999, %v2960, %v2389
        %v3010 = vsel %vm2999, %v2961, %v2391
        %v3011 = vsel %vm2999, %v2962, %v2393
        %v3012 = vsel %vm2999, %v2963, %v2395
        %v3013 = vsel %vm2999, %v2964, %v2397
        %v3014 = vsel %vm2999, %v2965, %v2399
        %v3015 = vsel %vm2999, %v2966, %v2401
        %v3016 = vsel %vm2999, %v2967, %v2403
        %v3017 = vsel %vm2999, %v2968, %v2405
        %v3018 = vsel %vm2999, %v2969, %v2407
        %v3019 = vsel %vm2999, %v2970, %v2409
        %v3020 = vsel %vm2999, %v2971, %v2411
        %v3021 = vsel %vm2999, %v2972, %v2413
        %v3022 = vsel %vm2999, %v2973, %v2415
        %v3023 = vsel %vm2999, %v2974, %v2417
        %v3024 = vsel %vm2999, %v2975, %v2419
        %v3025 = vsel %vm2999, %v2976, %v2421
        %v3026 = vsel %vm2999, %v2977, %v2423
        %v3027 = vsel %vm2999, %v2978, %v2425
        %v3028 = vsel %vm2999, %v2979, %v2427
        %v3029 = vsel %vm2999, %v2980, %v2429
        %v3030 = vsel %vm2999, %v2981, %v2431
        %v3031 = vsel %vm2999, %v2982, %v2433
        %v3032 = vsel %vm2999, %v2983, %v2435
        %v3033 = vsel %vm2999, %v2984, %v2437
        %v3034 = vsel %vm2999, %v2985, %v2439
        %v3035 = vsel %vm2999, %v2986, %v2441
        %v3036 = vsel %vm2999, %v2987, %v2443
        %v3037 = vsel %vm2999, %v2988, %v2445
        %v3038 = vsel %vm2999, %v2989, %v2447
        %v3039 = vsel %vm2999, %v2990, %v2449
        %v3040 = vsel %vm2999, %v2991, %v2451
        %v3041 = vsel %vm2999, %v2992, %v2453
        %v3042 = vsel %vm2999, %v2993, %v2455
        %v3043 = vsel %vm2999, %v2994, %v2457
        %v3044 = vsel %vm2999, %v2995, %v2459
        %v3045 = vsel %vm2999, %v2996, %v2461
        %v3046 = vsel %vm2999, %v2997, %v2463
        %v3047 = vsel %vm2999, %v2998, %v2465
        %vm3048 = vcmask 195584
        %v3049 = vsel %vm3048, %v3000, %v2563
        %v3050 = vsel %vm3048, %v3001, %v2565
        %v3051 = vsel %vm3048, %v3002, %v2567
        %v3052 = vsel %vm3048, %v3003, %v2569
        %v3053 = vsel %vm3048, %v3004, %v2571
        %v3054 = vsel %vm3048, %v3005, %v2573
        %v3055 = vsel %vm3048, %v3006, %v2575
        %v3056 = vsel %vm3048, %v3007, %v2577
        %v3057 = vsel %vm3048, %v3008, %v2579
        %v3058 = vsel %vm3048, %v3009, %v2581
        %v3059 = vsel %vm3048, %v3010, %v2583
        %v3060 = vsel %vm3048, %v3011, %v2585
        %v3061 = vsel %vm3048, %v3012, %v2587
        %v3062 = vsel %vm3048, %v3013, %v2589
        %v3063 = vsel %vm3048, %v3014, %v2591
        %v3064 = vsel %vm3048, %v3015, %v2593
        %v3065 = vsel %vm3048, %v3016, %v2595
        %v3066 = vsel %vm3048, %v3017, %v2597
        %v3067 = vsel %vm3048, %v3018, %v2599
        %v3068 = vsel %vm3048, %v3019, %v2601
        %v3069 = vsel %vm3048, %v3020, %v2603
        %v3070 = vsel %vm3048, %v3021, %v2605
        %v3071 = vsel %vm3048, %v3022, %v2607
        %v3072 = vsel %vm3048, %v3023, %v2609
        %v3073 = vsel %vm3048, %v3024, %v2611
        %v3074 = vsel %vm3048, %v3025, %v2613
        %v3075 = vsel %vm3048, %v3026, %v2615
        %v3076 = vsel %vm3048, %v3027, %v2617
        %v3077 = vsel %vm3048, %v3028, %v2619
        %v3078 = vsel %vm3048, %v3029, %v2621
        %v3079 = vsel %vm3048, %v3030, %v2623
        %v3080 = vsel %vm3048, %v3031, %v2625
        %v3081 = vsel %vm3048, %v3032, %v2627
        %v3082 = vsel %vm3048, %v3033, %v2629
        %v3083 = vsel %vm3048, %v3034, %v2631
        %v3084 = vsel %vm3048, %v3035, %v2633
        %v3085 = vsel %vm3048, %v3036, %v2635
        %v3086 = vsel %vm3048, %v3037, %v2637
        %v3087 = vsel %vm3048, %v3038, %v2639
        %v3088 = vsel %vm3048, %v3039, %v2641
        %v3089 = vsel %vm3048, %v3040, %v2643
        %v3090 = vsel %vm3048, %v3041, %v2645
        %v3091 = vsel %vm3048, %v3042, %v2647
        %v3092 = vsel %vm3048, %v3043, %v2649
        %v3093 = vsel %vm3048, %v3044, %v2651
        %v3094 = vsel %vm3048, %v3045, %v2653
        %v3095 = vsel %vm3048, %v3046, %v2655
        %v3096 = vsel %vm3048, %v3047, %v2657
        %3129 = vrot.lane.b32.xlu0 %v3051, 27
        %v3130 = vpop.permute.xlu0 %3129
        %3131 = vrot.lane.b32.xlu0 %v3052, 27
        %v3132 = vpop.permute.xlu0 %3131
        %3133 = vrot.lane.b32.xlu0 %v3053, 27
        %v3134 = vpop.permute.xlu0 %3133
        %3135 = vrot.lane.b32.xlu0 %v3054, 27
        %v3136 = vpop.permute.xlu0 %3135
        %3137 = vrot.lane.b32.xlu0 %v3055, 27
        %v3138 = vpop.permute.xlu0 %3137
        %3139 = vrot.lane.b32.xlu0 %v3056, 27
        %v3140 = vpop.permute.xlu0 %3139
        %3141 = vrot.lane.b32.xlu0 %v3057, 27
        %v3142 = vpop.permute.xlu0 %3141
        %3143 = vrot.lane.b32.xlu0 %v3058, 27
        %v3144 = vpop.permute.xlu0 %3143
        %3145 = vrot.lane.b32.xlu0 %v3059, 27
        %v3146 = vpop.permute.xlu0 %3145
        %3147 = vrot.lane.b32.xlu0 %v3060, 27
        %v3148 = vpop.permute.xlu0 %3147
        %3149 = vrot.lane.b32.xlu0 %v3061, 27
        %v3150 = vpop.permute.xlu0 %3149
        %3151 = vrot.lane.b32.xlu0 %v3062, 27
        %v3152 = vpop.permute.xlu0 %3151
        %3153 = vrot.lane.b32.xlu0 %v3063, 27
        %v3154 = vpop.permute.xlu0 %3153
        %3155 = vrot.lane.b32.xlu0 %v3064, 27
        %v3156 = vpop.permute.xlu0 %3155
        %3157 = vrot.lane.b32.xlu0 %v3065, 27
        %v3158 = vpop.permute.xlu0 %3157
        %3159 = vrot.lane.b32.xlu0 %v3066, 27
        %v3160 = vpop.permute.xlu0 %3159
        %3161 = vrot.lane.b32.xlu0 %v3067, 27
        %v3162 = vpop.permute.xlu0 %3161
        %3163 = vrot.lane.b32.xlu0 %v3068, 27
        %v3164 = vpop.permute.xlu0 %3163
        %3165 = vrot.lane.b32.xlu0 %v3069, 27
        %v3166 = vpop.permute.xlu0 %3165
        %3167 = vrot.lane.b32.xlu0 %v3070, 27
        %v3168 = vpop.permute.xlu0 %3167
        %3169 = vrot.lane.b32.xlu0 %v3071, 27
        %v3170 = vpop.permute.xlu0 %3169
        %3171 = vrot.lane.b32.xlu0 %v3072, 27
        %v3172 = vpop.permute.xlu0 %3171
        %3173 = vrot.lane.b32.xlu0 %v3073, 27
        %v3174 = vpop.permute.xlu0 %3173
        %3175 = vrot.lane.b32.xlu0 %v3074, 27
        %v3176 = vpop.permute.xlu0 %3175
        %3177 = vrot.lane.b32.xlu0 %v3075, 27
        %v3178 = vpop.permute.xlu0 %3177
        %3179 = vrot.lane.b32.xlu0 %v3076, 27
        %v3180 = vpop.permute.xlu0 %3179
        %3181 = vrot.lane.b32.xlu0 %v3077, 27
        %v3182 = vpop.permute.xlu0 %3181
        %3183 = vrot.lane.b32.xlu0 %v3078, 27
        %v3184 = vpop.permute.xlu0 %3183
        %3185 = vrot.lane.b32.xlu0 %v3079, 27
        %v3186 = vpop.permute.xlu0 %3185
        %3187 = vrot.lane.b32.xlu0 %v3080, 27
        %v3188 = vpop.permute.xlu0 %3187
        %3189 = vrot.lane.b32.xlu0 %v3081, 27
        %v3190 = vpop.permute.xlu0 %3189
        %3191 = vrot.lane.b32.xlu0 %v3082, 27
        %v3192 = vpop.permute.xlu0 %3191
        %3227 = vrot.lane.b32.xlu0 %v3053, 54
        %v3228 = vpop.permute.xlu0 %3227
        %3229 = vrot.lane.b32.xlu0 %v3054, 54
        %v3230 = vpop.permute.xlu0 %3229
        %3231 = vrot.lane.b32.xlu0 %v3055, 54
        %v3232 = vpop.permute.xlu0 %3231
        %3233 = vrot.lane.b32.xlu0 %v3056, 54
        %v3234 = vpop.permute.xlu0 %3233
        %3235 = vrot.lane.b32.xlu0 %v3057, 54
        %v3236 = vpop.permute.xlu0 %3235
        %3237 = vrot.lane.b32.xlu0 %v3058, 54
        %v3238 = vpop.permute.xlu0 %3237
        %3239 = vrot.lane.b32.xlu0 %v3059, 54
        %v3240 = vpop.permute.xlu0 %3239
        %3241 = vrot.lane.b32.xlu0 %v3060, 54
        %v3242 = vpop.permute.xlu0 %3241
        %3243 = vrot.lane.b32.xlu0 %v3061, 54
        %v3244 = vpop.permute.xlu0 %3243
        %3245 = vrot.lane.b32.xlu0 %v3062, 54
        %v3246 = vpop.permute.xlu0 %3245
        %3247 = vrot.lane.b32.xlu0 %v3063, 54
        %v3248 = vpop.permute.xlu0 %3247
        %3249 = vrot.lane.b32.xlu0 %v3064, 54
        %v3250 = vpop.permute.xlu0 %3249
        %3251 = vrot.lane.b32.xlu0 %v3065, 54
        %v3252 = vpop.permute.xlu0 %3251
        %3253 = vrot.lane.b32.xlu0 %v3066, 54
        %v3254 = vpop.permute.xlu0 %3253
        %3255 = vrot.lane.b32.xlu0 %v3067, 54
        %v3256 = vpop.permute.xlu0 %3255
        %3257 = vrot.lane.b32.xlu0 %v3068, 54
        %v3258 = vpop.permute.xlu0 %3257
        %3259 = vrot.lane.b32.xlu0 %v3069, 54
        %v3260 = vpop.permute.xlu0 %3259
        %3261 = vrot.lane.b32.xlu0 %v3070, 54
        %v3262 = vpop.permute.xlu0 %3261
        %3263 = vrot.lane.b32.xlu0 %v3071, 54
        %v3264 = vpop.permute.xlu0 %3263
        %3265 = vrot.lane.b32.xlu0 %v3072, 54
        %v3266 = vpop.permute.xlu0 %3265
        %3267 = vrot.lane.b32.xlu0 %v3073, 54
        %v3268 = vpop.permute.xlu0 %3267
        %3269 = vrot.lane.b32.xlu0 %v3074, 54
        %v3270 = vpop.permute.xlu0 %3269
        %3271 = vrot.lane.b32.xlu0 %v3075, 54
        %v3272 = vpop.permute.xlu0 %3271
        %3273 = vrot.lane.b32.xlu0 %v3076, 54
        %v3274 = vpop.permute.xlu0 %3273
        %3275 = vrot.lane.b32.xlu0 %v3077, 54
        %v3276 = vpop.permute.xlu0 %3275
        %3277 = vrot.lane.b32.xlu0 %v3078, 54
        %v3278 = vpop.permute.xlu0 %3277
        %3279 = vrot.lane.b32.xlu0 %v3079, 54
        %v3280 = vpop.permute.xlu0 %3279
        %3281 = vrot.lane.b32.xlu0 %v3080, 54
        %v3282 = vpop.permute.xlu0 %3281
        %3283 = vrot.lane.b32.xlu0 %v3081, 54
        %v3284 = vpop.permute.xlu0 %3283
        %3285 = vrot.lane.b32.xlu0 %v3082, 54
        %v3286 = vpop.permute.xlu0 %3285
        %3287 = vrot.lane.b32.xlu0 %v3083, 54
        %v3288 = vpop.permute.xlu0 %3287
        %3289 = vrot.lane.b32.xlu0 %v3084, 54
        %v3290 = vpop.permute.xlu0 %3289
        %3325 = vrot.lane.b32.xlu0 %v3055, 81
        %v3326 = vpop.permute.xlu0 %3325
        %3327 = vrot.lane.b32.xlu0 %v3056, 81
        %v3328 = vpop.permute.xlu0 %3327
        %3329 = vrot.lane.b32.xlu0 %v3057, 81
        %v3330 = vpop.permute.xlu0 %3329
        %3331 = vrot.lane.b32.xlu0 %v3058, 81
        %v3332 = vpop.permute.xlu0 %3331
        %3333 = vrot.lane.b32.xlu0 %v3059, 81
        %v3334 = vpop.permute.xlu0 %3333
        %3335 = vrot.lane.b32.xlu0 %v3060, 81
        %v3336 = vpop.permute.xlu0 %3335
        %3337 = vrot.lane.b32.xlu0 %v3061, 81
        %v3338 = vpop.permute.xlu0 %3337
        %3339 = vrot.lane.b32.xlu0 %v3062, 81
        %v3340 = vpop.permute.xlu0 %3339
        %3341 = vrot.lane.b32.xlu0 %v3063, 81
        %v3342 = vpop.permute.xlu0 %3341
        %3343 = vrot.lane.b32.xlu0 %v3064, 81
        %v3344 = vpop.permute.xlu0 %3343
        %3345 = vrot.lane.b32.xlu0 %v3065, 81
        %v3346 = vpop.permute.xlu0 %3345
        %3347 = vrot.lane.b32.xlu0 %v3066, 81
        %v3348 = vpop.permute.xlu0 %3347
        %3349 = vrot.lane.b32.xlu0 %v3067, 81
        %v3350 = vpop.permute.xlu0 %3349
        %3351 = vrot.lane.b32.xlu0 %v3068, 81
        %v3352 = vpop.permute.xlu0 %3351
        %3353 = vrot.lane.b32.xlu0 %v3069, 81
        %v3354 = vpop.permute.xlu0 %3353
        %3355 = vrot.lane.b32.xlu0 %v3070, 81
        %v3356 = vpop.permute.xlu0 %3355
        %3357 = vrot.lane.b32.xlu0 %v3071, 81
        %v3358 = vpop.permute.xlu0 %3357
        %3359 = vrot.lane.b32.xlu0 %v3072, 81
        %v3360 = vpop.permute.xlu0 %3359
        %3361 = vrot.lane.b32.xlu0 %v3073, 81
        %v3362 = vpop.permute.xlu0 %3361
        %3363 = vrot.lane.b32.xlu0 %v3074, 81
        %v3364 = vpop.permute.xlu0 %3363
        %3365 = vrot.lane.b32.xlu0 %v3075, 81
        %v3366 = vpop.permute.xlu0 %3365
        %3367 = vrot.lane.b32.xlu0 %v3076, 81
        %v3368 = vpop.permute.xlu0 %3367
        %3369 = vrot.lane.b32.xlu0 %v3077, 81
        %v3370 = vpop.permute.xlu0 %3369
        %3371 = vrot.lane.b32.xlu0 %v3078, 81
        %v3372 = vpop.permute.xlu0 %3371
        %3373 = vrot.lane.b32.xlu0 %v3079, 81
        %v3374 = vpop.permute.xlu0 %3373
        %3375 = vrot.lane.b32.xlu0 %v3080, 81
        %v3376 = vpop.permute.xlu0 %3375
        %3377 = vrot.lane.b32.xlu0 %v3081, 81
        %v3378 = vpop.permute.xlu0 %3377
        %3379 = vrot.lane.b32.xlu0 %v3082, 81
        %v3380 = vpop.permute.xlu0 %3379
        %3381 = vrot.lane.b32.xlu0 %v3083, 81
        %v3382 = vpop.permute.xlu0 %3381
        %3383 = vrot.lane.b32.xlu0 %v3084, 81
        %v3384 = vpop.permute.xlu0 %3383
        %3385 = vrot.lane.b32.xlu0 %v3085, 81
        %v3386 = vpop.permute.xlu0 %3385
        %3387 = vrot.lane.b32.xlu0 %v3086, 81
        %v3388 = vpop.permute.xlu0 %3387
        %3423 = vrot.lane.b32.xlu0 %v3057, 108
        %v3424 = vpop.permute.xlu0 %3423
        %3425 = vrot.lane.b32.xlu0 %v3058, 108
        %v3426 = vpop.permute.xlu0 %3425
        %3427 = vrot.lane.b32.xlu0 %v3059, 108
        %v3428 = vpop.permute.xlu0 %3427
        %3429 = vrot.lane.b32.xlu0 %v3060, 108
        %v3430 = vpop.permute.xlu0 %3429
        %3431 = vrot.lane.b32.xlu0 %v3061, 108
        %v3432 = vpop.permute.xlu0 %3431
        %3433 = vrot.lane.b32.xlu0 %v3062, 108
        %v3434 = vpop.permute.xlu0 %3433
        %3435 = vrot.lane.b32.xlu0 %v3063, 108
        %v3436 = vpop.permute.xlu0 %3435
        %3437 = vrot.lane.b32.xlu0 %v3064, 108
        %v3438 = vpop.permute.xlu0 %3437
        %3439 = vrot.lane.b32.xlu0 %v3065, 108
        %v3440 = vpop.permute.xlu0 %3439
        %3441 = vrot.lane.b32.xlu0 %v3066, 108
        %v3442 = vpop.permute.xlu0 %3441
        %3443 = vrot.lane.b32.xlu0 %v3067, 108
        %v3444 = vpop.permute.xlu0 %3443
        %3445 = vrot.lane.b32.xlu0 %v3068, 108
        %v3446 = vpop.permute.xlu0 %3445
        %3447 = vrot.lane.b32.xlu0 %v3069, 108
        %v3448 = vpop.permute.xlu0 %3447
        %3449 = vrot.lane.b32.xlu0 %v3070, 108
        %v3450 = vpop.permute.xlu0 %3449
        %3451 = vrot.lane.b32.xlu0 %v3071, 108
        %v3452 = vpop.permute.xlu0 %3451
        %3453 = vrot.lane.b32.xlu0 %v3072, 108
        %v3454 = vpop.permute.xlu0 %3453
        %3455 = vrot.lane.b32.xlu0 %v3073, 108
        %v3456 = vpop.permute.xlu0 %3455
        %3457 = vrot.lane.b32.xlu0 %v3074, 108
        %v3458 = vpop.permute.xlu0 %3457
        %3459 = vrot.lane.b32.xlu0 %v3075, 108
        %v3460 = vpop.permute.xlu0 %3459
        %3461 = vrot.lane.b32.xlu0 %v3076, 108
        %v3462 = vpop.permute.xlu0 %3461
        %3463 = vrot.lane.b32.xlu0 %v3077, 108
        %v3464 = vpop.permute.xlu0 %3463
        %3465 = vrot.lane.b32.xlu0 %v3078, 108
        %v3466 = vpop.permute.xlu0 %3465
        %3467 = vrot.lane.b32.xlu0 %v3079, 108
        %v3468 = vpop.permute.xlu0 %3467
        %3469 = vrot.lane.b32.xlu0 %v3080, 108
        %v3470 = vpop.permute.xlu0 %3469
        %3471 = vrot.lane.b32.xlu0 %v3081, 108
        %v3472 = vpop.permute.xlu0 %3471
        %3473 = vrot.lane.b32.xlu0 %v3082, 108
        %v3474 = vpop.permute.xlu0 %3473
        %3475 = vrot.lane.b32.xlu0 %v3083, 108
        %v3476 = vpop.permute.xlu0 %3475
        %3477 = vrot.lane.b32.xlu0 %v3084, 108
        %v3478 = vpop.permute.xlu0 %3477
        %3479 = vrot.lane.b32.xlu0 %v3085, 108
        %v3480 = vpop.permute.xlu0 %3479
        %3481 = vrot.lane.b32.xlu0 %v3086, 108
        %v3482 = vpop.permute.xlu0 %3481
        %3483 = vrot.lane.b32.xlu0 %v3087, 108
        %v3484 = vpop.permute.xlu0 %3483
        %3485 = vrot.lane.b32.xlu0 %v3088, 108
        %v3486 = vpop.permute.xlu0 %3485
        %3521 = vrot.lane.b32.xlu0 %v3059, 7
        %v3522 = vpop.permute.xlu0 %3521
        %3523 = vrot.lane.b32.xlu0 %v3060, 7
        %v3524 = vpop.permute.xlu0 %3523
        %3525 = vrot.lane.b32.xlu0 %v3061, 7
        %v3526 = vpop.permute.xlu0 %3525
        %3527 = vrot.lane.b32.xlu0 %v3062, 7
        %v3528 = vpop.permute.xlu0 %3527
        %3529 = vrot.lane.b32.xlu0 %v3063, 7
        %v3530 = vpop.permute.xlu0 %3529
        %3531 = vrot.lane.b32.xlu0 %v3064, 7
        %v3532 = vpop.permute.xlu0 %3531
        %3533 = vrot.lane.b32.xlu0 %v3065, 7
        %v3534 = vpop.permute.xlu0 %3533
        %3535 = vrot.lane.b32.xlu0 %v3066, 7
        %v3536 = vpop.permute.xlu0 %3535
        %3537 = vrot.lane.b32.xlu0 %v3067, 7
        %v3538 = vpop.permute.xlu0 %3537
        %3539 = vrot.lane.b32.xlu0 %v3068, 7
        %v3540 = vpop.permute.xlu0 %3539
        %3541 = vrot.lane.b32.xlu0 %v3069, 7
        %v3542 = vpop.permute.xlu0 %3541
        %3543 = vrot.lane.b32.xlu0 %v3070, 7
        %v3544 = vpop.permute.xlu0 %3543
        %3545 = vrot.lane.b32.xlu0 %v3071, 7
        %v3546 = vpop.permute.xlu0 %3545
        %3547 = vrot.lane.b32.xlu0 %v3072, 7
        %v3548 = vpop.permute.xlu0 %3547
        %3549 = vrot.lane.b32.xlu0 %v3073, 7
        %v3550 = vpop.permute.xlu0 %3549
        %3551 = vrot.lane.b32.xlu0 %v3074, 7
        %v3552 = vpop.permute.xlu0 %3551
        %3553 = vrot.lane.b32.xlu0 %v3075, 7
        %v3554 = vpop.permute.xlu0 %3553
        %3555 = vrot.lane.b32.xlu0 %v3076, 7
        %v3556 = vpop.permute.xlu0 %3555
        %3557 = vrot.lane.b32.xlu0 %v3077, 7
        %v3558 = vpop.permute.xlu0 %3557
        %3559 = vrot.lane.b32.xlu0 %v3078, 7
        %v3560 = vpop.permute.xlu0 %3559
        %3561 = vrot.lane.b32.xlu0 %v3079, 7
        %v3562 = vpop.permute.xlu0 %3561
        %3563 = vrot.lane.b32.xlu0 %v3080, 7
        %v3564 = vpop.permute.xlu0 %3563
        %3565 = vrot.lane.b32.xlu0 %v3081, 7
        %v3566 = vpop.permute.xlu0 %3565
        %3567 = vrot.lane.b32.xlu0 %v3082, 7
        %v3568 = vpop.permute.xlu0 %3567
        %3569 = vrot.lane.b32.xlu0 %v3083, 7
        %v3570 = vpop.permute.xlu0 %3569
        %3571 = vrot.lane.b32.xlu0 %v3084, 7
        %v3572 = vpop.permute.xlu0 %3571
        %3573 = vrot.lane.b32.xlu0 %v3085, 7
        %v3574 = vpop.permute.xlu0 %3573
        %3575 = vrot.lane.b32.xlu0 %v3086, 7
        %v3576 = vpop.permute.xlu0 %3575
        %3577 = vrot.lane.b32.xlu0 %v3087, 7
        %v3578 = vpop.permute.xlu0 %3577
        %3579 = vrot.lane.b32.xlu0 %v3088, 7
        %v3580 = vpop.permute.xlu0 %3579
        %3581 = vrot.lane.b32.xlu0 %v3089, 7
        %v3582 = vpop.permute.xlu0 %3581
        %3583 = vrot.lane.b32.xlu0 %v3090, 7
        %v3584 = vpop.permute.xlu0 %3583
        %3619 = vrot.lane.b32.xlu0 %v3061, 34
        %v3620 = vpop.permute.xlu0 %3619
        %3621 = vrot.lane.b32.xlu0 %v3062, 34
        %v3622 = vpop.permute.xlu0 %3621
        %3623 = vrot.lane.b32.xlu0 %v3063, 34
        %v3624 = vpop.permute.xlu0 %3623
        %3625 = vrot.lane.b32.xlu0 %v3064, 34
        %v3626 = vpop.permute.xlu0 %3625
        %3627 = vrot.lane.b32.xlu0 %v3065, 34
        %v3628 = vpop.permute.xlu0 %3627
        %3629 = vrot.lane.b32.xlu0 %v3066, 34
        %v3630 = vpop.permute.xlu0 %3629
        %3631 = vrot.lane.b32.xlu0 %v3067, 34
        %v3632 = vpop.permute.xlu0 %3631
        %3633 = vrot.lane.b32.xlu0 %v3068, 34
        %v3634 = vpop.permute.xlu0 %3633
        %3635 = vrot.lane.b32.xlu0 %v3069, 34
        %v3636 = vpop.permute.xlu0 %3635
        %3637 = vrot.lane.b32.xlu0 %v3070, 34
        %v3638 = vpop.permute.xlu0 %3637
        %3639 = vrot.lane.b32.xlu0 %v3071, 34
        %v3640 = vpop.permute.xlu0 %3639
        %3641 = vrot.lane.b32.xlu0 %v3072, 34
        %v3642 = vpop.permute.xlu0 %3641
        %3643 = vrot.lane.b32.xlu0 %v3073, 34
        %v3644 = vpop.permute.xlu0 %3643
        %3645 = vrot.lane.b32.xlu0 %v3074, 34
        %v3646 = vpop.permute.xlu0 %3645
        %3647 = vrot.lane.b32.xlu0 %v3075, 34
        %v3648 = vpop.permute.xlu0 %3647
        %3649 = vrot.lane.b32.xlu0 %v3076, 34
        %v3650 = vpop.permute.xlu0 %3649
        %3651 = vrot.lane.b32.xlu0 %v3077, 34
        %v3652 = vpop.permute.xlu0 %3651
        %3653 = vrot.lane.b32.xlu0 %v3078, 34
        %v3654 = vpop.permute.xlu0 %3653
        %3655 = vrot.lane.b32.xlu0 %v3079, 34
        %v3656 = vpop.permute.xlu0 %3655
        %3657 = vrot.lane.b32.xlu0 %v3080, 34
        %v3658 = vpop.permute.xlu0 %3657
        %3659 = vrot.lane.b32.xlu0 %v3081, 34
        %v3660 = vpop.permute.xlu0 %3659
        %3661 = vrot.lane.b32.xlu0 %v3082, 34
        %v3662 = vpop.permute.xlu0 %3661
        %3663 = vrot.lane.b32.xlu0 %v3083, 34
        %v3664 = vpop.permute.xlu0 %3663
        %3665 = vrot.lane.b32.xlu0 %v3084, 34
        %v3666 = vpop.permute.xlu0 %3665
        %3667 = vrot.lane.b32.xlu0 %v3085, 34
        %v3668 = vpop.permute.xlu0 %3667
        %3669 = vrot.lane.b32.xlu0 %v3086, 34
        %v3670 = vpop.permute.xlu0 %3669
        %3671 = vrot.lane.b32.xlu0 %v3087, 34
        %v3672 = vpop.permute.xlu0 %3671
        %3673 = vrot.lane.b32.xlu0 %v3088, 34
        %v3674 = vpop.permute.xlu0 %3673
        %3675 = vrot.lane.b32.xlu0 %v3089, 34
        %v3676 = vpop.permute.xlu0 %3675
        %3677 = vrot.lane.b32.xlu0 %v3090, 34
        %v3678 = vpop.permute.xlu0 %3677
        %3679 = vrot.lane.b32.xlu0 %v3091, 34
        %v3680 = vpop.permute.xlu0 %3679
        %3681 = vrot.lane.b32.xlu0 %v3092, 34
        %v3682 = vpop.permute.xlu0 %3681
        %3717 = vrot.lane.b32.xlu0 %v3063, 61
        %v3718 = vpop.permute.xlu0 %3717
        %3719 = vrot.lane.b32.xlu0 %v3064, 61
        %v3720 = vpop.permute.xlu0 %3719
        %3721 = vrot.lane.b32.xlu0 %v3065, 61
        %v3722 = vpop.permute.xlu0 %3721
        %3723 = vrot.lane.b32.xlu0 %v3066, 61
        %v3724 = vpop.permute.xlu0 %3723
        %3725 = vrot.lane.b32.xlu0 %v3067, 61
        %v3726 = vpop.permute.xlu0 %3725
        %3727 = vrot.lane.b32.xlu0 %v3068, 61
        %v3728 = vpop.permute.xlu0 %3727
        %3729 = vrot.lane.b32.xlu0 %v3069, 61
        %v3730 = vpop.permute.xlu0 %3729
        %3731 = vrot.lane.b32.xlu0 %v3070, 61
        %v3732 = vpop.permute.xlu0 %3731
        %3733 = vrot.lane.b32.xlu0 %v3071, 61
        %v3734 = vpop.permute.xlu0 %3733
        %3735 = vrot.lane.b32.xlu0 %v3072, 61
        %v3736 = vpop.permute.xlu0 %3735
        %3737 = vrot.lane.b32.xlu0 %v3073, 61
        %v3738 = vpop.permute.xlu0 %3737
        %3739 = vrot.lane.b32.xlu0 %v3074, 61
        %v3740 = vpop.permute.xlu0 %3739
        %3741 = vrot.lane.b32.xlu0 %v3075, 61
        %v3742 = vpop.permute.xlu0 %3741
        %3743 = vrot.lane.b32.xlu0 %v3076, 61
        %v3744 = vpop.permute.xlu0 %3743
        %3745 = vrot.lane.b32.xlu0 %v3077, 61
        %v3746 = vpop.permute.xlu0 %3745
        %3747 = vrot.lane.b32.xlu0 %v3078, 61
        %v3748 = vpop.permute.xlu0 %3747
        %3749 = vrot.lane.b32.xlu0 %v3079, 61
        %v3750 = vpop.permute.xlu0 %3749
        %3751 = vrot.lane.b32.xlu0 %v3080, 61
        %v3752 = vpop.permute.xlu0 %3751
        %3753 = vrot.lane.b32.xlu0 %v3081, 61
        %v3754 = vpop.permute.xlu0 %3753
        %3755 = vrot.lane.b32.xlu0 %v3082, 61
        %v3756 = vpop.permute.xlu0 %3755
        %3757 = vrot.lane.b32.xlu0 %v3083, 61
        %v3758 = vpop.permute.xlu0 %3757
        %3759 = vrot.lane.b32.xlu0 %v3084, 61
        %v3760 = vpop.permute.xlu0 %3759
        %3761 = vrot.lane.b32.xlu0 %v3085, 61
        %v3762 = vpop.permute.xlu0 %3761
        %3763 = vrot.lane.b32.xlu0 %v3086, 61
        %v3764 = vpop.permute.xlu0 %3763
        %3765 = vrot.lane.b32.xlu0 %v3087, 61
        %v3766 = vpop.permute.xlu0 %3765
        %3767 = vrot.lane.b32.xlu0 %v3088, 61
        %v3768 = vpop.permute.xlu0 %3767
        %3769 = vrot.lane.b32.xlu0 %v3089, 61
        %v3770 = vpop.permute.xlu0 %3769
        %3771 = vrot.lane.b32.xlu0 %v3090, 61
        %v3772 = vpop.permute.xlu0 %3771
        %3773 = vrot.lane.b32.xlu0 %v3091, 61
        %v3774 = vpop.permute.xlu0 %3773
        %3775 = vrot.lane.b32.xlu0 %v3092, 61
        %v3776 = vpop.permute.xlu0 %3775
        %3777 = vrot.lane.b32.xlu0 %v3093, 61
        %v3778 = vpop.permute.xlu0 %3777
        %3779 = vrot.lane.b32.xlu0 %v3094, 61
        %v3780 = vpop.permute.xlu0 %3779
        %3815 = vrot.lane.b32.xlu0 %v3065, 88
        %v3816 = vpop.permute.xlu0 %3815
        %3817 = vrot.lane.b32.xlu0 %v3066, 88
        %v3818 = vpop.permute.xlu0 %3817
        %3819 = vrot.lane.b32.xlu0 %v3067, 88
        %v3820 = vpop.permute.xlu0 %3819
        %3821 = vrot.lane.b32.xlu0 %v3068, 88
        %v3822 = vpop.permute.xlu0 %3821
        %3823 = vrot.lane.b32.xlu0 %v3069, 88
        %v3824 = vpop.permute.xlu0 %3823
        %3825 = vrot.lane.b32.xlu0 %v3070, 88
        %v3826 = vpop.permute.xlu0 %3825
        %3827 = vrot.lane.b32.xlu0 %v3071, 88
        %v3828 = vpop.permute.xlu0 %3827
        %3829 = vrot.lane.b32.xlu0 %v3072, 88
        %v3830 = vpop.permute.xlu0 %3829
        %3831 = vrot.lane.b32.xlu0 %v3073, 88
        %v3832 = vpop.permute.xlu0 %3831
        %3833 = vrot.lane.b32.xlu0 %v3074, 88
        %v3834 = vpop.permute.xlu0 %3833
        %3835 = vrot.lane.b32.xlu0 %v3075, 88
        %v3836 = vpop.permute.xlu0 %3835
        %3837 = vrot.lane.b32.xlu0 %v3076, 88
        %v3838 = vpop.permute.xlu0 %3837
        %3839 = vrot.lane.b32.xlu0 %v3077, 88
        %v3840 = vpop.permute.xlu0 %3839
        %3841 = vrot.lane.b32.xlu0 %v3078, 88
        %v3842 = vpop.permute.xlu0 %3841
        %3843 = vrot.lane.b32.xlu0 %v3079, 88
        %v3844 = vpop.permute.xlu0 %3843
        %3845 = vrot.lane.b32.xlu0 %v3080, 88
        %v3846 = vpop.permute.xlu0 %3845
        %3847 = vrot.lane.b32.xlu0 %v3081, 88
        %v3848 = vpop.permute.xlu0 %3847
        %3849 = vrot.lane.b32.xlu0 %v3082, 88
        %v3850 = vpop.permute.xlu0 %3849
        %3851 = vrot.lane.b32.xlu0 %v3083, 88
        %v3852 = vpop.permute.xlu0 %3851
        %3853 = vrot.lane.b32.xlu0 %v3084, 88
        %v3854 = vpop.permute.xlu0 %3853
        %3855 = vrot.lane.b32.xlu0 %v3085, 88
        %v3856 = vpop.permute.xlu0 %3855
        %3857 = vrot.lane.b32.xlu0 %v3086, 88
        %v3858 = vpop.permute.xlu0 %3857
        %3859 = vrot.lane.b32.xlu0 %v3087, 88
        %v3860 = vpop.permute.xlu0 %3859
        %3861 = vrot.lane.b32.xlu0 %v3088, 88
        %v3862 = vpop.permute.xlu0 %3861
        %3863 = vrot.lane.b32.xlu0 %v3089, 88
        %v3864 = vpop.permute.xlu0 %3863
        %3865 = vrot.lane.b32.xlu0 %v3090, 88
        %v3866 = vpop.permute.xlu0 %3865
        %3867 = vrot.lane.b32.xlu0 %v3091, 88
        %v3868 = vpop.permute.xlu0 %3867
        %3869 = vrot.lane.b32.xlu0 %v3092, 88
        %v3870 = vpop.permute.xlu0 %3869
        %3871 = vrot.lane.b32.xlu0 %v3093, 88
        %v3872 = vpop.permute.xlu0 %3871
        %3873 = vrot.lane.b32.xlu0 %v3094, 88
        %v3874 = vpop.permute.xlu0 %3873
        %3875 = vrot.lane.b32.xlu0 %v3095, 88
        %v3876 = vpop.permute.xlu0 %3875
        %3877 = vrot.lane.b32.xlu0 %v3096, 88
        %v3878 = vpop.permute.xlu0 %3877
        %vm3911 = vcmask 220160
        %v3912 = vsel %vm3911, %v3049, %v3130
        %v3913 = vsel %vm3911, %v3050, %v3132
        %v3914 = vsel %vm3911, %v3051, %v3134
        %v3915 = vsel %vm3911, %v3052, %v3136
        %v3916 = vsel %vm3911, %v3053, %v3138
        %v3917 = vsel %vm3911, %v3054, %v3140
        %v3918 = vsel %vm3911, %v3055, %v3142
        %v3919 = vsel %vm3911, %v3056, %v3144
        %v3920 = vsel %vm3911, %v3057, %v3146
        %v3921 = vsel %vm3911, %v3058, %v3148
        %v3922 = vsel %vm3911, %v3059, %v3150
        %v3923 = vsel %vm3911, %v3060, %v3152
        %v3924 = vsel %vm3911, %v3061, %v3154
        %v3925 = vsel %vm3911, %v3062, %v3156
        %v3926 = vsel %vm3911, %v3063, %v3158
        %v3927 = vsel %vm3911, %v3064, %v3160
        %v3928 = vsel %vm3911, %v3065, %v3162
        %v3929 = vsel %vm3911, %v3066, %v3164
        %v3930 = vsel %vm3911, %v3067, %v3166
        %v3931 = vsel %vm3911, %v3068, %v3168
        %v3932 = vsel %vm3911, %v3069, %v3170
        %v3933 = vsel %vm3911, %v3070, %v3172
        %v3934 = vsel %vm3911, %v3071, %v3174
        %v3935 = vsel %vm3911, %v3072, %v3176
        %v3936 = vsel %vm3911, %v3073, %v3178
        %v3937 = vsel %vm3911, %v3074, %v3180
        %v3938 = vsel %vm3911, %v3075, %v3182
        %v3939 = vsel %vm3911, %v3076, %v3184
        %v3940 = vsel %vm3911, %v3077, %v3186
        %v3941 = vsel %vm3911, %v3078, %v3188
        %v3942 = vsel %vm3911, %v3079, %v3190
        %v3943 = vsel %vm3911, %v3080, %v3192
        %vm3944 = vcmask 441344
        %v3945 = vsel %vm3944, %v3912, %v3228
        %v3946 = vsel %vm3944, %v3913, %v3230
        %v3947 = vsel %vm3944, %v3914, %v3232
        %v3948 = vsel %vm3944, %v3915, %v3234
        %v3949 = vsel %vm3944, %v3916, %v3236
        %v3950 = vsel %vm3944, %v3917, %v3238
        %v3951 = vsel %vm3944, %v3918, %v3240
        %v3952 = vsel %vm3944, %v3919, %v3242
        %v3953 = vsel %vm3944, %v3920, %v3244
        %v3954 = vsel %vm3944, %v3921, %v3246
        %v3955 = vsel %vm3944, %v3922, %v3248
        %v3956 = vsel %vm3944, %v3923, %v3250
        %v3957 = vsel %vm3944, %v3924, %v3252
        %v3958 = vsel %vm3944, %v3925, %v3254
        %v3959 = vsel %vm3944, %v3926, %v3256
        %v3960 = vsel %vm3944, %v3927, %v3258
        %v3961 = vsel %vm3944, %v3928, %v3260
        %v3962 = vsel %vm3944, %v3929, %v3262
        %v3963 = vsel %vm3944, %v3930, %v3264
        %v3964 = vsel %vm3944, %v3931, %v3266
        %v3965 = vsel %vm3944, %v3932, %v3268
        %v3966 = vsel %vm3944, %v3933, %v3270
        %v3967 = vsel %vm3944, %v3934, %v3272
        %v3968 = vsel %vm3944, %v3935, %v3274
        %v3969 = vsel %vm3944, %v3936, %v3276
        %v3970 = vsel %vm3944, %v3937, %v3278
        %v3971 = vsel %vm3944, %v3938, %v3280
        %v3972 = vsel %vm3944, %v3939, %v3282
        %v3973 = vsel %vm3944, %v3940, %v3284
        %v3974 = vsel %vm3944, %v3941, %v3286
        %v3975 = vsel %vm3944, %v3942, %v3288
        %v3976 = vsel %vm3944, %v3943, %v3290
        %vm3977 = vcmask 662528
        %v3978 = vsel %vm3977, %v3945, %v3326
        %v3979 = vsel %vm3977, %v3946, %v3328
        %v3980 = vsel %vm3977, %v3947, %v3330
        %v3981 = vsel %vm3977, %v3948, %v3332
        %v3982 = vsel %vm3977, %v3949, %v3334
        %v3983 = vsel %vm3977, %v3950, %v3336
        %v3984 = vsel %vm3977, %v3951, %v3338
        %v3985 = vsel %vm3977, %v3952, %v3340
        %v3986 = vsel %vm3977, %v3953, %v3342
        %v3987 = vsel %vm3977, %v3954, %v3344
        %v3988 = vsel %vm3977, %v3955, %v3346
        %v3989 = vsel %vm3977, %v3956, %v3348
        %v3990 = vsel %vm3977, %v3957, %v3350
        %v3991 = vsel %vm3977, %v3958, %v3352
        %v3992 = vsel %vm3977, %v3959, %v3354
        %v3993 = vsel %vm3977, %v3960, %v3356
        %v3994 = vsel %vm3977, %v3961, %v3358
        %v3995 = vsel %vm3977, %v3962, %v3360
        %v3996 = vsel %vm3977, %v3963, %v3362
        %v3997 = vsel %vm3977, %v3964, %v3364
        %v3998 = vsel %vm3977, %v3965, %v3366
        %v3999 = vsel %vm3977, %v3966, %v3368
        %v4000 = vsel %vm3977, %v3967, %v3370
        %v4001 = vsel %vm3977, %v3968, %v3372
        %v4002 = vsel %vm3977, %v3969, %v3374
        %v4003 = vsel %vm3977, %v3970, %v3376
        %v4004 = vsel %vm3977, %v3971, %v3378
        %v4005 = vsel %vm3977, %v3972, %v3380
        %v4006 = vsel %vm3977, %v3973, %v3382
        %v4007 = vsel %vm3977, %v3974, %v3384
        %v4008 = vsel %vm3977, %v3975, %v3386
        %v4009 = vsel %vm3977, %v3976, %v3388
        %vm4010 = vcmask 883712
        %v4011 = vsel %vm4010, %v3978, %v3424
        %v4012 = vsel %vm4010, %v3979, %v3426
        %v4013 = vsel %vm4010, %v3980, %v3428
        %v4014 = vsel %vm4010, %v3981, %v3430
        %v4015 = vsel %vm4010, %v3982, %v3432
        %v4016 = vsel %vm4010, %v3983, %v3434
        %v4017 = vsel %vm4010, %v3984, %v3436
        %v4018 = vsel %vm4010, %v3985, %v3438
        %v4019 = vsel %vm4010, %v3986, %v3440
        %v4020 = vsel %vm4010, %v3987, %v3442
        %v4021 = vsel %vm4010, %v3988, %v3444
        %v4022 = vsel %vm4010, %v3989, %v3446
        %v4023 = vsel %vm4010, %v3990, %v3448
        %v4024 = vsel %vm4010, %v3991, %v3450
        %v4025 = vsel %vm4010, %v3992, %v3452
        %v4026 = vsel %vm4010, %v3993, %v3454
        %v4027 = vsel %vm4010, %v3994, %v3456
        %v4028 = vsel %vm4010, %v3995, %v3458
        %v4029 = vsel %vm4010, %v3996, %v3460
        %v4030 = vsel %vm4010, %v3997, %v3462
        %v4031 = vsel %vm4010, %v3998, %v3464
        %v4032 = vsel %vm4010, %v3999, %v3466
        %v4033 = vsel %vm4010, %v4000, %v3468
        %v4034 = vsel %vm4010, %v4001, %v3470
        %v4035 = vsel %vm4010, %v4002, %v3472
        %v4036 = vsel %vm4010, %v4003, %v3474
        %v4037 = vsel %vm4010, %v4004, %v3476
        %v4038 = vsel %vm4010, %v4005, %v3478
        %v4039 = vsel %vm4010, %v4006, %v3480
        %v4040 = vsel %vm4010, %v4007, %v3482
        %v4041 = vsel %vm4010, %v4008, %v3484
        %v4042 = vsel %vm4010, %v4009, %v3486
        %vm4043 = vcmask 56320
        %v4044 = vsel %vm4043, %v3424, %v3522
        %v4045 = vsel %vm4043, %v3426, %v3524
        %v4046 = vsel %vm4043, %v3428, %v3526
        %v4047 = vsel %vm4043, %v3430, %v3528
        %v4048 = vsel %vm4043, %v3432, %v3530
        %v4049 = vsel %vm4043, %v3434, %v3532
        %v4050 = vsel %vm4043, %v3436, %v3534
        %v4051 = vsel %vm4043, %v3438, %v3536
        %v4052 = vsel %vm4043, %v3440, %v3538
        %v4053 = vsel %vm4043, %v3442, %v3540
        %v4054 = vsel %vm4043, %v3444, %v3542
        %v4055 = vsel %vm4043, %v3446, %v3544
        %v4056 = vsel %vm4043, %v3448, %v3546
        %v4057 = vsel %vm4043, %v3450, %v3548
        %v4058 = vsel %vm4043, %v3452, %v3550
        %v4059 = vsel %vm4043, %v3454, %v3552
        %v4060 = vsel %vm4043, %v3456, %v3554
        %v4061 = vsel %vm4043, %v3458, %v3556
        %v4062 = vsel %vm4043, %v3460, %v3558
        %v4063 = vsel %vm4043, %v3462, %v3560
        %v4064 = vsel %vm4043, %v3464, %v3562
        %v4065 = vsel %vm4043, %v3466, %v3564
        %v4066 = vsel %vm4043, %v3468, %v3566
        %v4067 = vsel %vm4043, %v3470, %v3568
        %v4068 = vsel %vm4043, %v3472, %v3570
        %v4069 = vsel %vm4043, %v3474, %v3572
        %v4070 = vsel %vm4043, %v3476, %v3574
        %v4071 = vsel %vm4043, %v3478, %v3576
        %v4072 = vsel %vm4043, %v3480, %v3578
        %v4073 = vsel %vm4043, %v3482, %v3580
        %v4074 = vsel %vm4043, %v3484, %v3582
        %v4075 = vsel %vm4043, %v3486, %v3584
        %vm4076 = vcmask 277504
        %v4077 = vsel %vm4076, %v4044, %v3620
        %v4078 = vsel %vm4076, %v4045, %v3622
        %v4079 = vsel %vm4076, %v4046, %v3624
        %v4080 = vsel %vm4076, %v4047, %v3626
        %v4081 = vsel %vm4076, %v4048, %v3628
        %v4082 = vsel %vm4076, %v4049, %v3630
        %v4083 = vsel %vm4076, %v4050, %v3632
        %v4084 = vsel %vm4076, %v4051, %v3634
        %v4085 = vsel %vm4076, %v4052, %v3636
        %v4086 = vsel %vm4076, %v4053, %v3638
        %v4087 = vsel %vm4076, %v4054, %v3640
        %v4088 = vsel %vm4076, %v4055, %v3642
        %v4089 = vsel %vm4076, %v4056, %v3644
        %v4090 = vsel %vm4076, %v4057, %v3646
        %v4091 = vsel %vm4076, %v4058, %v3648
        %v4092 = vsel %vm4076, %v4059, %v3650
        %v4093 = vsel %vm4076, %v4060, %v3652
        %v4094 = vsel %vm4076, %v4061, %v3654
        %v4095 = vsel %vm4076, %v4062, %v3656
        %v4096 = vsel %vm4076, %v4063, %v3658
        %v4097 = vsel %vm4076, %v4064, %v3660
        %v4098 = vsel %vm4076, %v4065, %v3662
        %v4099 = vsel %vm4076, %v4066, %v3664
        %v4100 = vsel %vm4076, %v4067, %v3666
        %v4101 = vsel %vm4076, %v4068, %v3668
        %v4102 = vsel %vm4076, %v4069, %v3670
        %v4103 = vsel %vm4076, %v4070, %v3672
        %v4104 = vsel %vm4076, %v4071, %v3674
        %v4105 = vsel %vm4076, %v4072, %v3676
        %v4106 = vsel %vm4076, %v4073, %v3678
        %v4107 = vsel %vm4076, %v4074, %v3680
        %v4108 = vsel %vm4076, %v4075, %v3682
        %vm4109 = vcmask 498688
        %v4110 = vsel %vm4109, %v4077, %v3718
        %v4111 = vsel %vm4109, %v4078, %v3720
        %v4112 = vsel %vm4109, %v4079, %v3722
        %v4113 = vsel %vm4109, %v4080, %v3724
        %v4114 = vsel %vm4109, %v4081, %v3726
        %v4115 = vsel %vm4109, %v4082, %v3728
        %v4116 = vsel %vm4109, %v4083, %v3730
        %v4117 = vsel %vm4109, %v4084, %v3732
        %v4118 = vsel %vm4109, %v4085, %v3734
        %v4119 = vsel %vm4109, %v4086, %v3736
        %v4120 = vsel %vm4109, %v4087, %v3738
        %v4121 = vsel %vm4109, %v4088, %v3740
        %v4122 = vsel %vm4109, %v4089, %v3742
        %v4123 = vsel %vm4109, %v4090, %v3744
        %v4124 = vsel %vm4109, %v4091, %v3746
        %v4125 = vsel %vm4109, %v4092, %v3748
        %v4126 = vsel %vm4109, %v4093, %v3750
        %v4127 = vsel %vm4109, %v4094, %v3752
        %v4128 = vsel %vm4109, %v4095, %v3754
        %v4129 = vsel %vm4109, %v4096, %v3756
        %v4130 = vsel %vm4109, %v4097, %v3758
        %v4131 = vsel %vm4109, %v4098, %v3760
        %v4132 = vsel %vm4109, %v4099, %v3762
        %v4133 = vsel %vm4109, %v4100, %v3764
        %v4134 = vsel %vm4109, %v4101, %v3766
        %v4135 = vsel %vm4109, %v4102, %v3768
        %v4136 = vsel %vm4109, %v4103, %v3770
        %v4137 = vsel %vm4109, %v4104, %v3772
        %v4138 = vsel %vm4109, %v4105, %v3774
        %v4139 = vsel %vm4109, %v4106, %v3776
        %v4140 = vsel %vm4109, %v4107, %v3778
        %v4141 = vsel %vm4109, %v4108, %v3780
        %vm4142 = vcmask 719872
        %v4143 = vsel %vm4142, %v4110, %v3816
        %v4144 = vsel %vm4142, %v4111, %v3818
        %v4145 = vsel %vm4142, %v4112, %v3820
        %v4146 = vsel %vm4142, %v4113, %v3822
        %v4147 = vsel %vm4142, %v4114, %v3824
        %v4148 = vsel %vm4142, %v4115, %v3826
        %v4149 = vsel %vm4142, %v4116, %v3828
        %v4150 = vsel %vm4142, %v4117, %v3830
        %v4151 = vsel %vm4142, %v4118, %v3832
        %v4152 = vsel %vm4142, %v4119, %v3834
        %v4153 = vsel %vm4142, %v4120, %v3836
        %v4154 = vsel %vm4142, %v4121, %v3838
        %v4155 = vsel %vm4142, %v4122, %v3840
        %v4156 = vsel %vm4142, %v4123, %v3842
        %v4157 = vsel %vm4142, %v4124, %v3844
        %v4158 = vsel %vm4142, %v4125, %v3846
        %v4159 = vsel %vm4142, %v4126, %v3848
        %v4160 = vsel %vm4142, %v4127, %v3850
        %v4161 = vsel %vm4142, %v4128, %v3852
        %v4162 = vsel %vm4142, %v4129, %v3854
        %v4163 = vsel %vm4142, %v4130, %v3856
        %v4164 = vsel %vm4142, %v4131, %v3858
        %v4165 = vsel %vm4142, %v4132, %v3860
        %v4166 = vsel %vm4142, %v4133, %v3862
        %v4167 = vsel %vm4142, %v4134, %v3864
        %v4168 = vsel %vm4142, %v4135, %v3866
        %v4169 = vsel %vm4142, %v4136, %v3868
        %v4170 = vsel %vm4142, %v4137, %v3870
        %v4171 = vsel %vm4142, %v4138, %v3872
        %v4172 = vsel %vm4142, %v4139, %v3874
        %v4173 = vsel %vm4142, %v4140, %v3876
        %v4174 = vsel %vm4142, %v4141, %v3878
        %v4175 = vld [vmem:[#allocation8] sm:$0xff]
        %v4176 = vld [vmem:[#allocation8 + $0x8] sm:$0xff]
        %v4177 = vld [vmem:[#allocation8 + $0x10] sm:$0xff]
        %v4178 = vld [vmem:[#allocation8 + $0x18] sm:$0xff]
        %v4179 = vld [vmem:[#allocation8 + $0x20] sm:$0xff]
        %v4180 = vld [vmem:[#allocation8 + $0x28] sm:$0xff]
        %v4181 = vld [vmem:[#allocation8 + $0x30] sm:$0xff]
        %v4182 = vld [vmem:[#allocation8 + $0x38] sm:$0xff]
        %v4183 = vld [vmem:[#allocation8 + $0x40] sm:$0xff]
        %v4184 = vld [vmem:[#allocation8 + $0x48] sm:$0xff]
        %v4185 = vld [vmem:[#allocation8 + $0x50] sm:$0xff]
        %v4186 = vld [vmem:[#allocation8 + $0x58] sm:$0xff]
        %v4187 = vld [vmem:[#allocation8 + $0x60] sm:$0xff]
        %v4188 = vld [vmem:[#allocation8 + $0x68] sm:$0xff]
        %v4189 = vld [vmem:[#allocation8 + $0x70] sm:$0xff]
        %v4190 = vld [vmem:[#allocation8 + $0x78] sm:$0xff]
        %v4191 = vld [vmem:[#allocation8 + $0x80] sm:$0xff]
        %v4192 = vld [vmem:[#allocation8 + $0x88] sm:$0xff]
        %v4193 = vld [vmem:[#allocation8 + $0x90] sm:$0xff]
        %v4194 = vld [vmem:[#allocation8 + $0x98] sm:$0xff]
        %v4195 = vld [vmem:[#allocation8 + $0xa0] sm:$0xff]
        %v4196 = vld [vmem:[#allocation8 + $0xa8] sm:$0xff]
        %v4197 = vld [vmem:[#allocation8 + $0xb0] sm:$0xff]
        %v4198 = vld [vmem:[#allocation8 + $0xb8] sm:$0xff]
        %v4199 = vld [vmem:[#allocation8 + $0xc0] sm:$0xff]
        %v4200 = vld [vmem:[#allocation8 + $0xc8] sm:$0xff]
        %v4201 = vld [vmem:[#allocation8 + $0xd0] sm:$0xff]
        %v4202 = vld [vmem:[#allocation8 + $0xd8] sm:$0xff]
        %v4203 = vld [vmem:[#allocation8 + $0xe0] sm:$0xff]
        %v4204 = vld [vmem:[#allocation8 + $0xe8] sm:$0xff]
        %v4205 = vld [vmem:[#allocation8 + $0xf0] sm:$0x7]
        %v4206 = vld [vmem:[#allocation10] sm:$0x1]
        %v4208 = vlaneseq
        %v4209 = vshrl.u32 %v4208, 7
        %v4210 = vsub.s32 0, %v4209
        %v4211 = vrot.slane %v4206, %v4210
        %vm4213 = vcmask 941056
        %v4215 = vsel %vm4213, %v4143, 0
        %v4218 = vsel %vm4213, %v4144, 0
        %v4221 = vsel %vm4213, %v4145, 0
        %v4224 = vsel %vm4213, %v4146, 0
        %v4227 = vsel %vm4213, %v4147, 0
        %v4230 = vsel %vm4213, %v4148, 0
        %v4233 = vsel %vm4213, %v4149, 0
        %v4236 = vsel %vm4213, %v4150, 0
        %v4239 = vsel %vm4213, %v4151, 0
        %v4242 = vsel %vm4213, %v4152, 0
        %v4245 = vsel %vm4213, %v4153, 0
        %v4248 = vsel %vm4213, %v4154, 0
        %v4251 = vsel %vm4213, %v4155, 0
        %v4254 = vsel %vm4213, %v4156, 0
        %v4257 = vsel %vm4213, %v4157, 0
        %v4260 = vsel %vm4213, %v4158, 0
        %v4263 = vsel %vm4213, %v4159, 0
        %v4266 = vsel %vm4213, %v4160, 0
        %v4269 = vsel %vm4213, %v4161, 0
        %v4272 = vsel %vm4213, %v4162, 0
        %v4275 = vsel %vm4213, %v4163, 0
        %v4278 = vsel %vm4213, %v4164, 0
        %v4281 = vsel %vm4213, %v4165, 0
        %v4284 = vsel %vm4213, %v4166, 0
        %v4287 = vsel %vm4213, %v4167, 0
        %v4290 = vsel %vm4213, %v4168, 0
        %v4293 = vsel %vm4213, %v4169, 0
        %v4296 = vsel %vm4213, %v4170, 0
        %v4299 = vsel %vm4213, %v4171, 0
        %v4302 = vsel %vm4213, %v4172, 0
        %v4305 = vsel %vm4213, %v4173, 0
        %v4308 = vsel %vm4213, %v4174, 0
        %vm4310 = vcmask 1042432
        %v4312 = vsel %vm4310, %v4205, 0
        %4314 = vmatprep.subr.mxu0 0.0
        %4315 = vmatpush1.msra.mxu0 %v4175
        %4316 = vmatprep.subr.mxu0 0.0
        %4317 = vmatpush1.msra.mxu0 %v4176
        %4318 = vmatprep.subr.mxu0 0.0
        %4319 = vmatpush1.msra.mxu0 %v4177
        %4320 = vmatprep.subr.mxu0 0.0
        %4321 = vmatpush1.msra.mxu0 %v4178
        %4322 = vmatprep.subr.mxu0 0.0
        %4323 = vmatpush1.msra.mxu0 %v4179
        %4324 = vmatprep.subr.mxu0 0.0
        %4325 = vmatpush1.msra.mxu0 %v4180
        %4326 = vmatprep.subr.mxu0 0.0
        %4327 = vmatpush1.msra.mxu0 %v4181
        %4328 = vmatprep.subr.mxu0 0.0
        %4329 = vmatpush1.msra.mxu0 %v4182
        %4330 = vmatprep.subr.mxu0 0.0
        %4331 = vmatpush1.msra.mxu0 %v4183
        %4332 = vmatprep.subr.mxu0 0.0
        %4333 = vmatpush1.msra.mxu0 %v4184
        %4334 = vmatprep.subr.mxu0 0.0
        %4335 = vmatpush1.msra.mxu0 %v4185
        %4336 = vmatprep.subr.mxu0 0.0
        %4337 = vmatpush1.msra.mxu0 %v4186
        %4338 = vmatprep.subr.mxu0 0.0
        %4339 = vmatpush1.msra.mxu0 %v4187
        %4340 = vmatprep.subr.mxu0 0.0
        %4341 = vmatpush1.msra.mxu0 %v4188
        %4342 = vmatprep.subr.mxu0 0.0
        %4343 = vmatpush1.msra.mxu0 %v4189
        %4344 = vmatprep.subr.mxu0 0.0
        %4345 = vmatpush1.msra.mxu0 %v4190
        %4346 = vmatprep.subr.mxu0 0.0
        %4347 = vmatpush1.msra.mxu0 %v4191
        %4348 = vmatprep.subr.mxu0 0.0
        %4349 = vmatpush1.msra.mxu0 %v4192
        %4350 = vmatprep.subr.mxu0 0.0
        %4351 = vmatpush1.msra.mxu0 %v4193
        %4352 = vmatprep.subr.mxu0 0.0
        %4353 = vmatpush1.msra.mxu0 %v4194
        %4354 = vmatprep.subr.mxu0 0.0
        %4355 = vmatpush1.msra.mxu0 %v4195
        %4356 = vmatprep.subr.mxu0 0.0
        %4357 = vmatpush1.msra.mxu0 %v4196
        %4358 = vmatprep.subr.mxu0 0.0
        %4359 = vmatpush1.msra.mxu0 %v4197
        %4360 = vmatprep.subr.mxu0 0.0
        %4361 = vmatpush1.msra.mxu0 %v4198
        %4362 = vmatprep.subr.mxu0 0.0
        %4363 = vmatpush1.msra.mxu0 %v4199
        %4364 = vmatprep.subr.mxu0 0.0
        %4365 = vmatpush1.msra.mxu0 %v4200
        %4366 = vmatprep.subr.mxu0 0.0
        %4367 = vmatpush1.msra.mxu0 %v4201
        %4368 = vmatprep.subr.mxu0 0.0
        %4369 = vmatpush1.msra.mxu0 %v4202
        %4370 = vmatprep.subr.mxu0 0.0
        %4371 = vmatpush1.msra.mxu0 %v4203
        %4372 = vmatprep.subr.mxu0 0.0
        %4373 = vmatpush1.msra.mxu0 %v4204
        %4374 = vmatprep.subr.mxu0 0.0
        %4375 = vmatpush1.msra.mxu0 %v4312
        %4376 = vmatprep.subr.mxu0 0.0
        %4377 = vmatpush1.msra.mxu0 0.0
        %4378 = vmatprep.mubr.f32.mxu0 %v4215
        %4379 = vmatmul.mubr.f32.gmra.mrb[0].mxu0 %v4011
        %v4380 = vpop.f32.mrb[0].mxu0
        %v4381 = vadd.f32 %v4211, %v4380
        %v4382 = vpop.f32.mrb[0].mxu0
        %4383 = vmatprep.mubr.f32.mxu0 %v4218
        %4384 = vmatmul.mubr.f32.gmra.mrb[0].mxu0 %v4012
        %v4385 = vpop.f32.mrb[0].mxu0
        %v4386 = vadd.f32 %v4211, %v4385
        %v4387 = vpop.f32.mrb[0].mxu0
        %4388 = vmatprep.mubr.f32.mxu0 %v4221
        %4389 = vmatmul.mubr.f32.gmra.mrb[0].mxu0 %v4013
        %v4390 = vpop.f32.mrb[0].mxu0
        %v4391 = vadd.f32 %v4211, %v4390
        %v4392 = vpop.f32.mrb[0].mxu0
        %4393 = vmatprep.mubr.f32.mxu0 %v4224
        %4394 = vmatmul.mubr.f32.gmra.mrb[0].mxu0 %v4014
        %v4395 = vpop.f32.mrb[0].mxu0
        %v4396 = vadd.f32 %v4211, %v4395
        %v4397 = vpop.f32.mrb[0].mxu0
        %4398 = vmatprep.mubr.f32.mxu0 %v4227
        %4399 = vmatmul.mubr.f32.gmra.mrb[0].mxu0 %v4015
        %v4400 = vpop.f32.mrb[0].mxu0
        %v4401 = vadd.f32 %v4211, %v4400
        %v4402 = vpop.f32.mrb[0].mxu0
        %4403 = vmatprep.mubr.f32.mxu0 %v4230
        %4404 = vmatmul.mubr.f32.gmra.mrb[0].mxu0 %v4016
        %v4405 = vpop.f32.mrb[0].mxu0
        %v4406 = vadd.f32 %v4211, %v4405
        %v4407 = vpop.f32.mrb[0].mxu0
        %4408 = vmatprep.mubr.f32.mxu0 %v4233
        %4409 = vmatmul.mubr.f32.gmra.mrb[0].mxu0 %v4017
        %v4410 = vpop.f32.mrb[0].mxu0
        %v4411 = vadd.f32 %v4211, %v4410
        %v4412 = vpop.f32.mrb[0].mxu0
        %4413 = vmatprep.mubr.f32.mxu0 %v4236
        %4414 = vmatmul.mubr.f32.gmra.mrb[0].mxu0 %v4018
        %v4415 = vpop.f32.mrb[0].mxu0
        %v4416 = vadd.f32 %v4211, %v4415
        %v4417 = vpop.f32.mrb[0].mxu0
        %4418 = vmatprep.mubr.f32.mxu0 %v4239
        %4419 = vmatmul.mubr.f32.gmra.mrb[0].mxu0 %v4019
        %v4420 = vpop.f32.mrb[0].mxu0
        %v4421 = vadd.f32 %v4211, %v4420
        %v4422 = vpop.f32.mrb[0].mxu0
        %4423 = vmatprep.mubr.f32.mxu0 %v4242
        %4424 = vmatmul.mubr.f32.gmra.mrb[0].mxu0 %v4020
        %v4425 = vpop.f32.mrb[0].mxu0
        %v4426 = vadd.f32 %v4211, %v4425
        %v4427 = vpop.f32.mrb[0].mxu0
        %4428 = vmatprep.mubr.f32.mxu0 %v4245
        %4429 = vmatmul.mubr.f32.gmra.mrb[0].mxu0 %v4021
        %v4430 = vpop.f32.mrb[0].mxu0
        %v4431 = vadd.f32 %v4211, %v4430
        %v4432 = vpop.f32.mrb[0].mxu0
        %4433 = vmatprep.mubr.f32.mxu0 %v4248
        %4434 = vmatmul.mubr.f32.gmra.mrb[0].mxu0 %v4022
        %v4435 = vpop.f32.mrb[0].mxu0
        %v4436 = vadd.f32 %v4211, %v4435
        %v4437 = vpop.f32.mrb[0].mxu0
        %4438 = vmatprep.mubr.f32.mxu0 %v4251
        %4439 = vmatmul.mubr.f32.gmra.mrb[0].mxu0 %v4023
        %v4440 = vpop.f32.mrb[0].mxu0
        %v4441 = vadd.f32 %v4211, %v4440
        %v4442 = vpop.f32.mrb[0].mxu0
        %4443 = vmatprep.mubr.f32.mxu0 %v4254
        %4444 = vmatmul.mubr.f32.gmra.mrb[0].mxu0 %v4024
        %v4445 = vpop.f32.mrb[0].mxu0
        %v4446 = vadd.f32 %v4211, %v4445
        %v4447 = vpop.f32.mrb[0].mxu0
        %4448 = vmatprep.mubr.f32.mxu0 %v4257
        %4449 = vmatmul.mubr.f32.gmra.mrb[0].mxu0 %v4025
        %v4450 = vpop.f32.mrb[0].mxu0
        %v4451 = vadd.f32 %v4211, %v4450
        %v4452 = vpop.f32.mrb[0].mxu0
        %4453 = vmatprep.mubr.f32.mxu0 %v4260
        %4454 = vmatmul.mubr.f32.gmra.mrb[0].mxu0 %v4026
        %v4455 = vpop.f32.mrb[0].mxu0
        %v4456 = vadd.f32 %v4211, %v4455
        %v4457 = vpop.f32.mrb[0].mxu0
        %4458 = vmatprep.mubr.f32.mxu0 %v4263
        %4459 = vmatmul.mubr.f32.gmra.mrb[0].mxu0 %v4027
        %v4460 = vpop.f32.mrb[0].mxu0
        %v4461 = vadd.f32 %v4211, %v4460
        %v4462 = vpop.f32.mrb[0].mxu0
        %4463 = vmatprep.mubr.f32.mxu0 %v4266
        %4464 = vmatmul.mubr.f32.gmra.mrb[0].mxu0 %v4028
        %v4465 = vpop.f32.mrb[0].mxu0
        %v4466 = vadd.f32 %v4211, %v4465
        %v4467 = vpop.f32.mrb[0].mxu0
        %4468 = vmatprep.mubr.f32.mxu0 %v4269
        %4469 = vmatmul.mubr.f32.gmra.mrb[0].mxu0 %v4029
        %v4470 = vpop.f32.mrb[0].mxu0
        %v4471 = vadd.f32 %v4211, %v4470
        %v4472 = vpop.f32.mrb[0].mxu0
        %4473 = vmatprep.mubr.f32.mxu0 %v4272
        %4474 = vmatmul.mubr.f32.gmra.mrb[0].mxu0 %v4030
        %v4475 = vpop.f32.mrb[0].mxu0
        %v4476 = vadd.f32 %v4211, %v4475
        %v4477 = vpop.f32.mrb[0].mxu0
        %4478 = vmatprep.mubr.f32.mxu0 %v4275
        %4479 = vmatmul.mubr.f32.gmra.mrb[0].mxu0 %v4031
        %v4480 = vpop.f32.mrb[0].mxu0
        %v4481 = vadd.f32 %v4211, %v4480
        %v4482 = vpop.f32.mrb[0].mxu0
        %4483 = vmatprep.mubr.f32.mxu0 %v4278
        %4484 = vmatmul.mubr.f32.gmra.mrb[0].mxu0 %v4032
        %v4485 = vpop.f32.mrb[0].mxu0
        %v4486 = vadd.f32 %v4211, %v4485
        %v4487 = vpop.f32.mrb[0].mxu0
        %4488 = vmatprep.mubr.f32.mxu0 %v4281
        %4489 = vmatmul.mubr.f32.gmra.mrb[0].mxu0 %v4033
        %v4490 = vpop.f32.mrb[0].mxu0
        %v4491 = vadd.f32 %v4211, %v4490
        %v4492 = vpop.f32.mrb[0].mxu0
        %4493 = vmatprep.mubr.f32.mxu0 %v4284
        %4494 = vmatmul.mubr.f32.gmra.mrb[0].mxu0 %v4034
        %v4495 = vpop.f32.mrb[0].mxu0
        %v4496 = vadd.f32 %v4211, %v4495
        %v4497 = vpop.f32.mrb[0].mxu0
        %4498 = vmatprep.mubr.f32.mxu0 %v4287
        %4499 = vmatmul.mubr.f32.gmra.mrb[0].mxu0 %v4035
        %v4500 = vpop.f32.mrb[0].mxu0
        %v4501 = vadd.f32 %v4211, %v4500
        %v4502 = vpop.f32.mrb[0].mxu0
        %4503 = vmatprep.mubr.f32.mxu0 %v4290
        %4504 = vmatmul.mubr.f32.gmra.mrb[0].mxu0 %v4036
        %v4505 = vpop.f32.mrb[0].mxu0
        %v4506 = vadd.f32 %v4211, %v4505
        %v4507 = vpop.f32.mrb[0].mxu0
        %4508 = vmatprep.mubr.f32.mxu0 %v4293
        %4509 = vmatmul.mubr.f32.gmra.mrb[0].mxu0 %v4037
        %v4510 = vpop.f32.mrb[0].mxu0
        %v4511 = vadd.f32 %v4211, %v4510
        %v4512 = vpop.f32.mrb[0].mxu0
        %4513 = vmatprep.mubr.f32.mxu0 %v4296
        %4514 = vmatmul.mubr.f32.gmra.mrb[0].mxu0 %v4038
        %v4515 = vpop.f32.mrb[0].mxu0
        %v4516 = vadd.f32 %v4211, %v4515
        %v4517 = vpop.f32.mrb[0].mxu0
        %4518 = vmatprep.mubr.f32.mxu0 %v4299
        %4519 = vmatmul.mubr.f32.gmra.mrb[0].mxu0 %v4039
        %v4520 = vpop.f32.mrb[0].mxu0
        %v4521 = vadd.f32 %v4211, %v4520
        %v4522 = vpop.f32.mrb[0].mxu0
        %4523 = vmatprep.mubr.f32.mxu0 %v4302
        %4524 = vmatmul.mubr.f32.gmra.mrb[0].mxu0 %v4040
        %v4525 = vpop.f32.mrb[0].mxu0
        %v4526 = vadd.f32 %v4211, %v4525
        %v4527 = vpop.f32.mrb[0].mxu0
        %4528 = vmatprep.mubr.f32.mxu0 %v4305
        %4529 = vmatmul.mubr.f32.gmra.mrb[0].mxu0 %v4041
        %v4530 = vpop.f32.mrb[0].mxu0
        %v4531 = vadd.f32 %v4211, %v4530
        %v4532 = vpop.f32.mrb[0].mxu0
        %4533 = vmatprep.mubr.f32.mxu0 %v4308
        %4534 = vmatmul.mubr.f32.gmra.mrb[0].mxu0 %v4042
        %v4535 = vpop.f32.mrb[0].mxu0
        %v4536 = vadd.f32 %v4211, %v4535
        %v4537 = vpop.f32.mrb[0].mxu0
        %4538 = vdwg.mxu0
        %v4539 = vmax.f32 %v4381, 0.0
        %v4540 = vmax.f32 %v4386, 0.0
        %v4541 = vmax.f32 %v4391, 0.0
        %v4542 = vmax.f32 %v4396, 0.0
        %v4543 = vmax.f32 %v4401, 0.0
        %v4544 = vmax.f32 %v4406, 0.0
        %v4545 = vmax.f32 %v4411, 0.0
        %v4546 = vmax.f32 %v4416, 0.0
        %v4547 = vmax.f32 %v4421, 0.0
        %v4548 = vmax.f32 %v4426, 0.0
        %v4549 = vmax.f32 %v4431, 0.0
        %v4550 = vmax.f32 %v4436, 0.0
        %v4551 = vmax.f32 %v4441, 0.0
        %v4552 = vmax.f32 %v4446, 0.0
        %v4553 = vmax.f32 %v4451, 0.0
        %v4554 = vmax.f32 %v4456, 0.0
        %v4555 = vmax.f32 %v4461, 0.0
        %v4556 = vmax.f32 %v4466, 0.0
        %v4557 = vmax.f32 %v4471, 0.0
        %v4558 = vmax.f32 %v4476, 0.0
        %v4559 = vmax.f32 %v4481, 0.0
        %v4560 = vmax.f32 %v4486, 0.0
        %v4561 = vmax.f32 %v4491, 0.0
        %v4562 = vmax.f32 %v4496, 0.0
        %v4563 = vmax.f32 %v4501, 0.0
        %v4564 = vmax.f32 %v4506, 0.0
        %v4565 = vmax.f32 %v4511, 0.0
        %v4566 = vmax.f32 %v4516, 0.0
        %v4567 = vmax.f32 %v4521, 0.0
        %v4568 = vmax.f32 %v4526, 0.0
        %v4569 = vmax.f32 %v4531, 0.0
        %v4570 = vmax.f32 %v4536, 0.0
        %v4571 = vld [vmem:[#allocation11] sm:$0xff]
        %v4572 = vld [vmem:[#allocation11 + $0x8] sm:$0xff]
        %v4573 = vld [vmem:[#allocation11 + $0x10] sm:$0xff]
        %v4574 = vld [vmem:[#allocation11 + $0x18] sm:$0xff]
        %v4575 = vld [vmem:[#allocation11 + $0x20] sm:$0xff]
        %v4576 = vld [vmem:[#allocation11 + $0x28] sm:$0xff]
        %v4577 = vld [vmem:[#allocation11 + $0x30] sm:$0xff]
        %v4578 = vld [vmem:[#allocation11 + $0x38] sm:$0xff]
        %v4579 = vld [vmem:[#allocation13] sm:$0x1]
        %v4581 = vlaneseq
        %v4582 = vshrl.u32 %v4581, 7
        %v4583 = vsub.s32 0, %v4582
        %v4584 = vrot.slane %v4579, %v4583
        %v4587 = vsel %vm600, %v4539, 0
        %v4590 = vsel %vm600, %v4540, 0
        %v4593 = vsel %vm600, %v4541, 0
        %v4596 = vsel %vm600, %v4542, 0
        %v4599 = vsel %vm600, %v4543, 0
        %v4602 = vsel %vm600, %v4544, 0
        %v4605 = vsel %vm600, %v4545, 0
        %v4608 = vsel %vm600, %v4546, 0
        %v4611 = vsel %vm600, %v4547, 0
        %v4614 = vsel %vm600, %v4548, 0
        %v4617 = vsel %vm600, %v4549, 0
        %v4620 = vsel %vm600, %v4550, 0
        %v4623 = vsel %vm600, %v4551, 0
        %v4626 = vsel %vm600, %v4552, 0
        %v4629 = vsel %vm600, %v4553, 0
        %v4632 = vsel %vm600, %v4554, 0
        %v4635 = vsel %vm600, %v4555, 0
        %v4638 = vsel %vm600, %v4556, 0
        %v4641 = vsel %vm600, %v4557, 0
        %v4644 = vsel %vm600, %v4558, 0
        %v4647 = vsel %vm600, %v4559, 0
        %v4650 = vsel %vm600, %v4560, 0
        %v4653 = vsel %vm600, %v4561, 0
        %v4656 = vsel %vm600, %v4562, 0
        %v4659 = vsel %vm600, %v4563, 0
        %v4662 = vsel %vm600, %v4564, 0
        %v4665 = vsel %vm600, %v4565, 0
        %v4668 = vsel %vm600, %v4566, 0
        %v4671 = vsel %vm600, %v4567, 0
        %v4674 = vsel %vm600, %v4568, 0
        %v4677 = vsel %vm600, %v4569, 0
        %v4680 = vsel %vm600, %v4570, 0
        %4682 = vmatprep.subr.mxu0 0.0
        %4683 = vmatpush1.msra.mxu0 %v4571
        %4684 = vmatprep.subr.mxu0 0.0
        %4685 = vmatpush1.msra.mxu0 %v4572
        %4686 = vmatprep.subr.mxu0 0.0
        %4687 = vmatpush1.msra.mxu0 %v4573
        %4688 = vmatprep.subr.mxu0 0.0
        %4689 = vmatpush1.msra.mxu0 %v4574
        %4690 = vmatprep.subr.mxu0 0.0
        %4691 = vmatpush1.msra.mxu0 %v4575
        %4692 = vmatprep.subr.mxu0 0.0
        %4693 = vmatpush1.msra.mxu0 %v4576
        %4694 = vmatprep.subr.mxu0 0.0
        %4695 = vmatpush1.msra.mxu0 %v4577
        %4696 = vmatprep.subr.mxu0 0.0
        %4697 = vmatpush1.msra.mxu0 %v4578
        %4698 = vmatprep.subr.mxu0 0.0
        %4699 = vmatpush1.msra.mxu0 0.0
        %4700 = vmatprep.subr.mxu0 0.0
        %4701 = vmatpush1.msra.mxu0 0.0
        %4702 = vmatprep.subr.mxu0 0.0
        %4703 = vmatpush1.msra.mxu0 0.0
        %4704 = vmatprep.subr.mxu0 0.0
        %4705 = vmatpush1.msra.mxu0 0.0
        %4706 = vmatprep.subr.mxu0 0.0
        %4707 = vmatpush1.msra.mxu0 0.0
        %4708 = vmatprep.subr.mxu0 0.0
        %4709 = vmatpush1.msra.mxu0 0.0
        %4710 = vmatprep.subr.mxu0 0.0
        %4711 = vmatpush1.msra.mxu0 0.0
        %4712 = vmatprep.subr.mxu0 0.0
        %4713 = vmatpush1.msra.mxu0 0.0
        %4714 = vmatprep.subr.mxu0 0.0
        %4715 = vmatpush1.msra.mxu0 0.0
        %4716 = vmatprep.subr.mxu0 0.0
        %4717 = vmatpush1.msra.mxu0 0.0
        %4718 = vmatprep.subr.mxu0 0.0
        %4719 = vmatpush1.msra.mxu0 0.0
        %4720 = vmatprep.subr.mxu0 0.0
        %4721 = vmatpush1.msra.mxu0 0.0
        %4722 = vmatprep.subr.mxu0 0.0
        %4723 = vmatpush1.msra.mxu0 0.0
        %4724 = vmatprep.subr.mxu0 0.0
        %4725 = vmatpush1.msra.mxu0 0.0
        %4726 = vmatprep.subr.mxu0 0.0
        %4727 = vmatpush1.msra.mxu0 0.0
        %4728 = vmatprep.subr.mxu0 0.0
        %4729 = vmatpush1.msra.mxu0 0.0
        %4730 = vmatprep.subr.mxu0 0.0
        %4731 = vmatpush1.msra.mxu0 0.0
        %4732 = vmatprep.subr.mxu0 0.0
        %4733 = vmatpush1.msra.mxu0 0.0
        %4734 = vmatprep.subr.mxu0 0.0
        %4735 = vmatpush1.msra.mxu0 0.0
        %4736 = vmatprep.subr.mxu0 0.0
        %4737 = vmatpush1.msra.mxu0 0.0
        %4738 = vmatprep.subr.mxu0 0.0
        %4739 = vmatpush1.msra.mxu0 0.0
        %4740 = vmatprep.subr.mxu0 0.0
        %4741 = vmatpush1.msra.mxu0 0.0
        %4742 = vmatprep.subr.mxu0 0.0
        %4743 = vmatpush1.msra.mxu0 0.0
        %4744 = vmatprep.subr.mxu0 0.0
        %4745 = vmatpush1.msra.mxu0 0.0
        %4746 = vmatprep.mubr.f32.mxu0 0.0
        %4747 = vmatmul.mubr.f32.gmra.mrb[0].mxu0 %v4587
        %v4748 = vpop.f32.mrb[0].mxu0
        %v4749 = vadd.f32 %v4584, %v4748
        %v4750 = vpop.f32.mrb[0].mxu0
        %4751 = vmatprep.mubr.f32.mxu0 0.0
        %4752 = vmatmul.mubr.f32.gmra.mrb[0].mxu0 %v4590
        %v4753 = vpop.f32.mrb[0].mxu0
        %v4754 = vadd.f32 %v4584, %v4753
        %v4755 = vpop.f32.mrb[0].mxu0
        %4756 = vmatprep.mubr.f32.mxu0 0.0
        %4757 = vmatmul.mubr.f32.gmra.mrb[0].mxu0 %v4593
        %v4758 = vpop.f32.mrb[0].mxu0
        %v4759 = vadd.f32 %v4584, %v4758
        %v4760 = vpop.f32.mrb[0].mxu0
        %4761 = vmatprep.mubr.f32.mxu0 0.0
        %4762 = vmatmul.mubr.f32.gmra.mrb[0].mxu0 %v4596
        %v4763 = vpop.f32.mrb[0].mxu0
        %v4764 = vadd.f32 %v4584, %v4763
        %v4765 = vpop.f32.mrb[0].mxu0
        %4766 = vmatprep.mubr.f32.mxu0 0.0
        %4767 = vmatmul.mubr.f32.gmra.mrb[0].mxu0 %v4599
        %v4768 = vpop.f32.mrb[0].mxu0
        %v4769 = vadd.f32 %v4584, %v4768
        %v4770 = vpop.f32.mrb[0].mxu0
        %4771 = vmatprep.mubr.f32.mxu0 0.0
        %4772 = vmatmul.mubr.f32.gmra.mrb[0].mxu0 %v4602
        %v4773 = vpop.f32.mrb[0].mxu0
        %v4774 = vadd.f32 %v4584, %v4773
        %v4775 = vpop.f32.mrb[0].mxu0
        %4776 = vmatprep.mubr.f32.mxu0 0.0
        %4777 = vmatmul.mubr.f32.gmra.mrb[0].mxu0 %v4605
        %v4778 = vpop.f32.mrb[0].mxu0
        %v4779 = vadd.f32 %v4584, %v4778
        %v4780 = vpop.f32.mrb[0].mxu0
        %4781 = vmatprep.mubr.f32.mxu0 0.0
        %4782 = vmatmul.mubr.f32.gmra.mrb[0].mxu0 %v4608
        %v4783 = vpop.f32.mrb[0].mxu0
        %v4784 = vadd.f32 %v4584, %v4783
        %v4785 = vpop.f32.mrb[0].mxu0
        %4786 = vmatprep.mubr.f32.mxu0 0.0
        %4787 = vmatmul.mubr.f32.gmra.mrb[0].mxu0 %v4611
        %v4788 = vpop.f32.mrb[0].mxu0
        %v4789 = vadd.f32 %v4584, %v4788
        %v4790 = vpop.f32.mrb[0].mxu0
        %4791 = vmatprep.mubr.f32.mxu0 0.0
        %4792 = vmatmul.mubr.f32.gmra.mrb[0].mxu0 %v4614
        %v4793 = vpop.f32.mrb[0].mxu0
        %v4794 = vadd.f32 %v4584, %v4793
        %v4795 = vpop.f32.mrb[0].mxu0
        %4796 = vmatprep.mubr.f32.mxu0 0.0
        %4797 = vmatmul.mubr.f32.gmra.mrb[0].mxu0 %v4617
        %v4798 = vpop.f32.mrb[0].mxu0
        %v4799 = vadd.f32 %v4584, %v4798
        %v4800 = vpop.f32.mrb[0].mxu0
        %4801 = vmatprep.mubr.f32.mxu0 0.0
        %4802 = vmatmul.mubr.f32.gmra.mrb[0].mxu0 %v4620
        %v4803 = vpop.f32.mrb[0].mxu0
        %v4804 = vadd.f32 %v4584, %v4803
        %v4805 = vpop.f32.mrb[0].mxu0
        %4806 = vmatprep.mubr.f32.mxu0 0.0
        %4807 = vmatmul.mubr.f32.gmra.mrb[0].mxu0 %v4623
        %v4808 = vpop.f32.mrb[0].mxu0
        %v4809 = vadd.f32 %v4584, %v4808
        %v4810 = vpop.f32.mrb[0].mxu0
        %4811 = vmatprep.mubr.f32.mxu0 0.0
        %4812 = vmatmul.mubr.f32.gmra.mrb[0].mxu0 %v4626
        %v4813 = vpop.f32.mrb[0].mxu0
        %v4814 = vadd.f32 %v4584, %v4813
        %v4815 = vpop.f32.mrb[0].mxu0
        %4816 = vmatprep.mubr.f32.mxu0 0.0
        %4817 = vmatmul.mubr.f32.gmra.mrb[0].mxu0 %v4629
        %v4818 = vpop.f32.mrb[0].mxu0
        %v4819 = vadd.f32 %v4584, %v4818
        %v4820 = vpop.f32.mrb[0].mxu0
        %4821 = vmatprep.mubr.f32.mxu0 0.0
        %4822 = vmatmul.mubr.f32.gmra.mrb[0].mxu0 %v4632
        %v4823 = vpop.f32.mrb[0].mxu0
        %v4824 = vadd.f32 %v4584, %v4823
        %v4825 = vpop.f32.mrb[0].mxu0
        %4826 = vmatprep.mubr.f32.mxu0 0.0
        %4827 = vmatmul.mubr.f32.gmra.mrb[0].mxu0 %v4635
        %v4828 = vpop.f32.mrb[0].mxu0
        %v4829 = vadd.f32 %v4584, %v4828
        %v4830 = vpop.f32.mrb[0].mxu0
        %4831 = vmatprep.mubr.f32.mxu0 0.0
        %4832 = vmatmul.mubr.f32.gmra.mrb[0].mxu0 %v4638
        %v4833 = vpop.f32.mrb[0].mxu0
        %v4834 = vadd.f32 %v4584, %v4833
        %v4835 = vpop.f32.mrb[0].mxu0
        %4836 = vmatprep.mubr.f32.mxu0 0.0
        %4837 = vmatmul.mubr.f32.gmra.mrb[0].mxu0 %v4641
        %v4838 = vpop.f32.mrb[0].mxu0
        %v4839 = vadd.f32 %v4584, %v4838
        %v4840 = vpop.f32.mrb[0].mxu0
        %4841 = vmatprep.mubr.f32.mxu0 0.0
        %4842 = vmatmul.mubr.f32.gmra.mrb[0].mxu0 %v4644
        %v4843 = vpop.f32.mrb[0].mxu0
        %v4844 = vadd.f32 %v4584, %v4843
        %v4845 = vpop.f32.mrb[0].mxu0
        %4846 = vmatprep.mubr.f32.mxu0 0.0
        %4847 = vmatmul.mubr.f32.gmra.mrb[0].mxu0 %v4647
        %v4848 = vpop.f32.mrb[0].mxu0
        %v4849 = vadd.f32 %v4584, %v4848
        %v4850 = vpop.f32.mrb[0].mxu0
        %4851 = vmatprep.mubr.f32.mxu0 0.0
        %4852 = vmatmul.mubr.f32.gmra.mrb[0].mxu0 %v4650
        %v4853 = vpop.f32.mrb[0].mxu0
        %v4854 = vadd.f32 %v4584, %v4853
        %v4855 = vpop.f32.mrb[0].mxu0
        %4856 = vmatprep.mubr.f32.mxu0 0.0
        %4857 = vmatmul.mubr.f32.gmra.mrb[0].mxu0 %v4653
        %v4858 = vpop.f32.mrb[0].mxu0
        %v4859 = vadd.f32 %v4584, %v4858
        %v4860 = vpop.f32.mrb[0].mxu0
        %4861 = vmatprep.mubr.f32.mxu0 0.0
        %4862 = vmatmul.mubr.f32.gmra.mrb[0].mxu0 %v4656
        %v4863 = vpop.f32.mrb[0].mxu0
        %v4864 = vadd.f32 %v4584, %v4863
        %v4865 = vpop.f32.mrb[0].mxu0
        %4866 = vmatprep.mubr.f32.mxu0 0.0
        %4867 = vmatmul.mubr.f32.gmra.mrb[0].mxu0 %v4659
        %v4868 = vpop.f32.mrb[0].mxu0
        %v4869 = vadd.f32 %v4584, %v4868
        %v4870 = vpop.f32.mrb[0].mxu0
        %4871 = vmatprep.mubr.f32.mxu0 0.0
        %4872 = vmatmul.mubr.f32.gmra.mrb[0].mxu0 %v4662
        %v4873 = vpop.f32.mrb[0].mxu0
        %v4874 = vadd.f32 %v4584, %v4873
        %v4875 = vpop.f32.mrb[0].mxu0
        %4876 = vmatprep.mubr.f32.mxu0 0.0
        %4877 = vmatmul.mubr.f32.gmra.mrb[0].mxu0 %v4665
        %v4878 = vpop.f32.mrb[0].mxu0
        %v4879 = vadd.f32 %v4584, %v4878
        %v4880 = vpop.f32.mrb[0].mxu0
        %4881 = vmatprep.mubr.f32.mxu0 0.0
        %4882 = vmatmul.mubr.f32.gmra.mrb[0].mxu0 %v4668
        %v4883 = vpop.f32.mrb[0].mxu0
        %v4884 = vadd.f32 %v4584, %v4883
        %v4885 = vpop.f32.mrb[0].mxu0
        %4886 = vmatprep.mubr.f32.mxu0 0.0
        %4887 = vmatmul.mubr.f32.gmra.mrb[0].mxu0 %v4671
        %v4888 = vpop.f32.mrb[0].mxu0
        %v4889 = vadd.f32 %v4584, %v4888
        %v4890 = vpop.f32.mrb[0].mxu0
        %4891 = vmatprep.mubr.f32.mxu0 0.0
        %4892 = vmatmul.mubr.f32.gmra.mrb[0].mxu0 %v4674
        %v4893 = vpop.f32.mrb[0].mxu0
        %v4894 = vadd.f32 %v4584, %v4893
        %v4895 = vpop.f32.mrb[0].mxu0
        %4896 = vmatprep.mubr.f32.mxu0 0.0
        %4897 = vmatmul.mubr.f32.gmra.mrb[0].mxu0 %v4677
        %v4898 = vpop.f32.mrb[0].mxu0
        %v4899 = vadd.f32 %v4584, %v4898
        %v4900 = vpop.f32.mrb[0].mxu0
        %4901 = vmatprep.mubr.f32.mxu0 0.0
        %4902 = vmatmul.mubr.f32.gmra.mrb[0].mxu0 %v4680
        %v4903 = vpop.f32.mrb[0].mxu0
        %v4904 = vadd.f32 %v4584, %v4903
        %v4905 = vpop.f32.mrb[0].mxu0
        %4906 = vdwg.mxu0
        %4907 = vst.msk [vmem:[%s615 + $0x2] sm:$0xff] %vm600, %v4749
        %4908 = vst.msk [vmem:[%s615 + $0xa] sm:$0xff] %vm600, %v4754
        %4909 = vst.msk [vmem:[%s615 + $0x1a] sm:$0xff] %vm600, %v4759
        %4910 = vst.msk [vmem:[%s615 + $0x22] sm:$0xff] %vm600, %v4764
        %4911 = vst.msk [vmem:[%s615 + $0x32] sm:$0xff] %vm600, %v4769
        %4912 = vst.msk [vmem:[%s615 + $0x3a] sm:$0xff] %vm600, %v4774
        %4913 = vst.msk [vmem:[%s615 + $0x4a] sm:$0xff] %vm600, %v4779
        %4914 = vst.msk [vmem:[%s615 + $0x52] sm:$0xff] %vm600, %v4784
        %4915 = vst.msk [vmem:[%s615 + $0x62] sm:$0xff] %vm600, %v4789
        %4916 = vst.msk [vmem:[%s615 + $0x6a] sm:$0xff] %vm600, %v4794
        %4917 = vst.msk [vmem:[%s615 + $0x7a] sm:$0xff] %vm600, %v4799
        %4918 = vst.msk [vmem:[%s615 + $0x82] sm:$0xff] %vm600, %v4804
        %4919 = vst.msk [vmem:[%s615 + $0x92] sm:$0xff] %vm600, %v4809
        %4920 = vst.msk [vmem:[%s615 + $0x9a] sm:$0xff] %vm600, %v4814
        %4921 = vst.msk [vmem:[%s615 + $0xaa] sm:$0xff] %vm600, %v4819
        %4922 = vst.msk [vmem:[%s615 + $0xb2] sm:$0xff] %vm600, %v4824
        %4923 = vst.msk [vmem:[%s615 + $0xc2] sm:$0xff] %vm600, %v4829
        %4924 = vst.msk [vmem:[%s615 + $0xca] sm:$0xff] %vm600, %v4834
        %4925 = vst.msk [vmem:[%s615 + $0xda] sm:$0xff] %vm600, %v4839
        %4926 = vst.msk [vmem:[%s615 + $0xe2] sm:$0xff] %vm600, %v4844
        %4927 = vst.msk [vmem:[%s615 + $0xf2] sm:$0xff] %vm600, %v4849
        %4928 = vst.msk [vmem:[%s615 + $0xfa] sm:$0xff] %vm600, %v4854
        %4929 = vst.msk [vmem:[%s615 + $0x10a] sm:$0xff] %vm600, %v4859
        %4930 = vst.msk [vmem:[%s615 + $0x112] sm:$0xff] %vm600, %v4864
        %4931 = vst.msk [vmem:[%s615 + $0x122] sm:$0xff] %vm600, %v4869
        %4932 = vst.msk [vmem:[%s615 + $0x12a] sm:$0xff] %vm600, %v4874
        %4933 = vst.msk [vmem:[%s615 + $0x13a] sm:$0xff] %vm600, %v4879
        %4934 = vst.msk [vmem:[%s615 + $0x142] sm:$0xff] %vm600, %v4884
        %4935 = vst.msk [vmem:[%s615 + $0x152] sm:$0xff] %vm600, %v4889
        %4936 = vst.msk [vmem:[%s615 + $0x15a] sm:$0xff] %vm600, %v4894
        %4937 = vst.msk [vmem:[%s615 + $0x16a] sm:$0xff] %vm600, %v4899
        %4938 = vst.msk [vmem:[%s615 + $0x172] sm:$0xff] %vm600, %v4904
        %v4939 = vld [vmem:[#allocation3] sm:$0xff]
        %v4940 = vld [vmem:[#allocation3 + $0x8] sm:$0xff]
        %v4941 = vld [vmem:[#allocation3 + $0x18] sm:$0xff]
        %v4942 = vld [vmem:[#allocation3 + $0x20] sm:$0xff]
        %v4943 = vld [vmem:[#allocation3 + $0x30] sm:$0xff]
        %v4944 = vld [vmem:[#allocation3 + $0x38] sm:$0xff]
        %v4945 = vld [vmem:[#allocation3 + $0x48] sm:$0xff]
        %v4946 = vld [vmem:[#allocation3 + $0x50] sm:$0xff]
        %v4947 = vld [vmem:[#allocation3 + $0x60] sm:$0xff]
        %v4948 = vld [vmem:[#allocation3 + $0x68] sm:$0xff]
        %v4949 = vld [vmem:[#allocation3 + $0x78] sm:$0xff]
        %v4950 = vld [vmem:[#allocation3 + $0x80] sm:$0xff]
        %v4951 = vld [vmem:[#allocation3 + $0x90] sm:$0xff]
        %v4952 = vld [vmem:[#allocation3 + $0x98] sm:$0xff]
        %v4953 = vld [vmem:[#allocation3 + $0xa8] sm:$0xff]
        %v4954 = vld [vmem:[#allocation3 + $0xb0] sm:$0xff]
        %v4955 = vld [vmem:[#allocation3 + $0xc0] sm:$0xff]
        %v4956 = vld [vmem:[#allocation3 + $0xc8] sm:$0xff]
        %v4957 = vld [vmem:[#allocation3 + $0xd8] sm:$0xff]
        %v4958 = vld [vmem:[#allocation3 + $0xe0] sm:$0xff]
        %v4959 = vld [vmem:[#allocation3 + $0xf0] sm:$0xff]
        %v4960 = vld [vmem:[#allocation3 + $0xf8] sm:$0xff]
        %v4961 = vld [vmem:[#allocation3 + $0x108] sm:$0xff]
        %v4962 = vld [vmem:[#allocation3 + $0x110] sm:$0xff]
        %v4963 = vld [vmem:[#allocation3 + $0x120] sm:$0xff]
        %v4964 = vld [vmem:[#allocation3 + $0x128] sm:$0xff]
        %v4965 = vld [vmem:[#allocation3 + $0x138] sm:$0xff]
        %v4966 = vld [vmem:[#allocation3 + $0x140] sm:$0xff]
        %v4967 = vld [vmem:[#allocation3 + $0x150] sm:$0xff]
        %v4968 = vld [vmem:[#allocation3 + $0x158] sm:$0xff]
        %v4969 = vld [vmem:[#allocation3 + $0x168] sm:$0xff]
        %v4970 = vld [vmem:[#allocation3 + $0x170] sm:$0xff]
        %v4971 = vld [vmem:[#allocation3 + $0x180] sm:$0xff]
        %v4972 = vld [vmem:[#allocation3 + $0x188] sm:$0xff]
        %v4973 = vld [vmem:[#allocation3 + $0x198] sm:$0xff]
        %v4974 = vld [vmem:[#allocation3 + $0x1a0] sm:$0xff]
        %v4975 = vld [vmem:[#allocation3 + $0x1b0] sm:$0xff]
        %v4976 = vld [vmem:[#allocation3 + $0x1b8] sm:$0xff]
        %v4977 = vld [vmem:[#allocation3 + $0x1c8] sm:$0xff]
        %v4978 = vld [vmem:[#allocation3 + $0x1d0] sm:$0xff]
        %v4979 = vld [vmem:[#allocation3 + $0x1] sm:$0xff]
        %v4980 = vld [vmem:[#allocation3 + $0x9] sm:$0xff]
        %v4981 = vld [vmem:[#allocation3 + $0x19] sm:$0xff]
        %v4982 = vld [vmem:[#allocation3 + $0x21] sm:$0xff]
        %v4983 = vld [vmem:[#allocation3 + $0x31] sm:$0xff]
        %v4984 = vld [vmem:[#allocation3 + $0x39] sm:$0xff]
        %v4985 = vld [vmem:[#allocation3 + $0x49] sm:$0xff]
        %v4986 = vld [vmem:[#allocation3 + $0x51] sm:$0xff]
        %v4987 = vld [vmem:[#allocation3 + $0x61] sm:$0xff]
        %v4988 = vld [vmem:[#allocation3 + $0x69] sm:$0xff]
        %v4989 = vld [vmem:[#allocation3 + $0x79] sm:$0xff]
        %v4990 = vld [vmem:[#allocation3 + $0x81] sm:$0xff]
        %v4991 = vld [vmem:[#allocation3 + $0x91] sm:$0xff]
        %v4992 = vld [vmem:[#allocation3 + $0x99] sm:$0xff]
        %v4993 = vld [vmem:[#allocation3 + $0xa9] sm:$0xff]
        %v4994 = vld [vmem:[#allocation3 + $0xb1] sm:$0xff]
        %v4995 = vld [vmem:[#allocation3 + $0xc1] sm:$0xff]
        %v4996 = vld [vmem:[#allocation3 + $0xc9] sm:$0xff]
        %v4997 = vld [vmem:[#allocation3 + $0xd9] sm:$0xff]
        %v4998 = vld [vmem:[#allocation3 + $0xe1] sm:$0xff]
        %v4999 = vld [vmem:[#allocation3 + $0xf1] sm:$0xff]
        %v5000 = vld [vmem:[#allocation3 + $0xf9] sm:$0xff]
        %v5001 = vld [vmem:[#allocation3 + $0x109] sm:$0xff]
        %v5002 = vld [vmem:[#allocation3 + $0x111] sm:$0xff]
        %v5003 = vld [vmem:[#allocation3 + $0x121] sm:$0xff]
        %v5004 = vld [vmem:[#allocation3 + $0x129] sm:$0xff]
        %v5005 = vld [vmem:[#allocation3 + $0x139] sm:$0xff]
        %v5006 = vld [vmem:[#allocation3 + $0x141] sm:$0xff]
        %v5007 = vld [vmem:[#allocation3 + $0x151] sm:$0xff]
        %v5008 = vld [vmem:[#allocation3 + $0x159] sm:$0xff]
        %v5009 = vld [vmem:[#allocation3 + $0x169] sm:$0xff]
        %v5010 = vld [vmem:[#allocation3 + $0x171] sm:$0xff]
        %v5011 = vld [vmem:[#allocation3 + $0x181] sm:$0xff]
        %v5012 = vld [vmem:[#allocation3 + $0x189] sm:$0xff]
        %v5013 = vld [vmem:[#allocation3 + $0x199] sm:$0xff]
        %v5014 = vld [vmem:[#allocation3 + $0x1a1] sm:$0xff]
        %v5015 = vld [vmem:[#allocation3 + $0x1b1] sm:$0xff]
        %v5016 = vld [vmem:[#allocation3 + $0x1b9] sm:$0xff]
        %v5017 = vld [vmem:[#allocation3 + $0x1c9] sm:$0xff]
        %v5018 = vld [vmem:[#allocation3 + $0x1d1] sm:$0xff]
        %v5019 = vld [vmem:[#allocation3 + $0x2] sm:$0xff]
        %v5020 = vld [vmem:[#allocation3 + $0xa] sm:$0xff]
        %v5021 = vld [vmem:[#allocation3 + $0x1a] sm:$0xff]
        %v5022 = vld [vmem:[#allocation3 + $0x22] sm:$0xff]
        %v5023 = vld [vmem:[#allocation3 + $0x32] sm:$0xff]
        %v5024 = vld [vmem:[#allocation3 + $0x3a] sm:$0xff]
        %v5025 = vld [vmem:[#allocation3 + $0x4a] sm:$0xff]
        %v5026 = vld [vmem:[#allocation3 + $0x52] sm:$0xff]
        %v5027 = vld [vmem:[#allocation3 + $0x62] sm:$0xff]
        %v5028 = vld [vmem:[#allocation3 + $0x6a] sm:$0xff]
        %v5029 = vld [vmem:[#allocation3 + $0x7a] sm:$0xff]
        %v5030 = vld [vmem:[#allocation3 + $0x82] sm:$0xff]
        %v5031 = vld [vmem:[#allocation3 + $0x92] sm:$0xff]
        %v5032 = vld [vmem:[#allocation3 + $0x9a] sm:$0xff]
        %v5033 = vld [vmem:[#allocation3 + $0xaa] sm:$0xff]
        %v5034 = vld [vmem:[#allocation3 + $0xb2] sm:$0xff]
        %v5035 = vld [vmem:[#allocation3 + $0xc2] sm:$0xff]
        %v5036 = vld [vmem:[#allocation3 + $0xca] sm:$0xff]
        %v5037 = vld [vmem:[#allocation3 + $0xda] sm:$0xff]
        %v5038 = vld [vmem:[#allocation3 + $0xe2] sm:$0xff]
        %v5039 = vld [vmem:[#allocation3 + $0xf2] sm:$0xff]
        %v5040 = vld [vmem:[#allocation3 + $0xfa] sm:$0xff]
        %v5041 = vld [vmem:[#allocation3 + $0x10a] sm:$0xff]
        %v5042 = vld [vmem:[#allocation3 + $0x112] sm:$0xff]
        %v5043 = vld [vmem:[#allocation3 + $0x122] sm:$0xff]
        %v5044 = vld [vmem:[#allocation3 + $0x12a] sm:$0xff]
        %v5045 = vld [vmem:[#allocation3 + $0x13a] sm:$0xff]
        %v5046 = vld [vmem:[#allocation3 + $0x142] sm:$0xff]
        %v5047 = vld [vmem:[#allocation3 + $0x152] sm:$0xff]
        %v5048 = vld [vmem:[#allocation3 + $0x15a] sm:$0xff]
        %v5049 = vld [vmem:[#allocation3 + $0x16a] sm:$0xff]
        %v5050 = vld [vmem:[#allocation3 + $0x172] sm:$0xff]
        %v5051 = vld [vmem:[#allocation3 + $0x182] sm:$0xff]
        %v5052 = vld [vmem:[#allocation3 + $0x18a] sm:$0xff]
        %v5053 = vld [vmem:[#allocation3 + $0x19a] sm:$0xff]
        %v5054 = vld [vmem:[#allocation3 + $0x1a2] sm:$0xff]
        %v5055 = vld [vmem:[#allocation3 + $0x1b2] sm:$0xff]
        %v5056 = vld [vmem:[#allocation3 + $0x1ba] sm:$0xff]
        %v5057 = vld [vmem:[#allocation3 + $0x1ca] sm:$0xff]
        %v5058 = vld [vmem:[#allocation3 + $0x1d2] sm:$0xff]
        %v5059 = vld [vmem:[#allocation3 + $0x3] sm:$0xff]
        %v5060 = vld [vmem:[#allocation3 + $0xb] sm:$0xff]
        %v5061 = vld [vmem:[#allocation3 + $0x1b] sm:$0xff]
        %v5062 = vld [vmem:[#allocation3 + $0x23] sm:$0xff]
        %v5063 = vld [vmem:[#allocation3 + $0x33] sm:$0xff]
        %v5064 = vld [vmem:[#allocation3 + $0x3b] sm:$0xff]
        %v5065 = vld [vmem:[#allocation3 + $0x4b] sm:$0xff]
        %v5066 = vld [vmem:[#allocation3 + $0x53] sm:$0xff]
        %v5067 = vld [vmem:[#allocation3 + $0x63] sm:$0xff]
        %v5068 = vld [vmem:[#allocation3 + $0x6b] sm:$0xff]
        %v5069 = vld [vmem:[#allocation3 + $0x7b] sm:$0xff]
        %v5070 = vld [vmem:[#allocation3 + $0x83] sm:$0xff]
        %v5071 = vld [vmem:[#allocation3 + $0x93] sm:$0xff]
        %v5072 = vld [vmem:[#allocation3 + $0x9b] sm:$0xff]
        %v5073 = vld [vmem:[#allocation3 + $0xab] sm:$0xff]
        %v5074 = vld [vmem:[#allocation3 + $0xb3] sm:$0xff]
        %v5075 = vld [vmem:[#allocation3 + $0xc3] sm:$0xff]
        %v5076 = vld [vmem:[#allocation3 + $0xcb] sm:$0xff]
        %v5077 = vld [vmem:[#allocation3 + $0xdb] sm:$0xff]
        %v5078 = vld [vmem:[#allocation3 + $0xe3] sm:$0xff]
        %v5079 = vld [vmem:[#allocation3 + $0xf3] sm:$0xff]
        %v5080 = vld [vmem:[#allocation3 + $0xfb] sm:$0xff]
        %v5081 = vld [vmem:[#allocation3 + $0x10b] sm:$0xff]
        %v5082 = vld [vmem:[#allocation3 + $0x113] sm:$0xff]
        %v5083 = vld [vmem:[#allocation3 + $0x123] sm:$0xff]
        %v5084 = vld [vmem:[#allocation3 + $0x12b] sm:$0xff]
        %v5085 = vld [vmem:[#allocation3 + $0x13b] sm:$0xff]
        %v5086 = vld [vmem:[#allocation3 + $0x143] sm:$0xff]
        %v5087 = vld [vmem:[#allocation3 + $0x153] sm:$0xff]
        %v5088 = vld [vmem:[#allocation3 + $0x15b] sm:$0xff]
        %v5089 = vld [vmem:[#allocation3 + $0x16b] sm:$0xff]
        %v5090 = vld [vmem:[#allocation3 + $0x173] sm:$0xff]
        %v5091 = vld [vmem:[#allocation3 + $0x183] sm:$0xff]
        %v5092 = vld [vmem:[#allocation3 + $0x18b] sm:$0xff]
        %v5093 = vld [vmem:[#allocation3 + $0x19b] sm:$0xff]
        %v5094 = vld [vmem:[#allocation3 + $0x1a3] sm:$0xff]
        %v5095 = vld [vmem:[#allocation3 + $0x1b3] sm:$0xff]
        %v5096 = vld [vmem:[#allocation3 + $0x1bb] sm:$0xff]
        %v5097 = vld [vmem:[#allocation3 + $0x1cb] sm:$0xff]
        %v5098 = vld [vmem:[#allocation3 + $0x1d3] sm:$0xff]
        %v5099 = vld [vmem:[#allocation3 + $0x4] sm:$0xff]
        %v5100 = vld [vmem:[#allocation3 + $0xc] sm:$0xff]
        %v5101 = vld [vmem:[#allocation3 + $0x1c] sm:$0xff]
        %v5102 = vld [vmem:[#allocation3 + $0x24] sm:$0xff]
        %v5103 = vld [vmem:[#allocation3 + $0x34] sm:$0xff]
        %v5104 = vld [vmem:[#allocation3 + $0x3c] sm:$0xff]
        %v5105 = vld [vmem:[#allocation3 + $0x4c] sm:$0xff]
        %v5106 = vld [vmem:[#allocation3 + $0x54] sm:$0xff]
        %v5107 = vld [vmem:[#allocation3 + $0x64] sm:$0xff]
        %v5108 = vld [vmem:[#allocation3 + $0x6c] sm:$0xff]
        %v5109 = vld [vmem:[#allocation3 + $0x7c] sm:$0xff]
        %v5110 = vld [vmem:[#allocation3 + $0x84] sm:$0xff]
        %v5111 = vld [vmem:[#allocation3 + $0x94] sm:$0xff]
        %v5112 = vld [vmem:[#allocation3 + $0x9c] sm:$0xff]
        %v5113 = vld [vmem:[#allocation3 + $0xac] sm:$0xff]
        %v5114 = vld [vmem:[#allocation3 + $0xb4] sm:$0xff]
        %v5115 = vld [vmem:[#allocation3 + $0xc4] sm:$0xff]
        %v5116 = vld [vmem:[#allocation3 + $0xcc] sm:$0xff]
        %v5117 = vld [vmem:[#allocation3 + $0xdc] sm:$0xff]
        %v5118 = vld [vmem:[#allocation3 + $0xe4] sm:$0xff]
        %v5119 = vld [vmem:[#allocation3 + $0xf4] sm:$0xff]
        %v5120 = vld [vmem:[#allocation3 + $0xfc] sm:$0xff]
        %v5121 = vld [vmem:[#allocation3 + $0x10c] sm:$0xff]
        %v5122 = vld [vmem:[#allocation3 + $0x114] sm:$0xff]
        %v5123 = vld [vmem:[#allocation3 + $0x124] sm:$0xff]
        %v5124 = vld [vmem:[#allocation3 + $0x12c] sm:$0xff]
        %v5125 = vld [vmem:[#allocation3 + $0x13c] sm:$0xff]
        %v5126 = vld [vmem:[#allocation3 + $0x144] sm:$0xff]
        %v5127 = vld [vmem:[#allocation3 + $0x154] sm:$0xff]
        %v5128 = vld [vmem:[#allocation3 + $0x15c] sm:$0xff]
        %v5129 = vld [vmem:[#allocation3 + $0x16c] sm:$0xff]
        %v5130 = vld [vmem:[#allocation3 + $0x174] sm:$0xff]
        %v5131 = vld [vmem:[#allocation3 + $0x184] sm:$0xff]
        %v5132 = vld [vmem:[#allocation3 + $0x18c] sm:$0xff]
        %v5133 = vld [vmem:[#allocation3 + $0x19c] sm:$0xff]
        %v5134 = vld [vmem:[#allocation3 + $0x1a4] sm:$0xff]
        %v5135 = vld [vmem:[#allocation3 + $0x1b4] sm:$0xff]
        %v5136 = vld [vmem:[#allocation3 + $0x1bc] sm:$0xff]
        %v5137 = vld [vmem:[#allocation3 + $0x1cc] sm:$0xff]
        %v5138 = vld [vmem:[#allocation3 + $0x1d4] sm:$0xff]
        %5179 = vrot.lane.b32.xlu0 %v4979, 64
        %v5180 = vpop.permute.xlu0 %5179
        %5181 = vrot.lane.b32.xlu0 %v4980, 64
        %v5182 = vpop.permute.xlu0 %5181
        %5183 = vrot.lane.b32.xlu0 %v4981, 64
        %v5184 = vpop.permute.xlu0 %5183
        %5185 = vrot.lane.b32.xlu0 %v4982, 64
        %v5186 = vpop.permute.xlu0 %5185
        %5187 = vrot.lane.b32.xlu0 %v4983, 64
        %v5188 = vpop.permute.xlu0 %5187
        %5189 = vrot.lane.b32.xlu0 %v4984, 64
        %v5190 = vpop.permute.xlu0 %5189
        %5191 = vrot.lane.b32.xlu0 %v4985, 64
        %v5192 = vpop.permute.xlu0 %5191
        %5193 = vrot.lane.b32.xlu0 %v4986, 64
        %v5194 = vpop.permute.xlu0 %5193
        %5195 = vrot.lane.b32.xlu0 %v4987, 64
        %v5196 = vpop.permute.xlu0 %5195
        %5197 = vrot.lane.b32.xlu0 %v4988, 64
        %v5198 = vpop.permute.xlu0 %5197
        %5199 = vrot.lane.b32.xlu0 %v4989, 64
        %v5200 = vpop.permute.xlu0 %5199
        %5201 = vrot.lane.b32.xlu0 %v4990, 64
        %v5202 = vpop.permute.xlu0 %5201
        %5203 = vrot.lane.b32.xlu0 %v4991, 64
        %v5204 = vpop.permute.xlu0 %5203
        %5205 = vrot.lane.b32.xlu0 %v4992, 64
        %v5206 = vpop.permute.xlu0 %5205
        %5207 = vrot.lane.b32.xlu0 %v4993, 64
        %v5208 = vpop.permute.xlu0 %5207
        %5209 = vrot.lane.b32.xlu0 %v4994, 64
        %v5210 = vpop.permute.xlu0 %5209
        %5211 = vrot.lane.b32.xlu0 %v4995, 64
        %v5212 = vpop.permute.xlu0 %5211
        %5213 = vrot.lane.b32.xlu0 %v4996, 64
        %v5214 = vpop.permute.xlu0 %5213
        %5215 = vrot.lane.b32.xlu0 %v4997, 64
        %v5216 = vpop.permute.xlu0 %5215
        %5217 = vrot.lane.b32.xlu0 %v4998, 64
        %v5218 = vpop.permute.xlu0 %5217
        %5219 = vrot.lane.b32.xlu0 %v4999, 64
        %v5220 = vpop.permute.xlu0 %5219
        %5221 = vrot.lane.b32.xlu0 %v5000, 64
        %v5222 = vpop.permute.xlu0 %5221
        %5223 = vrot.lane.b32.xlu0 %v5001, 64
        %v5224 = vpop.permute.xlu0 %5223
        %5225 = vrot.lane.b32.xlu0 %v5002, 64
        %v5226 = vpop.permute.xlu0 %5225
        %5227 = vrot.lane.b32.xlu0 %v5003, 64
        %v5228 = vpop.permute.xlu0 %5227
        %5229 = vrot.lane.b32.xlu0 %v5004, 64
        %v5230 = vpop.permute.xlu0 %5229
        %5231 = vrot.lane.b32.xlu0 %v5005, 64
        %v5232 = vpop.permute.xlu0 %5231
        %5233 = vrot.lane.b32.xlu0 %v5006, 64
        %v5234 = vpop.permute.xlu0 %5233
        %5235 = vrot.lane.b32.xlu0 %v5007, 64
        %v5236 = vpop.permute.xlu0 %5235
        %5237 = vrot.lane.b32.xlu0 %v5008, 64
        %v5238 = vpop.permute.xlu0 %5237
        %5239 = vrot.lane.b32.xlu0 %v5009, 64
        %v5240 = vpop.permute.xlu0 %5239
        %5241 = vrot.lane.b32.xlu0 %v5010, 64
        %v5242 = vpop.permute.xlu0 %5241
        %5243 = vrot.lane.b32.xlu0 %v5011, 64
        %v5244 = vpop.permute.xlu0 %5243
        %5245 = vrot.lane.b32.xlu0 %v5012, 64
        %v5246 = vpop.permute.xlu0 %5245
        %5247 = vrot.lane.b32.xlu0 %v5013, 64
        %v5248 = vpop.permute.xlu0 %5247
        %5249 = vrot.lane.b32.xlu0 %v5014, 64
        %v5250 = vpop.permute.xlu0 %5249
        %5251 = vrot.lane.b32.xlu0 %v5015, 64
        %v5252 = vpop.permute.xlu0 %5251
        %5253 = vrot.lane.b32.xlu0 %v5016, 64
        %v5254 = vpop.permute.xlu0 %5253
        %5255 = vrot.lane.b32.xlu0 %v5017, 64
        %v5256 = vpop.permute.xlu0 %5255
        %5257 = vrot.lane.b32.xlu0 %v5018, 64
        %v5258 = vpop.permute.xlu0 %5257
        %5339 = vrot.lane.b32.xlu0 %v5059, 64
        %v5340 = vpop.permute.xlu0 %5339
        %5341 = vrot.lane.b32.xlu0 %v5060, 64
        %v5342 = vpop.permute.xlu0 %5341
        %5343 = vrot.lane.b32.xlu0 %v5061, 64
        %v5344 = vpop.permute.xlu0 %5343
        %5345 = vrot.lane.b32.xlu0 %v5062, 64
        %v5346 = vpop.permute.xlu0 %5345
        %5347 = vrot.lane.b32.xlu0 %v5063, 64
        %v5348 = vpop.permute.xlu0 %5347
        %5349 = vrot.lane.b32.xlu0 %v5064, 64
        %v5350 = vpop.permute.xlu0 %5349
        %5351 = vrot.lane.b32.xlu0 %v5065, 64
        %v5352 = vpop.permute.xlu0 %5351
        %5353 = vrot.lane.b32.xlu0 %v5066, 64
        %v5354 = vpop.permute.xlu0 %5353
        %5355 = vrot.lane.b32.xlu0 %v5067, 64
        %v5356 = vpop.permute.xlu0 %5355
        %5357 = vrot.lane.b32.xlu0 %v5068, 64
        %v5358 = vpop.permute.xlu0 %5357
        %5359 = vrot.lane.b32.xlu0 %v5069, 64
        %v5360 = vpop.permute.xlu0 %5359
        %5361 = vrot.lane.b32.xlu0 %v5070, 64
        %v5362 = vpop.permute.xlu0 %5361
        %5363 = vrot.lane.b32.xlu0 %v5071, 64
        %v5364 = vpop.permute.xlu0 %5363
        %5365 = vrot.lane.b32.xlu0 %v5072, 64
        %v5366 = vpop.permute.xlu0 %5365
        %5367 = vrot.lane.b32.xlu0 %v5073, 64
        %v5368 = vpop.permute.xlu0 %5367
        %5369 = vrot.lane.b32.xlu0 %v5074, 64
        %v5370 = vpop.permute.xlu0 %5369
        %5371 = vrot.lane.b32.xlu0 %v5075, 64
        %v5372 = vpop.permute.xlu0 %5371
        %5373 = vrot.lane.b32.xlu0 %v5076, 64
        %v5374 = vpop.permute.xlu0 %5373
        %5375 = vrot.lane.b32.xlu0 %v5077, 64
        %v5376 = vpop.permute.xlu0 %5375
        %5377 = vrot.lane.b32.xlu0 %v5078, 64
        %v5378 = vpop.permute.xlu0 %5377
        %5379 = vrot.lane.b32.xlu0 %v5079, 64
        %v5380 = vpop.permute.xlu0 %5379
        %5381 = vrot.lane.b32.xlu0 %v5080, 64
        %v5382 = vpop.permute.xlu0 %5381
        %5383 = vrot.lane.b32.xlu0 %v5081, 64
        %v5384 = vpop.permute.xlu0 %5383
        %5385 = vrot.lane.b32.xlu0 %v5082, 64
        %v5386 = vpop.permute.xlu0 %5385
        %5387 = vrot.lane.b32.xlu0 %v5083, 64
        %v5388 = vpop.permute.xlu0 %5387
        %5389 = vrot.lane.b32.xlu0 %v5084, 64
        %v5390 = vpop.permute.xlu0 %5389
        %5391 = vrot.lane.b32.xlu0 %v5085, 64
        %v5392 = vpop.permute.xlu0 %5391
        %5393 = vrot.lane.b32.xlu0 %v5086, 64
        %v5394 = vpop.permute.xlu0 %5393
        %5395 = vrot.lane.b32.xlu0 %v5087, 64
        %v5396 = vpop.permute.xlu0 %5395
        %5397 = vrot.lane.b32.xlu0 %v5088, 64
        %v5398 = vpop.permute.xlu0 %5397
        %5399 = vrot.lane.b32.xlu0 %v5089, 64
        %v5400 = vpop.permute.xlu0 %5399
        %5401 = vrot.lane.b32.xlu0 %v5090, 64
        %v5402 = vpop.permute.xlu0 %5401
        %5403 = vrot.lane.b32.xlu0 %v5091, 64
        %v5404 = vpop.permute.xlu0 %5403
        %5405 = vrot.lane.b32.xlu0 %v5092, 64
        %v5406 = vpop.permute.xlu0 %5405
        %5407 = vrot.lane.b32.xlu0 %v5093, 64
        %v5408 = vpop.permute.xlu0 %5407
        %5409 = vrot.lane.b32.xlu0 %v5094, 64
        %v5410 = vpop.permute.xlu0 %5409
        %5411 = vrot.lane.b32.xlu0 %v5095, 64
        %v5412 = vpop.permute.xlu0 %5411
        %5413 = vrot.lane.b32.xlu0 %v5096, 64
        %v5414 = vpop.permute.xlu0 %5413
        %5415 = vrot.lane.b32.xlu0 %v5097, 64
        %v5416 = vpop.permute.xlu0 %5415
        %5417 = vrot.lane.b32.xlu0 %v5098, 64
        %v5418 = vpop.permute.xlu0 %5417
        %v5459 = vsel %vm600, %v4939, %v5180
        %v5460 = vsel %vm600, %v4940, %v5182
        %v5461 = vsel %vm600, %v4941, %v5184
        %v5462 = vsel %vm600, %v4942, %v5186
        %v5463 = vsel %vm600, %v4943, %v5188
        %v5464 = vsel %vm600, %v4944, %v5190
        %v5465 = vsel %vm600, %v4945, %v5192
        %v5466 = vsel %vm600, %v4946, %v5194
        %v5467 = vsel %vm600, %v4947, %v5196
        %v5468 = vsel %vm600, %v4948, %v5198
        %v5469 = vsel %vm600, %v4949, %v5200
        %v5470 = vsel %vm600, %v4950, %v5202
        %v5471 = vsel %vm600, %v4951, %v5204
        %v5472 = vsel %vm600, %v4952, %v5206
        %v5473 = vsel %vm600, %v4953, %v5208
        %v5474 = vsel %vm600, %v4954, %v5210
        %v5475 = vsel %vm600, %v4955, %v5212
        %v5476 = vsel %vm600, %v4956, %v5214
        %v5477 = vsel %vm600, %v4957, %v5216
        %v5478 = vsel %vm600, %v4958, %v5218
        %v5479 = vsel %vm600, %v4959, %v5220
        %v5480 = vsel %vm600, %v4960, %v5222
        %v5481 = vsel %vm600, %v4961, %v5224
        %v5482 = vsel %vm600, %v4962, %v5226
        %v5483 = vsel %vm600, %v4963, %v5228
        %v5484 = vsel %vm600, %v4964, %v5230
        %v5485 = vsel %vm600, %v4965, %v5232
        %v5486 = vsel %vm600, %v4966, %v5234
        %v5487 = vsel %vm600, %v4967, %v5236
        %v5488 = vsel %vm600, %v4968, %v5238
        %v5489 = vsel %vm600, %v4969, %v5240
        %v5490 = vsel %vm600, %v4970, %v5242
        %v5491 = vsel %vm600, %v4971, %v5244
        %v5492 = vsel %vm600, %v4972, %v5246
        %v5493 = vsel %vm600, %v4973, %v5248
        %v5494 = vsel %vm600, %v4974, %v5250
        %v5495 = vsel %vm600, %v4975, %v5252
        %v5496 = vsel %vm600, %v4976, %v5254
        %v5497 = vsel %vm600, %v4977, %v5256
        %v5498 = vsel %vm600, %v4978, %v5258
        %v5499 = vsel %vm600, %v5019, %v5340
        %v5500 = vsel %vm600, %v5020, %v5342
        %v5501 = vsel %vm600, %v5021, %v5344
        %v5502 = vsel %vm600, %v5022, %v5346
        %v5503 = vsel %vm600, %v5023, %v5348
        %v5504 = vsel %vm600, %v5024, %v5350
        %v5505 = vsel %vm600, %v5025, %v5352
        %v5506 = vsel %vm600, %v5026, %v5354
        %v5507 = vsel %vm600, %v5027, %v5356
        %v5508 = vsel %vm600, %v5028, %v5358
        %v5509 = vsel %vm600, %v5029, %v5360
        %v5510 = vsel %vm600, %v5030, %v5362
        %v5511 = vsel %vm600, %v5031, %v5364
        %v5512 = vsel %vm600, %v5032, %v5366
        %v5513 = vsel %vm600, %v5033, %v5368
        %v5514 = vsel %vm600, %v5034, %v5370
        %v5515 = vsel %vm600, %v5035, %v5372
        %v5516 = vsel %vm600, %v5036, %v5374
        %v5517 = vsel %vm600, %v5037, %v5376
        %v5518 = vsel %vm600, %v5038, %v5378
        %v5519 = vsel %vm600, %v5039, %v5380
        %v5520 = vsel %vm600, %v5040, %v5382
        %v5521 = vsel %vm600, %v5041, %v5384
        %v5522 = vsel %vm600, %v5042, %v5386
        %v5523 = vsel %vm600, %v5043, %v5388
        %v5524 = vsel %vm600, %v5044, %v5390
        %v5525 = vsel %vm600, %v5045, %v5392
        %v5526 = vsel %vm600, %v5046, %v5394
        %v5527 = vsel %vm600, %v5047, %v5396
        %v5528 = vsel %vm600, %v5048, %v5398
        %v5529 = vsel %vm600, %v5049, %v5400
        %v5530 = vsel %vm600, %v5050, %v5402
        %v5531 = vsel %vm600, %v5051, %v5404
        %v5532 = vsel %vm600, %v5052, %v5406
        %v5533 = vsel %vm600, %v5053, %v5408
        %v5534 = vsel %vm600, %v5054, %v5410
        %v5535 = vsel %vm600, %v5055, %v5412
        %v5536 = vsel %vm600, %v5056, %v5414
        %v5537 = vsel %vm600, %v5057, %v5416
        %v5538 = vsel %vm600, %v5058, %v5418
        %v5539 = vld [vmem:[#allocation14] sm:$0xff]
        %v5540 = vld [vmem:[#allocation14 + $0x8] sm:$0xff]
        %v5541 = vld [vmem:[#allocation14 + $0x10] sm:$0xff]
        %v5542 = vld [vmem:[#allocation14 + $0x18] sm:$0xff]
        %v5543 = vld [vmem:[#allocation14 + $0x20] sm:$0xff]
        %v5544 = vld [vmem:[#allocation14 + $0x28] sm:$0xff]
        %v5545 = vld [vmem:[#allocation14 + $0x30] sm:$0xff]
        %v5546 = vld [vmem:[#allocation14 + $0x38] sm:$0xff]
        %v5547 = vld [vmem:[#allocation14 + $0x40] sm:$0xff]
        %v5548 = vld [vmem:[#allocation14 + $0x48] sm:$0xff]
        %v5549 = vld [vmem:[#allocation14 + $0x50] sm:$0xff]
        %v5550 = vld [vmem:[#allocation14 + $0x58] sm:$0xff]
        %v5551 = vld [vmem:[#allocation14 + $0x60] sm:$0xff]
        %v5552 = vld [vmem:[#allocation14 + $0x68] sm:$0xff]
        %v5553 = vld [vmem:[#allocation14 + $0x70] sm:$0xff]
        %v5554 = vld [vmem:[#allocation14 + $0x78] sm:$0xff]
        %v5555 = vld [vmem:[#allocation14 + $0x80] sm:$0xff]
        %v5556 = vld [vmem:[#allocation14 + $0x88] sm:$0xff]
        %v5557 = vld [vmem:[#allocation14 + $0x90] sm:$0xff]
        %v5558 = vld [vmem:[#allocation14 + $0x98] sm:$0xff]
        %v5559 = vld [vmem:[#allocation14 + $0xa0] sm:$0xff]
        %v5560 = vld [vmem:[#allocation14 + $0xa8] sm:$0xff]
        %v5561 = vld [vmem:[#allocation14 + $0xb0] sm:$0xff]
        %v5562 = vld [vmem:[#allocation14 + $0xb8] sm:$0xff]
        %v5563 = vld [vmem:[#allocation14 + $0xc0] sm:$0xff]
        %v5564 = vld [vmem:[#allocation14 + $0xc8] sm:$0xff]
        %v5565 = vld [vmem:[#allocation14 + $0xd0] sm:$0xff]
        %v5566 = vld [vmem:[#allocation14 + $0xd8] sm:$0xff]
        %v5567 = vld [vmem:[#allocation14 + $0xe0] sm:$0xff]
        %v5568 = vld [vmem:[#allocation14 + $0xe8] sm:$0xff]
        %v5569 = vld [vmem:[#allocation14 + $0xf0] sm:$0xff]
        %v5570 = vld [vmem:[#allocation14 + $0xf8] sm:$0xff]
        %v5571 = vld [vmem:[#allocation14 + $0x100] sm:$0xff]
        %v5572 = vld [vmem:[#allocation14 + $0x108] sm:$0xff]
        %v5573 = vld [vmem:[#allocation14 + $0x110] sm:$0xff]
        %v5574 = vld [vmem:[#allocation14 + $0x118] sm:$0xff]
        %v5575 = vld [vmem:[#allocation14 + $0x120] sm:$0xff]
        %v5576 = vld [vmem:[#allocation14 + $0x128] sm:$0xff]
        %v5577 = vld [vmem:[#allocation14 + $0x130] sm:$0xff]
        %v5578 = vld [vmem:[#allocation14 + $0x138] sm:$0xff]
        %s5579 = scalar_lea.vmem [#allocation14], 320
        %v5580 = vld [vmem:[%s5579] sm:$0xff]
        %v5581 = vld [vmem:[%s5579 + $0x8] sm:$0xff]
        %v5582 = vld [vmem:[%s5579 + $0x10] sm:$0xff]
        %v5583 = vld [vmem:[%s5579 + $0x18] sm:$0xff]
        %v5584 = vld [vmem:[%s5579 + $0x20] sm:$0xff]
        %v5585 = vld [vmem:[%s5579 + $0x28] sm:$0xff]
        %v5586 = vld [vmem:[%s5579 + $0x30] sm:$0xff]
        %v5587 = vld [vmem:[%s5579 + $0x38] sm:$0xff]
        %v5588 = vld [vmem:[%s5579 + $0x40] sm:$0xff]
        %v5589 = vld [vmem:[%s5579 + $0x48] sm:$0xff]
        %v5590 = vld [vmem:[%s5579 + $0x50] sm:$0xff]
        %v5591 = vld [vmem:[%s5579 + $0x58] sm:$0xff]
        %v5592 = vld [vmem:[%s5579 + $0x60] sm:$0xff]
        %v5593 = vld [vmem:[%s5579 + $0x68] sm:$0xff]
        %v5594 = vld [vmem:[%s5579 + $0x70] sm:$0xff]
        %v5595 = vld [vmem:[%s5579 + $0x78] sm:$0xff]
        %v5596 = vld [vmem:[%s5579 + $0x80] sm:$0xff]
        %v5597 = vld [vmem:[%s5579 + $0x88] sm:$0xff]
        %v5598 = vld [vmem:[%s5579 + $0x90] sm:$0xff]
        %v5599 = vld [vmem:[%s5579 + $0x98] sm:$0xff]
        %v5600 = vld [vmem:[%s5579 + $0xa0] sm:$0xff]
        %v5601 = vld [vmem:[%s5579 + $0xa8] sm:$0xff]
        %v5602 = vld [vmem:[%s5579 + $0xb0] sm:$0xff]
        %v5603 = vld [vmem:[%s5579 + $0xb8] sm:$0xff]
        %v5604 = vld [vmem:[%s5579 + $0xc0] sm:$0xff]
        %v5605 = vld [vmem:[%s5579 + $0xc8] sm:$0xff]
        %v5606 = vld [vmem:[%s5579 + $0xd0] sm:$0xff]
        %v5607 = vld [vmem:[%s5579 + $0xd8] sm:$0xff]
        %v5608 = vld [vmem:[%s5579 + $0xe0] sm:$0xff]
        %v5609 = vld [vmem:[%s5579 + $0xe8] sm:$0xff]
        %v5610 = vld [vmem:[%s5579 + $0xf0] sm:$0xff]
        %v5611 = vld [vmem:[%s5579 + $0xf8] sm:$0xff]
        %v5612 = vld [vmem:[%s5579 + $0x100] sm:$0xff]
        %v5613 = vld [vmem:[%s5579 + $0x108] sm:$0xff]
        %v5614 = vld [vmem:[%s5579 + $0x110] sm:$0xff]
        %v5615 = vld [vmem:[%s5579 + $0x118] sm:$0xff]
        %v5616 = vld [vmem:[%s5579 + $0x120] sm:$0xff]
        %v5617 = vld [vmem:[%s5579 + $0x128] sm:$0xff]
        %v5618 = vld [vmem:[%s5579 + $0x130] sm:$0xff]
        %v5619 = vld [vmem:[%s5579 + $0x138] sm:$0xff]
        %v5621 = vsel %vm600, %v5101, 0
        %v5624 = vsel %vm600, %v5102, 0
        %v5627 = vsel %vm600, %v5103, 0
        %v5630 = vsel %vm600, %v5104, 0
        %v5633 = vsel %vm600, %v5105, 0
        %v5636 = vsel %vm600, %v5106, 0
        %v5639 = vsel %vm600, %v5107, 0
        %v5642 = vsel %vm600, %v5108, 0
        %v5645 = vsel %vm600, %v5109, 0
        %v5648 = vsel %vm600, %v5110, 0
        %v5651 = vsel %vm600, %v5111, 0
        %v5654 = vsel %vm600, %v5112, 0
        %v5657 = vsel %vm600, %v5113, 0
        %v5660 = vsel %vm600, %v5114, 0
        %v5663 = vsel %vm600, %v5115, 0
        %v5666 = vsel %vm600, %v5116, 0
        %v5669 = vsel %vm600, %v5117, 0
        %v5672 = vsel %vm600, %v5118, 0
        %v5675 = vsel %vm600, %v5119, 0
        %v5678 = vsel %vm600, %v5120, 0
        %v5681 = vsel %vm600, %v5121, 0
        %v5684 = vsel %vm600, %v5122, 0
        %v5687 = vsel %vm600, %v5123, 0
        %v5690 = vsel %vm600, %v5124, 0
        %v5693 = vsel %vm600, %v5125, 0
        %v5696 = vsel %vm600, %v5126, 0
        %v5699 = vsel %vm600, %v5127, 0
        %v5702 = vsel %vm600, %v5128, 0
        %v5705 = vsel %vm600, %v5129, 0
        %v5708 = vsel %vm600, %v5130, 0
        %v5711 = vsel %vm600, %v5131, 0
        %v5714 = vsel %vm600, %v5132, 0
        %5716 = vmatprep.subr.mxu0 0.0
        %5717 = vmatpush1.msra.mxu0 %v5580
        %5718 = vmatprep.subr.mxu0 0.0
        %5719 = vmatpush1.msra.mxu0 %v5581
        %5720 = vmatprep.subr.mxu0 0.0
        %5721 = vmatpush1.msra.mxu0 %v5582
        %5722 = vmatprep.subr.mxu0 0.0
        %5723 = vmatpush1.msra.mxu0 %v5583
        %5724 = vmatprep.subr.mxu0 0.0
        %5725 = vmatpush1.msra.mxu0 %v5584
        %5726 = vmatprep.subr.mxu0 0.0
        %5727 = vmatpush1.msra.mxu0 %v5585
        %5728 = vmatprep.subr.mxu0 0.0
        %5729 = vmatpush1.msra.mxu0 %v5586
        %5730 = vmatprep.subr.mxu0 0.0
        %5731 = vmatpush1.msra.mxu0 %v5587
        %5732 = vmatprep.subr.mxu0 0.0
        %5733 = vmatpush1.msra.mxu0 %v5588
        %5734 = vmatprep.subr.mxu0 0.0
        %5735 = vmatpush1.msra.mxu0 %v5589
        %5736 = vmatprep.subr.mxu0 0.0
        %5737 = vmatpush1.msra.mxu0 %v5590
        %5738 = vmatprep.subr.mxu0 0.0
        %5739 = vmatpush1.msra.mxu0 %v5591
        %5740 = vmatprep.subr.mxu0 0.0
        %5741 = vmatpush1.msra.mxu0 %v5592
        %5742 = vmatprep.subr.mxu0 0.0
        %5743 = vmatpush1.msra.mxu0 %v5593
        %5744 = vmatprep.subr.mxu0 0.0
        %5745 = vmatpush1.msra.mxu0 %v5594
        %5746 = vmatprep.subr.mxu0 0.0
        %5747 = vmatpush1.msra.mxu0 %v5595
        %5748 = vmatprep.subr.mxu0 0.0
        %5749 = vmatpush1.msra.mxu0 %v5596
        %5750 = vmatprep.subr.mxu0 0.0
        %5751 = vmatpush1.msra.mxu0 %v5597
        %5752 = vmatprep.subr.mxu0 0.0
        %5753 = vmatpush1.msra.mxu0 %v5598
        %5754 = vmatprep.subr.mxu0 0.0
        %5755 = vmatpush1.msra.mxu0 %v5599
        %5756 = vmatprep.subr.mxu0 0.0
        %5757 = vmatpush1.msra.mxu0 %v5600
        %5758 = vmatprep.subr.mxu0 0.0
        %5759 = vmatpush1.msra.mxu0 %v5601
        %5760 = vmatprep.subr.mxu0 0.0
        %5761 = vmatpush1.msra.mxu0 %v5602
        %5762 = vmatprep.subr.mxu0 0.0
        %5763 = vmatpush1.msra.mxu0 %v5603
        %5764 = vmatprep.subr.mxu0 0.0
        %5765 = vmatpush1.msra.mxu0 %v5604
        %5766 = vmatprep.subr.mxu0 0.0
        %5767 = vmatpush1.msra.mxu0 %v5605
        %5768 = vmatprep.subr.mxu0 0.0
        %5769 = vmatpush1.msra.mxu0 %v5606
        %5770 = vmatprep.subr.mxu0 0.0
        %5771 = vmatpush1.msra.mxu0 %v5607
        %5772 = vmatprep.subr.mxu0 0.0
        %5773 = vmatpush1.msra.mxu0 %v5608
        %5774 = vmatprep.subr.mxu0 0.0
        %5775 = vmatpush1.msra.mxu0 %v5609
        %5776 = vmatprep.subr.mxu0 0.0
        %5777 = vmatpush1.msra.mxu0 %v5610
        %5778 = vmatprep.subr.mxu0 0.0
        %5779 = vmatpush1.msra.mxu0 %v5611
        %5780 = vmatprep.mubr.f32.mxu0 %v5501
        %5781 = vmatmul.mubr.f32.gmra.mrb[0].mxu0 %v5461
        %v5782 = vpop.f32.mrb[0].mxu0
        %v5783 = vadd.f32 0.0, %v5782
        %v5784 = vpop.f32.mrb[0].mxu0
        %5785 = vmatprep.mubr.f32.mxu0 %v5502
        %5786 = vmatmul.mubr.f32.gmra.mrb[0].mxu0 %v5462
        %v5787 = vpop.f32.mrb[0].mxu0
        %v5788 = vadd.f32 0.0, %v5787
        %v5789 = vpop.f32.mrb[0].mxu0
        %5790 = vmatprep.mubr.f32.mxu0 %v5503
        %5791 = vmatmul.mubr.f32.gmra.mrb[0].mxu0 %v5463
        %v5792 = vpop.f32.mrb[0].mxu0
        %v5793 = vadd.f32 0.0, %v5792
        %v5794 = vpop.f32.mrb[0].mxu0
        %5795 = vmatprep.mubr.f32.mxu0 %v5504
        %5796 = vmatmul.mubr.f32.gmra.mrb[0].mxu0 %v5464
        %v5797 = vpop.f32.mrb[0].mxu0
        %v5798 = vadd.f32 0.0, %v5797
        %v5799 = vpop.f32.mrb[0].mxu0
        %5800 = vmatprep.mubr.f32.mxu0 %v5505
        %5801 = vmatmul.mubr.f32.gmra.mrb[0].mxu0 %v5465
        %v5802 = vpop.f32.mrb[0].mxu0
        %v5803 = vadd.f32 0.0, %v5802
        %v5804 = vpop.f32.mrb[0].mxu0
        %5805 = vmatprep.mubr.f32.mxu0 %v5506
        %5806 = vmatmul.mubr.f32.gmra.mrb[0].mxu0 %v5466
        %v5807 = vpop.f32.mrb[0].mxu0
        %v5808 = vadd.f32 0.0, %v5807
        %v5809 = vpop.f32.mrb[0].mxu0
        %5810 = vmatprep.mubr.f32.mxu0 %v5507
        %5811 = vmatmul.mubr.f32.gmra.mrb[0].mxu0 %v5467
        %v5812 = vpop.f32.mrb[0].mxu0
        %v5813 = vadd.f32 0.0, %v5812
        %v5814 = vpop.f32.mrb[0].mxu0
        %5815 = vmatprep.mubr.f32.mxu0 %v5508
        %5816 = vmatmul.mubr.f32.gmra.mrb[0].mxu0 %v5468
        %v5817 = vpop.f32.mrb[0].mxu0
        %v5818 = vadd.f32 0.0, %v5817
        %v5819 = vpop.f32.mrb[0].mxu0
        %5820 = vmatprep.mubr.f32.mxu0 %v5509
        %5821 = vmatmul.mubr.f32.gmra.mrb[0].mxu0 %v5469
        %v5822 = vpop.f32.mrb[0].mxu0
        %v5823 = vadd.f32 0.0, %v5822
        %v5824 = vpop.f32.mrb[0].mxu0
        %5825 = vmatprep.mubr.f32.mxu0 %v5510
        %5826 = vmatmul.mubr.f32.gmra.mrb[0].mxu0 %v5470
        %v5827 = vpop.f32.mrb[0].mxu0
        %v5828 = vadd.f32 0.0, %v5827
        %v5829 = vpop.f32.mrb[0].mxu0
        %5830 = vmatprep.mubr.f32.mxu0 %v5511
        %5831 = vmatmul.mubr.f32.gmra.mrb[0].mxu0 %v5471
        %v5832 = vpop.f32.mrb[0].mxu0
        %v5833 = vadd.f32 0.0, %v5832
        %v5834 = vpop.f32.mrb[0].mxu0
        %5835 = vmatprep.mubr.f32.mxu0 %v5512
        %5836 = vmatmul.mubr.f32.gmra.mrb[0].mxu0 %v5472
        %v5837 = vpop.f32.mrb[0].mxu0
        %v5838 = vadd.f32 0.0, %v5837
        %v5839 = vpop.f32.mrb[0].mxu0
        %5840 = vmatprep.mubr.f32.mxu0 %v5513
        %5841 = vmatmul.mubr.f32.gmra.mrb[0].mxu0 %v5473
        %v5842 = vpop.f32.mrb[0].mxu0
        %v5843 = vadd.f32 0.0, %v5842
        %v5844 = vpop.f32.mrb[0].mxu0
        %5845 = vmatprep.mubr.f32.mxu0 %v5514
        %5846 = vmatmul.mubr.f32.gmra.mrb[0].mxu0 %v5474
        %v5847 = vpop.f32.mrb[0].mxu0
        %v5848 = vadd.f32 0.0, %v5847
        %v5849 = vpop.f32.mrb[0].mxu0
        %5850 = vmatprep.mubr.f32.mxu0 %v5515
        %5851 = vmatmul.mubr.f32.gmra.mrb[0].mxu0 %v5475
        %v5852 = vpop.f32.mrb[0].mxu0
        %v5853 = vadd.f32 0.0, %v5852
        %v5854 = vpop.f32.mrb[0].mxu0
        %5855 = vmatprep.mubr.f32.mxu0 %v5516
        %5856 = vmatmul.mubr.f32.gmra.mrb[0].mxu0 %v5476
        %v5857 = vpop.f32.mrb[0].mxu0
        %v5858 = vadd.f32 0.0, %v5857
        %v5859 = vpop.f32.mrb[0].mxu0
        %5860 = vmatprep.mubr.f32.mxu0 %v5517
        %5861 = vmatmul.mubr.f32.gmra.mrb[0].mxu0 %v5477
        %v5862 = vpop.f32.mrb[0].mxu0
        %v5863 = vadd.f32 0.0, %v5862
        %v5864 = vpop.f32.mrb[0].mxu0
        %5865 = vmatprep.mubr.f32.mxu0 %v5518
        %5866 = vmatmul.mubr.f32.gmra.mrb[0].mxu0 %v5478
        %v5867 = vpop.f32.mrb[0].mxu0
        %v5868 = vadd.f32 0.0, %v5867
        %v5869 = vpop.f32.mrb[0].mxu0
        %5870 = vmatprep.mubr.f32.mxu0 %v5519
        %5871 = vmatmul.mubr.f32.gmra.mrb[0].mxu0 %v5479
        %v5872 = vpop.f32.mrb[0].mxu0
        %v5873 = vadd.f32 0.0, %v5872
        %v5874 = vpop.f32.mrb[0].mxu0
        %5875 = vmatprep.mubr.f32.mxu0 %v5520
        %5876 = vmatmul.mubr.f32.gmra.mrb[0].mxu0 %v5480
        %v5877 = vpop.f32.mrb[0].mxu0
        %v5878 = vadd.f32 0.0, %v5877
        %v5879 = vpop.f32.mrb[0].mxu0
        %5880 = vmatprep.mubr.f32.mxu0 %v5521
        %5881 = vmatmul.mubr.f32.gmra.mrb[0].mxu0 %v5481
        %v5882 = vpop.f32.mrb[0].mxu0
        %v5883 = vadd.f32 0.0, %v5882
        %v5884 = vpop.f32.mrb[0].mxu0
        %5885 = vmatprep.mubr.f32.mxu0 %v5522
        %5886 = vmatmul.mubr.f32.gmra.mrb[0].mxu0 %v5482
        %v5887 = vpop.f32.mrb[0].mxu0
        %v5888 = vadd.f32 0.0, %v5887
        %v5889 = vpop.f32.mrb[0].mxu0
        %5890 = vmatprep.mubr.f32.mxu0 %v5523
        %5891 = vmatmul.mubr.f32.gmra.mrb[0].mxu0 %v5483
        %v5892 = vpop.f32.mrb[0].mxu0
        %v5893 = vadd.f32 0.0, %v5892
        %v5894 = vpop.f32.mrb[0].mxu0
        %5895 = vmatprep.mubr.f32.mxu0 %v5524
        %5896 = vmatmul.mubr.f32.gmra.mrb[0].mxu0 %v5484
        %v5897 = vpop.f32.mrb[0].mxu0
        %v5898 = vadd.f32 0.0, %v5897
        %v5899 = vpop.f32.mrb[0].mxu0
        %5900 = vmatprep.mubr.f32.mxu0 %v5525
        %5901 = vmatmul.mubr.f32.gmra.mrb[0].mxu0 %v5485
        %v5902 = vpop.f32.mrb[0].mxu0
        %v5903 = vadd.f32 0.0, %v5902
        %v5904 = vpop.f32.mrb[0].mxu0
        %5905 = vmatprep.mubr.f32.mxu0 %v5526
        %5906 = vmatmul.mubr.f32.gmra.mrb[0].mxu0 %v5486
        %v5907 = vpop.f32.mrb[0].mxu0
        %v5908 = vadd.f32 0.0, %v5907
        %v5909 = vpop.f32.mrb[0].mxu0
        %5910 = vmatprep.mubr.f32.mxu0 %v5527
        %5911 = vmatmul.mubr.f32.gmra.mrb[0].mxu0 %v5487
        %v5912 = vpop.f32.mrb[0].mxu0
        %v5913 = vadd.f32 0.0, %v5912
        %v5914 = vpop.f32.mrb[0].mxu0
        %5915 = vmatprep.mubr.f32.mxu0 %v5528
        %5916 = vmatmul.mubr.f32.gmra.mrb[0].mxu0 %v5488
        %v5917 = vpop.f32.mrb[0].mxu0
        %v5918 = vadd.f32 0.0, %v5917
        %v5919 = vpop.f32.mrb[0].mxu0
        %5920 = vmatprep.mubr.f32.mxu0 %v5529
        %5921 = vmatmul.mubr.f32.gmra.mrb[0].mxu0 %v5489
        %v5922 = vpop.f32.mrb[0].mxu0
        %v5923 = vadd.f32 0.0, %v5922
        %v5924 = vpop.f32.mrb[0].mxu0
        %5925 = vmatprep.mubr.f32.mxu0 %v5530
        %5926 = vmatmul.mubr.f32.gmra.mrb[0].mxu0 %v5490
        %v5927 = vpop.f32.mrb[0].mxu0
        %v5928 = vadd.f32 0.0, %v5927
        %v5929 = vpop.f32.mrb[0].mxu0
        %5930 = vmatprep.mubr.f32.mxu0 %v5531
        %5931 = vmatmul.mubr.f32.gmra.mrb[0].mxu0 %v5491
        %v5932 = vpop.f32.mrb[0].mxu0
        %v5933 = vadd.f32 0.0, %v5932
        %v5934 = vpop.f32.mrb[0].mxu0
        %5935 = vmatprep.mubr.f32.mxu0 %v5532
        %5936 = vmatmul.mubr.f32.gmra.mrb[0].mxu0 %v5492
        %v5937 = vpop.f32.mrb[0].mxu0
        %v5938 = vadd.f32 0.0, %v5937
        %v5939 = vpop.f32.mrb[0].mxu0
        %5940 = vdwg.mxu0
        %5941 = vmatprep.subr.mxu0 0.0
        %5942 = vmatpush1.msra.mxu0 %v5612
        %5943 = vmatprep.subr.mxu0 0.0
        %5944 = vmatpush1.msra.mxu0 %v5613
        %5945 = vmatprep.subr.mxu0 0.0
        %5946 = vmatpush1.msra.mxu0 %v5614
        %5947 = vmatprep.subr.mxu0 0.0
        %5948 = vmatpush1.msra.mxu0 %v5615
        %5949 = vmatprep.subr.mxu0 0.0
        %5950 = vmatpush1.msra.mxu0 %v5616
        %5951 = vmatprep.subr.mxu0 0.0
        %5952 = vmatpush1.msra.mxu0 %v5617
        %5953 = vmatprep.subr.mxu0 0.0
        %5954 = vmatpush1.msra.mxu0 %v5618
        %5955 = vmatprep.subr.mxu0 0.0
        %5956 = vmatpush1.msra.mxu0 %v5619
        %5957 = vmatprep.subr.mxu0 0.0
        %5958 = vmatpush1.msra.mxu0 0.0
        %5959 = vmatprep.subr.mxu0 0.0
        %5960 = vmatpush1.msra.mxu0 0.0
        %5961 = vmatprep.subr.mxu0 0.0
        %5962 = vmatpush1.msra.mxu0 0.0
        %5963 = vmatprep.subr.mxu0 0.0
        %5964 = vmatpush1.msra.mxu0 0.0
        %5965 = vmatprep.subr.mxu0 0.0
        %5966 = vmatpush1.msra.mxu0 0.0
        %5967 = vmatprep.subr.mxu0 0.0
        %5968 = vmatpush1.msra.mxu0 0.0
        %5969 = vmatprep.subr.mxu0 0.0
        %5970 = vmatpush1.msra.mxu0 0.0
        %5971 = vmatprep.subr.mxu0 0.0
        %5972 = vmatpush1.msra.mxu0 0.0
        %5973 = vmatprep.subr.mxu0 0.0
        %5974 = vmatpush1.msra.mxu0 0.0
        %5975 = vmatprep.subr.mxu0 0.0
        %5976 = vmatpush1.msra.mxu0 0.0
        %5977 = vmatprep.subr.mxu0 0.0
        %5978 = vmatpush1.msra.mxu0 0.0
        %5979 = vmatprep.subr.mxu0 0.0
        %5980 = vmatpush1.msra.mxu0 0.0
        %5981 = vmatprep.subr.mxu0 0.0
        %5982 = vmatpush1.msra.mxu0 0.0
        %5983 = vmatprep.subr.mxu0 0.0
        %5984 = vmatpush1.msra.mxu0 0.0
        %5985 = vmatprep.subr.mxu0 0.0
        %5986 = vmatpush1.msra.mxu0 0.0
        %5987 = vmatprep.subr.mxu0 0.0
        %5988 = vmatpush1.msra.mxu0 0.0
        %5989 = vmatprep.subr.mxu0 0.0
        %5990 = vmatpush1.msra.mxu0 0.0
        %5991 = vmatprep.subr.mxu0 0.0
        %5992 = vmatpush1.msra.mxu0 0.0
        %5993 = vmatprep.subr.mxu0 0.0
        %5994 = vmatpush1.msra.mxu0 0.0
        %5995 = vmatprep.subr.mxu0 0.0
        %5996 = vmatpush1.msra.mxu0 0.0
        %5997 = vmatprep.subr.mxu0 0.0
        %5998 = vmatpush1.msra.mxu0 0.0
        %5999 = vmatprep.subr.mxu0 0.0
        %6000 = vmatpush1.msra.mxu0 0.0
        %6001 = vmatprep.subr.mxu0 0.0
        %6002 = vmatpush1.msra.mxu0 0.0
        %6003 = vmatprep.subr.mxu0 0.0
        %6004 = vmatpush1.msra.mxu0 0.0
        %6005 = vmatprep.mubr.f32.mxu0 0.0
        %6006 = vmatmul.mubr.f32.gmra.mrb[0].mxu0 %v5621
        %v6007 = vpop.f32.mrb[0].mxu0
        %v6008 = vadd.f32 %v5783, %v6007
        %v6009 = vpop.f32.mrb[0].mxu0
        %6010 = vmatprep.mubr.f32.mxu0 0.0
        %6011 = vmatmul.mubr.f32.gmra.mrb[0].mxu0 %v5624
        %v6012 = vpop.f32.mrb[0].mxu0
        %v6013 = vadd.f32 %v5788, %v6012
        %v6014 = vpop.f32.mrb[0].mxu0
        %6015 = vmatprep.mubr.f32.mxu0 0.0
        %6016 = vmatmul.mubr.f32.gmra.mrb[0].mxu0 %v5627
        %v6017 = vpop.f32.mrb[0].mxu0
        %v6018 = vadd.f32 %v5793, %v6017
        %v6019 = vpop.f32.mrb[0].mxu0
        %6020 = vmatprep.mubr.f32.mxu0 0.0
        %6021 = vmatmul.mubr.f32.gmra.mrb[0].mxu0 %v5630
        %v6022 = vpop.f32.mrb[0].mxu0
        %v6023 = vadd.f32 %v5798, %v6022
        %v6024 = vpop.f32.mrb[0].mxu0
        %6025 = vmatprep.mubr.f32.mxu0 0.0
        %6026 = vmatmul.mubr.f32.gmra.mrb[0].mxu0 %v5633
        %v6027 = vpop.f32.mrb[0].mxu0
        %v6028 = vadd.f32 %v5803, %v6027
        %v6029 = vpop.f32.mrb[0].mxu0
        %6030 = vmatprep.mubr.f32.mxu0 0.0
        %6031 = vmatmul.mubr.f32.gmra.mrb[0].mxu0 %v5636
        %v6032 = vpop.f32.mrb[0].mxu0
        %v6033 = vadd.f32 %v5808, %v6032
        %v6034 = vpop.f32.mrb[0].mxu0
        %6035 = vmatprep.mubr.f32.mxu0 0.0
        %6036 = vmatmul.mubr.f32.gmra.mrb[0].mxu0 %v5639
        %v6037 = vpop.f32.mrb[0].mxu0
        %v6038 = vadd.f32 %v5813, %v6037
        %v6039 = vpop.f32.mrb[0].mxu0
        %6040 = vmatprep.mubr.f32.mxu0 0.0
        %6041 = vmatmul.mubr.f32.gmra.mrb[0].mxu0 %v5642
        %v6042 = vpop.f32.mrb[0].mxu0
        %v6043 = vadd.f32 %v5818, %v6042
        %v6044 = vpop.f32.mrb[0].mxu0
        %6045 = vmatprep.mubr.f32.mxu0 0.0
        %6046 = vmatmul.mubr.f32.gmra.mrb[0].mxu0 %v5645
        %v6047 = vpop.f32.mrb[0].mxu0
        %v6048 = vadd.f32 %v5823, %v6047
        %v6049 = vpop.f32.mrb[0].mxu0
        %6050 = vmatprep.mubr.f32.mxu0 0.0
        %6051 = vmatmul.mubr.f32.gmra.mrb[0].mxu0 %v5648
        %v6052 = vpop.f32.mrb[0].mxu0
        %v6053 = vadd.f32 %v5828, %v6052
        %v6054 = vpop.f32.mrb[0].mxu0
        %6055 = vmatprep.mubr.f32.mxu0 0.0
        %6056 = vmatmul.mubr.f32.gmra.mrb[0].mxu0 %v5651
        %v6057 = vpop.f32.mrb[0].mxu0
        %v6058 = vadd.f32 %v5833, %v6057
        %v6059 = vpop.f32.mrb[0].mxu0
        %6060 = vmatprep.mubr.f32.mxu0 0.0
        %6061 = vmatmul.mubr.f32.gmra.mrb[0].mxu0 %v5654
        %v6062 = vpop.f32.mrb[0].mxu0
        %v6063 = vadd.f32 %v5838, %v6062
        %v6064 = vpop.f32.mrb[0].mxu0
        %6065 = vmatprep.mubr.f32.mxu0 0.0
        %6066 = vmatmul.mubr.f32.gmra.mrb[0].mxu0 %v5657
        %v6067 = vpop.f32.mrb[0].mxu0
        %v6068 = vadd.f32 %v5843, %v6067
        %v6069 = vpop.f32.mrb[0].mxu0
        %6070 = vmatprep.mubr.f32.mxu0 0.0
        %6071 = vmatmul.mubr.f32.gmra.mrb[0].mxu0 %v5660
        %v6072 = vpop.f32.mrb[0].mxu0
        %v6073 = vadd.f32 %v5848, %v6072
        %v6074 = vpop.f32.mrb[0].mxu0
        %6075 = vmatprep.mubr.f32.mxu0 0.0
        %6076 = vmatmul.mubr.f32.gmra.mrb[0].mxu0 %v5663
        %v6077 = vpop.f32.mrb[0].mxu0
        %v6078 = vadd.f32 %v5853, %v6077
        %v6079 = vpop.f32.mrb[0].mxu0
        %6080 = vmatprep.mubr.f32.mxu0 0.0
        %6081 = vmatmul.mubr.f32.gmra.mrb[0].mxu0 %v5666
        %v6082 = vpop.f32.mrb[0].mxu0
        %v6083 = vadd.f32 %v5858, %v6082
        %v6084 = vpop.f32.mrb[0].mxu0
        %6085 = vmatprep.mubr.f32.mxu0 0.0
        %6086 = vmatmul.mubr.f32.gmra.mrb[0].mxu0 %v5669
        %v6087 = vpop.f32.mrb[0].mxu0
        %v6088 = vadd.f32 %v5863, %v6087
        %v6089 = vpop.f32.mrb[0].mxu0
        %6090 = vmatprep.mubr.f32.mxu0 0.0
        %6091 = vmatmul.mubr.f32.gmra.mrb[0].mxu0 %v5672
        %v6092 = vpop.f32.mrb[0].mxu0
        %v6093 = vadd.f32 %v5868, %v6092
        %v6094 = vpop.f32.mrb[0].mxu0
        %6095 = vmatprep.mubr.f32.mxu0 0.0
        %6096 = vmatmul.mubr.f32.gmra.mrb[0].mxu0 %v5675
        %v6097 = vpop.f32.mrb[0].mxu0
        %v6098 = vadd.f32 %v5873, %v6097
        %v6099 = vpop.f32.mrb[0].mxu0
        %6100 = vmatprep.mubr.f32.mxu0 0.0
        %6101 = vmatmul.mubr.f32.gmra.mrb[0].mxu0 %v5678
        %v6102 = vpop.f32.mrb[0].mxu0
        %v6103 = vadd.f32 %v5878, %v6102
        %v6104 = vpop.f32.mrb[0].mxu0
        %6105 = vmatprep.mubr.f32.mxu0 0.0
        %6106 = vmatmul.mubr.f32.gmra.mrb[0].mxu0 %v5681
        %v6107 = vpop.f32.mrb[0].mxu0
        %v6108 = vadd.f32 %v5883, %v6107
        %v6109 = vpop.f32.mrb[0].mxu0
        %6110 = vmatprep.mubr.f32.mxu0 0.0
        %6111 = vmatmul.mubr.f32.gmra.mrb[0].mxu0 %v5684
        %v6112 = vpop.f32.mrb[0].mxu0
        %v6113 = vadd.f32 %v5888, %v6112
        %v6114 = vpop.f32.mrb[0].mxu0
        %6115 = vmatprep.mubr.f32.mxu0 0.0
        %6116 = vmatmul.mubr.f32.gmra.mrb[0].mxu0 %v5687
        %v6117 = vpop.f32.mrb[0].mxu0
        %v6118 = vadd.f32 %v5893, %v6117
        %v6119 = vpop.f32.mrb[0].mxu0
        %6120 = vmatprep.mubr.f32.mxu0 0.0
        %6121 = vmatmul.mubr.f32.gmra.mrb[0].mxu0 %v5690
        %v6122 = vpop.f32.mrb[0].mxu0
        %v6123 = vadd.f32 %v5898, %v6122
        %v6124 = vpop.f32.mrb[0].mxu0
        %6125 = vmatprep.mubr.f32.mxu0 0.0
        %6126 = vmatmul.mubr.f32.gmra.mrb[0].mxu0 %v5693
        %v6127 = vpop.f32.mrb[0].mxu0
        %v6128 = vadd.f32 %v5903, %v6127
        %v6129 = vpop.f32.mrb[0].mxu0
        %6130 = vmatprep.mubr.f32.mxu0 0.0
        %6131 = vmatmul.mubr.f32.gmra.mrb[0].mxu0 %v5696
        %v6132 = vpop.f32.mrb[0].mxu0
        %v6133 = vadd.f32 %v5908, %v6132
        %v6134 = vpop.f32.mrb[0].mxu0
        %6135 = vmatprep.mubr.f32.mxu0 0.0
        %6136 = vmatmul.mubr.f32.gmra.mrb[0].mxu0 %v5699
        %v6137 = vpop.f32.mrb[0].mxu0
        %v6138 = vadd.f32 %v5913, %v6137
        %v6139 = vpop.f32.mrb[0].mxu0
        %6140 = vmatprep.mubr.f32.mxu0 0.0
        %6141 = vmatmul.mubr.f32.gmra.mrb[0].mxu0 %v5702
        %v6142 = vpop.f32.mrb[0].mxu0
        %v6143 = vadd.f32 %v5918, %v6142
        %v6144 = vpop.f32.mrb[0].mxu0
        %6145 = vmatprep.mubr.f32.mxu0 0.0
        %6146 = vmatmul.mubr.f32.gmra.mrb[0].mxu0 %v5705
        %v6147 = vpop.f32.mrb[0].mxu0
        %v6148 = vadd.f32 %v5923, %v6147
        %v6149 = vpop.f32.mrb[0].mxu0
        %6150 = vmatprep.mubr.f32.mxu0 0.0
        %6151 = vmatmul.mubr.f32.gmra.mrb[0].mxu0 %v5708
        %v6152 = vpop.f32.mrb[0].mxu0
        %v6153 = vadd.f32 %v5928, %v6152
        %v6154 = vpop.f32.mrb[0].mxu0
        %6155 = vmatprep.mubr.f32.mxu0 0.0
        %6156 = vmatmul.mubr.f32.gmra.mrb[0].mxu0 %v5711
        %v6157 = vpop.f32.mrb[0].mxu0
        %v6158 = vadd.f32 %v5933, %v6157
        %v6159 = vpop.f32.mrb[0].mxu0
        %6160 = vmatprep.mubr.f32.mxu0 0.0
        %6161 = vmatmul.mubr.f32.gmra.mrb[0].mxu0 %v5714
        %v6162 = vpop.f32.mrb[0].mxu0
        %v6163 = vadd.f32 %v5938, %v6162
        %v6164 = vpop.f32.mrb[0].mxu0
        %6165 = vdwg.mxu0
        %v6167 = vsel %vm600, %v5099, 0
        %v6170 = vsel %vm600, %v5100, 0
        %6172 = vmatprep.subr.mxu0 0.0
        %6173 = vmatpush1.msra.mxu0 %v5539
        %6174 = vmatprep.subr.mxu0 0.0
        %6175 = vmatpush1.msra.mxu0 %v5540
        %6176 = vmatprep.subr.mxu0 0.0
        %6177 = vmatpush1.msra.mxu0 %v5541
        %6178 = vmatprep.subr.mxu0 0.0
        %6179 = vmatpush1.msra.mxu0 %v5542
        %6180 = vmatprep.subr.mxu0 0.0
        %6181 = vmatpush1.msra.mxu0 %v5543
        %6182 = vmatprep.subr.mxu0 0.0
        %6183 = vmatpush1.msra.mxu0 %v5544
        %6184 = vmatprep.subr.mxu0 0.0
        %6185 = vmatpush1.msra.mxu0 %v5545
        %6186 = vmatprep.subr.mxu0 0.0
        %6187 = vmatpush1.msra.mxu0 %v5546
        %6188 = vmatprep.subr.mxu0 0.0
        %6189 = vmatpush1.msra.mxu0 %v5547
        %6190 = vmatprep.subr.mxu0 0.0
        %6191 = vmatpush1.msra.mxu0 %v5548
        %6192 = vmatprep.subr.mxu0 0.0
        %6193 = vmatpush1.msra.mxu0 %v5549
        %6194 = vmatprep.subr.mxu0 0.0
        %6195 = vmatpush1.msra.mxu0 %v5550
        %6196 = vmatprep.subr.mxu0 0.0
        %6197 = vmatpush1.msra.mxu0 %v5551
        %6198 = vmatprep.subr.mxu0 0.0
        %6199 = vmatpush1.msra.mxu0 %v5552
        %6200 = vmatprep.subr.mxu0 0.0
        %6201 = vmatpush1.msra.mxu0 %v5553
        %6202 = vmatprep.subr.mxu0 0.0
        %6203 = vmatpush1.msra.mxu0 %v5554
        %6204 = vmatprep.subr.mxu0 0.0
        %6205 = vmatpush1.msra.mxu0 %v5555
        %6206 = vmatprep.subr.mxu0 0.0
        %6207 = vmatpush1.msra.mxu0 %v5556
        %6208 = vmatprep.subr.mxu0 0.0
        %6209 = vmatpush1.msra.mxu0 %v5557
        %6210 = vmatprep.subr.mxu0 0.0
        %6211 = vmatpush1.msra.mxu0 %v5558
        %6212 = vmatprep.subr.mxu0 0.0
        %6213 = vmatpush1.msra.mxu0 %v5559
        %6214 = vmatprep.subr.mxu0 0.0
        %6215 = vmatpush1.msra.mxu0 %v5560
        %6216 = vmatprep.subr.mxu0 0.0
        %6217 = vmatpush1.msra.mxu0 %v5561
        %6218 = vmatprep.subr.mxu0 0.0
        %6219 = vmatpush1.msra.mxu0 %v5562
        %6220 = vmatprep.subr.mxu0 0.0
        %6221 = vmatpush1.msra.mxu0 %v5563
        %6222 = vmatprep.subr.mxu0 0.0
        %6223 = vmatpush1.msra.mxu0 %v5564
        %6224 = vmatprep.subr.mxu0 0.0
        %6225 = vmatpush1.msra.mxu0 %v5565
        %6226 = vmatprep.subr.mxu0 0.0
        %6227 = vmatpush1.msra.mxu0 %v5566
        %6228 = vmatprep.subr.mxu0 0.0
        %6229 = vmatpush1.msra.mxu0 %v5567
        %6230 = vmatprep.subr.mxu0 0.0
        %6231 = vmatpush1.msra.mxu0 %v5568
        %6232 = vmatprep.subr.mxu0 0.0
        %6233 = vmatpush1.msra.mxu0 %v5569
        %6234 = vmatprep.subr.mxu0 0.0
        %6235 = vmatpush1.msra.mxu0 %v5570
        %6236 = vmatprep.mubr.f32.mxu0 %v5499
        %6237 = vmatmul.mubr.f32.gmra.mrb[0].mxu0 %v5459
        %v6238 = vpop.f32.mrb[0].mxu0
        %v6239 = vadd.f32 %v6008, %v6238
        %v6240 = vpop.f32.mrb[0].mxu0
        %6241 = vmatprep.mubr.f32.mxu0 %v5500
        %6242 = vmatmul.mubr.f32.gmra.mrb[0].mxu0 %v5460
        %v6243 = vpop.f32.mrb[0].mxu0
        %v6244 = vadd.f32 %v6013, %v6243
        %v6245 = vpop.f32.mrb[0].mxu0
        %6246 = vmatprep.mubr.f32.mxu0 %v5501
        %6247 = vmatmul.mubr.f32.gmra.mrb[0].mxu0 %v5461
        %v6248 = vpop.f32.mrb[0].mxu0
        %v6249 = vadd.f32 %v6018, %v6248
        %v6250 = vpop.f32.mrb[0].mxu0
        %6251 = vmatprep.mubr.f32.mxu0 %v5502
        %6252 = vmatmul.mubr.f32.gmra.mrb[0].mxu0 %v5462
        %v6253 = vpop.f32.mrb[0].mxu0
        %v6254 = vadd.f32 %v6023, %v6253
        %v6255 = vpop.f32.mrb[0].mxu0
        %6256 = vmatprep.mubr.f32.mxu0 %v5503
        %6257 = vmatmul.mubr.f32.gmra.mrb[0].mxu0 %v5463
        %v6258 = vpop.f32.mrb[0].mxu0
        %v6259 = vadd.f32 %v6028, %v6258
        %v6260 = vpop.f32.mrb[0].mxu0
        %6261 = vmatprep.mubr.f32.mxu0 %v5504
        %6262 = vmatmul.mubr.f32.gmra.mrb[0].mxu0 %v5464
        %v6263 = vpop.f32.mrb[0].mxu0
        %v6264 = vadd.f32 %v6033, %v6263
        %v6265 = vpop.f32.mrb[0].mxu0
        %6266 = vmatprep.mubr.f32.mxu0 %v5505
        %6267 = vmatmul.mubr.f32.gmra.mrb[0].mxu0 %v5465
        %v6268 = vpop.f32.mrb[0].mxu0
        %v6269 = vadd.f32 %v6038, %v6268
        %v6270 = vpop.f32.mrb[0].mxu0
        %6271 = vmatprep.mubr.f32.mxu0 %v5506
        %6272 = vmatmul.mubr.f32.gmra.mrb[0].mxu0 %v5466
        %v6273 = vpop.f32.mrb[0].mxu0
        %v6274 = vadd.f32 %v6043, %v6273
        %v6275 = vpop.f32.mrb[0].mxu0
        %6276 = vmatprep.mubr.f32.mxu0 %v5507
        %6277 = vmatmul.mubr.f32.gmra.mrb[0].mxu0 %v5467
        %v6278 = vpop.f32.mrb[0].mxu0
        %v6279 = vadd.f32 %v6048, %v6278
        %v6280 = vpop.f32.mrb[0].mxu0
        %6281 = vmatprep.mubr.f32.mxu0 %v5508
        %6282 = vmatmul.mubr.f32.gmra.mrb[0].mxu0 %v5468
        %v6283 = vpop.f32.mrb[0].mxu0
        %v6284 = vadd.f32 %v6053, %v6283
        %v6285 = vpop.f32.mrb[0].mxu0
        %6286 = vmatprep.mubr.f32.mxu0 %v5509
        %6287 = vmatmul.mubr.f32.gmra.mrb[0].mxu0 %v5469
        %v6288 = vpop.f32.mrb[0].mxu0
        %v6289 = vadd.f32 %v6058, %v6288
        %v6290 = vpop.f32.mrb[0].mxu0
        %6291 = vmatprep.mubr.f32.mxu0 %v5510
        %6292 = vmatmul.mubr.f32.gmra.mrb[0].mxu0 %v5470
        %v6293 = vpop.f32.mrb[0].mxu0
        %v6294 = vadd.f32 %v6063, %v6293
        %v6295 = vpop.f32.mrb[0].mxu0
        %6296 = vmatprep.mubr.f32.mxu0 %v5511
        %6297 = vmatmul.mubr.f32.gmra.mrb[0].mxu0 %v5471
        %v6298 = vpop.f32.mrb[0].mxu0
        %v6299 = vadd.f32 %v6068, %v6298
        %v6300 = vpop.f32.mrb[0].mxu0
        %6301 = vmatprep.mubr.f32.mxu0 %v5512
        %6302 = vmatmul.mubr.f32.gmra.mrb[0].mxu0 %v5472
        %v6303 = vpop.f32.mrb[0].mxu0
        %v6304 = vadd.f32 %v6073, %v6303
        %v6305 = vpop.f32.mrb[0].mxu0
        %6306 = vmatprep.mubr.f32.mxu0 %v5513
        %6307 = vmatmul.mubr.f32.gmra.mrb[0].mxu0 %v5473
        %v6308 = vpop.f32.mrb[0].mxu0
        %v6309 = vadd.f32 %v6078, %v6308
        %v6310 = vpop.f32.mrb[0].mxu0
        %6311 = vmatprep.mubr.f32.mxu0 %v5514
        %6312 = vmatmul.mubr.f32.gmra.mrb[0].mxu0 %v5474
        %v6313 = vpop.f32.mrb[0].mxu0
        %v6314 = vadd.f32 %v6083, %v6313
        %v6315 = vpop.f32.mrb[0].mxu0
        %6316 = vmatprep.mubr.f32.mxu0 %v5515
        %6317 = vmatmul.mubr.f32.gmra.mrb[0].mxu0 %v5475
        %v6318 = vpop.f32.mrb[0].mxu0
        %v6319 = vadd.f32 %v6088, %v6318
        %v6320 = vpop.f32.mrb[0].mxu0
        %6321 = vmatprep.mubr.f32.mxu0 %v5516
        %6322 = vmatmul.mubr.f32.gmra.mrb[0].mxu0 %v5476
        %v6323 = vpop.f32.mrb[0].mxu0
        %v6324 = vadd.f32 %v6093, %v6323
        %v6325 = vpop.f32.mrb[0].mxu0
        %6326 = vmatprep.mubr.f32.mxu0 %v5517
        %6327 = vmatmul.mubr.f32.gmra.mrb[0].mxu0 %v5477
        %v6328 = vpop.f32.mrb[0].mxu0
        %v6329 = vadd.f32 %v6098, %v6328
        %v6330 = vpop.f32.mrb[0].mxu0
        %6331 = vmatprep.mubr.f32.mxu0 %v5518
        %6332 = vmatmul.mubr.f32.gmra.mrb[0].mxu0 %v5478
        %v6333 = vpop.f32.mrb[0].mxu0
        %v6334 = vadd.f32 %v6103, %v6333
        %v6335 = vpop.f32.mrb[0].mxu0
        %6336 = vmatprep.mubr.f32.mxu0 %v5519
        %6337 = vmatmul.mubr.f32.gmra.mrb[0].mxu0 %v5479
        %v6338 = vpop.f32.mrb[0].mxu0
        %v6339 = vadd.f32 %v6108, %v6338
        %v6340 = vpop.f32.mrb[0].mxu0
        %6341 = vmatprep.mubr.f32.mxu0 %v5520
        %6342 = vmatmul.mubr.f32.gmra.mrb[0].mxu0 %v5480
        %v6343 = vpop.f32.mrb[0].mxu0
        %v6344 = vadd.f32 %v6113, %v6343
        %v6345 = vpop.f32.mrb[0].mxu0
        %6346 = vmatprep.mubr.f32.mxu0 %v5521
        %6347 = vmatmul.mubr.f32.gmra.mrb[0].mxu0 %v5481
        %v6348 = vpop.f32.mrb[0].mxu0
        %v6349 = vadd.f32 %v6118, %v6348
        %v6350 = vpop.f32.mrb[0].mxu0
        %6351 = vmatprep.mubr.f32.mxu0 %v5522
        %6352 = vmatmul.mubr.f32.gmra.mrb[0].mxu0 %v5482
        %v6353 = vpop.f32.mrb[0].mxu0
        %v6354 = vadd.f32 %v6123, %v6353
        %v6355 = vpop.f32.mrb[0].mxu0
        %6356 = vmatprep.mubr.f32.mxu0 %v5523
        %6357 = vmatmul.mubr.f32.gmra.mrb[0].mxu0 %v5483
        %v6358 = vpop.f32.mrb[0].mxu0
        %v6359 = vadd.f32 %v6128, %v6358
        %v6360 = vpop.f32.mrb[0].mxu0
        %6361 = vmatprep.mubr.f32.mxu0 %v5524
        %6362 = vmatmul.mubr.f32.gmra.mrb[0].mxu0 %v5484
        %v6363 = vpop.f32.mrb[0].mxu0
        %v6364 = vadd.f32 %v6133, %v6363
        %v6365 = vpop.f32.mrb[0].mxu0
        %6366 = vmatprep.mubr.f32.mxu0 %v5525
        %6367 = vmatmul.mubr.f32.gmra.mrb[0].mxu0 %v5485
        %v6368 = vpop.f32.mrb[0].mxu0
        %v6369 = vadd.f32 %v6138, %v6368
        %v6370 = vpop.f32.mrb[0].mxu0
        %6371 = vmatprep.mubr.f32.mxu0 %v5526
        %6372 = vmatmul.mubr.f32.gmra.mrb[0].mxu0 %v5486
        %v6373 = vpop.f32.mrb[0].mxu0
        %v6374 = vadd.f32 %v6143, %v6373
        %v6375 = vpop.f32.mrb[0].mxu0
        %6376 = vmatprep.mubr.f32.mxu0 %v5527
        %6377 = vmatmul.mubr.f32.gmra.mrb[0].mxu0 %v5487
        %v6378 = vpop.f32.mrb[0].mxu0
        %v6379 = vadd.f32 %v6148, %v6378
        %v6380 = vpop.f32.mrb[0].mxu0
        %6381 = vmatprep.mubr.f32.mxu0 %v5528
        %6382 = vmatmul.mubr.f32.gmra.mrb[0].mxu0 %v5488
        %v6383 = vpop.f32.mrb[0].mxu0
        %v6384 = vadd.f32 %v6153, %v6383
        %v6385 = vpop.f32.mrb[0].mxu0
        %6386 = vmatprep.mubr.f32.mxu0 %v5529
        %6387 = vmatmul.mubr.f32.gmra.mrb[0].mxu0 %v5489
        %v6388 = vpop.f32.mrb[0].mxu0
        %v6389 = vadd.f32 %v6158, %v6388
        %v6390 = vpop.f32.mrb[0].mxu0
        %6391 = vmatprep.mubr.f32.mxu0 %v5530
        %6392 = vmatmul.mubr.f32.gmra.mrb[0].mxu0 %v5490
        %v6393 = vpop.f32.mrb[0].mxu0
        %v6394 = vadd.f32 %v6163, %v6393
        %v6395 = vpop.f32.mrb[0].mxu0
        %6396 = vdwg.mxu0
        %6397 = vmatprep.subr.mxu0 0.0
        %6398 = vmatpush1.msra.mxu0 %v5571
        %6399 = vmatprep.subr.mxu0 0.0
        %6400 = vmatpush1.msra.mxu0 %v5572
        %6401 = vmatprep.subr.mxu0 0.0
        %6402 = vmatpush1.msra.mxu0 %v5573
        %6403 = vmatprep.subr.mxu0 0.0
        %6404 = vmatpush1.msra.mxu0 %v5574
        %6405 = vmatprep.subr.mxu0 0.0
        %6406 = vmatpush1.msra.mxu0 %v5575
        %6407 = vmatprep.subr.mxu0 0.0
        %6408 = vmatpush1.msra.mxu0 %v5576
        %6409 = vmatprep.subr.mxu0 0.0
        %6410 = vmatpush1.msra.mxu0 %v5577
        %6411 = vmatprep.subr.mxu0 0.0
        %6412 = vmatpush1.msra.mxu0 %v5578
        %6413 = vmatprep.subr.mxu0 0.0
        %6414 = vmatpush1.msra.mxu0 0.0
        %6415 = vmatprep.subr.mxu0 0.0
        %6416 = vmatpush1.msra.mxu0 0.0
        %6417 = vmatprep.subr.mxu0 0.0
        %6418 = vmatpush1.msra.mxu0 0.0
        %6419 = vmatprep.subr.mxu0 0.0
        %6420 = vmatpush1.msra.mxu0 0.0
        %6421 = vmatprep.subr.mxu0 0.0
        %6422 = vmatpush1.msra.mxu0 0.0
        %6423 = vmatprep.subr.mxu0 0.0
        %6424 = vmatpush1.msra.mxu0 0.0
        %6425 = vmatprep.subr.mxu0 0.0
        %6426 = vmatpush1.msra.mxu0 0.0
        %6427 = vmatprep.subr.mxu0 0.0
        %6428 = vmatpush1.msra.mxu0 0.0
        %6429 = vmatprep.subr.mxu0 0.0
        %6430 = vmatpush1.msra.mxu0 0.0
        %6431 = vmatprep.subr.mxu0 0.0
        %6432 = vmatpush1.msra.mxu0 0.0
        %6433 = vmatprep.subr.mxu0 0.0
        %6434 = vmatpush1.msra.mxu0 0.0
        %6435 = vmatprep.subr.mxu0 0.0
        %6436 = vmatpush1.msra.mxu0 0.0
        %6437 = vmatprep.subr.mxu0 0.0
        %6438 = vmatpush1.msra.mxu0 0.0
        %6439 = vmatprep.subr.mxu0 0.0
        %6440 = vmatpush1.msra.mxu0 0.0
        %6441 = vmatprep.subr.mxu0 0.0
        %6442 = vmatpush1.msra.mxu0 0.0
        %6443 = vmatprep.subr.mxu0 0.0
        %6444 = vmatpush1.msra.mxu0 0.0
        %6445 = vmatprep.subr.mxu0 0.0
        %6446 = vmatpush1.msra.mxu0 0.0
        %6447 = vmatprep.subr.mxu0 0.0
        %6448 = vmatpush1.msra.mxu0 0.0
        %6449 = vmatprep.subr.mxu0 0.0
        %6450 = vmatpush1.msra.mxu0 0.0
        %6451 = vmatprep.subr.mxu0 0.0
        %6452 = vmatpush1.msra.mxu0 0.0
        %6453 = vmatprep.subr.mxu0 0.0
        %6454 = vmatpush1.msra.mxu0 0.0
        %6455 = vmatprep.subr.mxu0 0.0
        %6456 = vmatpush1.msra.mxu0 0.0
        %6457 = vmatprep.subr.mxu0 0.0
        %6458 = vmatpush1.msra.mxu0 0.0
        %6459 = vmatprep.subr.mxu0 0.0
        %6460 = vmatpush1.msra.mxu0 0.0
        %6461 = vmatprep.mubr.f32.mxu0 0.0
        %6462 = vmatmul.mubr.f32.gmra.mrb[0].mxu0 %v6167
        %v6463 = vpop.f32.mrb[0].mxu0
        %v6464 = vadd.f32 %v6239, %v6463
        %v6465 = vpop.f32.mrb[0].mxu0
        %6466 = vmatprep.mubr.f32.mxu0 0.0
        %6467 = vmatmul.mubr.f32.gmra.mrb[0].mxu0 %v6170
        %v6468 = vpop.f32.mrb[0].mxu0
        %v6469 = vadd.f32 %v6244, %v6468
        %v6470 = vpop.f32.mrb[0].mxu0
        %6471 = vmatprep.mubr.f32.mxu0 0.0
        %6472 = vmatmul.mubr.f32.gmra.mrb[0].mxu0 %v5621
        %v6473 = vpop.f32.mrb[0].mxu0
        %v6474 = vadd.f32 %v6249, %v6473
        %v6475 = vpop.f32.mrb[0].mxu0
        %6476 = vmatprep.mubr.f32.mxu0 0.0
        %6477 = vmatmul.mubr.f32.gmra.mrb[0].mxu0 %v5624
        %v6478 = vpop.f32.mrb[0].mxu0
        %v6479 = vadd.f32 %v6254, %v6478
        %v6480 = vpop.f32.mrb[0].mxu0
        %6481 = vmatprep.mubr.f32.mxu0 0.0
        %6482 = vmatmul.mubr.f32.gmra.mrb[0].mxu0 %v5627
        %v6483 = vpop.f32.mrb[0].mxu0
        %v6484 = vadd.f32 %v6259, %v6483
        %v6485 = vpop.f32.mrb[0].mxu0
        %6486 = vmatprep.mubr.f32.mxu0 0.0
        %6487 = vmatmul.mubr.f32.gmra.mrb[0].mxu0 %v5630
        %v6488 = vpop.f32.mrb[0].mxu0
        %v6489 = vadd.f32 %v6264, %v6488
        %v6490 = vpop.f32.mrb[0].mxu0
        %6491 = vmatprep.mubr.f32.mxu0 0.0
        %6492 = vmatmul.mubr.f32.gmra.mrb[0].mxu0 %v5633
        %v6493 = vpop.f32.mrb[0].mxu0
        %v6494 = vadd.f32 %v6269, %v6493
        %v6495 = vpop.f32.mrb[0].mxu0
        %6496 = vmatprep.mubr.f32.mxu0 0.0
        %6497 = vmatmul.mubr.f32.gmra.mrb[0].mxu0 %v5636
        %v6498 = vpop.f32.mrb[0].mxu0
        %v6499 = vadd.f32 %v6274, %v6498
        %v6500 = vpop.f32.mrb[0].mxu0
        %6501 = vmatprep.mubr.f32.mxu0 0.0
        %6502 = vmatmul.mubr.f32.gmra.mrb[0].mxu0 %v5639
        %v6503 = vpop.f32.mrb[0].mxu0
        %v6504 = vadd.f32 %v6279, %v6503
        %v6505 = vpop.f32.mrb[0].mxu0
        %6506 = vmatprep.mubr.f32.mxu0 0.0
        %6507 = vmatmul.mubr.f32.gmra.mrb[0].mxu0 %v5642
        %v6508 = vpop.f32.mrb[0].mxu0
        %v6509 = vadd.f32 %v6284, %v6508
        %v6510 = vpop.f32.mrb[0].mxu0
        %6511 = vmatprep.mubr.f32.mxu0 0.0
        %6512 = vmatmul.mubr.f32.gmra.mrb[0].mxu0 %v5645
        %v6513 = vpop.f32.mrb[0].mxu0
        %v6514 = vadd.f32 %v6289, %v6513
        %v6515 = vpop.f32.mrb[0].mxu0
        %6516 = vmatprep.mubr.f32.mxu0 0.0
        %6517 = vmatmul.mubr.f32.gmra.mrb[0].mxu0 %v5648
        %v6518 = vpop.f32.mrb[0].mxu0
        %v6519 = vadd.f32 %v6294, %v6518
        %v6520 = vpop.f32.mrb[0].mxu0
        %6521 = vmatprep.mubr.f32.mxu0 0.0
        %6522 = vmatmul.mubr.f32.gmra.mrb[0].mxu0 %v5651
        %v6523 = vpop.f32.mrb[0].mxu0
        %v6524 = vadd.f32 %v6299, %v6523
        %v6525 = vpop.f32.mrb[0].mxu0
        %6526 = vmatprep.mubr.f32.mxu0 0.0
        %6527 = vmatmul.mubr.f32.gmra.mrb[0].mxu0 %v5654
        %v6528 = vpop.f32.mrb[0].mxu0
        %v6529 = vadd.f32 %v6304, %v6528
        %v6530 = vpop.f32.mrb[0].mxu0
        %6531 = vmatprep.mubr.f32.mxu0 0.0
        %6532 = vmatmul.mubr.f32.gmra.mrb[0].mxu0 %v5657
        %v6533 = vpop.f32.mrb[0].mxu0
        %v6534 = vadd.f32 %v6309, %v6533
        %v6535 = vpop.f32.mrb[0].mxu0
        %6536 = vmatprep.mubr.f32.mxu0 0.0
        %6537 = vmatmul.mubr.f32.gmra.mrb[0].mxu0 %v5660
        %v6538 = vpop.f32.mrb[0].mxu0
        %v6539 = vadd.f32 %v6314, %v6538
        %v6540 = vpop.f32.mrb[0].mxu0
        %6541 = vmatprep.mubr.f32.mxu0 0.0
        %6542 = vmatmul.mubr.f32.gmra.mrb[0].mxu0 %v5663
        %v6543 = vpop.f32.mrb[0].mxu0
        %v6544 = vadd.f32 %v6319, %v6543
        %v6545 = vpop.f32.mrb[0].mxu0
        %6546 = vmatprep.mubr.f32.mxu0 0.0
        %6547 = vmatmul.mubr.f32.gmra.mrb[0].mxu0 %v5666
        %v6548 = vpop.f32.mrb[0].mxu0
        %v6549 = vadd.f32 %v6324, %v6548
        %v6550 = vpop.f32.mrb[0].mxu0
        %6551 = vmatprep.mubr.f32.mxu0 0.0
        %6552 = vmatmul.mubr.f32.gmra.mrb[0].mxu0 %v5669
        %v6553 = vpop.f32.mrb[0].mxu0
        %v6554 = vadd.f32 %v6329, %v6553
        %v6555 = vpop.f32.mrb[0].mxu0
        %6556 = vmatprep.mubr.f32.mxu0 0.0
        %6557 = vmatmul.mubr.f32.gmra.mrb[0].mxu0 %v5672
        %v6558 = vpop.f32.mrb[0].mxu0
        %v6559 = vadd.f32 %v6334, %v6558
        %v6560 = vpop.f32.mrb[0].mxu0
        %6561 = vmatprep.mubr.f32.mxu0 0.0
        %6562 = vmatmul.mubr.f32.gmra.mrb[0].mxu0 %v5675
        %v6563 = vpop.f32.mrb[0].mxu0
        %v6564 = vadd.f32 %v6339, %v6563
        %v6565 = vpop.f32.mrb[0].mxu0
        %6566 = vmatprep.mubr.f32.mxu0 0.0
        %6567 = vmatmul.mubr.f32.gmra.mrb[0].mxu0 %v5678
        %v6568 = vpop.f32.mrb[0].mxu0
        %v6569 = vadd.f32 %v6344, %v6568
        %v6570 = vpop.f32.mrb[0].mxu0
        %6571 = vmatprep.mubr.f32.mxu0 0.0
        %6572 = vmatmul.mubr.f32.gmra.mrb[0].mxu0 %v5681
        %v6573 = vpop.f32.mrb[0].mxu0
        %v6574 = vadd.f32 %v6349, %v6573
        %v6575 = vpop.f32.mrb[0].mxu0
        %6576 = vmatprep.mubr.f32.mxu0 0.0
        %6577 = vmatmul.mubr.f32.gmra.mrb[0].mxu0 %v5684
        %v6578 = vpop.f32.mrb[0].mxu0
        %v6579 = vadd.f32 %v6354, %v6578
        %v6580 = vpop.f32.mrb[0].mxu0
        %6581 = vmatprep.mubr.f32.mxu0 0.0
        %6582 = vmatmul.mubr.f32.gmra.mrb[0].mxu0 %v5687
        %v6583 = vpop.f32.mrb[0].mxu0
        %v6584 = vadd.f32 %v6359, %v6583
        %v6585 = vpop.f32.mrb[0].mxu0
        %6586 = vmatprep.mubr.f32.mxu0 0.0
        %6587 = vmatmul.mubr.f32.gmra.mrb[0].mxu0 %v5690
        %v6588 = vpop.f32.mrb[0].mxu0
        %v6589 = vadd.f32 %v6364, %v6588
        %v6590 = vpop.f32.mrb[0].mxu0
        %6591 = vmatprep.mubr.f32.mxu0 0.0
        %6592 = vmatmul.mubr.f32.gmra.mrb[0].mxu0 %v5693
        %v6593 = vpop.f32.mrb[0].mxu0
        %v6594 = vadd.f32 %v6369, %v6593
        %v6595 = vpop.f32.mrb[0].mxu0
        %6596 = vmatprep.mubr.f32.mxu0 0.0
        %6597 = vmatmul.mubr.f32.gmra.mrb[0].mxu0 %v5696
        %v6598 = vpop.f32.mrb[0].mxu0
        %v6599 = vadd.f32 %v6374, %v6598
        %v6600 = vpop.f32.mrb[0].mxu0
        %6601 = vmatprep.mubr.f32.mxu0 0.0
        %6602 = vmatmul.mubr.f32.gmra.mrb[0].mxu0 %v5699
        %v6603 = vpop.f32.mrb[0].mxu0
        %v6604 = vadd.f32 %v6379, %v6603
        %v6605 = vpop.f32.mrb[0].mxu0
        %6606 = vmatprep.mubr.f32.mxu0 0.0
        %6607 = vmatmul.mubr.f32.gmra.mrb[0].mxu0 %v5702
        %v6608 = vpop.f32.mrb[0].mxu0
        %v6609 = vadd.f32 %v6384, %v6608
        %v6610 = vpop.f32.mrb[0].mxu0
        %6611 = vmatprep.mubr.f32.mxu0 0.0
        %6612 = vmatmul.mubr.f32.gmra.mrb[0].mxu0 %v5705
        %v6613 = vpop.f32.mrb[0].mxu0
        %v6614 = vadd.f32 %v6389, %v6613
        %v6615 = vpop.f32.mrb[0].mxu0
        %6616 = vmatprep.mubr.f32.mxu0 0.0
        %6617 = vmatmul.mubr.f32.gmra.mrb[0].mxu0 %v5708
        %v6618 = vpop.f32.mrb[0].mxu0
        %v6619 = vadd.f32 %v6394, %v6618
        %v6620 = vpop.f32.mrb[0].mxu0
        %6621 = vdwg.mxu0
        %s6622 = scalar_lea.vmem [#allocation14], 640
        %v6623 = vld [vmem:[%s6622] sm:$0xff]
        %v6624 = vld [vmem:[%s6622 + $0x8] sm:$0xff]
        %v6625 = vld [vmem:[%s6622 + $0x10] sm:$0xff]
        %v6626 = vld [vmem:[%s6622 + $0x18] sm:$0xff]
        %v6627 = vld [vmem:[%s6622 + $0x20] sm:$0xff]
        %v6628 = vld [vmem:[%s6622 + $0x28] sm:$0xff]
        %v6629 = vld [vmem:[%s6622 + $0x30] sm:$0xff]
        %v6630 = vld [vmem:[%s6622 + $0x38] sm:$0xff]
        %v6631 = vld [vmem:[%s6622 + $0x40] sm:$0xff]
        %v6632 = vld [vmem:[%s6622 + $0x48] sm:$0xff]
        %v6633 = vld [vmem:[%s6622 + $0x50] sm:$0xff]
        %v6634 = vld [vmem:[%s6622 + $0x58] sm:$0xff]
        %v6635 = vld [vmem:[%s6622 + $0x60] sm:$0xff]
        %v6636 = vld [vmem:[%s6622 + $0x68] sm:$0xff]
        %v6637 = vld [vmem:[%s6622 + $0x70] sm:$0xff]
        %v6638 = vld [vmem:[%s6622 + $0x78] sm:$0xff]
        %v6639 = vld [vmem:[%s6622 + $0x80] sm:$0xff]
        %v6640 = vld [vmem:[%s6622 + $0x88] sm:$0xff]
        %v6641 = vld [vmem:[%s6622 + $0x90] sm:$0xff]
        %v6642 = vld [vmem:[%s6622 + $0x98] sm:$0xff]
        %v6643 = vld [vmem:[%s6622 + $0xa0] sm:$0xff]
        %v6644 = vld [vmem:[%s6622 + $0xa8] sm:$0xff]
        %v6645 = vld [vmem:[%s6622 + $0xb0] sm:$0xff]
        %v6646 = vld [vmem:[%s6622 + $0xb8] sm:$0xff]
        %v6647 = vld [vmem:[%s6622 + $0xc0] sm:$0xff]
        %v6648 = vld [vmem:[%s6622 + $0xc8] sm:$0xff]
        %v6649 = vld [vmem:[%s6622 + $0xd0] sm:$0xff]
        %v6650 = vld [vmem:[%s6622 + $0xd8] sm:$0xff]
        %v6651 = vld [vmem:[%s6622 + $0xe0] sm:$0xff]
        %v6652 = vld [vmem:[%s6622 + $0xe8] sm:$0xff]
        %v6653 = vld [vmem:[%s6622 + $0xf0] sm:$0xff]
        %v6654 = vld [vmem:[%s6622 + $0xf8] sm:$0xff]
        %v6655 = vld [vmem:[%s6622 + $0x100] sm:$0xff]
        %v6656 = vld [vmem:[%s6622 + $0x108] sm:$0xff]
        %v6657 = vld [vmem:[%s6622 + $0x110] sm:$0xff]
        %v6658 = vld [vmem:[%s6622 + $0x118] sm:$0xff]
        %v6659 = vld [vmem:[%s6622 + $0x120] sm:$0xff]
        %v6660 = vld [vmem:[%s6622 + $0x128] sm:$0xff]
        %v6661 = vld [vmem:[%s6622 + $0x130] sm:$0xff]
        %v6662 = vld [vmem:[%s6622 + $0x138] sm:$0xff]
        %v6664 = vsel %vm600, %v5133, 0
        %v6667 = vsel %vm600, %v5134, 0
        %6669 = vmatprep.subr.mxu0 0.0
        %6670 = vmatpush1.msra.mxu0 %v6623
        %6671 = vmatprep.subr.mxu0 0.0
        %6672 = vmatpush1.msra.mxu0 %v6624
        %6673 = vmatprep.subr.mxu0 0.0
        %6674 = vmatpush1.msra.mxu0 %v6625
        %6675 = vmatprep.subr.mxu0 0.0
        %6676 = vmatpush1.msra.mxu0 %v6626
        %6677 = vmatprep.subr.mxu0 0.0
        %6678 = vmatpush1.msra.mxu0 %v6627
        %6679 = vmatprep.subr.mxu0 0.0
        %6680 = vmatpush1.msra.mxu0 %v6628
        %6681 = vmatprep.subr.mxu0 0.0
        %6682 = vmatpush1.msra.mxu0 %v6629
        %6683 = vmatprep.subr.mxu0 0.0
        %6684 = vmatpush1.msra.mxu0 %v6630
        %6685 = vmatprep.subr.mxu0 0.0
        %6686 = vmatpush1.msra.mxu0 %v6631
        %6687 = vmatprep.subr.mxu0 0.0
        %6688 = vmatpush1.msra.mxu0 %v6632
        %6689 = vmatprep.subr.mxu0 0.0
        %6690 = vmatpush1.msra.mxu0 %v6633
        %6691 = vmatprep.subr.mxu0 0.0
        %6692 = vmatpush1.msra.mxu0 %v6634
        %6693 = vmatprep.subr.mxu0 0.0
        %6694 = vmatpush1.msra.mxu0 %v6635
        %6695 = vmatprep.subr.mxu0 0.0
        %6696 = vmatpush1.msra.mxu0 %v6636
        %6697 = vmatprep.subr.mxu0 0.0
        %6698 = vmatpush1.msra.mxu0 %v6637
        %6699 = vmatprep.subr.mxu0 0.0
        %6700 = vmatpush1.msra.mxu0 %v6638
        %6701 = vmatprep.subr.mxu0 0.0
        %6702 = vmatpush1.msra.mxu0 %v6639
        %6703 = vmatprep.subr.mxu0 0.0
        %6704 = vmatpush1.msra.mxu0 %v6640
        %6705 = vmatprep.subr.mxu0 0.0
        %6706 = vmatpush1.msra.mxu0 %v6641
        %6707 = vmatprep.subr.mxu0 0.0
        %6708 = vmatpush1.msra.mxu0 %v6642
        %6709 = vmatprep.subr.mxu0 0.0
        %6710 = vmatpush1.msra.mxu0 %v6643
        %6711 = vmatprep.subr.mxu0 0.0
        %6712 = vmatpush1.msra.mxu0 %v6644
        %6713 = vmatprep.subr.mxu0 0.0
        %6714 = vmatpush1.msra.mxu0 %v6645
        %6715 = vmatprep.subr.mxu0 0.0
        %6716 = vmatpush1.msra.mxu0 %v6646
        %6717 = vmatprep.subr.mxu0 0.0
        %6718 = vmatpush1.msra.mxu0 %v6647
        %6719 = vmatprep.subr.mxu0 0.0
        %6720 = vmatpush1.msra.mxu0 %v6648
        %6721 = vmatprep.subr.mxu0 0.0
        %6722 = vmatpush1.msra.mxu0 %v6649
        %6723 = vmatprep.subr.mxu0 0.0
        %6724 = vmatpush1.msra.mxu0 %v6650
        %6725 = vmatprep.subr.mxu0 0.0
        %6726 = vmatpush1.msra.mxu0 %v6651
        %6727 = vmatprep.subr.mxu0 0.0
        %6728 = vmatpush1.msra.mxu0 %v6652
        %6729 = vmatprep.subr.mxu0 0.0
        %6730 = vmatpush1.msra.mxu0 %v6653
        %6731 = vmatprep.subr.mxu0 0.0
        %6732 = vmatpush1.msra.mxu0 %v6654
        %6733 = vmatprep.mubr.f32.mxu0 %v5503
        %6734 = vmatmul.mubr.f32.gmra.mrb[0].mxu0 %v5463
        %v6735 = vpop.f32.mrb[0].mxu0
        %v6736 = vadd.f32 0.0, %v6735
        %v6737 = vpop.f32.mrb[0].mxu0
        %6738 = vmatprep.mubr.f32.mxu0 %v5504
        %6739 = vmatmul.mubr.f32.gmra.mrb[0].mxu0 %v5464
        %v6740 = vpop.f32.mrb[0].mxu0
        %v6741 = vadd.f32 0.0, %v6740
        %v6742 = vpop.f32.mrb[0].mxu0
        %6743 = vmatprep.mubr.f32.mxu0 %v5505
        %6744 = vmatmul.mubr.f32.gmra.mrb[0].mxu0 %v5465
        %v6745 = vpop.f32.mrb[0].mxu0
        %v6746 = vadd.f32 0.0, %v6745
        %v6747 = vpop.f32.mrb[0].mxu0
        %6748 = vmatprep.mubr.f32.mxu0 %v5506
        %6749 = vmatmul.mubr.f32.gmra.mrb[0].mxu0 %v5466
        %v6750 = vpop.f32.mrb[0].mxu0
        %v6751 = vadd.f32 0.0, %v6750
        %v6752 = vpop.f32.mrb[0].mxu0
        %6753 = vmatprep.mubr.f32.mxu0 %v5507
        %6754 = vmatmul.mubr.f32.gmra.mrb[0].mxu0 %v5467
        %v6755 = vpop.f32.mrb[0].mxu0
        %v6756 = vadd.f32 0.0, %v6755
        %v6757 = vpop.f32.mrb[0].mxu0
        %6758 = vmatprep.mubr.f32.mxu0 %v5508
        %6759 = vmatmul.mubr.f32.gmra.mrb[0].mxu0 %v5468
        %v6760 = vpop.f32.mrb[0].mxu0
        %v6761 = vadd.f32 0.0, %v6760
        %v6762 = vpop.f32.mrb[0].mxu0
        %6763 = vmatprep.mubr.f32.mxu0 %v5509
        %6764 = vmatmul.mubr.f32.gmra.mrb[0].mxu0 %v5469
        %v6765 = vpop.f32.mrb[0].mxu0
        %v6766 = vadd.f32 0.0, %v6765
        %v6767 = vpop.f32.mrb[0].mxu0
        %6768 = vmatprep.mubr.f32.mxu0 %v5510
        %6769 = vmatmul.mubr.f32.gmra.mrb[0].mxu0 %v5470
        %v6770 = vpop.f32.mrb[0].mxu0
        %v6771 = vadd.f32 0.0, %v6770
        %v6772 = vpop.f32.mrb[0].mxu0
        %6773 = vmatprep.mubr.f32.mxu0 %v5511
        %6774 = vmatmul.mubr.f32.gmra.mrb[0].mxu0 %v5471
        %v6775 = vpop.f32.mrb[0].mxu0
        %v6776 = vadd.f32 0.0, %v6775
        %v6777 = vpop.f32.mrb[0].mxu0
        %6778 = vmatprep.mubr.f32.mxu0 %v5512
        %6779 = vmatmul.mubr.f32.gmra.mrb[0].mxu0 %v5472
        %v6780 = vpop.f32.mrb[0].mxu0
        %v6781 = vadd.f32 0.0, %v6780
        %v6782 = vpop.f32.mrb[0].mxu0
        %6783 = vmatprep.mubr.f32.mxu0 %v5513
        %6784 = vmatmul.mubr.f32.gmra.mrb[0].mxu0 %v5473
        %v6785 = vpop.f32.mrb[0].mxu0
        %v6786 = vadd.f32 0.0, %v6785
        %v6787 = vpop.f32.mrb[0].mxu0
        %6788 = vmatprep.mubr.f32.mxu0 %v5514
        %6789 = vmatmul.mubr.f32.gmra.mrb[0].mxu0 %v5474
        %v6790 = vpop.f32.mrb[0].mxu0
        %v6791 = vadd.f32 0.0, %v6790
        %v6792 = vpop.f32.mrb[0].mxu0
        %6793 = vmatprep.mubr.f32.mxu0 %v5515
        %6794 = vmatmul.mubr.f32.gmra.mrb[0].mxu0 %v5475
        %v6795 = vpop.f32.mrb[0].mxu0
        %v6796 = vadd.f32 0.0, %v6795
        %v6797 = vpop.f32.mrb[0].mxu0
        %6798 = vmatprep.mubr.f32.mxu0 %v5516
        %6799 = vmatmul.mubr.f32.gmra.mrb[0].mxu0 %v5476
        %v6800 = vpop.f32.mrb[0].mxu0
        %v6801 = vadd.f32 0.0, %v6800
        %v6802 = vpop.f32.mrb[0].mxu0
        %6803 = vmatprep.mubr.f32.mxu0 %v5517
        %6804 = vmatmul.mubr.f32.gmra.mrb[0].mxu0 %v5477
        %v6805 = vpop.f32.mrb[0].mxu0
        %v6806 = vadd.f32 0.0, %v6805
        %v6807 = vpop.f32.mrb[0].mxu0
        %6808 = vmatprep.mubr.f32.mxu0 %v5518
        %6809 = vmatmul.mubr.f32.gmra.mrb[0].mxu0 %v5478
        %v6810 = vpop.f32.mrb[0].mxu0
        %v6811 = vadd.f32 0.0, %v6810
        %v6812 = vpop.f32.mrb[0].mxu0
        %6813 = vmatprep.mubr.f32.mxu0 %v5519
        %6814 = vmatmul.mubr.f32.gmra.mrb[0].mxu0 %v5479
        %v6815 = vpop.f32.mrb[0].mxu0
        %v6816 = vadd.f32 0.0, %v6815
        %v6817 = vpop.f32.mrb[0].mxu0
        %6818 = vmatprep.mubr.f32.mxu0 %v5520
        %6819 = vmatmul.mubr.f32.gmra.mrb[0].mxu0 %v5480
        %v6820 = vpop.f32.mrb[0].mxu0
        %v6821 = vadd.f32 0.0, %v6820
        %v6822 = vpop.f32.mrb[0].mxu0
        %6823 = vmatprep.mubr.f32.mxu0 %v5521
        %6824 = vmatmul.mubr.f32.gmra.mrb[0].mxu0 %v5481
        %v6825 = vpop.f32.mrb[0].mxu0
        %v6826 = vadd.f32 0.0, %v6825
        %v6827 = vpop.f32.mrb[0].mxu0
        %6828 = vmatprep.mubr.f32.mxu0 %v5522
        %6829 = vmatmul.mubr.f32.gmra.mrb[0].mxu0 %v5482
        %v6830 = vpop.f32.mrb[0].mxu0
        %v6831 = vadd.f32 0.0, %v6830
        %v6832 = vpop.f32.mrb[0].mxu0
        %6833 = vmatprep.mubr.f32.mxu0 %v5523
        %6834 = vmatmul.mubr.f32.gmra.mrb[0].mxu0 %v5483
        %v6835 = vpop.f32.mrb[0].mxu0
        %v6836 = vadd.f32 0.0, %v6835
        %v6837 = vpop.f32.mrb[0].mxu0
        %6838 = vmatprep.mubr.f32.mxu0 %v5524
        %6839 = vmatmul.mubr.f32.gmra.mrb[0].mxu0 %v5484
        %v6840 = vpop.f32.mrb[0].mxu0
        %v6841 = vadd.f32 0.0, %v6840
        %v6842 = vpop.f32.mrb[0].mxu0
        %6843 = vmatprep.mubr.f32.mxu0 %v5525
        %6844 = vmatmul.mubr.f32.gmra.mrb[0].mxu0 %v5485
        %v6845 = vpop.f32.mrb[0].mxu0
        %v6846 = vadd.f32 0.0, %v6845
        %v6847 = vpop.f32.mrb[0].mxu0
        %6848 = vmatprep.mubr.f32.mxu0 %v5526
        %6849 = vmatmul.mubr.f32.gmra.mrb[0].mxu0 %v5486
        %v6850 = vpop.f32.mrb[0].mxu0
        %v6851 = vadd.f32 0.0, %v6850
        %v6852 = vpop.f32.mrb[0].mxu0
        %6853 = vmatprep.mubr.f32.mxu0 %v5527
        %6854 = vmatmul.mubr.f32.gmra.mrb[0].mxu0 %v5487
        %v6855 = vpop.f32.mrb[0].mxu0
        %v6856 = vadd.f32 0.0, %v6855
        %v6857 = vpop.f32.mrb[0].mxu0
        %6858 = vmatprep.mubr.f32.mxu0 %v5528
        %6859 = vmatmul.mubr.f32.gmra.mrb[0].mxu0 %v5488
        %v6860 = vpop.f32.mrb[0].mxu0
        %v6861 = vadd.f32 0.0, %v6860
        %v6862 = vpop.f32.mrb[0].mxu0
        %6863 = vmatprep.mubr.f32.mxu0 %v5529
        %6864 = vmatmul.mubr.f32.gmra.mrb[0].mxu0 %v5489
        %v6865 = vpop.f32.mrb[0].mxu0
        %v6866 = vadd.f32 0.0, %v6865
        %v6867 = vpop.f32.mrb[0].mxu0
        %6868 = vmatprep.mubr.f32.mxu0 %v5530
        %6869 = vmatmul.mubr.f32.gmra.mrb[0].mxu0 %v5490
        %v6870 = vpop.f32.mrb[0].mxu0
        %v6871 = vadd.f32 0.0, %v6870
        %v6872 = vpop.f32.mrb[0].mxu0
        %6873 = vmatprep.mubr.f32.mxu0 %v5531
        %6874 = vmatmul.mubr.f32.gmra.mrb[0].mxu0 %v5491
        %v6875 = vpop.f32.mrb[0].mxu0
        %v6876 = vadd.f32 0.0, %v6875
        %v6877 = vpop.f32.mrb[0].mxu0
        %6878 = vmatprep.mubr.f32.mxu0 %v5532
        %6879 = vmatmul.mubr.f32.gmra.mrb[0].mxu0 %v5492
        %v6880 = vpop.f32.mrb[0].mxu0
        %v6881 = vadd.f32 0.0, %v6880
        %v6882 = vpop.f32.mrb[0].mxu0
        %6883 = vmatprep.mubr.f32.mxu0 %v5533
        %6884 = vmatmul.mubr.f32.gmra.mrb[0].mxu0 %v5493
        %v6885 = vpop.f32.mrb[0].mxu0
        %v6886 = vadd.f32 0.0, %v6885
        %v6887 = vpop.f32.mrb[0].mxu0
        %6888 = vmatprep.mubr.f32.mxu0 %v5534
        %6889 = vmatmul.mubr.f32.gmra.mrb[0].mxu0 %v5494
        %v6890 = vpop.f32.mrb[0].mxu0
        %v6891 = vadd.f32 0.0, %v6890
        %v6892 = vpop.f32.mrb[0].mxu0
        %6893 = vdwg.mxu0
        %6894 = vmatprep.subr.mxu0 0.0
        %6895 = vmatpush1.msra.mxu0 %v6655
        %6896 = vmatprep.subr.mxu0 0.0
        %6897 = vmatpush1.msra.mxu0 %v6656
        %6898 = vmatprep.subr.mxu0 0.0
        %6899 = vmatpush1.msra.mxu0 %v6657
        %6900 = vmatprep.subr.mxu0 0.0
        %6901 = vmatpush1.msra.mxu0 %v6658
        %6902 = vmatprep.subr.mxu0 0.0
        %6903 = vmatpush1.msra.mxu0 %v6659
        %6904 = vmatprep.subr.mxu0 0.0
        %6905 = vmatpush1.msra.mxu0 %v6660
        %6906 = vmatprep.subr.mxu0 0.0
        %6907 = vmatpush1.msra.mxu0 %v6661
        %6908 = vmatprep.subr.mxu0 0.0
        %6909 = vmatpush1.msra.mxu0 %v6662
        %6910 = vmatprep.subr.mxu0 0.0
        %6911 = vmatpush1.msra.mxu0 0.0
        %6912 = vmatprep.subr.mxu0 0.0
        %6913 = vmatpush1.msra.mxu0 0.0
        %6914 = vmatprep.subr.mxu0 0.0
        %6915 = vmatpush1.msra.mxu0 0.0
        %6916 = vmatprep.subr.mxu0 0.0
        %6917 = vmatpush1.msra.mxu0 0.0
        %6918 = vmatprep.subr.mxu0 0.0
        %6919 = vmatpush1.msra.mxu0 0.0
        %6920 = vmatprep.subr.mxu0 0.0
        %6921 = vmatpush1.msra.mxu0 0.0
        %6922 = vmatprep.subr.mxu0 0.0
        %6923 = vmatpush1.msra.mxu0 0.0
        %6924 = vmatprep.subr.mxu0 0.0
        %6925 = vmatpush1.msra.mxu0 0.0
        %6926 = vmatprep.subr.mxu0 0.0
        %6927 = vmatpush1.msra.mxu0 0.0
        %6928 = vmatprep.subr.mxu0 0.0
        %6929 = vmatpush1.msra.mxu0 0.0
        %6930 = vmatprep.subr.mxu0 0.0
        %6931 = vmatpush1.msra.mxu0 0.0
        %6932 = vmatprep.subr.mxu0 0.0
        %6933 = vmatpush1.msra.mxu0 0.0
        %6934 = vmatprep.subr.mxu0 0.0
        %6935 = vmatpush1.msra.mxu0 0.0
        %6936 = vmatprep.subr.mxu0 0.0
        %6937 = vmatpush1.msra.mxu0 0.0
        %6938 = vmatprep.subr.mxu0 0.0
        %6939 = vmatpush1.msra.mxu0 0.0
        %6940 = vmatprep.subr.mxu0 0.0
        %6941 = vmatpush1.msra.mxu0 0.0
        %6942 = vmatprep.subr.mxu0 0.0
        %6943 = vmatpush1.msra.mxu0 0.0
        %6944 = vmatprep.subr.mxu0 0.0
        %6945 = vmatpush1.msra.mxu0 0.0
        %6946 = vmatprep.subr.mxu0 0.0
        %6947 = vmatpush1.msra.mxu0 0.0
        %6948 = vmatprep.subr.mxu0 0.0
        %6949 = vmatpush1.msra.mxu0 0.0
        %6950 = vmatprep.subr.mxu0 0.0
        %6951 = vmatpush1.msra.mxu0 0.0
        %6952 = vmatprep.subr.mxu0 0.0
        %6953 = vmatpush1.msra.mxu0 0.0
        %6954 = vmatprep.subr.mxu0 0.0
        %6955 = vmatpush1.msra.mxu0 0.0
        %6956 = vmatprep.subr.mxu0 0.0
        %6957 = vmatpush1.msra.mxu0 0.0
        %6958 = vmatprep.mubr.f32.mxu0 0.0
        %6959 = vmatmul.mubr.f32.gmra.mrb[0].mxu0 %v5627
        %v6960 = vpop.f32.mrb[0].mxu0
        %v6961 = vadd.f32 %v6736, %v6960
        %v6962 = vpop.f32.mrb[0].mxu0
        %6963 = vmatprep.mubr.f32.mxu0 0.0
        %6964 = vmatmul.mubr.f32.gmra.mrb[0].mxu0 %v5630
        %v6965 = vpop.f32.mrb[0].mxu0
        %v6966 = vadd.f32 %v6741, %v6965
        %v6967 = vpop.f32.mrb[0].mxu0
        %6968 = vmatprep.mubr.f32.mxu0 0.0
        %6969 = vmatmul.mubr.f32.gmra.mrb[0].mxu0 %v5633
        %v6970 = vpop.f32.mrb[0].mxu0
        %v6971 = vadd.f32 %v6746, %v6970
        %v6972 = vpop.f32.mrb[0].mxu0
        %6973 = vmatprep.mubr.f32.mxu0 0.0
        %6974 = vmatmul.mubr.f32.gmra.mrb[0].mxu0 %v5636
        %v6975 = vpop.f32.mrb[0].mxu0
        %v6976 = vadd.f32 %v6751, %v6975
        %v6977 = vpop.f32.mrb[0].mxu0
        %6978 = vmatprep.mubr.f32.mxu0 0.0
        %6979 = vmatmul.mubr.f32.gmra.mrb[0].mxu0 %v5639
        %v6980 = vpop.f32.mrb[0].mxu0
        %v6981 = vadd.f32 %v6756, %v6980
        %v6982 = vpop.f32.mrb[0].mxu0
        %6983 = vmatprep.mubr.f32.mxu0 0.0
        %6984 = vmatmul.mubr.f32.gmra.mrb[0].mxu0 %v5642
        %v6985 = vpop.f32.mrb[0].mxu0
        %v6986 = vadd.f32 %v6761, %v6985
        %v6987 = vpop.f32.mrb[0].mxu0
        %6988 = vmatprep.mubr.f32.mxu0 0.0
        %6989 = vmatmul.mubr.f32.gmra.mrb[0].mxu0 %v5645
        %v6990 = vpop.f32.mrb[0].mxu0
        %v6991 = vadd.f32 %v6766, %v6990
        %v6992 = vpop.f32.mrb[0].mxu0
        %6993 = vmatprep.mubr.f32.mxu0 0.0
        %6994 = vmatmul.mubr.f32.gmra.mrb[0].mxu0 %v5648
        %v6995 = vpop.f32.mrb[0].mxu0
        %v6996 = vadd.f32 %v6771, %v6995
        %v6997 = vpop.f32.mrb[0].mxu0
        %6998 = vmatprep.mubr.f32.mxu0 0.0
        %6999 = vmatmul.mubr.f32.gmra.mrb[0].mxu0 %v5651
        %v7000 = vpop.f32.mrb[0].mxu0
        %v7001 = vadd.f32 %v6776, %v7000
        %v7002 = vpop.f32.mrb[0].mxu0
        %7003 = vmatprep.mubr.f32.mxu0 0.0
        %7004 = vmatmul.mubr.f32.gmra.mrb[0].mxu0 %v5654
        %v7005 = vpop.f32.mrb[0].mxu0
        %v7006 = vadd.f32 %v6781, %v7005
        %v7007 = vpop.f32.mrb[0].mxu0
        %7008 = vmatprep.mubr.f32.mxu0 0.0
        %7009 = vmatmul.mubr.f32.gmra.mrb[0].mxu0 %v5657
        %v7010 = vpop.f32.mrb[0].mxu0
        %v7011 = vadd.f32 %v6786, %v7010
        %v7012 = vpop.f32.mrb[0].mxu0
        %7013 = vmatprep.mubr.f32.mxu0 0.0
        %7014 = vmatmul.mubr.f32.gmra.mrb[0].mxu0 %v5660
        %v7015 = vpop.f32.mrb[0].mxu0
        %v7016 = vadd.f32 %v6791, %v7015
        %v7017 = vpop.f32.mrb[0].mxu0
        %7018 = vmatprep.mubr.f32.mxu0 0.0
        %7019 = vmatmul.mubr.f32.gmra.mrb[0].mxu0 %v5663
        %v7020 = vpop.f32.mrb[0].mxu0
        %v7021 = vadd.f32 %v6796, %v7020
        %v7022 = vpop.f32.mrb[0].mxu0
        %7023 = vmatprep.mubr.f32.mxu0 0.0
        %7024 = vmatmul.mubr.f32.gmra.mrb[0].mxu0 %v5666
        %v7025 = vpop.f32.mrb[0].mxu0
        %v7026 = vadd.f32 %v6801, %v7025
        %v7027 = vpop.f32.mrb[0].mxu0
        %7028 = vmatprep.mubr.f32.mxu0 0.0
        %7029 = vmatmul.mubr.f32.gmra.mrb[0].mxu0 %v5669
        %v7030 = vpop.f32.mrb[0].mxu0
        %v7031 = vadd.f32 %v6806, %v7030
        %v7032 = vpop.f32.mrb[0].mxu0
        %7033 = vmatprep.mubr.f32.mxu0 0.0
        %7034 = vmatmul.mubr.f32.gmra.mrb[0].mxu0 %v5672
        %v7035 = vpop.f32.mrb[0].mxu0
        %v7036 = vadd.f32 %v6811, %v7035
        %v7037 = vpop.f32.mrb[0].mxu0
        %7038 = vmatprep.mubr.f32.mxu0 0.0
        %7039 = vmatmul.mubr.f32.gmra.mrb[0].mxu0 %v5675
        %v7040 = vpop.f32.mrb[0].mxu0
        %v7041 = vadd.f32 %v6816, %v7040
        %v7042 = vpop.f32.mrb[0].mxu0
        %7043 = vmatprep.mubr.f32.mxu0 0.0
        %7044 = vmatmul.mubr.f32.gmra.mrb[0].mxu0 %v5678
        %v7045 = vpop.f32.mrb[0].mxu0
        %v7046 = vadd.f32 %v6821, %v7045
        %v7047 = vpop.f32.mrb[0].mxu0
        %7048 = vmatprep.mubr.f32.mxu0 0.0
        %7049 = vmatmul.mubr.f32.gmra.mrb[0].mxu0 %v5681
        %v7050 = vpop.f32.mrb[0].mxu0
        %v7051 = vadd.f32 %v6826, %v7050
        %v7052 = vpop.f32.mrb[0].mxu0
        %7053 = vmatprep.mubr.f32.mxu0 0.0
        %7054 = vmatmul.mubr.f32.gmra.mrb[0].mxu0 %v5684
        %v7055 = vpop.f32.mrb[0].mxu0
        %v7056 = vadd.f32 %v6831, %v7055
        %v7057 = vpop.f32.mrb[0].mxu0
        %7058 = vmatprep.mubr.f32.mxu0 0.0
        %7059 = vmatmul.mubr.f32.gmra.mrb[0].mxu0 %v5687
        %v7060 = vpop.f32.mrb[0].mxu0
        %v7061 = vadd.f32 %v6836, %v7060
        %v7062 = vpop.f32.mrb[0].mxu0
        %7063 = vmatprep.mubr.f32.mxu0 0.0
        %7064 = vmatmul.mubr.f32.gmra.mrb[0].mxu0 %v5690
        %v7065 = vpop.f32.mrb[0].mxu0
        %v7066 = vadd.f32 %v6841, %v7065
        %v7067 = vpop.f32.mrb[0].mxu0
        %7068 = vmatprep.mubr.f32.mxu0 0.0
        %7069 = vmatmul.mubr.f32.gmra.mrb[0].mxu0 %v5693
        %v7070 = vpop.f32.mrb[0].mxu0
        %v7071 = vadd.f32 %v6846, %v7070
        %v7072 = vpop.f32.mrb[0].mxu0
        %7073 = vmatprep.mubr.f32.mxu0 0.0
        %7074 = vmatmul.mubr.f32.gmra.mrb[0].mxu0 %v5696
        %v7075 = vpop.f32.mrb[0].mxu0
        %v7076 = vadd.f32 %v6851, %v7075
        %v7077 = vpop.f32.mrb[0].mxu0
        %7078 = vmatprep.mubr.f32.mxu0 0.0
        %7079 = vmatmul.mubr.f32.gmra.mrb[0].mxu0 %v5699
        %v7080 = vpop.f32.mrb[0].mxu0
        %v7081 = vadd.f32 %v6856, %v7080
        %v7082 = vpop.f32.mrb[0].mxu0
        %7083 = vmatprep.mubr.f32.mxu0 0.0
        %7084 = vmatmul.mubr.f32.gmra.mrb[0].mxu0 %v5702
        %v7085 = vpop.f32.mrb[0].mxu0
        %v7086 = vadd.f32 %v6861, %v7085
        %v7087 = vpop.f32.mrb[0].mxu0
        %7088 = vmatprep.mubr.f32.mxu0 0.0
        %7089 = vmatmul.mubr.f32.gmra.mrb[0].mxu0 %v5705
        %v7090 = vpop.f32.mrb[0].mxu0
        %v7091 = vadd.f32 %v6866, %v7090
        %v7092 = vpop.f32.mrb[0].mxu0
        %7093 = vmatprep.mubr.f32.mxu0 0.0
        %7094 = vmatmul.mubr.f32.gmra.mrb[0].mxu0 %v5708
        %v7095 = vpop.f32.mrb[0].mxu0
        %v7096 = vadd.f32 %v6871, %v7095
        %v7097 = vpop.f32.mrb[0].mxu0
        %7098 = vmatprep.mubr.f32.mxu0 0.0
        %7099 = vmatmul.mubr.f32.gmra.mrb[0].mxu0 %v5711
        %v7100 = vpop.f32.mrb[0].mxu0
        %v7101 = vadd.f32 %v6876, %v7100
        %v7102 = vpop.f32.mrb[0].mxu0
        %7103 = vmatprep.mubr.f32.mxu0 0.0
        %7104 = vmatmul.mubr.f32.gmra.mrb[0].mxu0 %v5714
        %v7105 = vpop.f32.mrb[0].mxu0
        %v7106 = vadd.f32 %v6881, %v7105
        %v7107 = vpop.f32.mrb[0].mxu0
        %7108 = vmatprep.mubr.f32.mxu0 0.0
        %7109 = vmatmul.mubr.f32.gmra.mrb[0].mxu0 %v6664
        %v7110 = vpop.f32.mrb[0].mxu0
        %v7111 = vadd.f32 %v6886, %v7110
        %v7112 = vpop.f32.mrb[0].mxu0
        %7113 = vmatprep.mubr.f32.mxu0 0.0
        %7114 = vmatmul.mubr.f32.gmra.mrb[0].mxu0 %v6667
        %v7115 = vpop.f32.mrb[0].mxu0
        %v7116 = vadd.f32 %v6891, %v7115
        %v7117 = vpop.f32.mrb[0].mxu0
        %7118 = vdwg.mxu0
        %v7119 = vadd.f32 %v6464, %v6961
        %v7120 = vadd.f32 %v6469, %v6966
        %v7121 = vadd.f32 %v6474, %v6971
        %v7122 = vadd.f32 %v6479, %v6976
        %v7123 = vadd.f32 %v6484, %v6981
        %v7124 = vadd.f32 %v6489, %v6986
        %v7125 = vadd.f32 %v6494, %v6991
        %v7126 = vadd.f32 %v6499, %v6996
        %v7127 = vadd.f32 %v6504, %v7001
        %v7128 = vadd.f32 %v6509, %v7006
        %v7129 = vadd.f32 %v6514, %v7011
        %v7130 = vadd.f32 %v6519, %v7016
        %v7131 = vadd.f32 %v6524, %v7021
        %v7132 = vadd.f32 %v6529, %v7026
        %v7133 = vadd.f32 %v6534, %v7031
        %v7134 = vadd.f32 %v6539, %v7036
        %v7135 = vadd.f32 %v6544, %v7041
        %v7136 = vadd.f32 %v6549, %v7046
        %v7137 = vadd.f32 %v6554, %v7051
        %v7138 = vadd.f32 %v6559, %v7056
        %v7139 = vadd.f32 %v6564, %v7061
        %v7140 = vadd.f32 %v6569, %v7066
        %v7141 = vadd.f32 %v6574, %v7071
        %v7142 = vadd.f32 %v6579, %v7076
        %v7143 = vadd.f32 %v6584, %v7081
        %v7144 = vadd.f32 %v6589, %v7086
        %v7145 = vadd.f32 %v6594, %v7091
        %v7146 = vadd.f32 %v6599, %v7096
        %v7147 = vadd.f32 %v6604, %v7101
        %v7148 = vadd.f32 %v6609, %v7106
        %v7149 = vadd.f32 %v6614, %v7111
        %v7150 = vadd.f32 %v6619, %v7116
        %s7151 = scalar_lea.vmem [#allocation14], 960
        %v7152 = vld [vmem:[%s7151] sm:$0xff]
        %v7153 = vld [vmem:[%s7151 + $0x8] sm:$0xff]
        %v7154 = vld [vmem:[%s7151 + $0x10] sm:$0xff]
        %v7155 = vld [vmem:[%s7151 + $0x18] sm:$0xff]
        %v7156 = vld [vmem:[%s7151 + $0x20] sm:$0xff]
        %v7157 = vld [vmem:[%s7151 + $0x28] sm:$0xff]
        %v7158 = vld [vmem:[%s7151 + $0x30] sm:$0xff]
        %v7159 = vld [vmem:[%s7151 + $0x38] sm:$0xff]
        %v7160 = vld [vmem:[%s7151 + $0x40] sm:$0xff]
        %v7161 = vld [vmem:[%s7151 + $0x48] sm:$0xff]
        %v7162 = vld [vmem:[%s7151 + $0x50] sm:$0xff]
        %v7163 = vld [vmem:[%s7151 + $0x58] sm:$0xff]
        %v7164 = vld [vmem:[%s7151 + $0x60] sm:$0xff]
        %v7165 = vld [vmem:[%s7151 + $0x68] sm:$0xff]
        %v7166 = vld [vmem:[%s7151 + $0x70] sm:$0xff]
        %v7167 = vld [vmem:[%s7151 + $0x78] sm:$0xff]
        %v7168 = vld [vmem:[%s7151 + $0x80] sm:$0xff]
        %v7169 = vld [vmem:[%s7151 + $0x88] sm:$0xff]
        %v7170 = vld [vmem:[%s7151 + $0x90] sm:$0xff]
        %v7171 = vld [vmem:[%s7151 + $0x98] sm:$0xff]
        %v7172 = vld [vmem:[%s7151 + $0xa0] sm:$0xff]
        %v7173 = vld [vmem:[%s7151 + $0xa8] sm:$0xff]
        %v7174 = vld [vmem:[%s7151 + $0xb0] sm:$0xff]
        %v7175 = vld [vmem:[%s7151 + $0xb8] sm:$0xff]
        %v7176 = vld [vmem:[%s7151 + $0xc0] sm:$0xff]
        %v7177 = vld [vmem:[%s7151 + $0xc8] sm:$0xff]
        %v7178 = vld [vmem:[%s7151 + $0xd0] sm:$0xff]
        %v7179 = vld [vmem:[%s7151 + $0xd8] sm:$0xff]
        %v7180 = vld [vmem:[%s7151 + $0xe0] sm:$0xff]
        %v7181 = vld [vmem:[%s7151 + $0xe8] sm:$0xff]
        %v7182 = vld [vmem:[%s7151 + $0xf0] sm:$0xff]
        %v7183 = vld [vmem:[%s7151 + $0xf8] sm:$0xff]
        %v7184 = vld [vmem:[%s7151 + $0x100] sm:$0xff]
        %v7185 = vld [vmem:[%s7151 + $0x108] sm:$0xff]
        %v7186 = vld [vmem:[%s7151 + $0x110] sm:$0xff]
        %v7187 = vld [vmem:[%s7151 + $0x118] sm:$0xff]
        %v7188 = vld [vmem:[%s7151 + $0x120] sm:$0xff]
        %v7189 = vld [vmem:[%s7151 + $0x128] sm:$0xff]
        %v7190 = vld [vmem:[%s7151 + $0x130] sm:$0xff]
        %v7191 = vld [vmem:[%s7151 + $0x138] sm:$0xff]
        %v7193 = vsel %vm600, %v5135, 0
        %v7196 = vsel %vm600, %v5136, 0
        %7198 = vmatprep.subr.mxu0 0.0
        %7199 = vmatpush1.msra.mxu0 %v7152
        %7200 = vmatprep.subr.mxu0 0.0
        %7201 = vmatpush1.msra.mxu0 %v7153
        %7202 = vmatprep.subr.mxu0 0.0
        %7203 = vmatpush1.msra.mxu0 %v7154
        %7204 = vmatprep.subr.mxu0 0.0
        %7205 = vmatpush1.msra.mxu0 %v7155
        %7206 = vmatprep.subr.mxu0 0.0
        %7207 = vmatpush1.msra.mxu0 %v7156
        %7208 = vmatprep.subr.mxu0 0.0
        %7209 = vmatpush1.msra.mxu0 %v7157
        %7210 = vmatprep.subr.mxu0 0.0
        %7211 = vmatpush1.msra.mxu0 %v7158
        %7212 = vmatprep.subr.mxu0 0.0
        %7213 = vmatpush1.msra.mxu0 %v7159
        %7214 = vmatprep.subr.mxu0 0.0
        %7215 = vmatpush1.msra.mxu0 %v7160
        %7216 = vmatprep.subr.mxu0 0.0
        %7217 = vmatpush1.msra.mxu0 %v7161
        %7218 = vmatprep.subr.mxu0 0.0
        %7219 = vmatpush1.msra.mxu0 %v7162
        %7220 = vmatprep.subr.mxu0 0.0
        %7221 = vmatpush1.msra.mxu0 %v7163
        %7222 = vmatprep.subr.mxu0 0.0
        %7223 = vmatpush1.msra.mxu0 %v7164
        %7224 = vmatprep.subr.mxu0 0.0
        %7225 = vmatpush1.msra.mxu0 %v7165
        %7226 = vmatprep.subr.mxu0 0.0
        %7227 = vmatpush1.msra.mxu0 %v7166
        %7228 = vmatprep.subr.mxu0 0.0
        %7229 = vmatpush1.msra.mxu0 %v7167
        %7230 = vmatprep.subr.mxu0 0.0
        %7231 = vmatpush1.msra.mxu0 %v7168
        %7232 = vmatprep.subr.mxu0 0.0
        %7233 = vmatpush1.msra.mxu0 %v7169
        %7234 = vmatprep.subr.mxu0 0.0
        %7235 = vmatpush1.msra.mxu0 %v7170
        %7236 = vmatprep.subr.mxu0 0.0
        %7237 = vmatpush1.msra.mxu0 %v7171
        %7238 = vmatprep.subr.mxu0 0.0
        %7239 = vmatpush1.msra.mxu0 %v7172
        %7240 = vmatprep.subr.mxu0 0.0
        %7241 = vmatpush1.msra.mxu0 %v7173
        %7242 = vmatprep.subr.mxu0 0.0
        %7243 = vmatpush1.msra.mxu0 %v7174
        %7244 = vmatprep.subr.mxu0 0.0
        %7245 = vmatpush1.msra.mxu0 %v7175
        %7246 = vmatprep.subr.mxu0 0.0
        %7247 = vmatpush1.msra.mxu0 %v7176
        %7248 = vmatprep.subr.mxu0 0.0
        %7249 = vmatpush1.msra.mxu0 %v7177
        %7250 = vmatprep.subr.mxu0 0.0
        %7251 = vmatpush1.msra.mxu0 %v7178
        %7252 = vmatprep.subr.mxu0 0.0
        %7253 = vmatpush1.msra.mxu0 %v7179
        %7254 = vmatprep.subr.mxu0 0.0
        %7255 = vmatpush1.msra.mxu0 %v7180
        %7256 = vmatprep.subr.mxu0 0.0
        %7257 = vmatpush1.msra.mxu0 %v7181
        %7258 = vmatprep.subr.mxu0 0.0
        %7259 = vmatpush1.msra.mxu0 %v7182
        %7260 = vmatprep.subr.mxu0 0.0
        %7261 = vmatpush1.msra.mxu0 %v7183
        %7262 = vmatprep.mubr.f32.mxu0 %v5505
        %7263 = vmatmul.mubr.f32.gmra.mrb[0].mxu0 %v5465
        %v7264 = vpop.f32.mrb[0].mxu0
        %v7265 = vadd.f32 0.0, %v7264
        %v7266 = vpop.f32.mrb[0].mxu0
        %7267 = vmatprep.mubr.f32.mxu0 %v5506
        %7268 = vmatmul.mubr.f32.gmra.mrb[0].mxu0 %v5466
        %v7269 = vpop.f32.mrb[0].mxu0
        %v7270 = vadd.f32 0.0, %v7269
        %v7271 = vpop.f32.mrb[0].mxu0
        %7272 = vmatprep.mubr.f32.mxu0 %v5507
        %7273 = vmatmul.mubr.f32.gmra.mrb[0].mxu0 %v5467
        %v7274 = vpop.f32.mrb[0].mxu0
        %v7275 = vadd.f32 0.0, %v7274
        %v7276 = vpop.f32.mrb[0].mxu0
        %7277 = vmatprep.mubr.f32.mxu0 %v5508
        %7278 = vmatmul.mubr.f32.gmra.mrb[0].mxu0 %v5468
        %v7279 = vpop.f32.mrb[0].mxu0
        %v7280 = vadd.f32 0.0, %v7279
        %v7281 = vpop.f32.mrb[0].mxu0
        %7282 = vmatprep.mubr.f32.mxu0 %v5509
        %7283 = vmatmul.mubr.f32.gmra.mrb[0].mxu0 %v5469
        %v7284 = vpop.f32.mrb[0].mxu0
        %v7285 = vadd.f32 0.0, %v7284
        %v7286 = vpop.f32.mrb[0].mxu0
        %7287 = vmatprep.mubr.f32.mxu0 %v5510
        %7288 = vmatmul.mubr.f32.gmra.mrb[0].mxu0 %v5470
        %v7289 = vpop.f32.mrb[0].mxu0
        %v7290 = vadd.f32 0.0, %v7289
        %v7291 = vpop.f32.mrb[0].mxu0
        %7292 = vmatprep.mubr.f32.mxu0 %v5511
        %7293 = vmatmul.mubr.f32.gmra.mrb[0].mxu0 %v5471
        %v7294 = vpop.f32.mrb[0].mxu0
        %v7295 = vadd.f32 0.0, %v7294
        %v7296 = vpop.f32.mrb[0].mxu0
        %7297 = vmatprep.mubr.f32.mxu0 %v5512
        %7298 = vmatmul.mubr.f32.gmra.mrb[0].mxu0 %v5472
        %v7299 = vpop.f32.mrb[0].mxu0
        %v7300 = vadd.f32 0.0, %v7299
        %v7301 = vpop.f32.mrb[0].mxu0
        %7302 = vmatprep.mubr.f32.mxu0 %v5513
        %7303 = vmatmul.mubr.f32.gmra.mrb[0].mxu0 %v5473
        %v7304 = vpop.f32.mrb[0].mxu0
        %v7305 = vadd.f32 0.0, %v7304
        %v7306 = vpop.f32.mrb[0].mxu0
        %7307 = vmatprep.mubr.f32.mxu0 %v5514
        %7308 = vmatmul.mubr.f32.gmra.mrb[0].mxu0 %v5474
        %v7309 = vpop.f32.mrb[0].mxu0
        %v7310 = vadd.f32 0.0, %v7309
        %v7311 = vpop.f32.mrb[0].mxu0
        %7312 = vmatprep.mubr.f32.mxu0 %v5515
        %7313 = vmatmul.mubr.f32.gmra.mrb[0].mxu0 %v5475
        %v7314 = vpop.f32.mrb[0].mxu0
        %v7315 = vadd.f32 0.0, %v7314
        %v7316 = vpop.f32.mrb[0].mxu0
        %7317 = vmatprep.mubr.f32.mxu0 %v5516
        %7318 = vmatmul.mubr.f32.gmra.mrb[0].mxu0 %v5476
        %v7319 = vpop.f32.mrb[0].mxu0
        %v7320 = vadd.f32 0.0, %v7319
        %v7321 = vpop.f32.mrb[0].mxu0
        %7322 = vmatprep.mubr.f32.mxu0 %v5517
        %7323 = vmatmul.mubr.f32.gmra.mrb[0].mxu0 %v5477
        %v7324 = vpop.f32.mrb[0].mxu0
        %v7325 = vadd.f32 0.0, %v7324
        %v7326 = vpop.f32.mrb[0].mxu0
        %7327 = vmatprep.mubr.f32.mxu0 %v5518
        %7328 = vmatmul.mubr.f32.gmra.mrb[0].mxu0 %v5478
        %v7329 = vpop.f32.mrb[0].mxu0
        %v7330 = vadd.f32 0.0, %v7329
        %v7331 = vpop.f32.mrb[0].mxu0
        %7332 = vmatprep.mubr.f32.mxu0 %v5519
        %7333 = vmatmul.mubr.f32.gmra.mrb[0].mxu0 %v5479
        %v7334 = vpop.f32.mrb[0].mxu0
        %v7335 = vadd.f32 0.0, %v7334
        %v7336 = vpop.f32.mrb[0].mxu0
        %7337 = vmatprep.mubr.f32.mxu0 %v5520
        %7338 = vmatmul.mubr.f32.gmra.mrb[0].mxu0 %v5480
        %v7339 = vpop.f32.mrb[0].mxu0
        %v7340 = vadd.f32 0.0, %v7339
        %v7341 = vpop.f32.mrb[0].mxu0
        %7342 = vmatprep.mubr.f32.mxu0 %v5521
        %7343 = vmatmul.mubr.f32.gmra.mrb[0].mxu0 %v5481
        %v7344 = vpop.f32.mrb[0].mxu0
        %v7345 = vadd.f32 0.0, %v7344
        %v7346 = vpop.f32.mrb[0].mxu0
        %7347 = vmatprep.mubr.f32.mxu0 %v5522
        %7348 = vmatmul.mubr.f32.gmra.mrb[0].mxu0 %v5482
        %v7349 = vpop.f32.mrb[0].mxu0
        %v7350 = vadd.f32 0.0, %v7349
        %v7351 = vpop.f32.mrb[0].mxu0
        %7352 = vmatprep.mubr.f32.mxu0 %v5523
        %7353 = vmatmul.mubr.f32.gmra.mrb[0].mxu0 %v5483
        %v7354 = vpop.f32.mrb[0].mxu0
        %v7355 = vadd.f32 0.0, %v7354
        %v7356 = vpop.f32.mrb[0].mxu0
        %7357 = vmatprep.mubr.f32.mxu0 %v5524
        %7358 = vmatmul.mubr.f32.gmra.mrb[0].mxu0 %v5484
        %v7359 = vpop.f32.mrb[0].mxu0
        %v7360 = vadd.f32 0.0, %v7359
        %v7361 = vpop.f32.mrb[0].mxu0
        %7362 = vmatprep.mubr.f32.mxu0 %v5525
        %7363 = vmatmul.mubr.f32.gmra.mrb[0].mxu0 %v5485
        %v7364 = vpop.f32.mrb[0].mxu0
        %v7365 = vadd.f32 0.0, %v7364
        %v7366 = vpop.f32.mrb[0].mxu0
        %7367 = vmatprep.mubr.f32.mxu0 %v5526
        %7368 = vmatmul.mubr.f32.gmra.mrb[0].mxu0 %v5486
        %v7369 = vpop.f32.mrb[0].mxu0
        %v7370 = vadd.f32 0.0, %v7369
        %v7371 = vpop.f32.mrb[0].mxu0
        %7372 = vmatprep.mubr.f32.mxu0 %v5527
        %7373 = vmatmul.mubr.f32.gmra.mrb[0].mxu0 %v5487
        %v7374 = vpop.f32.mrb[0].mxu0
        %v7375 = vadd.f32 0.0, %v7374
        %v7376 = vpop.f32.mrb[0].mxu0
        %7377 = vmatprep.mubr.f32.mxu0 %v5528
        %7378 = vmatmul.mubr.f32.gmra.mrb[0].mxu0 %v5488
        %v7379 = vpop.f32.mrb[0].mxu0
        %v7380 = vadd.f32 0.0, %v7379
        %v7381 = vpop.f32.mrb[0].mxu0
        %7382 = vmatprep.mubr.f32.mxu0 %v5529
        %7383 = vmatmul.mubr.f32.gmra.mrb[0].mxu0 %v5489
        %v7384 = vpop.f32.mrb[0].mxu0
        %v7385 = vadd.f32 0.0, %v7384
        %v7386 = vpop.f32.mrb[0].mxu0
        %7387 = vmatprep.mubr.f32.mxu0 %v5530
        %7388 = vmatmul.mubr.f32.gmra.mrb[0].mxu0 %v5490
        %v7389 = vpop.f32.mrb[0].mxu0
        %v7390 = vadd.f32 0.0, %v7389
        %v7391 = vpop.f32.mrb[0].mxu0
        %7392 = vmatprep.mubr.f32.mxu0 %v5531
        %7393 = vmatmul.mubr.f32.gmra.mrb[0].mxu0 %v5491
        %v7394 = vpop.f32.mrb[0].mxu0
        %v7395 = vadd.f32 0.0, %v7394
        %v7396 = vpop.f32.mrb[0].mxu0
        %7397 = vmatprep.mubr.f32.mxu0 %v5532
        %7398 = vmatmul.mubr.f32.gmra.mrb[0].mxu0 %v5492
        %v7399 = vpop.f32.mrb[0].mxu0
        %v7400 = vadd.f32 0.0, %v7399
        %v7401 = vpop.f32.mrb[0].mxu0
        %7402 = vmatprep.mubr.f32.mxu0 %v5533
        %7403 = vmatmul.mubr.f32.gmra.mrb[0].mxu0 %v5493
        %v7404 = vpop.f32.mrb[0].mxu0
        %v7405 = vadd.f32 0.0, %v7404
        %v7406 = vpop.f32.mrb[0].mxu0
        %7407 = vmatprep.mubr.f32.mxu0 %v5534
        %7408 = vmatmul.mubr.f32.gmra.mrb[0].mxu0 %v5494
        %v7409 = vpop.f32.mrb[0].mxu0
        %v7410 = vadd.f32 0.0, %v7409
        %v7411 = vpop.f32.mrb[0].mxu0
        %7412 = vmatprep.mubr.f32.mxu0 %v5535
        %7413 = vmatmul.mubr.f32.gmra.mrb[0].mxu0 %v5495
        %v7414 = vpop.f32.mrb[0].mxu0
        %v7415 = vadd.f32 0.0, %v7414
        %v7416 = vpop.f32.mrb[0].mxu0
        %7417 = vmatprep.mubr.f32.mxu0 %v5536
        %7418 = vmatmul.mubr.f32.gmra.mrb[0].mxu0 %v5496
        %v7419 = vpop.f32.mrb[0].mxu0
        %v7420 = vadd.f32 0.0, %v7419
        %v7421 = vpop.f32.mrb[0].mxu0
        %7422 = vdwg.mxu0
        %7423 = vmatprep.subr.mxu0 0.0
        %7424 = vmatpush1.msra.mxu0 %v7184
        %7425 = vmatprep.subr.mxu0 0.0
        %7426 = vmatpush1.msra.mxu0 %v7185
        %7427 = vmatprep.subr.mxu0 0.0
        %7428 = vmatpush1.msra.mxu0 %v7186
        %7429 = vmatprep.subr.mxu0 0.0
        %7430 = vmatpush1.msra.mxu0 %v7187
        %7431 = vmatprep.subr.mxu0 0.0
        %7432 = vmatpush1.msra.mxu0 %v7188
        %7433 = vmatprep.subr.mxu0 0.0
        %7434 = vmatpush1.msra.mxu0 %v7189
        %7435 = vmatprep.subr.mxu0 0.0
        %7436 = vmatpush1.msra.mxu0 %v7190
        %7437 = vmatprep.subr.mxu0 0.0
        %7438 = vmatpush1.msra.mxu0 %v7191
        %7439 = vmatprep.subr.mxu0 0.0
        %7440 = vmatpush1.msra.mxu0 0.0
        %7441 = vmatprep.subr.mxu0 0.0
        %7442 = vmatpush1.msra.mxu0 0.0
        %7443 = vmatprep.subr.mxu0 0.0
        %7444 = vmatpush1.msra.mxu0 0.0
        %7445 = vmatprep.subr.mxu0 0.0
        %7446 = vmatpush1.msra.mxu0 0.0
        %7447 = vmatprep.subr.mxu0 0.0
        %7448 = vmatpush1.msra.mxu0 0.0
        %7449 = vmatprep.subr.mxu0 0.0
        %7450 = vmatpush1.msra.mxu0 0.0
        %7451 = vmatprep.subr.mxu0 0.0
        %7452 = vmatpush1.msra.mxu0 0.0
        %7453 = vmatprep.subr.mxu0 0.0
        %7454 = vmatpush1.msra.mxu0 0.0
        %7455 = vmatprep.subr.mxu0 0.0
        %7456 = vmatpush1.msra.mxu0 0.0
        %7457 = vmatprep.subr.mxu0 0.0
        %7458 = vmatpush1.msra.mxu0 0.0
        %7459 = vmatprep.subr.mxu0 0.0
        %7460 = vmatpush1.msra.mxu0 0.0
        %7461 = vmatprep.subr.mxu0 0.0
        %7462 = vmatpush1.msra.mxu0 0.0
        %7463 = vmatprep.subr.mxu0 0.0
        %7464 = vmatpush1.msra.mxu0 0.0
        %7465 = vmatprep.subr.mxu0 0.0
        %7466 = vmatpush1.msra.mxu0 0.0
        %7467 = vmatprep.subr.mxu0 0.0
        %7468 = vmatpush1.msra.mxu0 0.0
        %7469 = vmatprep.subr.mxu0 0.0
        %7470 = vmatpush1.msra.mxu0 0.0
        %7471 = vmatprep.subr.mxu0 0.0
        %7472 = vmatpush1.msra.mxu0 0.0
        %7473 = vmatprep.subr.mxu0 0.0
        %7474 = vmatpush1.msra.mxu0 0.0
        %7475 = vmatprep.subr.mxu0 0.0
        %7476 = vmatpush1.msra.mxu0 0.0
        %7477 = vmatprep.subr.mxu0 0.0
        %7478 = vmatpush1.msra.mxu0 0.0
        %7479 = vmatprep.subr.mxu0 0.0
        %7480 = vmatpush1.msra.mxu0 0.0
        %7481 = vmatprep.subr.mxu0 0.0
        %7482 = vmatpush1.msra.mxu0 0.0
        %7483 = vmatprep.subr.mxu0 0.0
        %7484 = vmatpush1.msra.mxu0 0.0
        %7485 = vmatprep.subr.mxu0 0.0
        %7486 = vmatpush1.msra.mxu0 0.0
        %7487 = vmatprep.mubr.f32.mxu0 0.0
        %7488 = vmatmul.mubr.f32.gmra.mrb[0].mxu0 %v5633
        %v7489 = vpop.f32.mrb[0].mxu0
        %v7490 = vadd.f32 %v7265, %v7489
        %v7491 = vpop.f32.mrb[0].mxu0
        %7492 = vmatprep.mubr.f32.mxu0 0.0
        %7493 = vmatmul.mubr.f32.gmra.mrb[0].mxu0 %v5636
        %v7494 = vpop.f32.mrb[0].mxu0
        %v7495 = vadd.f32 %v7270, %v7494
        %v7496 = vpop.f32.mrb[0].mxu0
        %7497 = vmatprep.mubr.f32.mxu0 0.0
        %7498 = vmatmul.mubr.f32.gmra.mrb[0].mxu0 %v5639
        %v7499 = vpop.f32.mrb[0].mxu0
        %v7500 = vadd.f32 %v7275, %v7499
        %v7501 = vpop.f32.mrb[0].mxu0
        %7502 = vmatprep.mubr.f32.mxu0 0.0
        %7503 = vmatmul.mubr.f32.gmra.mrb[0].mxu0 %v5642
        %v7504 = vpop.f32.mrb[0].mxu0
        %v7505 = vadd.f32 %v7280, %v7504
        %v7506 = vpop.f32.mrb[0].mxu0
        %7507 = vmatprep.mubr.f32.mxu0 0.0
        %7508 = vmatmul.mubr.f32.gmra.mrb[0].mxu0 %v5645
        %v7509 = vpop.f32.mrb[0].mxu0
        %v7510 = vadd.f32 %v7285, %v7509
        %v7511 = vpop.f32.mrb[0].mxu0
        %7512 = vmatprep.mubr.f32.mxu0 0.0
        %7513 = vmatmul.mubr.f32.gmra.mrb[0].mxu0 %v5648
        %v7514 = vpop.f32.mrb[0].mxu0
        %v7515 = vadd.f32 %v7290, %v7514
        %v7516 = vpop.f32.mrb[0].mxu0
        %7517 = vmatprep.mubr.f32.mxu0 0.0
        %7518 = vmatmul.mubr.f32.gmra.mrb[0].mxu0 %v5651
        %v7519 = vpop.f32.mrb[0].mxu0
        %v7520 = vadd.f32 %v7295, %v7519
        %v7521 = vpop.f32.mrb[0].mxu0
        %7522 = vmatprep.mubr.f32.mxu0 0.0
        %7523 = vmatmul.mubr.f32.gmra.mrb[0].mxu0 %v5654
        %v7524 = vpop.f32.mrb[0].mxu0
        %v7525 = vadd.f32 %v7300, %v7524
        %v7526 = vpop.f32.mrb[0].mxu0
        %7527 = vmatprep.mubr.f32.mxu0 0.0
        %7528 = vmatmul.mubr.f32.gmra.mrb[0].mxu0 %v5657
        %v7529 = vpop.f32.mrb[0].mxu0
        %v7530 = vadd.f32 %v7305, %v7529
        %v7531 = vpop.f32.mrb[0].mxu0
        %7532 = vmatprep.mubr.f32.mxu0 0.0
        %7533 = vmatmul.mubr.f32.gmra.mrb[0].mxu0 %v5660
        %v7534 = vpop.f32.mrb[0].mxu0
        %v7535 = vadd.f32 %v7310, %v7534
        %v7536 = vpop.f32.mrb[0].mxu0
        %7537 = vmatprep.mubr.f32.mxu0 0.0
        %7538 = vmatmul.mubr.f32.gmra.mrb[0].mxu0 %v5663
        %v7539 = vpop.f32.mrb[0].mxu0
        %v7540 = vadd.f32 %v7315, %v7539
        %v7541 = vpop.f32.mrb[0].mxu0
        %7542 = vmatprep.mubr.f32.mxu0 0.0
        %7543 = vmatmul.mubr.f32.gmra.mrb[0].mxu0 %v5666
        %v7544 = vpop.f32.mrb[0].mxu0
        %v7545 = vadd.f32 %v7320, %v7544
        %v7546 = vpop.f32.mrb[0].mxu0
        %7547 = vmatprep.mubr.f32.mxu0 0.0
        %7548 = vmatmul.mubr.f32.gmra.mrb[0].mxu0 %v5669
        %v7549 = vpop.f32.mrb[0].mxu0
        %v7550 = vadd.f32 %v7325, %v7549
        %v7551 = vpop.f32.mrb[0].mxu0
        %7552 = vmatprep.mubr.f32.mxu0 0.0
        %7553 = vmatmul.mubr.f32.gmra.mrb[0].mxu0 %v5672
        %v7554 = vpop.f32.mrb[0].mxu0
        %v7555 = vadd.f32 %v7330, %v7554
        %v7556 = vpop.f32.mrb[0].mxu0
        %7557 = vmatprep.mubr.f32.mxu0 0.0
        %7558 = vmatmul.mubr.f32.gmra.mrb[0].mxu0 %v5675
        %v7559 = vpop.f32.mrb[0].mxu0
        %v7560 = vadd.f32 %v7335, %v7559
        %v7561 = vpop.f32.mrb[0].mxu0
        %7562 = vmatprep.mubr.f32.mxu0 0.0
        %7563 = vmatmul.mubr.f32.gmra.mrb[0].mxu0 %v5678
        %v7564 = vpop.f32.mrb[0].mxu0
        %v7565 = vadd.f32 %v7340, %v7564
        %v7566 = vpop.f32.mrb[0].mxu0
        %7567 = vmatprep.mubr.f32.mxu0 0.0
        %7568 = vmatmul.mubr.f32.gmra.mrb[0].mxu0 %v5681
        %v7569 = vpop.f32.mrb[0].mxu0
        %v7570 = vadd.f32 %v7345, %v7569
        %v7571 = vpop.f32.mrb[0].mxu0
        %7572 = vmatprep.mubr.f32.mxu0 0.0
        %7573 = vmatmul.mubr.f32.gmra.mrb[0].mxu0 %v5684
        %v7574 = vpop.f32.mrb[0].mxu0
        %v7575 = vadd.f32 %v7350, %v7574
        %v7576 = vpop.f32.mrb[0].mxu0
        %7577 = vmatprep.mubr.f32.mxu0 0.0
        %7578 = vmatmul.mubr.f32.gmra.mrb[0].mxu0 %v5687
        %v7579 = vpop.f32.mrb[0].mxu0
        %v7580 = vadd.f32 %v7355, %v7579
        %v7581 = vpop.f32.mrb[0].mxu0
        %7582 = vmatprep.mubr.f32.mxu0 0.0
        %7583 = vmatmul.mubr.f32.gmra.mrb[0].mxu0 %v5690
        %v7584 = vpop.f32.mrb[0].mxu0
        %v7585 = vadd.f32 %v7360, %v7584
        %v7586 = vpop.f32.mrb[0].mxu0
        %7587 = vmatprep.mubr.f32.mxu0 0.0
        %7588 = vmatmul.mubr.f32.gmra.mrb[0].mxu0 %v5693
        %v7589 = vpop.f32.mrb[0].mxu0
        %v7590 = vadd.f32 %v7365, %v7589
        %v7591 = vpop.f32.mrb[0].mxu0
        %7592 = vmatprep.mubr.f32.mxu0 0.0
        %7593 = vmatmul.mubr.f32.gmra.mrb[0].mxu0 %v5696
        %v7594 = vpop.f32.mrb[0].mxu0
        %v7595 = vadd.f32 %v7370, %v7594
        %v7596 = vpop.f32.mrb[0].mxu0
        %7597 = vmatprep.mubr.f32.mxu0 0.0
        %7598 = vmatmul.mubr.f32.gmra.mrb[0].mxu0 %v5699
        %v7599 = vpop.f32.mrb[0].mxu0
        %v7600 = vadd.f32 %v7375, %v7599
        %v7601 = vpop.f32.mrb[0].mxu0
        %7602 = vmatprep.mubr.f32.mxu0 0.0
        %7603 = vmatmul.mubr.f32.gmra.mrb[0].mxu0 %v5702
        %v7604 = vpop.f32.mrb[0].mxu0
        %v7605 = vadd.f32 %v7380, %v7604
        %v7606 = vpop.f32.mrb[0].mxu0
        %7607 = vmatprep.mubr.f32.mxu0 0.0
        %7608 = vmatmul.mubr.f32.gmra.mrb[0].mxu0 %v5705
        %v7609 = vpop.f32.mrb[0].mxu0
        %v7610 = vadd.f32 %v7385, %v7609
        %v7611 = vpop.f32.mrb[0].mxu0
        %7612 = vmatprep.mubr.f32.mxu0 0.0
        %7613 = vmatmul.mubr.f32.gmra.mrb[0].mxu0 %v5708
        %v7614 = vpop.f32.mrb[0].mxu0
        %v7615 = vadd.f32 %v7390, %v7614
        %v7616 = vpop.f32.mrb[0].mxu0
        %7617 = vmatprep.mubr.f32.mxu0 0.0
        %7618 = vmatmul.mubr.f32.gmra.mrb[0].mxu0 %v5711
        %v7619 = vpop.f32.mrb[0].mxu0
        %v7620 = vadd.f32 %v7395, %v7619
        %v7621 = vpop.f32.mrb[0].mxu0
        %7622 = vmatprep.mubr.f32.mxu0 0.0
        %7623 = vmatmul.mubr.f32.gmra.mrb[0].mxu0 %v5714
        %v7624 = vpop.f32.mrb[0].mxu0
        %v7625 = vadd.f32 %v7400, %v7624
        %v7626 = vpop.f32.mrb[0].mxu0
        %7627 = vmatprep.mubr.f32.mxu0 0.0
        %7628 = vmatmul.mubr.f32.gmra.mrb[0].mxu0 %v6664
        %v7629 = vpop.f32.mrb[0].mxu0
        %v7630 = vadd.f32 %v7405, %v7629
        %v7631 = vpop.f32.mrb[0].mxu0
        %7632 = vmatprep.mubr.f32.mxu0 0.0
        %7633 = vmatmul.mubr.f32.gmra.mrb[0].mxu0 %v6667
        %v7634 = vpop.f32.mrb[0].mxu0
        %v7635 = vadd.f32 %v7410, %v7634
        %v7636 = vpop.f32.mrb[0].mxu0
        %7637 = vmatprep.mubr.f32.mxu0 0.0
        %7638 = vmatmul.mubr.f32.gmra.mrb[0].mxu0 %v7193
        %v7639 = vpop.f32.mrb[0].mxu0
        %v7640 = vadd.f32 %v7415, %v7639
        %v7641 = vpop.f32.mrb[0].mxu0
        %7642 = vmatprep.mubr.f32.mxu0 0.0
        %7643 = vmatmul.mubr.f32.gmra.mrb[0].mxu0 %v7196
        %v7644 = vpop.f32.mrb[0].mxu0
        %v7645 = vadd.f32 %v7420, %v7644
        %v7646 = vpop.f32.mrb[0].mxu0
        %7647 = vdwg.mxu0
        %v7648 = vadd.f32 %v7119, %v7490
        %v7649 = vadd.f32 %v7120, %v7495
        %v7650 = vadd.f32 %v7121, %v7500
        %v7651 = vadd.f32 %v7122, %v7505
        %v7652 = vadd.f32 %v7123, %v7510
        %v7653 = vadd.f32 %v7124, %v7515
        %v7654 = vadd.f32 %v7125, %v7520
        %v7655 = vadd.f32 %v7126, %v7525
        %v7656 = vadd.f32 %v7127, %v7530
        %v7657 = vadd.f32 %v7128, %v7535
        %v7658 = vadd.f32 %v7129, %v7540
        %v7659 = vadd.f32 %v7130, %v7545
        %v7660 = vadd.f32 %v7131, %v7550
        %v7661 = vadd.f32 %v7132, %v7555
        %v7662 = vadd.f32 %v7133, %v7560
        %v7663 = vadd.f32 %v7134, %v7565
        %v7664 = vadd.f32 %v7135, %v7570
        %v7665 = vadd.f32 %v7136, %v7575
        %v7666 = vadd.f32 %v7137, %v7580
        %v7667 = vadd.f32 %v7138, %v7585
        %v7668 = vadd.f32 %v7139, %v7590
        %v7669 = vadd.f32 %v7140, %v7595
        %v7670 = vadd.f32 %v7141, %v7600
        %v7671 = vadd.f32 %v7142, %v7605
        %v7672 = vadd.f32 %v7143, %v7610
        %v7673 = vadd.f32 %v7144, %v7615
        %v7674 = vadd.f32 %v7145, %v7620
        %v7675 = vadd.f32 %v7146, %v7625
        %v7676 = vadd.f32 %v7147, %v7630
        %v7677 = vadd.f32 %v7148, %v7635
        %v7678 = vadd.f32 %v7149, %v7640
        %v7679 = vadd.f32 %v7150, %v7645
        %s7680 = scalar_lea.vmem [#allocation14], 1280
        %v7681 = vld [vmem:[%s7680] sm:$0xff]
        %v7682 = vld [vmem:[%s7680 + $0x8] sm:$0xff]
        %v7683 = vld [vmem:[%s7680 + $0x10] sm:$0xff]
        %v7684 = vld [vmem:[%s7680 + $0x18] sm:$0xff]
        %v7685 = vld [vmem:[%s7680 + $0x20] sm:$0xff]
        %v7686 = vld [vmem:[%s7680 + $0x28] sm:$0xff]
        %v7687 = vld [vmem:[%s7680 + $0x30] sm:$0xff]
        %v7688 = vld [vmem:[%s7680 + $0x38] sm:$0xff]
        %v7689 = vld [vmem:[%s7680 + $0x40] sm:$0xff]
        %v7690 = vld [vmem:[%s7680 + $0x48] sm:$0xff]
        %v7691 = vld [vmem:[%s7680 + $0x50] sm:$0xff]
        %v7692 = vld [vmem:[%s7680 + $0x58] sm:$0xff]
        %v7693 = vld [vmem:[%s7680 + $0x60] sm:$0xff]
        %v7694 = vld [vmem:[%s7680 + $0x68] sm:$0xff]
        %v7695 = vld [vmem:[%s7680 + $0x70] sm:$0xff]
        %v7696 = vld [vmem:[%s7680 + $0x78] sm:$0xff]
        %v7697 = vld [vmem:[%s7680 + $0x80] sm:$0xff]
        %v7698 = vld [vmem:[%s7680 + $0x88] sm:$0xff]
        %v7699 = vld [vmem:[%s7680 + $0x90] sm:$0xff]
        %v7700 = vld [vmem:[%s7680 + $0x98] sm:$0xff]
        %v7701 = vld [vmem:[%s7680 + $0xa0] sm:$0xff]
        %v7702 = vld [vmem:[%s7680 + $0xa8] sm:$0xff]
        %v7703 = vld [vmem:[%s7680 + $0xb0] sm:$0xff]
        %v7704 = vld [vmem:[%s7680 + $0xb8] sm:$0xff]
        %v7705 = vld [vmem:[%s7680 + $0xc0] sm:$0xff]
        %v7706 = vld [vmem:[%s7680 + $0xc8] sm:$0xff]
        %v7707 = vld [vmem:[%s7680 + $0xd0] sm:$0xff]
        %v7708 = vld [vmem:[%s7680 + $0xd8] sm:$0xff]
        %v7709 = vld [vmem:[%s7680 + $0xe0] sm:$0xff]
        %v7710 = vld [vmem:[%s7680 + $0xe8] sm:$0xff]
        %v7711 = vld [vmem:[%s7680 + $0xf0] sm:$0xff]
        %v7712 = vld [vmem:[%s7680 + $0xf8] sm:$0xff]
        %v7713 = vld [vmem:[%s7680 + $0x100] sm:$0xff]
        %v7714 = vld [vmem:[%s7680 + $0x108] sm:$0xff]
        %v7715 = vld [vmem:[%s7680 + $0x110] sm:$0xff]
        %v7716 = vld [vmem:[%s7680 + $0x118] sm:$0xff]
        %v7717 = vld [vmem:[%s7680 + $0x120] sm:$0xff]
        %v7718 = vld [vmem:[%s7680 + $0x128] sm:$0xff]
        %v7719 = vld [vmem:[%s7680 + $0x130] sm:$0xff]
        %v7720 = vld [vmem:[%s7680 + $0x138] sm:$0xff]
        %v7722 = vsel %vm600, %v5137, 0
        %v7725 = vsel %vm600, %v5138, 0
        %7727 = vmatprep.subr.mxu0 0.0
        %7728 = vmatpush1.msra.mxu0 %v7681
        %7729 = vmatprep.subr.mxu0 0.0
        %7730 = vmatpush1.msra.mxu0 %v7682
        %7731 = vmatprep.subr.mxu0 0.0
        %7732 = vmatpush1.msra.mxu0 %v7683
        %7733 = vmatprep.subr.mxu0 0.0
        %7734 = vmatpush1.msra.mxu0 %v7684
        %7735 = vmatprep.subr.mxu0 0.0
        %7736 = vmatpush1.msra.mxu0 %v7685
        %7737 = vmatprep.subr.mxu0 0.0
        %7738 = vmatpush1.msra.mxu0 %v7686
        %7739 = vmatprep.subr.mxu0 0.0
        %7740 = vmatpush1.msra.mxu0 %v7687
        %7741 = vmatprep.subr.mxu0 0.0
        %7742 = vmatpush1.msra.mxu0 %v7688
        %7743 = vmatprep.subr.mxu0 0.0
        %7744 = vmatpush1.msra.mxu0 %v7689
        %7745 = vmatprep.subr.mxu0 0.0
        %7746 = vmatpush1.msra.mxu0 %v7690
        %7747 = vmatprep.subr.mxu0 0.0
        %7748 = vmatpush1.msra.mxu0 %v7691
        %7749 = vmatprep.subr.mxu0 0.0
        %7750 = vmatpush1.msra.mxu0 %v7692
        %7751 = vmatprep.subr.mxu0 0.0
        %7752 = vmatpush1.msra.mxu0 %v7693
        %7753 = vmatprep.subr.mxu0 0.0
        %7754 = vmatpush1.msra.mxu0 %v7694
        %7755 = vmatprep.subr.mxu0 0.0
        %7756 = vmatpush1.msra.mxu0 %v7695
        %7757 = vmatprep.subr.mxu0 0.0
        %7758 = vmatpush1.msra.mxu0 %v7696
        %7759 = vmatprep.subr.mxu0 0.0
        %7760 = vmatpush1.msra.mxu0 %v7697
        %7761 = vmatprep.subr.mxu0 0.0
        %7762 = vmatpush1.msra.mxu0 %v7698
        %7763 = vmatprep.subr.mxu0 0.0
        %7764 = vmatpush1.msra.mxu0 %v7699
        %7765 = vmatprep.subr.mxu0 0.0
        %7766 = vmatpush1.msra.mxu0 %v7700
        %7767 = vmatprep.subr.mxu0 0.0
        %7768 = vmatpush1.msra.mxu0 %v7701
        %7769 = vmatprep.subr.mxu0 0.0
        %7770 = vmatpush1.msra.mxu0 %v7702
        %7771 = vmatprep.subr.mxu0 0.0
        %7772 = vmatpush1.msra.mxu0 %v7703
        %7773 = vmatprep.subr.mxu0 0.0
        %7774 = vmatpush1.msra.mxu0 %v7704
        %7775 = vmatprep.subr.mxu0 0.0
        %7776 = vmatpush1.msra.mxu0 %v7705
        %7777 = vmatprep.subr.mxu0 0.0
        %7778 = vmatpush1.msra.mxu0 %v7706
        %7779 = vmatprep.subr.mxu0 0.0
        %7780 = vmatpush1.msra.mxu0 %v7707
        %7781 = vmatprep.subr.mxu0 0.0
        %7782 = vmatpush1.msra.mxu0 %v7708
        %7783 = vmatprep.subr.mxu0 0.0
        %7784 = vmatpush1.msra.mxu0 %v7709
        %7785 = vmatprep.subr.mxu0 0.0
        %7786 = vmatpush1.msra.mxu0 %v7710
        %7787 = vmatprep.subr.mxu0 0.0
        %7788 = vmatpush1.msra.mxu0 %v7711
        %7789 = vmatprep.subr.mxu0 0.0
        %7790 = vmatpush1.msra.mxu0 %v7712
        %7791 = vmatprep.mubr.f32.mxu0 %v5507
        %7792 = vmatmul.mubr.f32.gmra.mrb[0].mxu0 %v5467
        %v7793 = vpop.f32.mrb[0].mxu0
        %v7794 = vadd.f32 0.0, %v7793
        %v7795 = vpop.f32.mrb[0].mxu0
        %7796 = vmatprep.mubr.f32.mxu0 %v5508
        %7797 = vmatmul.mubr.f32.gmra.mrb[0].mxu0 %v5468
        %v7798 = vpop.f32.mrb[0].mxu0
        %v7799 = vadd.f32 0.0, %v7798
        %v7800 = vpop.f32.mrb[0].mxu0
        %7801 = vmatprep.mubr.f32.mxu0 %v5509
        %7802 = vmatmul.mubr.f32.gmra.mrb[0].mxu0 %v5469
        %v7803 = vpop.f32.mrb[0].mxu0
        %v7804 = vadd.f32 0.0, %v7803
        %v7805 = vpop.f32.mrb[0].mxu0
        %7806 = vmatprep.mubr.f32.mxu0 %v5510
        %7807 = vmatmul.mubr.f32.gmra.mrb[0].mxu0 %v5470
        %v7808 = vpop.f32.mrb[0].mxu0
        %v7809 = vadd.f32 0.0, %v7808
        %v7810 = vpop.f32.mrb[0].mxu0
        %7811 = vmatprep.mubr.f32.mxu0 %v5511
        %7812 = vmatmul.mubr.f32.gmra.mrb[0].mxu0 %v5471
        %v7813 = vpop.f32.mrb[0].mxu0
        %v7814 = vadd.f32 0.0, %v7813
        %v7815 = vpop.f32.mrb[0].mxu0
        %7816 = vmatprep.mubr.f32.mxu0 %v5512
        %7817 = vmatmul.mubr.f32.gmra.mrb[0].mxu0 %v5472
        %v7818 = vpop.f32.mrb[0].mxu0
        %v7819 = vadd.f32 0.0, %v7818
        %v7820 = vpop.f32.mrb[0].mxu0
        %7821 = vmatprep.mubr.f32.mxu0 %v5513
        %7822 = vmatmul.mubr.f32.gmra.mrb[0].mxu0 %v5473
        %v7823 = vpop.f32.mrb[0].mxu0
        %v7824 = vadd.f32 0.0, %v7823
        %v7825 = vpop.f32.mrb[0].mxu0
        %7826 = vmatprep.mubr.f32.mxu0 %v5514
        %7827 = vmatmul.mubr.f32.gmra.mrb[0].mxu0 %v5474
        %v7828 = vpop.f32.mrb[0].mxu0
        %v7829 = vadd.f32 0.0, %v7828
        %v7830 = vpop.f32.mrb[0].mxu0
        %7831 = vmatprep.mubr.f32.mxu0 %v5515
        %7832 = vmatmul.mubr.f32.gmra.mrb[0].mxu0 %v5475
        %v7833 = vpop.f32.mrb[0].mxu0
        %v7834 = vadd.f32 0.0, %v7833
        %v7835 = vpop.f32.mrb[0].mxu0
        %7836 = vmatprep.mubr.f32.mxu0 %v5516
        %7837 = vmatmul.mubr.f32.gmra.mrb[0].mxu0 %v5476
        %v7838 = vpop.f32.mrb[0].mxu0
        %v7839 = vadd.f32 0.0, %v7838
        %v7840 = vpop.f32.mrb[0].mxu0
        %7841 = vmatprep.mubr.f32.mxu0 %v5517
        %7842 = vmatmul.mubr.f32.gmra.mrb[0].mxu0 %v5477
        %v7843 = vpop.f32.mrb[0].mxu0
        %v7844 = vadd.f32 0.0, %v7843
        %v7845 = vpop.f32.mrb[0].mxu0
        %7846 = vmatprep.mubr.f32.mxu0 %v5518
        %7847 = vmatmul.mubr.f32.gmra.mrb[0].mxu0 %v5478
        %v7848 = vpop.f32.mrb[0].mxu0
        %v7849 = vadd.f32 0.0, %v7848
        %v7850 = vpop.f32.mrb[0].mxu0
        %7851 = vmatprep.mubr.f32.mxu0 %v5519
        %7852 = vmatmul.mubr.f32.gmra.mrb[0].mxu0 %v5479
        %v7853 = vpop.f32.mrb[0].mxu0
        %v7854 = vadd.f32 0.0, %v7853
        %v7855 = vpop.f32.mrb[0].mxu0
        %7856 = vmatprep.mubr.f32.mxu0 %v5520
        %7857 = vmatmul.mubr.f32.gmra.mrb[0].mxu0 %v5480
        %v7858 = vpop.f32.mrb[0].mxu0
        %v7859 = vadd.f32 0.0, %v7858
        %v7860 = vpop.f32.mrb[0].mxu0
        %7861 = vmatprep.mubr.f32.mxu0 %v5521
        %7862 = vmatmul.mubr.f32.gmra.mrb[0].mxu0 %v5481
        %v7863 = vpop.f32.mrb[0].mxu0
        %v7864 = vadd.f32 0.0, %v7863
        %v7865 = vpop.f32.mrb[0].mxu0
        %7866 = vmatprep.mubr.f32.mxu0 %v5522
        %7867 = vmatmul.mubr.f32.gmra.mrb[0].mxu0 %v5482
        %v7868 = vpop.f32.mrb[0].mxu0
        %v7869 = vadd.f32 0.0, %v7868
        %v7870 = vpop.f32.mrb[0].mxu0
        %7871 = vmatprep.mubr.f32.mxu0 %v5523
        %7872 = vmatmul.mubr.f32.gmra.mrb[0].mxu0 %v5483
        %v7873 = vpop.f32.mrb[0].mxu0
        %v7874 = vadd.f32 0.0, %v7873
        %v7875 = vpop.f32.mrb[0].mxu0
        %7876 = vmatprep.mubr.f32.mxu0 %v5524
        %7877 = vmatmul.mubr.f32.gmra.mrb[0].mxu0 %v5484
        %v7878 = vpop.f32.mrb[0].mxu0
        %v7879 = vadd.f32 0.0, %v7878
        %v7880 = vpop.f32.mrb[0].mxu0
        %7881 = vmatprep.mubr.f32.mxu0 %v5525
        %7882 = vmatmul.mubr.f32.gmra.mrb[0].mxu0 %v5485
        %v7883 = vpop.f32.mrb[0].mxu0
        %v7884 = vadd.f32 0.0, %v7883
        %v7885 = vpop.f32.mrb[0].mxu0
        %7886 = vmatprep.mubr.f32.mxu0 %v5526
        %7887 = vmatmul.mubr.f32.gmra.mrb[0].mxu0 %v5486
        %v7888 = vpop.f32.mrb[0].mxu0
        %v7889 = vadd.f32 0.0, %v7888
        %v7890 = vpop.f32.mrb[0].mxu0
        %7891 = vmatprep.mubr.f32.mxu0 %v5527
        %7892 = vmatmul.mubr.f32.gmra.mrb[0].mxu0 %v5487
        %v7893 = vpop.f32.mrb[0].mxu0
        %v7894 = vadd.f32 0.0, %v7893
        %v7895 = vpop.f32.mrb[0].mxu0
        %7896 = vmatprep.mubr.f32.mxu0 %v5528
        %7897 = vmatmul.mubr.f32.gmra.mrb[0].mxu0 %v5488
        %v7898 = vpop.f32.mrb[0].mxu0
        %v7899 = vadd.f32 0.0, %v7898
        %v7900 = vpop.f32.mrb[0].mxu0
        %7901 = vmatprep.mubr.f32.mxu0 %v5529
        %7902 = vmatmul.mubr.f32.gmra.mrb[0].mxu0 %v5489
        %v7903 = vpop.f32.mrb[0].mxu0
        %v7904 = vadd.f32 0.0, %v7903
        %v7905 = vpop.f32.mrb[0].mxu0
        %7906 = vmatprep.mubr.f32.mxu0 %v5530
        %7907 = vmatmul.mubr.f32.gmra.mrb[0].mxu0 %v5490
        %v7908 = vpop.f32.mrb[0].mxu0
        %v7909 = vadd.f32 0.0, %v7908
        %v7910 = vpop.f32.mrb[0].mxu0
        %7911 = vmatprep.mubr.f32.mxu0 %v5531
        %7912 = vmatmul.mubr.f32.gmra.mrb[0].mxu0 %v5491
        %v7913 = vpop.f32.mrb[0].mxu0
        %v7914 = vadd.f32 0.0, %v7913
        %v7915 = vpop.f32.mrb[0].mxu0
        %7916 = vmatprep.mubr.f32.mxu0 %v5532
        %7917 = vmatmul.mubr.f32.gmra.mrb[0].mxu0 %v5492
        %v7918 = vpop.f32.mrb[0].mxu0
        %v7919 = vadd.f32 0.0, %v7918
        %v7920 = vpop.f32.mrb[0].mxu0
        %7921 = vmatprep.mubr.f32.mxu0 %v5533
        %7922 = vmatmul.mubr.f32.gmra.mrb[0].mxu0 %v5493
        %v7923 = vpop.f32.mrb[0].mxu0
        %v7924 = vadd.f32 0.0, %v7923
        %v7925 = vpop.f32.mrb[0].mxu0
        %7926 = vmatprep.mubr.f32.mxu0 %v5534
        %7927 = vmatmul.mubr.f32.gmra.mrb[0].mxu0 %v5494
        %v7928 = vpop.f32.mrb[0].mxu0
        %v7929 = vadd.f32 0.0, %v7928
        %v7930 = vpop.f32.mrb[0].mxu0
        %7931 = vmatprep.mubr.f32.mxu0 %v5535
        %7932 = vmatmul.mubr.f32.gmra.mrb[0].mxu0 %v5495
        %v7933 = vpop.f32.mrb[0].mxu0
        %v7934 = vadd.f32 0.0, %v7933
        %v7935 = vpop.f32.mrb[0].mxu0
        %7936 = vmatprep.mubr.f32.mxu0 %v5536
        %7937 = vmatmul.mubr.f32.gmra.mrb[0].mxu0 %v5496
        %v7938 = vpop.f32.mrb[0].mxu0
        %v7939 = vadd.f32 0.0, %v7938
        %v7940 = vpop.f32.mrb[0].mxu0
        %7941 = vmatprep.mubr.f32.mxu0 %v5537
        %7942 = vmatmul.mubr.f32.gmra.mrb[0].mxu0 %v5497
        %v7943 = vpop.f32.mrb[0].mxu0
        %v7944 = vadd.f32 0.0, %v7943
        %v7945 = vpop.f32.mrb[0].mxu0
        %7946 = vmatprep.mubr.f32.mxu0 %v5538
        %7947 = vmatmul.mubr.f32.gmra.mrb[0].mxu0 %v5498
        %v7948 = vpop.f32.mrb[0].mxu0
        %v7949 = vadd.f32 0.0, %v7948
        %v7950 = vpop.f32.mrb[0].mxu0
        %7951 = vdwg.mxu0
        %7952 = vmatprep.subr.mxu0 0.0
        %7953 = vmatpush1.msra.mxu0 %v7713
        %7954 = vmatprep.subr.mxu0 0.0
        %7955 = vmatpush1.msra.mxu0 %v7714
        %7956 = vmatprep.subr.mxu0 0.0
        %7957 = vmatpush1.msra.mxu0 %v7715
        %7958 = vmatprep.subr.mxu0 0.0
        %7959 = vmatpush1.msra.mxu0 %v7716
        %7960 = vmatprep.subr.mxu0 0.0
        %7961 = vmatpush1.msra.mxu0 %v7717
        %7962 = vmatprep.subr.mxu0 0.0
        %7963 = vmatpush1.msra.mxu0 %v7718
        %7964 = vmatprep.subr.mxu0 0.0
        %7965 = vmatpush1.msra.mxu0 %v7719
        %7966 = vmatprep.subr.mxu0 0.0
        %7967 = vmatpush1.msra.mxu0 %v7720
        %7968 = vmatprep.subr.mxu0 0.0
        %7969 = vmatpush1.msra.mxu0 0.0
        %7970 = vmatprep.subr.mxu0 0.0
        %7971 = vmatpush1.msra.mxu0 0.0
        %7972 = vmatprep.subr.mxu0 0.0
        %7973 = vmatpush1.msra.mxu0 0.0
        %7974 = vmatprep.subr.mxu0 0.0
        %7975 = vmatpush1.msra.mxu0 0.0
        %7976 = vmatprep.subr.mxu0 0.0
        %7977 = vmatpush1.msra.mxu0 0.0
        %7978 = vmatprep.subr.mxu0 0.0
        %7979 = vmatpush1.msra.mxu0 0.0
        %7980 = vmatprep.subr.mxu0 0.0
        %7981 = vmatpush1.msra.mxu0 0.0
        %7982 = vmatprep.subr.mxu0 0.0
        %7983 = vmatpush1.msra.mxu0 0.0
        %7984 = vmatprep.subr.mxu0 0.0
        %7985 = vmatpush1.msra.mxu0 0.0
        %7986 = vmatprep.subr.mxu0 0.0
        %7987 = vmatpush1.msra.mxu0 0.0
        %7988 = vmatprep.subr.mxu0 0.0
        %7989 = vmatpush1.msra.mxu0 0.0
        %7990 = vmatprep.subr.mxu0 0.0
        %7991 = vmatpush1.msra.mxu0 0.0
        %7992 = vmatprep.subr.mxu0 0.0
        %7993 = vmatpush1.msra.mxu0 0.0
        %7994 = vmatprep.subr.mxu0 0.0
        %7995 = vmatpush1.msra.mxu0 0.0
        %7996 = vmatprep.subr.mxu0 0.0
        %7997 = vmatpush1.msra.mxu0 0.0
        %7998 = vmatprep.subr.mxu0 0.0
        %7999 = vmatpush1.msra.mxu0 0.0
        %8000 = vmatprep.subr.mxu0 0.0
        %8001 = vmatpush1.msra.mxu0 0.0
        %8002 = vmatprep.subr.mxu0 0.0
        %8003 = vmatpush1.msra.mxu0 0.0
        %8004 = vmatprep.subr.mxu0 0.0
        %8005 = vmatpush1.msra.mxu0 0.0
        %8006 = vmatprep.subr.mxu0 0.0
        %8007 = vmatpush1.msra.mxu0 0.0
        %8008 = vmatprep.subr.mxu0 0.0
        %8009 = vmatpush1.msra.mxu0 0.0
        %8010 = vmatprep.subr.mxu0 0.0
        %8011 = vmatpush1.msra.mxu0 0.0
        %8012 = vmatprep.subr.mxu0 0.0
        %8013 = vmatpush1.msra.mxu0 0.0
        %8014 = vmatprep.subr.mxu0 0.0
        %8015 = vmatpush1.msra.mxu0 0.0
        %8016 = vmatprep.mubr.f32.mxu0 0.0
        %8017 = vmatmul.mubr.f32.gmra.mrb[0].mxu0 %v5639
        %v8018 = vpop.f32.mrb[0].mxu0
        %v8019 = vadd.f32 %v7794, %v8018
        %v8020 = vpop.f32.mrb[0].mxu0
        %8021 = vmatprep.mubr.f32.mxu0 0.0
        %8022 = vmatmul.mubr.f32.gmra.mrb[0].mxu0 %v5642
        %v8023 = vpop.f32.mrb[0].mxu0
        %v8024 = vadd.f32 %v7799, %v8023
        %v8025 = vpop.f32.mrb[0].mxu0
        %8026 = vmatprep.mubr.f32.mxu0 0.0
        %8027 = vmatmul.mubr.f32.gmra.mrb[0].mxu0 %v5645
        %v8028 = vpop.f32.mrb[0].mxu0
        %v8029 = vadd.f32 %v7804, %v8028
        %v8030 = vpop.f32.mrb[0].mxu0
        %8031 = vmatprep.mubr.f32.mxu0 0.0
        %8032 = vmatmul.mubr.f32.gmra.mrb[0].mxu0 %v5648
        %v8033 = vpop.f32.mrb[0].mxu0
        %v8034 = vadd.f32 %v7809, %v8033
        %v8035 = vpop.f32.mrb[0].mxu0
        %8036 = vmatprep.mubr.f32.mxu0 0.0
        %8037 = vmatmul.mubr.f32.gmra.mrb[0].mxu0 %v5651
        %v8038 = vpop.f32.mrb[0].mxu0
        %v8039 = vadd.f32 %v7814, %v8038
        %v8040 = vpop.f32.mrb[0].mxu0
        %8041 = vmatprep.mubr.f32.mxu0 0.0
        %8042 = vmatmul.mubr.f32.gmra.mrb[0].mxu0 %v5654
        %v8043 = vpop.f32.mrb[0].mxu0
        %v8044 = vadd.f32 %v7819, %v8043
        %v8045 = vpop.f32.mrb[0].mxu0
        %8046 = vmatprep.mubr.f32.mxu0 0.0
        %8047 = vmatmul.mubr.f32.gmra.mrb[0].mxu0 %v5657
        %v8048 = vpop.f32.mrb[0].mxu0
        %v8049 = vadd.f32 %v7824, %v8048
        %v8050 = vpop.f32.mrb[0].mxu0
        %8051 = vmatprep.mubr.f32.mxu0 0.0
        %8052 = vmatmul.mubr.f32.gmra.mrb[0].mxu0 %v5660
        %v8053 = vpop.f32.mrb[0].mxu0
        %v8054 = vadd.f32 %v7829, %v8053
        %v8055 = vpop.f32.mrb[0].mxu0
        %8056 = vmatprep.mubr.f32.mxu0 0.0
        %8057 = vmatmul.mubr.f32.gmra.mrb[0].mxu0 %v5663
        %v8058 = vpop.f32.mrb[0].mxu0
        %v8059 = vadd.f32 %v7834, %v8058
        %v8060 = vpop.f32.mrb[0].mxu0
        %8061 = vmatprep.mubr.f32.mxu0 0.0
        %8062 = vmatmul.mubr.f32.gmra.mrb[0].mxu0 %v5666
        %v8063 = vpop.f32.mrb[0].mxu0
        %v8064 = vadd.f32 %v7839, %v8063
        %v8065 = vpop.f32.mrb[0].mxu0
        %8066 = vmatprep.mubr.f32.mxu0 0.0
        %8067 = vmatmul.mubr.f32.gmra.mrb[0].mxu0 %v5669
        %v8068 = vpop.f32.mrb[0].mxu0
        %v8069 = vadd.f32 %v7844, %v8068
        %v8070 = vpop.f32.mrb[0].mxu0
        %8071 = vmatprep.mubr.f32.mxu0 0.0
        %8072 = vmatmul.mubr.f32.gmra.mrb[0].mxu0 %v5672
        %v8073 = vpop.f32.mrb[0].mxu0
        %v8074 = vadd.f32 %v7849, %v8073
        %v8075 = vpop.f32.mrb[0].mxu0
        %8076 = vmatprep.mubr.f32.mxu0 0.0
        %8077 = vmatmul.mubr.f32.gmra.mrb[0].mxu0 %v5675
        %v8078 = vpop.f32.mrb[0].mxu0
        %v8079 = vadd.f32 %v7854, %v8078
        %v8080 = vpop.f32.mrb[0].mxu0
        %8081 = vmatprep.mubr.f32.mxu0 0.0
        %8082 = vmatmul.mubr.f32.gmra.mrb[0].mxu0 %v5678
        %v8083 = vpop.f32.mrb[0].mxu0
        %v8084 = vadd.f32 %v7859, %v8083
        %v8085 = vpop.f32.mrb[0].mxu0
        %8086 = vmatprep.mubr.f32.mxu0 0.0
        %8087 = vmatmul.mubr.f32.gmra.mrb[0].mxu0 %v5681
        %v8088 = vpop.f32.mrb[0].mxu0
        %v8089 = vadd.f32 %v7864, %v8088
        %v8090 = vpop.f32.mrb[0].mxu0
        %8091 = vmatprep.mubr.f32.mxu0 0.0
        %8092 = vmatmul.mubr.f32.gmra.mrb[0].mxu0 %v5684
        %v8093 = vpop.f32.mrb[0].mxu0
        %v8094 = vadd.f32 %v7869, %v8093
        %v8095 = vpop.f32.mrb[0].mxu0
        %8096 = vmatprep.mubr.f32.mxu0 0.0
        %8097 = vmatmul.mubr.f32.gmra.mrb[0].mxu0 %v5687
        %v8098 = vpop.f32.mrb[0].mxu0
        %v8099 = vadd.f32 %v7874, %v8098
        %v8100 = vpop.f32.mrb[0].mxu0
        %8101 = vmatprep.mubr.f32.mxu0 0.0
        %8102 = vmatmul.mubr.f32.gmra.mrb[0].mxu0 %v5690
        %v8103 = vpop.f32.mrb[0].mxu0
        %v8104 = vadd.f32 %v7879, %v8103
        %v8105 = vpop.f32.mrb[0].mxu0
        %8106 = vmatprep.mubr.f32.mxu0 0.0
        %8107 = vmatmul.mubr.f32.gmra.mrb[0].mxu0 %v5693
        %v8108 = vpop.f32.mrb[0].mxu0
        %v8109 = vadd.f32 %v7884, %v8108
        %v8110 = vpop.f32.mrb[0].mxu0
        %8111 = vmatprep.mubr.f32.mxu0 0.0
        %8112 = vmatmul.mubr.f32.gmra.mrb[0].mxu0 %v5696
        %v8113 = vpop.f32.mrb[0].mxu0
        %v8114 = vadd.f32 %v7889, %v8113
        %v8115 = vpop.f32.mrb[0].mxu0
        %8116 = vmatprep.mubr.f32.mxu0 0.0
        %8117 = vmatmul.mubr.f32.gmra.mrb[0].mxu0 %v5699
        %v8118 = vpop.f32.mrb[0].mxu0
        %v8119 = vadd.f32 %v7894, %v8118
        %v8120 = vpop.f32.mrb[0].mxu0
        %8121 = vmatprep.mubr.f32.mxu0 0.0
        %8122 = vmatmul.mubr.f32.gmra.mrb[0].mxu0 %v5702
        %v8123 = vpop.f32.mrb[0].mxu0
        %v8124 = vadd.f32 %v7899, %v8123
        %v8125 = vpop.f32.mrb[0].mxu0
        %8126 = vmatprep.mubr.f32.mxu0 0.0
        %8127 = vmatmul.mubr.f32.gmra.mrb[0].mxu0 %v5705
        %v8128 = vpop.f32.mrb[0].mxu0
        %v8129 = vadd.f32 %v7904, %v8128
        %v8130 = vpop.f32.mrb[0].mxu0
        %8131 = vmatprep.mubr.f32.mxu0 0.0
        %8132 = vmatmul.mubr.f32.gmra.mrb[0].mxu0 %v5708
        %v8133 = vpop.f32.mrb[0].mxu0
        %v8134 = vadd.f32 %v7909, %v8133
        %v8135 = vpop.f32.mrb[0].mxu0
        %8136 = vmatprep.mubr.f32.mxu0 0.0
        %8137 = vmatmul.mubr.f32.gmra.mrb[0].mxu0 %v5711
        %v8138 = vpop.f32.mrb[0].mxu0
        %v8139 = vadd.f32 %v7914, %v8138
        %v8140 = vpop.f32.mrb[0].mxu0
        %8141 = vmatprep.mubr.f32.mxu0 0.0
        %8142 = vmatmul.mubr.f32.gmra.mrb[0].mxu0 %v5714
        %v8143 = vpop.f32.mrb[0].mxu0
        %v8144 = vadd.f32 %v7919, %v8143
        %v8145 = vpop.f32.mrb[0].mxu0
        %8146 = vmatprep.mubr.f32.mxu0 0.0
        %8147 = vmatmul.mubr.f32.gmra.mrb[0].mxu0 %v6664
        %v8148 = vpop.f32.mrb[0].mxu0
        %v8149 = vadd.f32 %v7924, %v8148
        %v8150 = vpop.f32.mrb[0].mxu0
        %8151 = vmatprep.mubr.f32.mxu0 0.0
        %8152 = vmatmul.mubr.f32.gmra.mrb[0].mxu0 %v6667
        %v8153 = vpop.f32.mrb[0].mxu0
        %v8154 = vadd.f32 %v7929, %v8153
        %v8155 = vpop.f32.mrb[0].mxu0
        %8156 = vmatprep.mubr.f32.mxu0 0.0
        %8157 = vmatmul.mubr.f32.gmra.mrb[0].mxu0 %v7193
        %v8158 = vpop.f32.mrb[0].mxu0
        %v8159 = vadd.f32 %v7934, %v8158
        %v8160 = vpop.f32.mrb[0].mxu0
        %8161 = vmatprep.mubr.f32.mxu0 0.0
        %8162 = vmatmul.mubr.f32.gmra.mrb[0].mxu0 %v7196
        %v8163 = vpop.f32.mrb[0].mxu0
        %v8164 = vadd.f32 %v7939, %v8163
        %v8165 = vpop.f32.mrb[0].mxu0
        %8166 = vmatprep.mubr.f32.mxu0 0.0
        %8167 = vmatmul.mubr.f32.gmra.mrb[0].mxu0 %v7722
        %v8168 = vpop.f32.mrb[0].mxu0
        %v8169 = vadd.f32 %v7944, %v8168
        %v8170 = vpop.f32.mrb[0].mxu0
        %8171 = vmatprep.mubr.f32.mxu0 0.0
        %8172 = vmatmul.mubr.f32.gmra.mrb[0].mxu0 %v7725
        %v8173 = vpop.f32.mrb[0].mxu0
        %v8174 = vadd.f32 %v7949, %v8173
        %v8175 = vpop.f32.mrb[0].mxu0
        %8176 = vdwg.mxu0
        %v8177 = vadd.f32 %v7648, %v8019
        %v8178 = vadd.f32 %v7649, %v8024
        %v8179 = vadd.f32 %v7650, %v8029
        %v8180 = vadd.f32 %v7651, %v8034
        %v8181 = vadd.f32 %v7652, %v8039
        %v8182 = vadd.f32 %v7653, %v8044
        %v8183 = vadd.f32 %v7654, %v8049
        %v8184 = vadd.f32 %v7655, %v8054
        %v8185 = vadd.f32 %v7656, %v8059
        %v8186 = vadd.f32 %v7657, %v8064
        %v8187 = vadd.f32 %v7658, %v8069
        %v8188 = vadd.f32 %v7659, %v8074
        %v8189 = vadd.f32 %v7660, %v8079
        %v8190 = vadd.f32 %v7661, %v8084
        %v8191 = vadd.f32 %v7662, %v8089
        %v8192 = vadd.f32 %v7663, %v8094
        %v8193 = vadd.f32 %v7664, %v8099
        %v8194 = vadd.f32 %v7665, %v8104
        %v8195 = vadd.f32 %v7666, %v8109
        %v8196 = vadd.f32 %v7667, %v8114
        %v8197 = vadd.f32 %v7668, %v8119
        %v8198 = vadd.f32 %v7669, %v8124
        %v8199 = vadd.f32 %v7670, %v8129
        %v8200 = vadd.f32 %v7671, %v8134
        %v8201 = vadd.f32 %v7672, %v8139
        %v8202 = vadd.f32 %v7673, %v8144
        %v8203 = vadd.f32 %v7674, %v8149
        %v8204 = vadd.f32 %v7675, %v8154
        %v8205 = vadd.f32 %v7676, %v8159
        %v8206 = vadd.f32 %v7677, %v8164
        %v8207 = vadd.f32 %v7678, %v8169
        %v8208 = vadd.f32 %v7679, %v8174
        %v8209 = vld [vmem:[#allocation16] sm:$0x1]
        %v8211 = vlaneseq
        %v8212 = vshrl.u32 %v8211, 7
        %v8213 = vsub.s32 0, %v8212
        %v8214 = vrot.slane %v8209, %v8213
        %v8216 = vadd.f32 %v8177, %v8214
        %v8217 = vadd.f32 %v8178, %v8214
        %v8218 = vadd.f32 %v8179, %v8214
        %v8219 = vadd.f32 %v8180, %v8214
        %v8220 = vadd.f32 %v8181, %v8214
        %v8221 = vadd.f32 %v8182, %v8214
        %v8222 = vadd.f32 %v8183, %v8214
        %v8223 = vadd.f32 %v8184, %v8214
        %v8224 = vadd.f32 %v8185, %v8214
        %v8225 = vadd.f32 %v8186, %v8214
        %v8226 = vadd.f32 %v8187, %v8214
        %v8227 = vadd.f32 %v8188, %v8214
        %v8228 = vadd.f32 %v8189, %v8214
        %v8229 = vadd.f32 %v8190, %v8214
        %v8230 = vadd.f32 %v8191, %v8214
        %v8231 = vadd.f32 %v8192, %v8214
        %v8232 = vadd.f32 %v8193, %v8214
        %v8233 = vadd.f32 %v8194, %v8214
        %v8234 = vadd.f32 %v8195, %v8214
        %v8235 = vadd.f32 %v8196, %v8214
        %v8236 = vadd.f32 %v8197, %v8214
        %v8237 = vadd.f32 %v8198, %v8214
        %v8238 = vadd.f32 %v8199, %v8214
        %v8239 = vadd.f32 %v8200, %v8214
        %v8240 = vadd.f32 %v8201, %v8214
        %v8241 = vadd.f32 %v8202, %v8214
        %v8242 = vadd.f32 %v8203, %v8214
        %v8243 = vadd.f32 %v8204, %v8214
        %v8244 = vadd.f32 %v8205, %v8214
        %v8245 = vadd.f32 %v8206, %v8214
        %v8246 = vadd.f32 %v8207, %v8214
        %v8247 = vadd.f32 %v8208, %v8214
        %v8248 = vmax.f32 %v8216, 0.0
        %v8249 = vmax.f32 %v8217, 0.0
        %v8250 = vmax.f32 %v8218, 0.0
        %v8251 = vmax.f32 %v8219, 0.0
        %v8252 = vmax.f32 %v8220, 0.0
        %v8253 = vmax.f32 %v8221, 0.0
        %v8254 = vmax.f32 %v8222, 0.0
        %v8255 = vmax.f32 %v8223, 0.0
        %v8256 = vmax.f32 %v8224, 0.0
        %v8257 = vmax.f32 %v8225, 0.0
        %v8258 = vmax.f32 %v8226, 0.0
        %v8259 = vmax.f32 %v8227, 0.0
        %v8260 = vmax.f32 %v8228, 0.0
        %v8261 = vmax.f32 %v8229, 0.0
        %v8262 = vmax.f32 %v8230, 0.0
        %v8263 = vmax.f32 %v8231, 0.0
        %v8264 = vmax.f32 %v8232, 0.0
        %v8265 = vmax.f32 %v8233, 0.0
        %v8266 = vmax.f32 %v8234, 0.0
        %v8267 = vmax.f32 %v8235, 0.0
        %v8268 = vmax.f32 %v8236, 0.0
        %v8269 = vmax.f32 %v8237, 0.0
        %v8270 = vmax.f32 %v8238, 0.0
        %v8271 = vmax.f32 %v8239, 0.0
        %v8272 = vmax.f32 %v8240, 0.0
        %v8273 = vmax.f32 %v8241, 0.0
        %v8274 = vmax.f32 %v8242, 0.0
        %v8275 = vmax.f32 %v8243, 0.0
        %v8276 = vmax.f32 %v8244, 0.0
        %v8277 = vmax.f32 %v8245, 0.0
        %v8278 = vmax.f32 %v8246, 0.0
        %v8279 = vmax.f32 %v8247, 0.0
        %v8280 = vld [vmem:[#allocation17] sm:$0xff]
        %v8281 = vld [vmem:[#allocation17 + $0x8] sm:$0xff]
        %v8282 = vld [vmem:[#allocation17 + $0x10] sm:$0xff]
        %v8283 = vld [vmem:[#allocation17 + $0x18] sm:$0xff]
        %v8284 = vld [vmem:[#allocation19] sm:$0x1]
        %v8286 = vlaneseq
        %v8287 = vshrl.u32 %v8286, 7
        %v8288 = vsub.s32 0, %v8287
        %v8289 = vrot.slane %v8284, %v8288
        %v8292 = vsel %vm649, %v8248, 0
        %v8295 = vsel %vm649, %v8249, 0
        %v8298 = vsel %vm649, %v8250, 0
        %v8301 = vsel %vm649, %v8251, 0
        %v8304 = vsel %vm649, %v8252, 0
        %v8307 = vsel %vm649, %v8253, 0
        %v8310 = vsel %vm649, %v8254, 0
        %v8313 = vsel %vm649, %v8255, 0
        %v8316 = vsel %vm649, %v8256, 0
        %v8319 = vsel %vm649, %v8257, 0
        %v8322 = vsel %vm649, %v8258, 0
        %v8325 = vsel %vm649, %v8259, 0
        %v8328 = vsel %vm649, %v8260, 0
        %v8331 = vsel %vm649, %v8261, 0
        %v8334 = vsel %vm649, %v8262, 0
        %v8337 = vsel %vm649, %v8263, 0
        %v8340 = vsel %vm649, %v8264, 0
        %v8343 = vsel %vm649, %v8265, 0
        %v8346 = vsel %vm649, %v8266, 0
        %v8349 = vsel %vm649, %v8267, 0
        %v8352 = vsel %vm649, %v8268, 0
        %v8355 = vsel %vm649, %v8269, 0
        %v8358 = vsel %vm649, %v8270, 0
        %v8361 = vsel %vm649, %v8271, 0
        %v8364 = vsel %vm649, %v8272, 0
        %v8367 = vsel %vm649, %v8273, 0
        %v8370 = vsel %vm649, %v8274, 0
        %v8373 = vsel %vm649, %v8275, 0
        %v8376 = vsel %vm649, %v8276, 0
        %v8379 = vsel %vm649, %v8277, 0
        %v8382 = vsel %vm649, %v8278, 0
        %v8385 = vsel %vm649, %v8279, 0
        %8387 = vmatprep.subr.mxu0 0.0
        %8388 = vmatpush1.msra.mxu0 %v8280
        %8389 = vmatprep.subr.mxu0 0.0
        %8390 = vmatpush1.msra.mxu0 %v8281
        %8391 = vmatprep.subr.mxu0 0.0
        %8392 = vmatpush1.msra.mxu0 %v8282
        %8393 = vmatprep.subr.mxu0 0.0
        %8394 = vmatpush1.msra.mxu0 %v8283
        %8395 = vmatprep.subr.mxu0 0.0
        %8396 = vmatpush1.msra.mxu0 0.0
        %8397 = vmatprep.subr.mxu0 0.0
        %8398 = vmatpush1.msra.mxu0 0.0
        %8399 = vmatprep.subr.mxu0 0.0
        %8400 = vmatpush1.msra.mxu0 0.0
        %8401 = vmatprep.subr.mxu0 0.0
        %8402 = vmatpush1.msra.mxu0 0.0
        %8403 = vmatprep.subr.mxu0 0.0
        %8404 = vmatpush1.msra.mxu0 0.0
        %8405 = vmatprep.subr.mxu0 0.0
        %8406 = vmatpush1.msra.mxu0 0.0
        %8407 = vmatprep.subr.mxu0 0.0
        %8408 = vmatpush1.msra.mxu0 0.0
        %8409 = vmatprep.subr.mxu0 0.0
        %8410 = vmatpush1.msra.mxu0 0.0
        %8411 = vmatprep.subr.mxu0 0.0
        %8412 = vmatpush1.msra.mxu0 0.0
        %8413 = vmatprep.subr.mxu0 0.0
        %8414 = vmatpush1.msra.mxu0 0.0
        %8415 = vmatprep.subr.mxu0 0.0
        %8416 = vmatpush1.msra.mxu0 0.0
        %8417 = vmatprep.subr.mxu0 0.0
        %8418 = vmatpush1.msra.mxu0 0.0
        %8419 = vmatprep.subr.mxu0 0.0
        %8420 = vmatpush1.msra.mxu0 0.0
        %8421 = vmatprep.subr.mxu0 0.0
        %8422 = vmatpush1.msra.mxu0 0.0
        %8423 = vmatprep.subr.mxu0 0.0
        %8424 = vmatpush1.msra.mxu0 0.0
        %8425 = vmatprep.subr.mxu0 0.0
        %8426 = vmatpush1.msra.mxu0 0.0
        %8427 = vmatprep.subr.mxu0 0.0
        %8428 = vmatpush1.msra.mxu0 0.0
        %8429 = vmatprep.subr.mxu0 0.0
        %8430 = vmatpush1.msra.mxu0 0.0
        %8431 = vmatprep.subr.mxu0 0.0
        %8432 = vmatpush1.msra.mxu0 0.0
        %8433 = vmatprep.subr.mxu0 0.0
        %8434 = vmatpush1.msra.mxu0 0.0
        %8435 = vmatprep.subr.mxu0 0.0
        %8436 = vmatpush1.msra.mxu0 0.0
        %8437 = vmatprep.subr.mxu0 0.0
        %8438 = vmatpush1.msra.mxu0 0.0
        %8439 = vmatprep.subr.mxu0 0.0
        %8440 = vmatpush1.msra.mxu0 0.0
        %8441 = vmatprep.subr.mxu0 0.0
        %8442 = vmatpush1.msra.mxu0 0.0
        %8443 = vmatprep.subr.mxu0 0.0
        %8444 = vmatpush1.msra.mxu0 0.0
        %8445 = vmatprep.subr.mxu0 0.0
        %8446 = vmatpush1.msra.mxu0 0.0
        %8447 = vmatprep.subr.mxu0 0.0
        %8448 = vmatpush1.msra.mxu0 0.0
        %8449 = vmatprep.subr.mxu0 0.0
        %8450 = vmatpush1.msra.mxu0 0.0
        %8451 = vmatprep.mubr.f32.mxu0 0.0
        %8452 = vmatmul.mubr.f32.gmra.mrb[0].mxu0 %v8292
        %v8453 = vpop.f32.mrb[0].mxu0
        %v8454 = vadd.f32 %v8289, %v8453
        %v8455 = vpop.f32.mrb[0].mxu0
        %8456 = vmatprep.mubr.f32.mxu0 0.0
        %8457 = vmatmul.mubr.f32.gmra.mrb[0].mxu0 %v8295
        %v8458 = vpop.f32.mrb[0].mxu0
        %v8459 = vadd.f32 %v8289, %v8458
        %v8460 = vpop.f32.mrb[0].mxu0
        %8461 = vmatprep.mubr.f32.mxu0 0.0
        %8462 = vmatmul.mubr.f32.gmra.mrb[0].mxu0 %v8298
        %v8463 = vpop.f32.mrb[0].mxu0
        %v8464 = vadd.f32 %v8289, %v8463
        %v8465 = vpop.f32.mrb[0].mxu0
        %8466 = vmatprep.mubr.f32.mxu0 0.0
        %8467 = vmatmul.mubr.f32.gmra.mrb[0].mxu0 %v8301
        %v8468 = vpop.f32.mrb[0].mxu0
        %v8469 = vadd.f32 %v8289, %v8468
        %v8470 = vpop.f32.mrb[0].mxu0
        %8471 = vmatprep.mubr.f32.mxu0 0.0
        %8472 = vmatmul.mubr.f32.gmra.mrb[0].mxu0 %v8304
        %v8473 = vpop.f32.mrb[0].mxu0
        %v8474 = vadd.f32 %v8289, %v8473
        %v8475 = vpop.f32.mrb[0].mxu0
        %8476 = vmatprep.mubr.f32.mxu0 0.0
        %8477 = vmatmul.mubr.f32.gmra.mrb[0].mxu0 %v8307
        %v8478 = vpop.f32.mrb[0].mxu0
        %v8479 = vadd.f32 %v8289, %v8478
        %v8480 = vpop.f32.mrb[0].mxu0
        %8481 = vmatprep.mubr.f32.mxu0 0.0
        %8482 = vmatmul.mubr.f32.gmra.mrb[0].mxu0 %v8310
        %v8483 = vpop.f32.mrb[0].mxu0
        %v8484 = vadd.f32 %v8289, %v8483
        %v8485 = vpop.f32.mrb[0].mxu0
        %8486 = vmatprep.mubr.f32.mxu0 0.0
        %8487 = vmatmul.mubr.f32.gmra.mrb[0].mxu0 %v8313
        %v8488 = vpop.f32.mrb[0].mxu0
        %v8489 = vadd.f32 %v8289, %v8488
        %v8490 = vpop.f32.mrb[0].mxu0
        %8491 = vmatprep.mubr.f32.mxu0 0.0
        %8492 = vmatmul.mubr.f32.gmra.mrb[0].mxu0 %v8316
        %v8493 = vpop.f32.mrb[0].mxu0
        %v8494 = vadd.f32 %v8289, %v8493
        %v8495 = vpop.f32.mrb[0].mxu0
        %8496 = vmatprep.mubr.f32.mxu0 0.0
        %8497 = vmatmul.mubr.f32.gmra.mrb[0].mxu0 %v8319
        %v8498 = vpop.f32.mrb[0].mxu0
        %v8499 = vadd.f32 %v8289, %v8498
        %v8500 = vpop.f32.mrb[0].mxu0
        %8501 = vmatprep.mubr.f32.mxu0 0.0
        %8502 = vmatmul.mubr.f32.gmra.mrb[0].mxu0 %v8322
        %v8503 = vpop.f32.mrb[0].mxu0
        %v8504 = vadd.f32 %v8289, %v8503
        %v8505 = vpop.f32.mrb[0].mxu0
        %8506 = vmatprep.mubr.f32.mxu0 0.0
        %8507 = vmatmul.mubr.f32.gmra.mrb[0].mxu0 %v8325
        %v8508 = vpop.f32.mrb[0].mxu0
        %v8509 = vadd.f32 %v8289, %v8508
        %v8510 = vpop.f32.mrb[0].mxu0
        %8511 = vmatprep.mubr.f32.mxu0 0.0
        %8512 = vmatmul.mubr.f32.gmra.mrb[0].mxu0 %v8328
        %v8513 = vpop.f32.mrb[0].mxu0
        %v8514 = vadd.f32 %v8289, %v8513
        %v8515 = vpop.f32.mrb[0].mxu0
        %8516 = vmatprep.mubr.f32.mxu0 0.0
        %8517 = vmatmul.mubr.f32.gmra.mrb[0].mxu0 %v8331
        %v8518 = vpop.f32.mrb[0].mxu0
        %v8519 = vadd.f32 %v8289, %v8518
        %v8520 = vpop.f32.mrb[0].mxu0
        %8521 = vmatprep.mubr.f32.mxu0 0.0
        %8522 = vmatmul.mubr.f32.gmra.mrb[0].mxu0 %v8334
        %v8523 = vpop.f32.mrb[0].mxu0
        %v8524 = vadd.f32 %v8289, %v8523
        %v8525 = vpop.f32.mrb[0].mxu0
        %8526 = vmatprep.mubr.f32.mxu0 0.0
        %8527 = vmatmul.mubr.f32.gmra.mrb[0].mxu0 %v8337
        %v8528 = vpop.f32.mrb[0].mxu0
        %v8529 = vadd.f32 %v8289, %v8528
        %v8530 = vpop.f32.mrb[0].mxu0
        %8531 = vmatprep.mubr.f32.mxu0 0.0
        %8532 = vmatmul.mubr.f32.gmra.mrb[0].mxu0 %v8340
        %v8533 = vpop.f32.mrb[0].mxu0
        %v8534 = vadd.f32 %v8289, %v8533
        %v8535 = vpop.f32.mrb[0].mxu0
        %8536 = vmatprep.mubr.f32.mxu0 0.0
        %8537 = vmatmul.mubr.f32.gmra.mrb[0].mxu0 %v8343
        %v8538 = vpop.f32.mrb[0].mxu0
        %v8539 = vadd.f32 %v8289, %v8538
        %v8540 = vpop.f32.mrb[0].mxu0
        %8541 = vmatprep.mubr.f32.mxu0 0.0
        %8542 = vmatmul.mubr.f32.gmra.mrb[0].mxu0 %v8346
        %v8543 = vpop.f32.mrb[0].mxu0
        %v8544 = vadd.f32 %v8289, %v8543
        %v8545 = vpop.f32.mrb[0].mxu0
        %8546 = vmatprep.mubr.f32.mxu0 0.0
        %8547 = vmatmul.mubr.f32.gmra.mrb[0].mxu0 %v8349
        %v8548 = vpop.f32.mrb[0].mxu0
        %v8549 = vadd.f32 %v8289, %v8548
        %v8550 = vpop.f32.mrb[0].mxu0
        %8551 = vmatprep.mubr.f32.mxu0 0.0
        %8552 = vmatmul.mubr.f32.gmra.mrb[0].mxu0 %v8352
        %v8553 = vpop.f32.mrb[0].mxu0
        %v8554 = vadd.f32 %v8289, %v8553
        %v8555 = vpop.f32.mrb[0].mxu0
        %8556 = vmatprep.mubr.f32.mxu0 0.0
        %8557 = vmatmul.mubr.f32.gmra.mrb[0].mxu0 %v8355
        %v8558 = vpop.f32.mrb[0].mxu0
        %v8559 = vadd.f32 %v8289, %v8558
        %v8560 = vpop.f32.mrb[0].mxu0
        %8561 = vmatprep.mubr.f32.mxu0 0.0
        %8562 = vmatmul.mubr.f32.gmra.mrb[0].mxu0 %v8358
        %v8563 = vpop.f32.mrb[0].mxu0
        %v8564 = vadd.f32 %v8289, %v8563
        %v8565 = vpop.f32.mrb[0].mxu0
        %8566 = vmatprep.mubr.f32.mxu0 0.0
        %8567 = vmatmul.mubr.f32.gmra.mrb[0].mxu0 %v8361
        %v8568 = vpop.f32.mrb[0].mxu0
        %v8569 = vadd.f32 %v8289, %v8568
        %v8570 = vpop.f32.mrb[0].mxu0
        %8571 = vmatprep.mubr.f32.mxu0 0.0
        %8572 = vmatmul.mubr.f32.gmra.mrb[0].mxu0 %v8364
        %v8573 = vpop.f32.mrb[0].mxu0
        %v8574 = vadd.f32 %v8289, %v8573
        %v8575 = vpop.f32.mrb[0].mxu0
        %8576 = vmatprep.mubr.f32.mxu0 0.0
        %8577 = vmatmul.mubr.f32.gmra.mrb[0].mxu0 %v8367
        %v8578 = vpop.f32.mrb[0].mxu0
        %v8579 = vadd.f32 %v8289, %v8578
        %v8580 = vpop.f32.mrb[0].mxu0
        %8581 = vmatprep.mubr.f32.mxu0 0.0
        %8582 = vmatmul.mubr.f32.gmra.mrb[0].mxu0 %v8370
        %v8583 = vpop.f32.mrb[0].mxu0
        %v8584 = vadd.f32 %v8289, %v8583
        %v8585 = vpop.f32.mrb[0].mxu0
        %8586 = vmatprep.mubr.f32.mxu0 0.0
        %8587 = vmatmul.mubr.f32.gmra.mrb[0].mxu0 %v8373
        %v8588 = vpop.f32.mrb[0].mxu0
        %v8589 = vadd.f32 %v8289, %v8588
        %v8590 = vpop.f32.mrb[0].mxu0
        %8591 = vmatprep.mubr.f32.mxu0 0.0
        %8592 = vmatmul.mubr.f32.gmra.mrb[0].mxu0 %v8376
        %v8593 = vpop.f32.mrb[0].mxu0
        %v8594 = vadd.f32 %v8289, %v8593
        %v8595 = vpop.f32.mrb[0].mxu0
        %8596 = vmatprep.mubr.f32.mxu0 0.0
        %8597 = vmatmul.mubr.f32.gmra.mrb[0].mxu0 %v8379
        %v8598 = vpop.f32.mrb[0].mxu0
        %v8599 = vadd.f32 %v8289, %v8598
        %v8600 = vpop.f32.mrb[0].mxu0
        %8601 = vmatprep.mubr.f32.mxu0 0.0
        %8602 = vmatmul.mubr.f32.gmra.mrb[0].mxu0 %v8382
        %v8603 = vpop.f32.mrb[0].mxu0
        %v8604 = vadd.f32 %v8289, %v8603
        %v8605 = vpop.f32.mrb[0].mxu0
        %8606 = vmatprep.mubr.f32.mxu0 0.0
        %8607 = vmatmul.mubr.f32.gmra.mrb[0].mxu0 %v8385
        %v8608 = vpop.f32.mrb[0].mxu0
        %v8609 = vadd.f32 %v8289, %v8608
        %v8610 = vpop.f32.mrb[0].mxu0
        %8611 = vdwg.mxu0
        %8612 = vst.msk [vmem:[%s664 + $0x2] sm:$0xff] %vm649, %v8454
        %8613 = vst.msk [vmem:[%s664 + $0xa] sm:$0xff] %vm649, %v8459
        %8614 = vst.msk [vmem:[%s664 + $0x1a] sm:$0xff] %vm649, %v8464
        %8615 = vst.msk [vmem:[%s664 + $0x22] sm:$0xff] %vm649, %v8469
        %8616 = vst.msk [vmem:[%s664 + $0x32] sm:$0xff] %vm649, %v8474
        %8617 = vst.msk [vmem:[%s664 + $0x3a] sm:$0xff] %vm649, %v8479
        %8618 = vst.msk [vmem:[%s664 + $0x4a] sm:$0xff] %vm649, %v8484
        %8619 = vst.msk [vmem:[%s664 + $0x52] sm:$0xff] %vm649, %v8489
        %8620 = vst.msk [vmem:[%s664 + $0x62] sm:$0xff] %vm649, %v8494
        %8621 = vst.msk [vmem:[%s664 + $0x6a] sm:$0xff] %vm649, %v8499
        %8622 = vst.msk [vmem:[%s664 + $0x7a] sm:$0xff] %vm649, %v8504
        %8623 = vst.msk [vmem:[%s664 + $0x82] sm:$0xff] %vm649, %v8509
        %8624 = vst.msk [vmem:[%s664 + $0x92] sm:$0xff] %vm649, %v8514
        %8625 = vst.msk [vmem:[%s664 + $0x9a] sm:$0xff] %vm649, %v8519
        %8626 = vst.msk [vmem:[%s664 + $0xaa] sm:$0xff] %vm649, %v8524
        %8627 = vst.msk [vmem:[%s664 + $0xb2] sm:$0xff] %vm649, %v8529
        %8628 = vst.msk [vmem:[%s664 + $0xc2] sm:$0xff] %vm649, %v8534
        %8629 = vst.msk [vmem:[%s664 + $0xca] sm:$0xff] %vm649, %v8539
        %8630 = vst.msk [vmem:[%s664 + $0xda] sm:$0xff] %vm649, %v8544
        %8631 = vst.msk [vmem:[%s664 + $0xe2] sm:$0xff] %vm649, %v8549
        %8632 = vst.msk [vmem:[%s664 + $0xf2] sm:$0xff] %vm649, %v8554
        %8633 = vst.msk [vmem:[%s664 + $0xfa] sm:$0xff] %vm649, %v8559
        %8634 = vst.msk [vmem:[%s664 + $0x10a] sm:$0xff] %vm649, %v8564
        %8635 = vst.msk [vmem:[%s664 + $0x112] sm:$0xff] %vm649, %v8569
        %8636 = vst.msk [vmem:[%s664 + $0x122] sm:$0xff] %vm649, %v8574
        %8637 = vst.msk [vmem:[%s664 + $0x12a] sm:$0xff] %vm649, %v8579
        %8638 = vst.msk [vmem:[%s664 + $0x13a] sm:$0xff] %vm649, %v8584
        %8639 = vst.msk [vmem:[%s664 + $0x142] sm:$0xff] %vm649, %v8589
        %8640 = vst.msk [vmem:[%s664 + $0x152] sm:$0xff] %vm649, %v8594
        %8641 = vst.msk [vmem:[%s664 + $0x15a] sm:$0xff] %vm649, %v8599
        %8642 = vst.msk [vmem:[%s664 + $0x16a] sm:$0xff] %vm649, %v8604
        %8643 = vst.msk [vmem:[%s664 + $0x172] sm:$0xff] %vm649, %v8609
        %v8644 = vld [vmem:[#allocation4] sm:$0xff]
        %v8645 = vld [vmem:[#allocation4 + $0x8] sm:$0xff]
        %v8646 = vld [vmem:[#allocation4 + $0x18] sm:$0xff]
        %v8647 = vld [vmem:[#allocation4 + $0x20] sm:$0xff]
        %v8648 = vld [vmem:[#allocation4 + $0x30] sm:$0xff]
        %v8649 = vld [vmem:[#allocation4 + $0x38] sm:$0xff]
        %v8650 = vld [vmem:[#allocation4 + $0x48] sm:$0xff]
        %v8651 = vld [vmem:[#allocation4 + $0x50] sm:$0xff]
        %v8652 = vld [vmem:[#allocation4 + $0x60] sm:$0xff]
        %v8653 = vld [vmem:[#allocation4 + $0x68] sm:$0xff]
        %v8654 = vld [vmem:[#allocation4 + $0x78] sm:$0xff]
        %v8655 = vld [vmem:[#allocation4 + $0x80] sm:$0xff]
        %v8656 = vld [vmem:[#allocation4 + $0x90] sm:$0xff]
        %v8657 = vld [vmem:[#allocation4 + $0x98] sm:$0xff]
        %v8658 = vld [vmem:[#allocation4 + $0xa8] sm:$0xff]
        %v8659 = vld [vmem:[#allocation4 + $0xb0] sm:$0xff]
        %v8660 = vld [vmem:[#allocation4 + $0xc0] sm:$0xff]
        %v8661 = vld [vmem:[#allocation4 + $0xc8] sm:$0xff]
        %v8662 = vld [vmem:[#allocation4 + $0xd8] sm:$0xff]
        %v8663 = vld [vmem:[#allocation4 + $0xe0] sm:$0xff]
        %v8664 = vld [vmem:[#allocation4 + $0xf0] sm:$0xff]
        %v8665 = vld [vmem:[#allocation4 + $0xf8] sm:$0xff]
        %v8666 = vld [vmem:[#allocation4 + $0x108] sm:$0xff]
        %v8667 = vld [vmem:[#allocation4 + $0x110] sm:$0xff]
        %v8668 = vld [vmem:[#allocation4 + $0x120] sm:$0xff]
        %v8669 = vld [vmem:[#allocation4 + $0x128] sm:$0xff]
        %v8670 = vld [vmem:[#allocation4 + $0x138] sm:$0xff]
        %v8671 = vld [vmem:[#allocation4 + $0x140] sm:$0xff]
        %v8672 = vld [vmem:[#allocation4 + $0x150] sm:$0xff]
        %v8673 = vld [vmem:[#allocation4 + $0x158] sm:$0xff]
        %v8674 = vld [vmem:[#allocation4 + $0x168] sm:$0xff]
        %v8675 = vld [vmem:[#allocation4 + $0x170] sm:$0xff]
        %v8676 = vld [vmem:[#allocation4 + $0x180] sm:$0xff]
        %v8677 = vld [vmem:[#allocation4 + $0x188] sm:$0xff]
        %v8678 = vld [vmem:[#allocation4 + $0x198] sm:$0xff]
        %v8679 = vld [vmem:[#allocation4 + $0x1a0] sm:$0xff]
        %v8680 = vld [vmem:[#allocation4 + $0x1b0] sm:$0xff]
        %v8681 = vld [vmem:[#allocation4 + $0x1b8] sm:$0xff]
        %v8682 = vld [vmem:[#allocation4 + $0x1c8] sm:$0xff]
        %v8683 = vld [vmem:[#allocation4 + $0x1d0] sm:$0xff]
        %v8684 = vld [vmem:[#allocation4 + $0x1] sm:$0xff]
        %v8685 = vld [vmem:[#allocation4 + $0x9] sm:$0xff]
        %v8686 = vld [vmem:[#allocation4 + $0x19] sm:$0xff]
        %v8687 = vld [vmem:[#allocation4 + $0x21] sm:$0xff]
        %v8688 = vld [vmem:[#allocation4 + $0x31] sm:$0xff]
        %v8689 = vld [vmem:[#allocation4 + $0x39] sm:$0xff]
        %v8690 = vld [vmem:[#allocation4 + $0x49] sm:$0xff]
        %v8691 = vld [vmem:[#allocation4 + $0x51] sm:$0xff]
        %v8692 = vld [vmem:[#allocation4 + $0x61] sm:$0xff]
        %v8693 = vld [vmem:[#allocation4 + $0x69] sm:$0xff]
        %v8694 = vld [vmem:[#allocation4 + $0x79] sm:$0xff]
        %v8695 = vld [vmem:[#allocation4 + $0x81] sm:$0xff]
        %v8696 = vld [vmem:[#allocation4 + $0x91] sm:$0xff]
        %v8697 = vld [vmem:[#allocation4 + $0x99] sm:$0xff]
        %v8698 = vld [vmem:[#allocation4 + $0xa9] sm:$0xff]
        %v8699 = vld [vmem:[#allocation4 + $0xb1] sm:$0xff]
        %v8700 = vld [vmem:[#allocation4 + $0xc1] sm:$0xff]
        %v8701 = vld [vmem:[#allocation4 + $0xc9] sm:$0xff]
        %v8702 = vld [vmem:[#allocation4 + $0xd9] sm:$0xff]
        %v8703 = vld [vmem:[#allocation4 + $0xe1] sm:$0xff]
        %v8704 = vld [vmem:[#allocation4 + $0xf1] sm:$0xff]
        %v8705 = vld [vmem:[#allocation4 + $0xf9] sm:$0xff]
        %v8706 = vld [vmem:[#allocation4 + $0x109] sm:$0xff]
        %v8707 = vld [vmem:[#allocation4 + $0x111] sm:$0xff]
        %v8708 = vld [vmem:[#allocation4 + $0x121] sm:$0xff]
        %v8709 = vld [vmem:[#allocation4 + $0x129] sm:$0xff]
        %v8710 = vld [vmem:[#allocation4 + $0x139] sm:$0xff]
        %v8711 = vld [vmem:[#allocation4 + $0x141] sm:$0xff]
        %v8712 = vld [vmem:[#allocation4 + $0x151] sm:$0xff]
        %v8713 = vld [vmem:[#allocation4 + $0x159] sm:$0xff]
        %v8714 = vld [vmem:[#allocation4 + $0x169] sm:$0xff]
        %v8715 = vld [vmem:[#allocation4 + $0x171] sm:$0xff]
        %v8716 = vld [vmem:[#allocation4 + $0x181] sm:$0xff]
        %v8717 = vld [vmem:[#allocation4 + $0x189] sm:$0xff]
        %v8718 = vld [vmem:[#allocation4 + $0x199] sm:$0xff]
        %v8719 = vld [vmem:[#allocation4 + $0x1a1] sm:$0xff]
        %v8720 = vld [vmem:[#allocation4 + $0x1b1] sm:$0xff]
        %v8721 = vld [vmem:[#allocation4 + $0x1b9] sm:$0xff]
        %v8722 = vld [vmem:[#allocation4 + $0x1c9] sm:$0xff]
        %v8723 = vld [vmem:[#allocation4 + $0x1d1] sm:$0xff]
        %v8724 = vld [vmem:[#allocation4 + $0x2] sm:$0xff]
        %v8725 = vld [vmem:[#allocation4 + $0xa] sm:$0xff]
        %v8726 = vld [vmem:[#allocation4 + $0x1a] sm:$0xff]
        %v8727 = vld [vmem:[#allocation4 + $0x22] sm:$0xff]
        %v8728 = vld [vmem:[#allocation4 + $0x32] sm:$0xff]
        %v8729 = vld [vmem:[#allocation4 + $0x3a] sm:$0xff]
        %v8730 = vld [vmem:[#allocation4 + $0x4a] sm:$0xff]
        %v8731 = vld [vmem:[#allocation4 + $0x52] sm:$0xff]
        %v8732 = vld [vmem:[#allocation4 + $0x62] sm:$0xff]
        %v8733 = vld [vmem:[#allocation4 + $0x6a] sm:$0xff]
        %v8734 = vld [vmem:[#allocation4 + $0x7a] sm:$0xff]
        %v8735 = vld [vmem:[#allocation4 + $0x82] sm:$0xff]
        %v8736 = vld [vmem:[#allocation4 + $0x92] sm:$0xff]
        %v8737 = vld [vmem:[#allocation4 + $0x9a] sm:$0xff]
        %v8738 = vld [vmem:[#allocation4 + $0xaa] sm:$0xff]
        %v8739 = vld [vmem:[#allocation4 + $0xb2] sm:$0xff]
        %v8740 = vld [vmem:[#allocation4 + $0xc2] sm:$0xff]
        %v8741 = vld [vmem:[#allocation4 + $0xca] sm:$0xff]
        %v8742 = vld [vmem:[#allocation4 + $0xda] sm:$0xff]
        %v8743 = vld [vmem:[#allocation4 + $0xe2] sm:$0xff]
        %v8744 = vld [vmem:[#allocation4 + $0xf2] sm:$0xff]
        %v8745 = vld [vmem:[#allocation4 + $0xfa] sm:$0xff]
        %v8746 = vld [vmem:[#allocation4 + $0x10a] sm:$0xff]
        %v8747 = vld [vmem:[#allocation4 + $0x112] sm:$0xff]
        %v8748 = vld [vmem:[#allocation4 + $0x122] sm:$0xff]
        %v8749 = vld [vmem:[#allocation4 + $0x12a] sm:$0xff]
        %v8750 = vld [vmem:[#allocation4 + $0x13a] sm:$0xff]
        %v8751 = vld [vmem:[#allocation4 + $0x142] sm:$0xff]
        %v8752 = vld [vmem:[#allocation4 + $0x152] sm:$0xff]
        %v8753 = vld [vmem:[#allocation4 + $0x15a] sm:$0xff]
        %v8754 = vld [vmem:[#allocation4 + $0x16a] sm:$0xff]
        %v8755 = vld [vmem:[#allocation4 + $0x172] sm:$0xff]
        %v8756 = vld [vmem:[#allocation4 + $0x182] sm:$0xff]
        %v8757 = vld [vmem:[#allocation4 + $0x18a] sm:$0xff]
        %v8758 = vld [vmem:[#allocation4 + $0x19a] sm:$0xff]
        %v8759 = vld [vmem:[#allocation4 + $0x1a2] sm:$0xff]
        %v8760 = vld [vmem:[#allocation4 + $0x1b2] sm:$0xff]
        %v8761 = vld [vmem:[#allocation4 + $0x1ba] sm:$0xff]
        %v8762 = vld [vmem:[#allocation4 + $0x1ca] sm:$0xff]
        %v8763 = vld [vmem:[#allocation4 + $0x1d2] sm:$0xff]
        %v8764 = vld [vmem:[#allocation4 + $0x3] sm:$0xff]
        %v8765 = vld [vmem:[#allocation4 + $0xb] sm:$0xff]
        %v8766 = vld [vmem:[#allocation4 + $0x1b] sm:$0xff]
        %v8767 = vld [vmem:[#allocation4 + $0x23] sm:$0xff]
        %v8768 = vld [vmem:[#allocation4 + $0x33] sm:$0xff]
        %v8769 = vld [vmem:[#allocation4 + $0x3b] sm:$0xff]
        %v8770 = vld [vmem:[#allocation4 + $0x4b] sm:$0xff]
        %v8771 = vld [vmem:[#allocation4 + $0x53] sm:$0xff]
        %v8772 = vld [vmem:[#allocation4 + $0x63] sm:$0xff]
        %v8773 = vld [vmem:[#allocation4 + $0x6b] sm:$0xff]
        %v8774 = vld [vmem:[#allocation4 + $0x7b] sm:$0xff]
        %v8775 = vld [vmem:[#allocation4 + $0x83] sm:$0xff]
        %v8776 = vld [vmem:[#allocation4 + $0x93] sm:$0xff]
        %v8777 = vld [vmem:[#allocation4 + $0x9b] sm:$0xff]
        %v8778 = vld [vmem:[#allocation4 + $0xab] sm:$0xff]
        %v8779 = vld [vmem:[#allocation4 + $0xb3] sm:$0xff]
        %v8780 = vld [vmem:[#allocation4 + $0xc3] sm:$0xff]
        %v8781 = vld [vmem:[#allocation4 + $0xcb] sm:$0xff]
        %v8782 = vld [vmem:[#allocation4 + $0xdb] sm:$0xff]
        %v8783 = vld [vmem:[#allocation4 + $0xe3] sm:$0xff]
        %v8784 = vld [vmem:[#allocation4 + $0xf3] sm:$0xff]
        %v8785 = vld [vmem:[#allocation4 + $0xfb] sm:$0xff]
        %v8786 = vld [vmem:[#allocation4 + $0x10b] sm:$0xff]
        %v8787 = vld [vmem:[#allocation4 + $0x113] sm:$0xff]
        %v8788 = vld [vmem:[#allocation4 + $0x123] sm:$0xff]
        %v8789 = vld [vmem:[#allocation4 + $0x12b] sm:$0xff]
        %v8790 = vld [vmem:[#allocation4 + $0x13b] sm:$0xff]
        %v8791 = vld [vmem:[#allocation4 + $0x143] sm:$0xff]
        %v8792 = vld [vmem:[#allocation4 + $0x153] sm:$0xff]
        %v8793 = vld [vmem:[#allocation4 + $0x15b] sm:$0xff]
        %v8794 = vld [vmem:[#allocation4 + $0x16b] sm:$0xff]
        %v8795 = vld [vmem:[#allocation4 + $0x173] sm:$0xff]
        %v8796 = vld [vmem:[#allocation4 + $0x183] sm:$0xff]
        %v8797 = vld [vmem:[#allocation4 + $0x18b] sm:$0xff]
        %v8798 = vld [vmem:[#allocation4 + $0x19b] sm:$0xff]
        %v8799 = vld [vmem:[#allocation4 + $0x1a3] sm:$0xff]
        %v8800 = vld [vmem:[#allocation4 + $0x1b3] sm:$0xff]
        %v8801 = vld [vmem:[#allocation4 + $0x1bb] sm:$0xff]
        %v8802 = vld [vmem:[#allocation4 + $0x1cb] sm:$0xff]
        %v8803 = vld [vmem:[#allocation4 + $0x1d3] sm:$0xff]
        %v8804 = vld [vmem:[#allocation4 + $0x4] sm:$0xff]
        %v8805 = vld [vmem:[#allocation4 + $0xc] sm:$0xff]
        %v8806 = vld [vmem:[#allocation4 + $0x1c] sm:$0xff]
        %v8807 = vld [vmem:[#allocation4 + $0x24] sm:$0xff]
        %v8808 = vld [vmem:[#allocation4 + $0x34] sm:$0xff]
        %v8809 = vld [vmem:[#allocation4 + $0x3c] sm:$0xff]
        %v8810 = vld [vmem:[#allocation4 + $0x4c] sm:$0xff]
        %v8811 = vld [vmem:[#allocation4 + $0x54] sm:$0xff]
        %v8812 = vld [vmem:[#allocation4 + $0x64] sm:$0xff]
        %v8813 = vld [vmem:[#allocation4 + $0x6c] sm:$0xff]
        %v8814 = vld [vmem:[#allocation4 + $0x7c] sm:$0xff]
        %v8815 = vld [vmem:[#allocation4 + $0x84] sm:$0xff]
        %v8816 = vld [vmem:[#allocation4 + $0x94] sm:$0xff]
        %v8817 = vld [vmem:[#allocation4 + $0x9c] sm:$0xff]
        %v8818 = vld [vmem:[#allocation4 + $0xac] sm:$0xff]
        %v8819 = vld [vmem:[#allocation4 + $0xb4] sm:$0xff]
        %v8820 = vld [vmem:[#allocation4 + $0xc4] sm:$0xff]
        %v8821 = vld [vmem:[#allocation4 + $0xcc] sm:$0xff]
        %v8822 = vld [vmem:[#allocation4 + $0xdc] sm:$0xff]
        %v8823 = vld [vmem:[#allocation4 + $0xe4] sm:$0xff]
        %v8824 = vld [vmem:[#allocation4 + $0xf4] sm:$0xff]
        %v8825 = vld [vmem:[#allocation4 + $0xfc] sm:$0xff]
        %v8826 = vld [vmem:[#allocation4 + $0x10c] sm:$0xff]
        %v8827 = vld [vmem:[#allocation4 + $0x114] sm:$0xff]
        %v8828 = vld [vmem:[#allocation4 + $0x124] sm:$0xff]
        %v8829 = vld [vmem:[#allocation4 + $0x12c] sm:$0xff]
        %v8830 = vld [vmem:[#allocation4 + $0x13c] sm:$0xff]
        %v8831 = vld [vmem:[#allocation4 + $0x144] sm:$0xff]
        %v8832 = vld [vmem:[#allocation4 + $0x154] sm:$0xff]
        %v8833 = vld [vmem:[#allocation4 + $0x15c] sm:$0xff]
        %v8834 = vld [vmem:[#allocation4 + $0x16c] sm:$0xff]
        %v8835 = vld [vmem:[#allocation4 + $0x174] sm:$0xff]
        %v8836 = vld [vmem:[#allocation4 + $0x184] sm:$0xff]
        %v8837 = vld [vmem:[#allocation4 + $0x18c] sm:$0xff]
        %v8838 = vld [vmem:[#allocation4 + $0x19c] sm:$0xff]
        %v8839 = vld [vmem:[#allocation4 + $0x1a4] sm:$0xff]
        %v8840 = vld [vmem:[#allocation4 + $0x1b4] sm:$0xff]
        %v8841 = vld [vmem:[#allocation4 + $0x1bc] sm:$0xff]
        %v8842 = vld [vmem:[#allocation4 + $0x1cc] sm:$0xff]
        %v8843 = vld [vmem:[#allocation4 + $0x1d4] sm:$0xff]
        %8884 = vrot.lane.b32.xlu0 %v8684, 32
        %v8885 = vpop.permute.xlu0 %8884
        %8886 = vrot.lane.b32.xlu0 %v8685, 32
        %v8887 = vpop.permute.xlu0 %8886
        %8888 = vrot.lane.b32.xlu0 %v8686, 32
        %v8889 = vpop.permute.xlu0 %8888
        %8890 = vrot.lane.b32.xlu0 %v8687, 32
        %v8891 = vpop.permute.xlu0 %8890
        %8892 = vrot.lane.b32.xlu0 %v8688, 32
        %v8893 = vpop.permute.xlu0 %8892
        %8894 = vrot.lane.b32.xlu0 %v8689, 32
        %v8895 = vpop.permute.xlu0 %8894
        %8896 = vrot.lane.b32.xlu0 %v8690, 32
        %v8897 = vpop.permute.xlu0 %8896
        %8898 = vrot.lane.b32.xlu0 %v8691, 32
        %v8899 = vpop.permute.xlu0 %8898
        %8900 = vrot.lane.b32.xlu0 %v8692, 32
        %v8901 = vpop.permute.xlu0 %8900
        %8902 = vrot.lane.b32.xlu0 %v8693, 32
        %v8903 = vpop.permute.xlu0 %8902
        %8904 = vrot.lane.b32.xlu0 %v8694, 32
        %v8905 = vpop.permute.xlu0 %8904
        %8906 = vrot.lane.b32.xlu0 %v8695, 32
        %v8907 = vpop.permute.xlu0 %8906
        %8908 = vrot.lane.b32.xlu0 %v8696, 32
        %v8909 = vpop.permute.xlu0 %8908
        %8910 = vrot.lane.b32.xlu0 %v8697, 32
        %v8911 = vpop.permute.xlu0 %8910
        %8912 = vrot.lane.b32.xlu0 %v8698, 32
        %v8913 = vpop.permute.xlu0 %8912
        %8914 = vrot.lane.b32.xlu0 %v8699, 32
        %v8915 = vpop.permute.xlu0 %8914
        %8916 = vrot.lane.b32.xlu0 %v8700, 32
        %v8917 = vpop.permute.xlu0 %8916
        %8918 = vrot.lane.b32.xlu0 %v8701, 32
        %v8919 = vpop.permute.xlu0 %8918
        %8920 = vrot.lane.b32.xlu0 %v8702, 32
        %v8921 = vpop.permute.xlu0 %8920
        %8922 = vrot.lane.b32.xlu0 %v8703, 32
        %v8923 = vpop.permute.xlu0 %8922
        %8924 = vrot.lane.b32.xlu0 %v8704, 32
        %v8925 = vpop.permute.xlu0 %8924
        %8926 = vrot.lane.b32.xlu0 %v8705, 32
        %v8927 = vpop.permute.xlu0 %8926
        %8928 = vrot.lane.b32.xlu0 %v8706, 32
        %v8929 = vpop.permute.xlu0 %8928
        %8930 = vrot.lane.b32.xlu0 %v8707, 32
        %v8931 = vpop.permute.xlu0 %8930
        %8932 = vrot.lane.b32.xlu0 %v8708, 32
        %v8933 = vpop.permute.xlu0 %8932
        %8934 = vrot.lane.b32.xlu0 %v8709, 32
        %v8935 = vpop.permute.xlu0 %8934
        %8936 = vrot.lane.b32.xlu0 %v8710, 32
        %v8937 = vpop.permute.xlu0 %8936
        %8938 = vrot.lane.b32.xlu0 %v8711, 32
        %v8939 = vpop.permute.xlu0 %8938
        %8940 = vrot.lane.b32.xlu0 %v8712, 32
        %v8941 = vpop.permute.xlu0 %8940
        %8942 = vrot.lane.b32.xlu0 %v8713, 32
        %v8943 = vpop.permute.xlu0 %8942
        %8944 = vrot.lane.b32.xlu0 %v8714, 32
        %v8945 = vpop.permute.xlu0 %8944
        %8946 = vrot.lane.b32.xlu0 %v8715, 32
        %v8947 = vpop.permute.xlu0 %8946
        %8948 = vrot.lane.b32.xlu0 %v8716, 32
        %v8949 = vpop.permute.xlu0 %8948
        %8950 = vrot.lane.b32.xlu0 %v8717, 32
        %v8951 = vpop.permute.xlu0 %8950
        %8952 = vrot.lane.b32.xlu0 %v8718, 32
        %v8953 = vpop.permute.xlu0 %8952
        %8954 = vrot.lane.b32.xlu0 %v8719, 32
        %v8955 = vpop.permute.xlu0 %8954
        %8956 = vrot.lane.b32.xlu0 %v8720, 32
        %v8957 = vpop.permute.xlu0 %8956
        %8958 = vrot.lane.b32.xlu0 %v8721, 32
        %v8959 = vpop.permute.xlu0 %8958
        %8960 = vrot.lane.b32.xlu0 %v8722, 32
        %v8961 = vpop.permute.xlu0 %8960
        %8962 = vrot.lane.b32.xlu0 %v8723, 32
        %v8963 = vpop.permute.xlu0 %8962
        %9044 = vrot.lane.b32.xlu0 %v8724, 64
        %v9045 = vpop.permute.xlu0 %9044
        %9046 = vrot.lane.b32.xlu0 %v8725, 64
        %v9047 = vpop.permute.xlu0 %9046
        %9048 = vrot.lane.b32.xlu0 %v8726, 64
        %v9049 = vpop.permute.xlu0 %9048
        %9050 = vrot.lane.b32.xlu0 %v8727, 64
        %v9051 = vpop.permute.xlu0 %9050
        %9052 = vrot.lane.b32.xlu0 %v8728, 64
        %v9053 = vpop.permute.xlu0 %9052
        %9054 = vrot.lane.b32.xlu0 %v8729, 64
        %v9055 = vpop.permute.xlu0 %9054
        %9056 = vrot.lane.b32.xlu0 %v8730, 64
        %v9057 = vpop.permute.xlu0 %9056
        %9058 = vrot.lane.b32.xlu0 %v8731, 64
        %v9059 = vpop.permute.xlu0 %9058
        %9060 = vrot.lane.b32.xlu0 %v8732, 64
        %v9061 = vpop.permute.xlu0 %9060
        %9062 = vrot.lane.b32.xlu0 %v8733, 64
        %v9063 = vpop.permute.xlu0 %9062
        %9064 = vrot.lane.b32.xlu0 %v8734, 64
        %v9065 = vpop.permute.xlu0 %9064
        %9066 = vrot.lane.b32.xlu0 %v8735, 64
        %v9067 = vpop.permute.xlu0 %9066
        %9068 = vrot.lane.b32.xlu0 %v8736, 64
        %v9069 = vpop.permute.xlu0 %9068
        %9070 = vrot.lane.b32.xlu0 %v8737, 64
        %v9071 = vpop.permute.xlu0 %9070
        %9072 = vrot.lane.b32.xlu0 %v8738, 64
        %v9073 = vpop.permute.xlu0 %9072
        %9074 = vrot.lane.b32.xlu0 %v8739, 64
        %v9075 = vpop.permute.xlu0 %9074
        %9076 = vrot.lane.b32.xlu0 %v8740, 64
        %v9077 = vpop.permute.xlu0 %9076
        %9078 = vrot.lane.b32.xlu0 %v8741, 64
        %v9079 = vpop.permute.xlu0 %9078
        %9080 = vrot.lane.b32.xlu0 %v8742, 64
        %v9081 = vpop.permute.xlu0 %9080
        %9082 = vrot.lane.b32.xlu0 %v8743, 64
        %v9083 = vpop.permute.xlu0 %9082
        %9084 = vrot.lane.b32.xlu0 %v8744, 64
        %v9085 = vpop.permute.xlu0 %9084
        %9086 = vrot.lane.b32.xlu0 %v8745, 64
        %v9087 = vpop.permute.xlu0 %9086
        %9088 = vrot.lane.b32.xlu0 %v8746, 64
        %v9089 = vpop.permute.xlu0 %9088
        %9090 = vrot.lane.b32.xlu0 %v8747, 64
        %v9091 = vpop.permute.xlu0 %9090
        %9092 = vrot.lane.b32.xlu0 %v8748, 64
        %v9093 = vpop.permute.xlu0 %9092
        %9094 = vrot.lane.b32.xlu0 %v8749, 64
        %v9095 = vpop.permute.xlu0 %9094
        %9096 = vrot.lane.b32.xlu0 %v8750, 64
        %v9097 = vpop.permute.xlu0 %9096
        %9098 = vrot.lane.b32.xlu0 %v8751, 64
        %v9099 = vpop.permute.xlu0 %9098
        %9100 = vrot.lane.b32.xlu0 %v8752, 64
        %v9101 = vpop.permute.xlu0 %9100
        %9102 = vrot.lane.b32.xlu0 %v8753, 64
        %v9103 = vpop.permute.xlu0 %9102
        %9104 = vrot.lane.b32.xlu0 %v8754, 64
        %v9105 = vpop.permute.xlu0 %9104
        %9106 = vrot.lane.b32.xlu0 %v8755, 64
        %v9107 = vpop.permute.xlu0 %9106
        %9108 = vrot.lane.b32.xlu0 %v8756, 64
        %v9109 = vpop.permute.xlu0 %9108
        %9110 = vrot.lane.b32.xlu0 %v8757, 64
        %v9111 = vpop.permute.xlu0 %9110
        %9112 = vrot.lane.b32.xlu0 %v8758, 64
        %v9113 = vpop.permute.xlu0 %9112
        %9114 = vrot.lane.b32.xlu0 %v8759, 64
        %v9115 = vpop.permute.xlu0 %9114
        %9116 = vrot.lane.b32.xlu0 %v8760, 64
        %v9117 = vpop.permute.xlu0 %9116
        %9118 = vrot.lane.b32.xlu0 %v8761, 64
        %v9119 = vpop.permute.xlu0 %9118
        %9120 = vrot.lane.b32.xlu0 %v8762, 64
        %v9121 = vpop.permute.xlu0 %9120
        %9122 = vrot.lane.b32.xlu0 %v8763, 64
        %v9123 = vpop.permute.xlu0 %9122
        %9204 = vrot.lane.b32.xlu0 %v8764, 96
        %v9205 = vpop.permute.xlu0 %9204
        %9206 = vrot.lane.b32.xlu0 %v8765, 96
        %v9207 = vpop.permute.xlu0 %9206
        %9208 = vrot.lane.b32.xlu0 %v8766, 96
        %v9209 = vpop.permute.xlu0 %9208
        %9210 = vrot.lane.b32.xlu0 %v8767, 96
        %v9211 = vpop.permute.xlu0 %9210
        %9212 = vrot.lane.b32.xlu0 %v8768, 96
        %v9213 = vpop.permute.xlu0 %9212
        %9214 = vrot.lane.b32.xlu0 %v8769, 96
        %v9215 = vpop.permute.xlu0 %9214
        %9216 = vrot.lane.b32.xlu0 %v8770, 96
        %v9217 = vpop.permute.xlu0 %9216
        %9218 = vrot.lane.b32.xlu0 %v8771, 96
        %v9219 = vpop.permute.xlu0 %9218
        %9220 = vrot.lane.b32.xlu0 %v8772, 96
        %v9221 = vpop.permute.xlu0 %9220
        %9222 = vrot.lane.b32.xlu0 %v8773, 96
        %v9223 = vpop.permute.xlu0 %9222
        %9224 = vrot.lane.b32.xlu0 %v8774, 96
        %v9225 = vpop.permute.xlu0 %9224
        %9226 = vrot.lane.b32.xlu0 %v8775, 96
        %v9227 = vpop.permute.xlu0 %9226
        %9228 = vrot.lane.b32.xlu0 %v8776, 96
        %v9229 = vpop.permute.xlu0 %9228
        %9230 = vrot.lane.b32.xlu0 %v8777, 96
        %v9231 = vpop.permute.xlu0 %9230
        %9232 = vrot.lane.b32.xlu0 %v8778, 96
        %v9233 = vpop.permute.xlu0 %9232
        %9234 = vrot.lane.b32.xlu0 %v8779, 96
        %v9235 = vpop.permute.xlu0 %9234
        %9236 = vrot.lane.b32.xlu0 %v8780, 96
        %v9237 = vpop.permute.xlu0 %9236
        %9238 = vrot.lane.b32.xlu0 %v8781, 96
        %v9239 = vpop.permute.xlu0 %9238
        %9240 = vrot.lane.b32.xlu0 %v8782, 96
        %v9241 = vpop.permute.xlu0 %9240
        %9242 = vrot.lane.b32.xlu0 %v8783, 96
        %v9243 = vpop.permute.xlu0 %9242
        %9244 = vrot.lane.b32.xlu0 %v8784, 96
        %v9245 = vpop.permute.xlu0 %9244
        %9246 = vrot.lane.b32.xlu0 %v8785, 96
        %v9247 = vpop.permute.xlu0 %9246
        %9248 = vrot.lane.b32.xlu0 %v8786, 96
        %v9249 = vpop.permute.xlu0 %9248
        %9250 = vrot.lane.b32.xlu0 %v8787, 96
        %v9251 = vpop.permute.xlu0 %9250
        %9252 = vrot.lane.b32.xlu0 %v8788, 96
        %v9253 = vpop.permute.xlu0 %9252
        %9254 = vrot.lane.b32.xlu0 %v8789, 96
        %v9255 = vpop.permute.xlu0 %9254
        %9256 = vrot.lane.b32.xlu0 %v8790, 96
        %v9257 = vpop.permute.xlu0 %9256
        %9258 = vrot.lane.b32.xlu0 %v8791, 96
        %v9259 = vpop.permute.xlu0 %9258
        %9260 = vrot.lane.b32.xlu0 %v8792, 96
        %v9261 = vpop.permute.xlu0 %9260
        %9262 = vrot.lane.b32.xlu0 %v8793, 96
        %v9263 = vpop.permute.xlu0 %9262
        %9264 = vrot.lane.b32.xlu0 %v8794, 96
        %v9265 = vpop.permute.xlu0 %9264
        %9266 = vrot.lane.b32.xlu0 %v8795, 96
        %v9267 = vpop.permute.xlu0 %9266
        %9268 = vrot.lane.b32.xlu0 %v8796, 96
        %v9269 = vpop.permute.xlu0 %9268
        %9270 = vrot.lane.b32.xlu0 %v8797, 96
        %v9271 = vpop.permute.xlu0 %9270
        %9272 = vrot.lane.b32.xlu0 %v8798, 96
        %v9273 = vpop.permute.xlu0 %9272
        %9274 = vrot.lane.b32.xlu0 %v8799, 96
        %v9275 = vpop.permute.xlu0 %9274
        %9276 = vrot.lane.b32.xlu0 %v8800, 96
        %v9277 = vpop.permute.xlu0 %9276
        %9278 = vrot.lane.b32.xlu0 %v8801, 96
        %v9279 = vpop.permute.xlu0 %9278
        %9280 = vrot.lane.b32.xlu0 %v8802, 96
        %v9281 = vpop.permute.xlu0 %9280
        %9282 = vrot.lane.b32.xlu0 %v8803, 96
        %v9283 = vpop.permute.xlu0 %9282
        %v9324 = vsel %vm649, %v8644, %v8885
        %v9325 = vsel %vm649, %v8645, %v8887
        %v9326 = vsel %vm649, %v8646, %v8889
        %v9327 = vsel %vm649, %v8647, %v8891
        %v9328 = vsel %vm649, %v8648, %v8893
        %v9329 = vsel %vm649, %v8649, %v8895
        %v9330 = vsel %vm649, %v8650, %v8897
        %v9331 = vsel %vm649, %v8651, %v8899
        %v9332 = vsel %vm649, %v8652, %v8901
        %v9333 = vsel %vm649, %v8653, %v8903
        %v9334 = vsel %vm649, %v8654, %v8905
        %v9335 = vsel %vm649, %v8655, %v8907
        %v9336 = vsel %vm649, %v8656, %v8909
        %v9337 = vsel %vm649, %v8657, %v8911
        %v9338 = vsel %vm649, %v8658, %v8913
        %v9339 = vsel %vm649, %v8659, %v8915
        %v9340 = vsel %vm649, %v8660, %v8917
        %v9341 = vsel %vm649, %v8661, %v8919
        %v9342 = vsel %vm649, %v8662, %v8921
        %v9343 = vsel %vm649, %v8663, %v8923
        %v9344 = vsel %vm649, %v8664, %v8925
        %v9345 = vsel %vm649, %v8665, %v8927
        %v9346 = vsel %vm649, %v8666, %v8929
        %v9347 = vsel %vm649, %v8667, %v8931
        %v9348 = vsel %vm649, %v8668, %v8933
        %v9349 = vsel %vm649, %v8669, %v8935
        %v9350 = vsel %vm649, %v8670, %v8937
        %v9351 = vsel %vm649, %v8671, %v8939
        %v9352 = vsel %vm649, %v8672, %v8941
        %v9353 = vsel %vm649, %v8673, %v8943
        %v9354 = vsel %vm649, %v8674, %v8945
        %v9355 = vsel %vm649, %v8675, %v8947
        %v9356 = vsel %vm649, %v8676, %v8949
        %v9357 = vsel %vm649, %v8677, %v8951
        %v9358 = vsel %vm649, %v8678, %v8953
        %v9359 = vsel %vm649, %v8679, %v8955
        %v9360 = vsel %vm649, %v8680, %v8957
        %v9361 = vsel %vm649, %v8681, %v8959
        %v9362 = vsel %vm649, %v8682, %v8961
        %v9363 = vsel %vm649, %v8683, %v8963
        %v9364 = vsel %vm600, %v9324, %v9045
        %v9365 = vsel %vm600, %v9325, %v9047
        %v9366 = vsel %vm600, %v9326, %v9049
        %v9367 = vsel %vm600, %v9327, %v9051
        %v9368 = vsel %vm600, %v9328, %v9053
        %v9369 = vsel %vm600, %v9329, %v9055
        %v9370 = vsel %vm600, %v9330, %v9057
        %v9371 = vsel %vm600, %v9331, %v9059
        %v9372 = vsel %vm600, %v9332, %v9061
        %v9373 = vsel %vm600, %v9333, %v9063
        %v9374 = vsel %vm600, %v9334, %v9065
        %v9375 = vsel %vm600, %v9335, %v9067
        %v9376 = vsel %vm600, %v9336, %v9069
        %v9377 = vsel %vm600, %v9337, %v9071
        %v9378 = vsel %vm600, %v9338, %v9073
        %v9379 = vsel %vm600, %v9339, %v9075
        %v9380 = vsel %vm600, %v9340, %v9077
        %v9381 = vsel %vm600, %v9341, %v9079
        %v9382 = vsel %vm600, %v9342, %v9081
        %v9383 = vsel %vm600, %v9343, %v9083
        %v9384 = vsel %vm600, %v9344, %v9085
        %v9385 = vsel %vm600, %v9345, %v9087
        %v9386 = vsel %vm600, %v9346, %v9089
        %v9387 = vsel %vm600, %v9347, %v9091
        %v9388 = vsel %vm600, %v9348, %v9093
        %v9389 = vsel %vm600, %v9349, %v9095
        %v9390 = vsel %vm600, %v9350, %v9097
        %v9391 = vsel %vm600, %v9351, %v9099
        %v9392 = vsel %vm600, %v9352, %v9101
        %v9393 = vsel %vm600, %v9353, %v9103
        %v9394 = vsel %vm600, %v9354, %v9105
        %v9395 = vsel %vm600, %v9355, %v9107
        %v9396 = vsel %vm600, %v9356, %v9109
        %v9397 = vsel %vm600, %v9357, %v9111
        %v9398 = vsel %vm600, %v9358, %v9113
        %v9399 = vsel %vm600, %v9359, %v9115
        %v9400 = vsel %vm600, %v9360, %v9117
        %v9401 = vsel %vm600, %v9361, %v9119
        %v9402 = vsel %vm600, %v9362, %v9121
        %v9403 = vsel %vm600, %v9363, %v9123
        %vm9404 = vcmask 785408
        %v9405 = vsel %vm9404, %v9364, %v9205
        %v9406 = vsel %vm9404, %v9365, %v9207
        %v9407 = vsel %vm9404, %v9366, %v9209
        %v9408 = vsel %vm9404, %v9367, %v9211
        %v9409 = vsel %vm9404, %v9368, %v9213
        %v9410 = vsel %vm9404, %v9369, %v9215
        %v9411 = vsel %vm9404, %v9370, %v9217
        %v9412 = vsel %vm9404, %v9371, %v9219
        %v9413 = vsel %vm9404, %v9372, %v9221
        %v9414 = vsel %vm9404, %v9373, %v9223
        %v9415 = vsel %vm9404, %v9374, %v9225
        %v9416 = vsel %vm9404, %v9375, %v9227
        %v9417 = vsel %vm9404, %v9376, %v9229
        %v9418 = vsel %vm9404, %v9377, %v9231
        %v9419 = vsel %vm9404, %v9378, %v9233
        %v9420 = vsel %vm9404, %v9379, %v9235
        %v9421 = vsel %vm9404, %v9380, %v9237
        %v9422 = vsel %vm9404, %v9381, %v9239
        %v9423 = vsel %vm9404, %v9382, %v9241
        %v9424 = vsel %vm9404, %v9383, %v9243
        %v9425 = vsel %vm9404, %v9384, %v9245
        %v9426 = vsel %vm9404, %v9385, %v9247
        %v9427 = vsel %vm9404, %v9386, %v9249
        %v9428 = vsel %vm9404, %v9387, %v9251
        %v9429 = vsel %vm9404, %v9388, %v9253
        %v9430 = vsel %vm9404, %v9389, %v9255
        %v9431 = vsel %vm9404, %v9390, %v9257
        %v9432 = vsel %vm9404, %v9391, %v9259
        %v9433 = vsel %vm9404, %v9392, %v9261
        %v9434 = vsel %vm9404, %v9393, %v9263
        %v9435 = vsel %vm9404, %v9394, %v9265
        %v9436 = vsel %vm9404, %v9395, %v9267
        %v9437 = vsel %vm9404, %v9396, %v9269
        %v9438 = vsel %vm9404, %v9397, %v9271
        %v9439 = vsel %vm9404, %v9398, %v9273
        %v9440 = vsel %vm9404, %v9399, %v9275
        %v9441 = vsel %vm9404, %v9400, %v9277
        %v9442 = vsel %vm9404, %v9401, %v9279
        %v9443 = vsel %vm9404, %v9402, %v9281
        %v9444 = vsel %vm9404, %v9403, %v9283
        %v9445 = vld [vmem:[#allocation20] sm:$0xff]
        %v9446 = vld [vmem:[#allocation20 + $0x8] sm:$0xff]
        %v9447 = vld [vmem:[#allocation20 + $0x10] sm:$0xff]
        %v9448 = vld [vmem:[#allocation20 + $0x18] sm:$0xff]
        %v9449 = vld [vmem:[#allocation20 + $0x20] sm:$0xff]
        %v9450 = vld [vmem:[#allocation20 + $0x28] sm:$0xff]
        %v9451 = vld [vmem:[#allocation20 + $0x30] sm:$0xff]
        %v9452 = vld [vmem:[#allocation20 + $0x38] sm:$0xff]
        %v9453 = vld [vmem:[#allocation20 + $0x40] sm:$0xff]
        %v9454 = vld [vmem:[#allocation20 + $0x48] sm:$0xff]
        %v9455 = vld [vmem:[#allocation20 + $0x50] sm:$0xff]
        %v9456 = vld [vmem:[#allocation20 + $0x58] sm:$0xff]
        %v9457 = vld [vmem:[#allocation20 + $0x60] sm:$0xff]
        %v9458 = vld [vmem:[#allocation20 + $0x68] sm:$0xff]
        %v9459 = vld [vmem:[#allocation20 + $0x70] sm:$0xff]
        %v9460 = vld [vmem:[#allocation20 + $0x78] sm:$0xff]
        %v9461 = vld [vmem:[#allocation20 + $0x80] sm:$0xff]
        %v9462 = vld [vmem:[#allocation20 + $0x88] sm:$0xff]
        %v9463 = vld [vmem:[#allocation20 + $0x90] sm:$0xff]
        %v9464 = vld [vmem:[#allocation20 + $0x98] sm:$0xff]
        %s9465 = scalar_lea.vmem [#allocation20], 160
        %v9466 = vld [vmem:[%s9465] sm:$0xff]
        %v9467 = vld [vmem:[%s9465 + $0x8] sm:$0xff]
        %v9468 = vld [vmem:[%s9465 + $0x10] sm:$0xff]
        %v9469 = vld [vmem:[%s9465 + $0x18] sm:$0xff]
        %v9470 = vld [vmem:[%s9465 + $0x20] sm:$0xff]
        %v9471 = vld [vmem:[%s9465 + $0x28] sm:$0xff]
        %v9472 = vld [vmem:[%s9465 + $0x30] sm:$0xff]
        %v9473 = vld [vmem:[%s9465 + $0x38] sm:$0xff]
        %v9474 = vld [vmem:[%s9465 + $0x40] sm:$0xff]
        %v9475 = vld [vmem:[%s9465 + $0x48] sm:$0xff]
        %v9476 = vld [vmem:[%s9465 + $0x50] sm:$0xff]
        %v9477 = vld [vmem:[%s9465 + $0x58] sm:$0xff]
        %v9478 = vld [vmem:[%s9465 + $0x60] sm:$0xff]
        %v9479 = vld [vmem:[%s9465 + $0x68] sm:$0xff]
        %v9480 = vld [vmem:[%s9465 + $0x70] sm:$0xff]
        %v9481 = vld [vmem:[%s9465 + $0x78] sm:$0xff]
        %v9482 = vld [vmem:[%s9465 + $0x80] sm:$0xff]
        %v9483 = vld [vmem:[%s9465 + $0x88] sm:$0xff]
        %v9484 = vld [vmem:[%s9465 + $0x90] sm:$0xff]
        %v9485 = vld [vmem:[%s9465 + $0x98] sm:$0xff]
        %v9487 = vsel %vm649, %v8806, 0
        %v9490 = vsel %vm649, %v8807, 0
        %v9493 = vsel %vm649, %v8808, 0
        %v9496 = vsel %vm649, %v8809, 0
        %v9499 = vsel %vm649, %v8810, 0
        %v9502 = vsel %vm649, %v8811, 0
        %v9505 = vsel %vm649, %v8812, 0
        %v9508 = vsel %vm649, %v8813, 0
        %v9511 = vsel %vm649, %v8814, 0
        %v9514 = vsel %vm649, %v8815, 0
        %v9517 = vsel %vm649, %v8816, 0
        %v9520 = vsel %vm649, %v8817, 0
        %v9523 = vsel %vm649, %v8818, 0
        %v9526 = vsel %vm649, %v8819, 0
        %v9529 = vsel %vm649, %v8820, 0
        %v9532 = vsel %vm649, %v8821, 0
        %v9535 = vsel %vm649, %v8822, 0
        %v9538 = vsel %vm649, %v8823, 0
        %v9541 = vsel %vm649, %v8824, 0
        %v9544 = vsel %vm649, %v8825, 0
        %v9547 = vsel %vm649, %v8826, 0
        %v9550 = vsel %vm649, %v8827, 0
        %v9553 = vsel %vm649, %v8828, 0
        %v9556 = vsel %vm649, %v8829, 0
        %v9559 = vsel %vm649, %v8830, 0
        %v9562 = vsel %vm649, %v8831, 0
        %v9565 = vsel %vm649, %v8832, 0
        %v9568 = vsel %vm649, %v8833, 0
        %v9571 = vsel %vm649, %v8834, 0
        %v9574 = vsel %vm649, %v8835, 0
        %v9577 = vsel %vm649, %v8836, 0
        %v9580 = vsel %vm649, %v8837, 0
        %9582 = vmatprep.subr.mxu0 0.0
        %9583 = vmatpush1.msra.mxu0 %v9466
        %9584 = vmatprep.subr.mxu0 0.0
        %9585 = vmatpush1.msra.mxu0 %v9467
        %9586 = vmatprep.subr.mxu0 0.0
        %9587 = vmatpush1.msra.mxu0 %v9468
        %9588 = vmatprep.subr.mxu0 0.0
        %9589 = vmatpush1.msra.mxu0 %v9469
        %9590 = vmatprep.subr.mxu0 0.0
        %9591 = vmatpush1.msra.mxu0 %v9470
        %9592 = vmatprep.subr.mxu0 0.0
        %9593 = vmatpush1.msra.mxu0 %v9471
        %9594 = vmatprep.subr.mxu0 0.0
        %9595 = vmatpush1.msra.mxu0 %v9472
        %9596 = vmatprep.subr.mxu0 0.0
        %9597 = vmatpush1.msra.mxu0 %v9473
        %9598 = vmatprep.subr.mxu0 0.0
        %9599 = vmatpush1.msra.mxu0 %v9474
        %9600 = vmatprep.subr.mxu0 0.0
        %9601 = vmatpush1.msra.mxu0 %v9475
        %9602 = vmatprep.subr.mxu0 0.0
        %9603 = vmatpush1.msra.mxu0 %v9476
        %9604 = vmatprep.subr.mxu0 0.0
        %9605 = vmatpush1.msra.mxu0 %v9477
        %9606 = vmatprep.subr.mxu0 0.0
        %9607 = vmatpush1.msra.mxu0 %v9478
        %9608 = vmatprep.subr.mxu0 0.0
        %9609 = vmatpush1.msra.mxu0 %v9479
        %9610 = vmatprep.subr.mxu0 0.0
        %9611 = vmatpush1.msra.mxu0 %v9480
        %9612 = vmatprep.subr.mxu0 0.0
        %9613 = vmatpush1.msra.mxu0 %v9481
        %9614 = vmatprep.subr.mxu0 0.0
        %9615 = vmatpush1.msra.mxu0 %v9482
        %9616 = vmatprep.subr.mxu0 0.0
        %9617 = vmatpush1.msra.mxu0 %v9483
        %9618 = vmatprep.subr.mxu0 0.0
        %9619 = vmatpush1.msra.mxu0 %v9484
        %9620 = vmatprep.subr.mxu0 0.0
        %9621 = vmatpush1.msra.mxu0 %v9485
        %9622 = vmatprep.subr.mxu0 0.0
        %9623 = vmatpush1.msra.mxu0 0.0
        %9624 = vmatprep.subr.mxu0 0.0
        %9625 = vmatpush1.msra.mxu0 0.0
        %9626 = vmatprep.subr.mxu0 0.0
        %9627 = vmatpush1.msra.mxu0 0.0
        %9628 = vmatprep.subr.mxu0 0.0
        %9629 = vmatpush1.msra.mxu0 0.0
        %9630 = vmatprep.subr.mxu0 0.0
        %9631 = vmatpush1.msra.mxu0 0.0
        %9632 = vmatprep.subr.mxu0 0.0
        %9633 = vmatpush1.msra.mxu0 0.0
        %9634 = vmatprep.subr.mxu0 0.0
        %9635 = vmatpush1.msra.mxu0 0.0
        %9636 = vmatprep.subr.mxu0 0.0
        %9637 = vmatpush1.msra.mxu0 0.0
        %9638 = vmatprep.subr.mxu0 0.0
        %9639 = vmatpush1.msra.mxu0 0.0
        %9640 = vmatprep.subr.mxu0 0.0
        %9641 = vmatpush1.msra.mxu0 0.0
        %9642 = vmatprep.subr.mxu0 0.0
        %9643 = vmatpush1.msra.mxu0 0.0
        %9644 = vmatprep.subr.mxu0 0.0
        %9645 = vmatpush1.msra.mxu0 0.0
        %9646 = vmatprep.mubr.f32.mxu0 %v9487
        %9647 = vmatmul.mubr.f32.gmra.mrb[0].mxu0 %v9407
        %v9648 = vpop.f32.mrb[0].mxu0
        %v9649 = vadd.f32 0.0, %v9648
        %v9650 = vpop.f32.mrb[0].mxu0
        %9651 = vmatprep.mubr.f32.mxu0 %v9490
        %9652 = vmatmul.mubr.f32.gmra.mrb[0].mxu0 %v9408
        %v9653 = vpop.f32.mrb[0].mxu0
        %v9654 = vadd.f32 0.0, %v9653
        %v9655 = vpop.f32.mrb[0].mxu0
        %9656 = vmatprep.mubr.f32.mxu0 %v9493
        %9657 = vmatmul.mubr.f32.gmra.mrb[0].mxu0 %v9409
        %v9658 = vpop.f32.mrb[0].mxu0
        %v9659 = vadd.f32 0.0, %v9658
        %v9660 = vpop.f32.mrb[0].mxu0
        %9661 = vmatprep.mubr.f32.mxu0 %v9496
        %9662 = vmatmul.mubr.f32.gmra.mrb[0].mxu0 %v9410
        %v9663 = vpop.f32.mrb[0].mxu0
        %v9664 = vadd.f32 0.0, %v9663
        %v9665 = vpop.f32.mrb[0].mxu0
        %9666 = vmatprep.mubr.f32.mxu0 %v9499
        %9667 = vmatmul.mubr.f32.gmra.mrb[0].mxu0 %v9411
        %v9668 = vpop.f32.mrb[0].mxu0
        %v9669 = vadd.f32 0.0, %v9668
        %v9670 = vpop.f32.mrb[0].mxu0
        %9671 = vmatprep.mubr.f32.mxu0 %v9502
        %9672 = vmatmul.mubr.f32.gmra.mrb[0].mxu0 %v9412
        %v9673 = vpop.f32.mrb[0].mxu0
        %v9674 = vadd.f32 0.0, %v9673
        %v9675 = vpop.f32.mrb[0].mxu0
        %9676 = vmatprep.mubr.f32.mxu0 %v9505
        %9677 = vmatmul.mubr.f32.gmra.mrb[0].mxu0 %v9413
        %v9678 = vpop.f32.mrb[0].mxu0
        %v9679 = vadd.f32 0.0, %v9678
        %v9680 = vpop.f32.mrb[0].mxu0
        %9681 = vmatprep.mubr.f32.mxu0 %v9508
        %9682 = vmatmul.mubr.f32.gmra.mrb[0].mxu0 %v9414
        %v9683 = vpop.f32.mrb[0].mxu0
        %v9684 = vadd.f32 0.0, %v9683
        %v9685 = vpop.f32.mrb[0].mxu0
        %9686 = vmatprep.mubr.f32.mxu0 %v9511
        %9687 = vmatmul.mubr.f32.gmra.mrb[0].mxu0 %v9415
        %v9688 = vpop.f32.mrb[0].mxu0
        %v9689 = vadd.f32 0.0, %v9688
        %v9690 = vpop.f32.mrb[0].mxu0
        %9691 = vmatprep.mubr.f32.mxu0 %v9514
        %9692 = vmatmul.mubr.f32.gmra.mrb[0].mxu0 %v9416
        %v9693 = vpop.f32.mrb[0].mxu0
        %v9694 = vadd.f32 0.0, %v9693
        %v9695 = vpop.f32.mrb[0].mxu0
        %9696 = vmatprep.mubr.f32.mxu0 %v9517
        %9697 = vmatmul.mubr.f32.gmra.mrb[0].mxu0 %v9417
        %v9698 = vpop.f32.mrb[0].mxu0
        %v9699 = vadd.f32 0.0, %v9698
        %v9700 = vpop.f32.mrb[0].mxu0
        %9701 = vmatprep.mubr.f32.mxu0 %v9520
        %9702 = vmatmul.mubr.f32.gmra.mrb[0].mxu0 %v9418
        %v9703 = vpop.f32.mrb[0].mxu0
        %v9704 = vadd.f32 0.0, %v9703
        %v9705 = vpop.f32.mrb[0].mxu0
        %9706 = vmatprep.mubr.f32.mxu0 %v9523
        %9707 = vmatmul.mubr.f32.gmra.mrb[0].mxu0 %v9419
        %v9708 = vpop.f32.mrb[0].mxu0
        %v9709 = vadd.f32 0.0, %v9708
        %v9710 = vpop.f32.mrb[0].mxu0
        %9711 = vmatprep.mubr.f32.mxu0 %v9526
        %9712 = vmatmul.mubr.f32.gmra.mrb[0].mxu0 %v9420
        %v9713 = vpop.f32.mrb[0].mxu0
        %v9714 = vadd.f32 0.0, %v9713
        %v9715 = vpop.f32.mrb[0].mxu0
        %9716 = vmatprep.mubr.f32.mxu0 %v9529
        %9717 = vmatmul.mubr.f32.gmra.mrb[0].mxu0 %v9421
        %v9718 = vpop.f32.mrb[0].mxu0
        %v9719 = vadd.f32 0.0, %v9718
        %v9720 = vpop.f32.mrb[0].mxu0
        %9721 = vmatprep.mubr.f32.mxu0 %v9532
        %9722 = vmatmul.mubr.f32.gmra.mrb[0].mxu0 %v9422
        %v9723 = vpop.f32.mrb[0].mxu0
        %v9724 = vadd.f32 0.0, %v9723
        %v9725 = vpop.f32.mrb[0].mxu0
        %9726 = vmatprep.mubr.f32.mxu0 %v9535
        %9727 = vmatmul.mubr.f32.gmra.mrb[0].mxu0 %v9423
        %v9728 = vpop.f32.mrb[0].mxu0
        %v9729 = vadd.f32 0.0, %v9728
        %v9730 = vpop.f32.mrb[0].mxu0
        %9731 = vmatprep.mubr.f32.mxu0 %v9538
        %9732 = vmatmul.mubr.f32.gmra.mrb[0].mxu0 %v9424
        %v9733 = vpop.f32.mrb[0].mxu0
        %v9734 = vadd.f32 0.0, %v9733
        %v9735 = vpop.f32.mrb[0].mxu0
        %9736 = vmatprep.mubr.f32.mxu0 %v9541
        %9737 = vmatmul.mubr.f32.gmra.mrb[0].mxu0 %v9425
        %v9738 = vpop.f32.mrb[0].mxu0
        %v9739 = vadd.f32 0.0, %v9738
        %v9740 = vpop.f32.mrb[0].mxu0
        %9741 = vmatprep.mubr.f32.mxu0 %v9544
        %9742 = vmatmul.mubr.f32.gmra.mrb[0].mxu0 %v9426
        %v9743 = vpop.f32.mrb[0].mxu0
        %v9744 = vadd.f32 0.0, %v9743
        %v9745 = vpop.f32.mrb[0].mxu0
        %9746 = vmatprep.mubr.f32.mxu0 %v9547
        %9747 = vmatmul.mubr.f32.gmra.mrb[0].mxu0 %v9427
        %v9748 = vpop.f32.mrb[0].mxu0
        %v9749 = vadd.f32 0.0, %v9748
        %v9750 = vpop.f32.mrb[0].mxu0
        %9751 = vmatprep.mubr.f32.mxu0 %v9550
        %9752 = vmatmul.mubr.f32.gmra.mrb[0].mxu0 %v9428
        %v9753 = vpop.f32.mrb[0].mxu0
        %v9754 = vadd.f32 0.0, %v9753
        %v9755 = vpop.f32.mrb[0].mxu0
        %9756 = vmatprep.mubr.f32.mxu0 %v9553
        %9757 = vmatmul.mubr.f32.gmra.mrb[0].mxu0 %v9429
        %v9758 = vpop.f32.mrb[0].mxu0
        %v9759 = vadd.f32 0.0, %v9758
        %v9760 = vpop.f32.mrb[0].mxu0
        %9761 = vmatprep.mubr.f32.mxu0 %v9556
        %9762 = vmatmul.mubr.f32.gmra.mrb[0].mxu0 %v9430
        %v9763 = vpop.f32.mrb[0].mxu0
        %v9764 = vadd.f32 0.0, %v9763
        %v9765 = vpop.f32.mrb[0].mxu0
        %9766 = vmatprep.mubr.f32.mxu0 %v9559
        %9767 = vmatmul.mubr.f32.gmra.mrb[0].mxu0 %v9431
        %v9768 = vpop.f32.mrb[0].mxu0
        %v9769 = vadd.f32 0.0, %v9768
        %v9770 = vpop.f32.mrb[0].mxu0
        %9771 = vmatprep.mubr.f32.mxu0 %v9562
        %9772 = vmatmul.mubr.f32.gmra.mrb[0].mxu0 %v9432
        %v9773 = vpop.f32.mrb[0].mxu0
        %v9774 = vadd.f32 0.0, %v9773
        %v9775 = vpop.f32.mrb[0].mxu0
        %9776 = vmatprep.mubr.f32.mxu0 %v9565
        %9777 = vmatmul.mubr.f32.gmra.mrb[0].mxu0 %v9433
        %v9778 = vpop.f32.mrb[0].mxu0
        %v9779 = vadd.f32 0.0, %v9778
        %v9780 = vpop.f32.mrb[0].mxu0
        %9781 = vmatprep.mubr.f32.mxu0 %v9568
        %9782 = vmatmul.mubr.f32.gmra.mrb[0].mxu0 %v9434
        %v9783 = vpop.f32.mrb[0].mxu0
        %v9784 = vadd.f32 0.0, %v9783
        %v9785 = vpop.f32.mrb[0].mxu0
        %9786 = vmatprep.mubr.f32.mxu0 %v9571
        %9787 = vmatmul.mubr.f32.gmra.mrb[0].mxu0 %v9435
        %v9788 = vpop.f32.mrb[0].mxu0
        %v9789 = vadd.f32 0.0, %v9788
        %v9790 = vpop.f32.mrb[0].mxu0
        %9791 = vmatprep.mubr.f32.mxu0 %v9574
        %9792 = vmatmul.mubr.f32.gmra.mrb[0].mxu0 %v9436
        %v9793 = vpop.f32.mrb[0].mxu0
        %v9794 = vadd.f32 0.0, %v9793
        %v9795 = vpop.f32.mrb[0].mxu0
        %9796 = vmatprep.mubr.f32.mxu0 %v9577
        %9797 = vmatmul.mubr.f32.gmra.mrb[0].mxu0 %v9437
        %v9798 = vpop.f32.mrb[0].mxu0
        %v9799 = vadd.f32 0.0, %v9798
        %v9800 = vpop.f32.mrb[0].mxu0
        %9801 = vmatprep.mubr.f32.mxu0 %v9580
        %9802 = vmatmul.mubr.f32.gmra.mrb[0].mxu0 %v9438
        %v9803 = vpop.f32.mrb[0].mxu0
        %v9804 = vadd.f32 0.0, %v9803
        %v9805 = vpop.f32.mrb[0].mxu0
        %9806 = vdwg.mxu0
        %v9808 = vsel %vm649, %v8804, 0
        %v9811 = vsel %vm649, %v8805, 0
        %9813 = vmatprep.subr.mxu0 0.0
        %9814 = vmatpush1.msra.mxu0 %v9445
        %9815 = vmatprep.subr.mxu0 0.0
        %9816 = vmatpush1.msra.mxu0 %v9446
        %9817 = vmatprep.subr.mxu0 0.0
        %9818 = vmatpush1.msra.mxu0 %v9447
        %9819 = vmatprep.subr.mxu0 0.0
        %9820 = vmatpush1.msra.mxu0 %v9448
        %9821 = vmatprep.subr.mxu0 0.0
        %9822 = vmatpush1.msra.mxu0 %v9449
        %9823 = vmatprep.subr.mxu0 0.0
        %9824 = vmatpush1.msra.mxu0 %v9450
        %9825 = vmatprep.subr.mxu0 0.0
        %9826 = vmatpush1.msra.mxu0 %v9451
        %9827 = vmatprep.subr.mxu0 0.0
        %9828 = vmatpush1.msra.mxu0 %v9452
        %9829 = vmatprep.subr.mxu0 0.0
        %9830 = vmatpush1.msra.mxu0 %v9453
        %9831 = vmatprep.subr.mxu0 0.0
        %9832 = vmatpush1.msra.mxu0 %v9454
        %9833 = vmatprep.subr.mxu0 0.0
        %9834 = vmatpush1.msra.mxu0 %v9455
        %9835 = vmatprep.subr.mxu0 0.0
        %9836 = vmatpush1.msra.mxu0 %v9456
        %9837 = vmatprep.subr.mxu0 0.0
        %9838 = vmatpush1.msra.mxu0 %v9457
        %9839 = vmatprep.subr.mxu0 0.0
        %9840 = vmatpush1.msra.mxu0 %v9458
        %9841 = vmatprep.subr.mxu0 0.0
        %9842 = vmatpush1.msra.mxu0 %v9459
        %9843 = vmatprep.subr.mxu0 0.0
        %9844 = vmatpush1.msra.mxu0 %v9460
        %9845 = vmatprep.subr.mxu0 0.0
        %9846 = vmatpush1.msra.mxu0 %v9461
        %9847 = vmatprep.subr.mxu0 0.0
        %9848 = vmatpush1.msra.mxu0 %v9462
        %9849 = vmatprep.subr.mxu0 0.0
        %9850 = vmatpush1.msra.mxu0 %v9463
        %9851 = vmatprep.subr.mxu0 0.0
        %9852 = vmatpush1.msra.mxu0 %v9464
        %9853 = vmatprep.subr.mxu0 0.0
        %9854 = vmatpush1.msra.mxu0 0.0
        %9855 = vmatprep.subr.mxu0 0.0
        %9856 = vmatpush1.msra.mxu0 0.0
        %9857 = vmatprep.subr.mxu0 0.0
        %9858 = vmatpush1.msra.mxu0 0.0
        %9859 = vmatprep.subr.mxu0 0.0
        %9860 = vmatpush1.msra.mxu0 0.0
        %9861 = vmatprep.subr.mxu0 0.0
        %9862 = vmatpush1.msra.mxu0 0.0
        %9863 = vmatprep.subr.mxu0 0.0
        %9864 = vmatpush1.msra.mxu0 0.0
        %9865 = vmatprep.subr.mxu0 0.0
        %9866 = vmatpush1.msra.mxu0 0.0
        %9867 = vmatprep.subr.mxu0 0.0
        %9868 = vmatpush1.msra.mxu0 0.0
        %9869 = vmatprep.subr.mxu0 0.0
        %9870 = vmatpush1.msra.mxu0 0.0
        %9871 = vmatprep.subr.mxu0 0.0
        %9872 = vmatpush1.msra.mxu0 0.0
        %9873 = vmatprep.subr.mxu0 0.0
        %9874 = vmatpush1.msra.mxu0 0.0
        %9875 = vmatprep.subr.mxu0 0.0
        %9876 = vmatpush1.msra.mxu0 0.0
        %9877 = vmatprep.mubr.f32.mxu0 %v9808
        %9878 = vmatmul.mubr.f32.gmra.mrb[0].mxu0 %v9405
        %v9879 = vpop.f32.mrb[0].mxu0
        %v9880 = vadd.f32 %v9649, %v9879
        %v9881 = vpop.f32.mrb[0].mxu0
        %9882 = vmatprep.mubr.f32.mxu0 %v9811
        %9883 = vmatmul.mubr.f32.gmra.mrb[0].mxu0 %v9406
        %v9884 = vpop.f32.mrb[0].mxu0
        %v9885 = vadd.f32 %v9654, %v9884
        %v9886 = vpop.f32.mrb[0].mxu0
        %9887 = vmatprep.mubr.f32.mxu0 %v9487
        %9888 = vmatmul.mubr.f32.gmra.mrb[0].mxu0 %v9407
        %v9889 = vpop.f32.mrb[0].mxu0
        %v9890 = vadd.f32 %v9659, %v9889
        %v9891 = vpop.f32.mrb[0].mxu0
        %9892 = vmatprep.mubr.f32.mxu0 %v9490
        %9893 = vmatmul.mubr.f32.gmra.mrb[0].mxu0 %v9408
        %v9894 = vpop.f32.mrb[0].mxu0
        %v9895 = vadd.f32 %v9664, %v9894
        %v9896 = vpop.f32.mrb[0].mxu0
        %9897 = vmatprep.mubr.f32.mxu0 %v9493
        %9898 = vmatmul.mubr.f32.gmra.mrb[0].mxu0 %v9409
        %v9899 = vpop.f32.mrb[0].mxu0
        %v9900 = vadd.f32 %v9669, %v9899
        %v9901 = vpop.f32.mrb[0].mxu0
        %9902 = vmatprep.mubr.f32.mxu0 %v9496
        %9903 = vmatmul.mubr.f32.gmra.mrb[0].mxu0 %v9410
        %v9904 = vpop.f32.mrb[0].mxu0
        %v9905 = vadd.f32 %v9674, %v9904
        %v9906 = vpop.f32.mrb[0].mxu0
        %9907 = vmatprep.mubr.f32.mxu0 %v9499
        %9908 = vmatmul.mubr.f32.gmra.mrb[0].mxu0 %v9411
        %v9909 = vpop.f32.mrb[0].mxu0
        %v9910 = vadd.f32 %v9679, %v9909
        %v9911 = vpop.f32.mrb[0].mxu0
        %9912 = vmatprep.mubr.f32.mxu0 %v9502
        %9913 = vmatmul.mubr.f32.gmra.mrb[0].mxu0 %v9412
        %v9914 = vpop.f32.mrb[0].mxu0
        %v9915 = vadd.f32 %v9684, %v9914
        %v9916 = vpop.f32.mrb[0].mxu0
        %9917 = vmatprep.mubr.f32.mxu0 %v9505
        %9918 = vmatmul.mubr.f32.gmra.mrb[0].mxu0 %v9413
        %v9919 = vpop.f32.mrb[0].mxu0
        %v9920 = vadd.f32 %v9689, %v9919
        %v9921 = vpop.f32.mrb[0].mxu0
        %9922 = vmatprep.mubr.f32.mxu0 %v9508
        %9923 = vmatmul.mubr.f32.gmra.mrb[0].mxu0 %v9414
        %v9924 = vpop.f32.mrb[0].mxu0
        %v9925 = vadd.f32 %v9694, %v9924
        %v9926 = vpop.f32.mrb[0].mxu0
        %9927 = vmatprep.mubr.f32.mxu0 %v9511
        %9928 = vmatmul.mubr.f32.gmra.mrb[0].mxu0 %v9415
        %v9929 = vpop.f32.mrb[0].mxu0
        %v9930 = vadd.f32 %v9699, %v9929
        %v9931 = vpop.f32.mrb[0].mxu0
        %9932 = vmatprep.mubr.f32.mxu0 %v9514
        %9933 = vmatmul.mubr.f32.gmra.mrb[0].mxu0 %v9416
        %v9934 = vpop.f32.mrb[0].mxu0
        %v9935 = vadd.f32 %v9704, %v9934
        %v9936 = vpop.f32.mrb[0].mxu0
        %9937 = vmatprep.mubr.f32.mxu0 %v9517
        %9938 = vmatmul.mubr.f32.gmra.mrb[0].mxu0 %v9417
        %v9939 = vpop.f32.mrb[0].mxu0
        %v9940 = vadd.f32 %v9709, %v9939
        %v9941 = vpop.f32.mrb[0].mxu0
        %9942 = vmatprep.mubr.f32.mxu0 %v9520
        %9943 = vmatmul.mubr.f32.gmra.mrb[0].mxu0 %v9418
        %v9944 = vpop.f32.mrb[0].mxu0
        %v9945 = vadd.f32 %v9714, %v9944
        %v9946 = vpop.f32.mrb[0].mxu0
        %9947 = vmatprep.mubr.f32.mxu0 %v9523
        %9948 = vmatmul.mubr.f32.gmra.mrb[0].mxu0 %v9419
        %v9949 = vpop.f32.mrb[0].mxu0
        %v9950 = vadd.f32 %v9719, %v9949
        %v9951 = vpop.f32.mrb[0].mxu0
        %9952 = vmatprep.mubr.f32.mxu0 %v9526
        %9953 = vmatmul.mubr.f32.gmra.mrb[0].mxu0 %v9420
        %v9954 = vpop.f32.mrb[0].mxu0
        %v9955 = vadd.f32 %v9724, %v9954
        %v9956 = vpop.f32.mrb[0].mxu0
        %9957 = vmatprep.mubr.f32.mxu0 %v9529
        %9958 = vmatmul.mubr.f32.gmra.mrb[0].mxu0 %v9421
        %v9959 = vpop.f32.mrb[0].mxu0
        %v9960 = vadd.f32 %v9729, %v9959
        %v9961 = vpop.f32.mrb[0].mxu0
        %9962 = vmatprep.mubr.f32.mxu0 %v9532
        %9963 = vmatmul.mubr.f32.gmra.mrb[0].mxu0 %v9422
        %v9964 = vpop.f32.mrb[0].mxu0
        %v9965 = vadd.f32 %v9734, %v9964
        %v9966 = vpop.f32.mrb[0].mxu0
        %9967 = vmatprep.mubr.f32.mxu0 %v9535
        %9968 = vmatmul.mubr.f32.gmra.mrb[0].mxu0 %v9423
        %v9969 = vpop.f32.mrb[0].mxu0
        %v9970 = vadd.f32 %v9739, %v9969
        %v9971 = vpop.f32.mrb[0].mxu0
        %9972 = vmatprep.mubr.f32.mxu0 %v9538
        %9973 = vmatmul.mubr.f32.gmra.mrb[0].mxu0 %v9424
        %v9974 = vpop.f32.mrb[0].mxu0
        %v9975 = vadd.f32 %v9744, %v9974
        %v9976 = vpop.f32.mrb[0].mxu0
        %9977 = vmatprep.mubr.f32.mxu0 %v9541
        %9978 = vmatmul.mubr.f32.gmra.mrb[0].mxu0 %v9425
        %v9979 = vpop.f32.mrb[0].mxu0
        %v9980 = vadd.f32 %v9749, %v9979
        %v9981 = vpop.f32.mrb[0].mxu0
        %9982 = vmatprep.mubr.f32.mxu0 %v9544
        %9983 = vmatmul.mubr.f32.gmra.mrb[0].mxu0 %v9426
        %v9984 = vpop.f32.mrb[0].mxu0
        %v9985 = vadd.f32 %v9754, %v9984
        %v9986 = vpop.f32.mrb[0].mxu0
        %9987 = vmatprep.mubr.f32.mxu0 %v9547
        %9988 = vmatmul.mubr.f32.gmra.mrb[0].mxu0 %v9427
        %v9989 = vpop.f32.mrb[0].mxu0
        %v9990 = vadd.f32 %v9759, %v9989
        %v9991 = vpop.f32.mrb[0].mxu0
        %9992 = vmatprep.mubr.f32.mxu0 %v9550
        %9993 = vmatmul.mubr.f32.gmra.mrb[0].mxu0 %v9428
        %v9994 = vpop.f32.mrb[0].mxu0
        %v9995 = vadd.f32 %v9764, %v9994
        %v9996 = vpop.f32.mrb[0].mxu0
        %9997 = vmatprep.mubr.f32.mxu0 %v9553
        %9998 = vmatmul.mubr.f32.gmra.mrb[0].mxu0 %v9429
        %v9999 = vpop.f32.mrb[0].mxu0
        %v10000 = vadd.f32 %v9769, %v9999
        %v10001 = vpop.f32.mrb[0].mxu0
        %10002 = vmatprep.mubr.f32.mxu0 %v9556
        %10003 = vmatmul.mubr.f32.gmra.mrb[0].mxu0 %v9430
        %v10004 = vpop.f32.mrb[0].mxu0
        %v10005 = vadd.f32 %v9774, %v10004
        %v10006 = vpop.f32.mrb[0].mxu0
        %10007 = vmatprep.mubr.f32.mxu0 %v9559
        %10008 = vmatmul.mubr.f32.gmra.mrb[0].mxu0 %v9431
        %v10009 = vpop.f32.mrb[0].mxu0
        %v10010 = vadd.f32 %v9779, %v10009
        %v10011 = vpop.f32.mrb[0].mxu0
        %10012 = vmatprep.mubr.f32.mxu0 %v9562
        %10013 = vmatmul.mubr.f32.gmra.mrb[0].mxu0 %v9432
        %v10014 = vpop.f32.mrb[0].mxu0
        %v10015 = vadd.f32 %v9784, %v10014
        %v10016 = vpop.f32.mrb[0].mxu0
        %10017 = vmatprep.mubr.f32.mxu0 %v9565
        %10018 = vmatmul.mubr.f32.gmra.mrb[0].mxu0 %v9433
        %v10019 = vpop.f32.mrb[0].mxu0
        %v10020 = vadd.f32 %v9789, %v10019
        %v10021 = vpop.f32.mrb[0].mxu0
        %10022 = vmatprep.mubr.f32.mxu0 %v9568
        %10023 = vmatmul.mubr.f32.gmra.mrb[0].mxu0 %v9434
        %v10024 = vpop.f32.mrb[0].mxu0
        %v10025 = vadd.f32 %v9794, %v10024
        %v10026 = vpop.f32.mrb[0].mxu0
        %10027 = vmatprep.mubr.f32.mxu0 %v9571
        %10028 = vmatmul.mubr.f32.gmra.mrb[0].mxu0 %v9435
        %v10029 = vpop.f32.mrb[0].mxu0
        %v10030 = vadd.f32 %v9799, %v10029
        %v10031 = vpop.f32.mrb[0].mxu0
        %10032 = vmatprep.mubr.f32.mxu0 %v9574
        %10033 = vmatmul.mubr.f32.gmra.mrb[0].mxu0 %v9436
        %v10034 = vpop.f32.mrb[0].mxu0
        %v10035 = vadd.f32 %v9804, %v10034
        %v10036 = vpop.f32.mrb[0].mxu0
        %10037 = vdwg.mxu0
        %s10038 = scalar_lea.vmem [#allocation20], 320
        %v10039 = vld [vmem:[%s10038] sm:$0xff]
        %v10040 = vld [vmem:[%s10038 + $0x8] sm:$0xff]
        %v10041 = vld [vmem:[%s10038 + $0x10] sm:$0xff]
        %v10042 = vld [vmem:[%s10038 + $0x18] sm:$0xff]
        %v10043 = vld [vmem:[%s10038 + $0x20] sm:$0xff]
        %v10044 = vld [vmem:[%s10038 + $0x28] sm:$0xff]
        %v10045 = vld [vmem:[%s10038 + $0x30] sm:$0xff]
        %v10046 = vld [vmem:[%s10038 + $0x38] sm:$0xff]
        %v10047 = vld [vmem:[%s10038 + $0x40] sm:$0xff]
        %v10048 = vld [vmem:[%s10038 + $0x48] sm:$0xff]
        %v10049 = vld [vmem:[%s10038 + $0x50] sm:$0xff]
        %v10050 = vld [vmem:[%s10038 + $0x58] sm:$0xff]
        %v10051 = vld [vmem:[%s10038 + $0x60] sm:$0xff]
        %v10052 = vld [vmem:[%s10038 + $0x68] sm:$0xff]
        %v10053 = vld [vmem:[%s10038 + $0x70] sm:$0xff]
        %v10054 = vld [vmem:[%s10038 + $0x78] sm:$0xff]
        %v10055 = vld [vmem:[%s10038 + $0x80] sm:$0xff]
        %v10056 = vld [vmem:[%s10038 + $0x88] sm:$0xff]
        %v10057 = vld [vmem:[%s10038 + $0x90] sm:$0xff]
        %v10058 = vld [vmem:[%s10038 + $0x98] sm:$0xff]
        %v10060 = vsel %vm649, %v8838, 0
        %v10063 = vsel %vm649, %v8839, 0
        %10065 = vmatprep.subr.mxu0 0.0
        %10066 = vmatpush1.msra.mxu0 %v10039
        %10067 = vmatprep.subr.mxu0 0.0
        %10068 = vmatpush1.msra.mxu0 %v10040
        %10069 = vmatprep.subr.mxu0 0.0
        %10070 = vmatpush1.msra.mxu0 %v10041
        %10071 = vmatprep.subr.mxu0 0.0
        %10072 = vmatpush1.msra.mxu0 %v10042
        %10073 = vmatprep.subr.mxu0 0.0
        %10074 = vmatpush1.msra.mxu0 %v10043
        %10075 = vmatprep.subr.mxu0 0.0
        %10076 = vmatpush1.msra.mxu0 %v10044
        %10077 = vmatprep.subr.mxu0 0.0
        %10078 = vmatpush1.msra.mxu0 %v10045
        %10079 = vmatprep.subr.mxu0 0.0
        %10080 = vmatpush1.msra.mxu0 %v10046
        %10081 = vmatprep.subr.mxu0 0.0
        %10082 = vmatpush1.msra.mxu0 %v10047
        %10083 = vmatprep.subr.mxu0 0.0
        %10084 = vmatpush1.msra.mxu0 %v10048
        %10085 = vmatprep.subr.mxu0 0.0
        %10086 = vmatpush1.msra.mxu0 %v10049
        %10087 = vmatprep.subr.mxu0 0.0
        %10088 = vmatpush1.msra.mxu0 %v10050
        %10089 = vmatprep.subr.mxu0 0.0
        %10090 = vmatpush1.msra.mxu0 %v10051
        %10091 = vmatprep.subr.mxu0 0.0
        %10092 = vmatpush1.msra.mxu0 %v10052
        %10093 = vmatprep.subr.mxu0 0.0
        %10094 = vmatpush1.msra.mxu0 %v10053
        %10095 = vmatprep.subr.mxu0 0.0
        %10096 = vmatpush1.msra.mxu0 %v10054
        %10097 = vmatprep.subr.mxu0 0.0
        %10098 = vmatpush1.msra.mxu0 %v10055
        %10099 = vmatprep.subr.mxu0 0.0
        %10100 = vmatpush1.msra.mxu0 %v10056
        %10101 = vmatprep.subr.mxu0 0.0
        %10102 = vmatpush1.msra.mxu0 %v10057
        %10103 = vmatprep.subr.mxu0 0.0
        %10104 = vmatpush1.msra.mxu0 %v10058
        %10105 = vmatprep.subr.mxu0 0.0
        %10106 = vmatpush1.msra.mxu0 0.0
        %10107 = vmatprep.subr.mxu0 0.0
        %10108 = vmatpush1.msra.mxu0 0.0
        %10109 = vmatprep.subr.mxu0 0.0
        %10110 = vmatpush1.msra.mxu0 0.0
        %10111 = vmatprep.subr.mxu0 0.0
        %10112 = vmatpush1.msra.mxu0 0.0
        %10113 = vmatprep.subr.mxu0 0.0
        %10114 = vmatpush1.msra.mxu0 0.0
        %10115 = vmatprep.subr.mxu0 0.0
        %10116 = vmatpush1.msra.mxu0 0.0
        %10117 = vmatprep.subr.mxu0 0.0
        %10118 = vmatpush1.msra.mxu0 0.0
        %10119 = vmatprep.subr.mxu0 0.0
        %10120 = vmatpush1.msra.mxu0 0.0
        %10121 = vmatprep.subr.mxu0 0.0
        %10122 = vmatpush1.msra.mxu0 0.0
        %10123 = vmatprep.subr.mxu0 0.0
        %10124 = vmatpush1.msra.mxu0 0.0
        %10125 = vmatprep.subr.mxu0 0.0
        %10126 = vmatpush1.msra.mxu0 0.0
        %10127 = vmatprep.subr.mxu0 0.0
        %10128 = vmatpush1.msra.mxu0 0.0
        %10129 = vmatprep.mubr.f32.mxu0 %v9493
        %10130 = vmatmul.mubr.f32.gmra.mrb[0].mxu0 %v9409
        %v10131 = vpop.f32.mrb[0].mxu0
        %v10132 = vadd.f32 0.0, %v10131
        %v10133 = vpop.f32.mrb[0].mxu0
        %10134 = vmatprep.mubr.f32.mxu0 %v9496
        %10135 = vmatmul.mubr.f32.gmra.mrb[0].mxu0 %v9410
        %v10136 = vpop.f32.mrb[0].mxu0
        %v10137 = vadd.f32 0.0, %v10136
        %v10138 = vpop.f32.mrb[0].mxu0
        %10139 = vmatprep.mubr.f32.mxu0 %v9499
        %10140 = vmatmul.mubr.f32.gmra.mrb[0].mxu0 %v9411
        %v10141 = vpop.f32.mrb[0].mxu0
        %v10142 = vadd.f32 0.0, %v10141
        %v10143 = vpop.f32.mrb[0].mxu0
        %10144 = vmatprep.mubr.f32.mxu0 %v9502
        %10145 = vmatmul.mubr.f32.gmra.mrb[0].mxu0 %v9412
        %v10146 = vpop.f32.mrb[0].mxu0
        %v10147 = vadd.f32 0.0, %v10146
        %v10148 = vpop.f32.mrb[0].mxu0
        %10149 = vmatprep.mubr.f32.mxu0 %v9505
        %10150 = vmatmul.mubr.f32.gmra.mrb[0].mxu0 %v9413
        %v10151 = vpop.f32.mrb[0].mxu0
        %v10152 = vadd.f32 0.0, %v10151
        %v10153 = vpop.f32.mrb[0].mxu0
        %10154 = vmatprep.mubr.f32.mxu0 %v9508
        %10155 = vmatmul.mubr.f32.gmra.mrb[0].mxu0 %v9414
        %v10156 = vpop.f32.mrb[0].mxu0
        %v10157 = vadd.f32 0.0, %v10156
        %v10158 = vpop.f32.mrb[0].mxu0
        %10159 = vmatprep.mubr.f32.mxu0 %v9511
        %10160 = vmatmul.mubr.f32.gmra.mrb[0].mxu0 %v9415
        %v10161 = vpop.f32.mrb[0].mxu0
        %v10162 = vadd.f32 0.0, %v10161
        %v10163 = vpop.f32.mrb[0].mxu0
        %10164 = vmatprep.mubr.f32.mxu0 %v9514
        %10165 = vmatmul.mubr.f32.gmra.mrb[0].mxu0 %v9416
        %v10166 = vpop.f32.mrb[0].mxu0
        %v10167 = vadd.f32 0.0, %v10166
        %v10168 = vpop.f32.mrb[0].mxu0
        %10169 = vmatprep.mubr.f32.mxu0 %v9517
        %10170 = vmatmul.mubr.f32.gmra.mrb[0].mxu0 %v9417
        %v10171 = vpop.f32.mrb[0].mxu0
        %v10172 = vadd.f32 0.0, %v10171
        %v10173 = vpop.f32.mrb[0].mxu0
        %10174 = vmatprep.mubr.f32.mxu0 %v9520
        %10175 = vmatmul.mubr.f32.gmra.mrb[0].mxu0 %v9418
        %v10176 = vpop.f32.mrb[0].mxu0
        %v10177 = vadd.f32 0.0, %v10176
        %v10178 = vpop.f32.mrb[0].mxu0
        %10179 = vmatprep.mubr.f32.mxu0 %v9523
        %10180 = vmatmul.mubr.f32.gmra.mrb[0].mxu0 %v9419
        %v10181 = vpop.f32.mrb[0].mxu0
        %v10182 = vadd.f32 0.0, %v10181
        %v10183 = vpop.f32.mrb[0].mxu0
        %10184 = vmatprep.mubr.f32.mxu0 %v9526
        %10185 = vmatmul.mubr.f32.gmra.mrb[0].mxu0 %v9420
        %v10186 = vpop.f32.mrb[0].mxu0
        %v10187 = vadd.f32 0.0, %v10186
        %v10188 = vpop.f32.mrb[0].mxu0
        %10189 = vmatprep.mubr.f32.mxu0 %v9529
        %10190 = vmatmul.mubr.f32.gmra.mrb[0].mxu0 %v9421
        %v10191 = vpop.f32.mrb[0].mxu0
        %v10192 = vadd.f32 0.0, %v10191
        %v10193 = vpop.f32.mrb[0].mxu0
        %10194 = vmatprep.mubr.f32.mxu0 %v9532
        %10195 = vmatmul.mubr.f32.gmra.mrb[0].mxu0 %v9422
        %v10196 = vpop.f32.mrb[0].mxu0
        %v10197 = vadd.f32 0.0, %v10196
        %v10198 = vpop.f32.mrb[0].mxu0
        %10199 = vmatprep.mubr.f32.mxu0 %v9535
        %10200 = vmatmul.mubr.f32.gmra.mrb[0].mxu0 %v9423
        %v10201 = vpop.f32.mrb[0].mxu0
        %v10202 = vadd.f32 0.0, %v10201
        %v10203 = vpop.f32.mrb[0].mxu0
        %10204 = vmatprep.mubr.f32.mxu0 %v9538
        %10205 = vmatmul.mubr.f32.gmra.mrb[0].mxu0 %v9424
        %v10206 = vpop.f32.mrb[0].mxu0
        %v10207 = vadd.f32 0.0, %v10206
        %v10208 = vpop.f32.mrb[0].mxu0
        %10209 = vmatprep.mubr.f32.mxu0 %v9541
        %10210 = vmatmul.mubr.f32.gmra.mrb[0].mxu0 %v9425
        %v10211 = vpop.f32.mrb[0].mxu0
        %v10212 = vadd.f32 0.0, %v10211
        %v10213 = vpop.f32.mrb[0].mxu0
        %10214 = vmatprep.mubr.f32.mxu0 %v9544
        %10215 = vmatmul.mubr.f32.gmra.mrb[0].mxu0 %v9426
        %v10216 = vpop.f32.mrb[0].mxu0
        %v10217 = vadd.f32 0.0, %v10216
        %v10218 = vpop.f32.mrb[0].mxu0
        %10219 = vmatprep.mubr.f32.mxu0 %v9547
        %10220 = vmatmul.mubr.f32.gmra.mrb[0].mxu0 %v9427
        %v10221 = vpop.f32.mrb[0].mxu0
        %v10222 = vadd.f32 0.0, %v10221
        %v10223 = vpop.f32.mrb[0].mxu0
        %10224 = vmatprep.mubr.f32.mxu0 %v9550
        %10225 = vmatmul.mubr.f32.gmra.mrb[0].mxu0 %v9428
        %v10226 = vpop.f32.mrb[0].mxu0
        %v10227 = vadd.f32 0.0, %v10226
        %v10228 = vpop.f32.mrb[0].mxu0
        %10229 = vmatprep.mubr.f32.mxu0 %v9553
        %10230 = vmatmul.mubr.f32.gmra.mrb[0].mxu0 %v9429
        %v10231 = vpop.f32.mrb[0].mxu0
        %v10232 = vadd.f32 0.0, %v10231
        %v10233 = vpop.f32.mrb[0].mxu0
        %10234 = vmatprep.mubr.f32.mxu0 %v9556
        %10235 = vmatmul.mubr.f32.gmra.mrb[0].mxu0 %v9430
        %v10236 = vpop.f32.mrb[0].mxu0
        %v10237 = vadd.f32 0.0, %v10236
        %v10238 = vpop.f32.mrb[0].mxu0
        %10239 = vmatprep.mubr.f32.mxu0 %v9559
        %10240 = vmatmul.mubr.f32.gmra.mrb[0].mxu0 %v9431
        %v10241 = vpop.f32.mrb[0].mxu0
        %v10242 = vadd.f32 0.0, %v10241
        %v10243 = vpop.f32.mrb[0].mxu0
        %10244 = vmatprep.mubr.f32.mxu0 %v9562
        %10245 = vmatmul.mubr.f32.gmra.mrb[0].mxu0 %v9432
        %v10246 = vpop.f32.mrb[0].mxu0
        %v10247 = vadd.f32 0.0, %v10246
        %v10248 = vpop.f32.mrb[0].mxu0
        %10249 = vmatprep.mubr.f32.mxu0 %v9565
        %10250 = vmatmul.mubr.f32.gmra.mrb[0].mxu0 %v9433
        %v10251 = vpop.f32.mrb[0].mxu0
        %v10252 = vadd.f32 0.0, %v10251
        %v10253 = vpop.f32.mrb[0].mxu0
        %10254 = vmatprep.mubr.f32.mxu0 %v9568
        %10255 = vmatmul.mubr.f32.gmra.mrb[0].mxu0 %v9434
        %v10256 = vpop.f32.mrb[0].mxu0
        %v10257 = vadd.f32 0.0, %v10256
        %v10258 = vpop.f32.mrb[0].mxu0
        %10259 = vmatprep.mubr.f32.mxu0 %v9571
        %10260 = vmatmul.mubr.f32.gmra.mrb[0].mxu0 %v9435
        %v10261 = vpop.f32.mrb[0].mxu0
        %v10262 = vadd.f32 0.0, %v10261
        %v10263 = vpop.f32.mrb[0].mxu0
        %10264 = vmatprep.mubr.f32.mxu0 %v9574
        %10265 = vmatmul.mubr.f32.gmra.mrb[0].mxu0 %v9436
        %v10266 = vpop.f32.mrb[0].mxu0
        %v10267 = vadd.f32 0.0, %v10266
        %v10268 = vpop.f32.mrb[0].mxu0
        %10269 = vmatprep.mubr.f32.mxu0 %v9577
        %10270 = vmatmul.mubr.f32.gmra.mrb[0].mxu0 %v9437
        %v10271 = vpop.f32.mrb[0].mxu0
        %v10272 = vadd.f32 0.0, %v10271
        %v10273 = vpop.f32.mrb[0].mxu0
        %10274 = vmatprep.mubr.f32.mxu0 %v9580
        %10275 = vmatmul.mubr.f32.gmra.mrb[0].mxu0 %v9438
        %v10276 = vpop.f32.mrb[0].mxu0
        %v10277 = vadd.f32 0.0, %v10276
        %v10278 = vpop.f32.mrb[0].mxu0
        %10279 = vmatprep.mubr.f32.mxu0 %v10060
        %10280 = vmatmul.mubr.f32.gmra.mrb[0].mxu0 %v9439
        %v10281 = vpop.f32.mrb[0].mxu0
        %v10282 = vadd.f32 0.0, %v10281
        %v10283 = vpop.f32.mrb[0].mxu0
        %10284 = vmatprep.mubr.f32.mxu0 %v10063
        %10285 = vmatmul.mubr.f32.gmra.mrb[0].mxu0 %v9440
        %v10286 = vpop.f32.mrb[0].mxu0
        %v10287 = vadd.f32 0.0, %v10286
        %v10288 = vpop.f32.mrb[0].mxu0
        %10289 = vdwg.mxu0
        %v10290 = vadd.f32 %v9880, %v10132
        %v10291 = vadd.f32 %v9885, %v10137
        %v10292 = vadd.f32 %v9890, %v10142
        %v10293 = vadd.f32 %v9895, %v10147
        %v10294 = vadd.f32 %v9900, %v10152
        %v10295 = vadd.f32 %v9905, %v10157
        %v10296 = vadd.f32 %v9910, %v10162
        %v10297 = vadd.f32 %v9915, %v10167
        %v10298 = vadd.f32 %v9920, %v10172
        %v10299 = vadd.f32 %v9925, %v10177
        %v10300 = vadd.f32 %v9930, %v10182
        %v10301 = vadd.f32 %v9935, %v10187
        %v10302 = vadd.f32 %v9940, %v10192
        %v10303 = vadd.f32 %v9945, %v10197
        %v10304 = vadd.f32 %v9950, %v10202
        %v10305 = vadd.f32 %v9955, %v10207
        %v10306 = vadd.f32 %v9960, %v10212
        %v10307 = vadd.f32 %v9965, %v10217
        %v10308 = vadd.f32 %v9970, %v10222
        %v10309 = vadd.f32 %v9975, %v10227
        %v10310 = vadd.f32 %v9980, %v10232
        %v10311 = vadd.f32 %v9985, %v10237
        %v10312 = vadd.f32 %v9990, %v10242
        %v10313 = vadd.f32 %v9995, %v10247
        %v10314 = vadd.f32 %v10000, %v10252
        %v10315 = vadd.f32 %v10005, %v10257
        %v10316 = vadd.f32 %v10010, %v10262
        %v10317 = vadd.f32 %v10015, %v10267
        %v10318 = vadd.f32 %v10020, %v10272
        %v10319 = vadd.f32 %v10025, %v10277
        %v10320 = vadd.f32 %v10030, %v10282
        %v10321 = vadd.f32 %v10035, %v10287
        %s10322 = scalar_lea.vmem [#allocation20], 480
        %v10323 = vld [vmem:[%s10322] sm:$0xff]
        %v10324 = vld [vmem:[%s10322 + $0x8] sm:$0xff]
        %v10325 = vld [vmem:[%s10322 + $0x10] sm:$0xff]
        %v10326 = vld [vmem:[%s10322 + $0x18] sm:$0xff]
        %v10327 = vld [vmem:[%s10322 + $0x20] sm:$0xff]
        %v10328 = vld [vmem:[%s10322 + $0x28] sm:$0xff]
        %v10329 = vld [vmem:[%s10322 + $0x30] sm:$0xff]
        %v10330 = vld [vmem:[%s10322 + $0x38] sm:$0xff]
        %v10331 = vld [vmem:[%s10322 + $0x40] sm:$0xff]
        %v10332 = vld [vmem:[%s10322 + $0x48] sm:$0xff]
        %v10333 = vld [vmem:[%s10322 + $0x50] sm:$0xff]
        %v10334 = vld [vmem:[%s10322 + $0x58] sm:$0xff]
        %v10335 = vld [vmem:[%s10322 + $0x60] sm:$0xff]
        %v10336 = vld [vmem:[%s10322 + $0x68] sm:$0xff]
        %v10337 = vld [vmem:[%s10322 + $0x70] sm:$0xff]
        %v10338 = vld [vmem:[%s10322 + $0x78] sm:$0xff]
        %v10339 = vld [vmem:[%s10322 + $0x80] sm:$0xff]
        %v10340 = vld [vmem:[%s10322 + $0x88] sm:$0xff]
        %v10341 = vld [vmem:[%s10322 + $0x90] sm:$0xff]
        %v10342 = vld [vmem:[%s10322 + $0x98] sm:$0xff]
        %v10344 = vsel %vm649, %v8840, 0
        %v10347 = vsel %vm649, %v8841, 0
        %10349 = vmatprep.subr.mxu0 0.0
        %10350 = vmatpush1.msra.mxu0 %v10323
        %10351 = vmatprep.subr.mxu0 0.0
        %10352 = vmatpush1.msra.mxu0 %v10324
        %10353 = vmatprep.subr.mxu0 0.0
        %10354 = vmatpush1.msra.mxu0 %v10325
        %10355 = vmatprep.subr.mxu0 0.0
        %10356 = vmatpush1.msra.mxu0 %v10326
        %10357 = vmatprep.subr.mxu0 0.0
        %10358 = vmatpush1.msra.mxu0 %v10327
        %10359 = vmatprep.subr.mxu0 0.0
        %10360 = vmatpush1.msra.mxu0 %v10328
        %10361 = vmatprep.subr.mxu0 0.0
        %10362 = vmatpush1.msra.mxu0 %v10329
        %10363 = vmatprep.subr.mxu0 0.0
        %10364 = vmatpush1.msra.mxu0 %v10330
        %10365 = vmatprep.subr.mxu0 0.0
        %10366 = vmatpush1.msra.mxu0 %v10331
        %10367 = vmatprep.subr.mxu0 0.0
        %10368 = vmatpush1.msra.mxu0 %v10332
        %10369 = vmatprep.subr.mxu0 0.0
        %10370 = vmatpush1.msra.mxu0 %v10333
        %10371 = vmatprep.subr.mxu0 0.0
        %10372 = vmatpush1.msra.mxu0 %v10334
        %10373 = vmatprep.subr.mxu0 0.0
        %10374 = vmatpush1.msra.mxu0 %v10335
        %10375 = vmatprep.subr.mxu0 0.0
        %10376 = vmatpush1.msra.mxu0 %v10336
        %10377 = vmatprep.subr.mxu0 0.0
        %10378 = vmatpush1.msra.mxu0 %v10337
        %10379 = vmatprep.subr.mxu0 0.0
        %10380 = vmatpush1.msra.mxu0 %v10338
        %10381 = vmatprep.subr.mxu0 0.0
        %10382 = vmatpush1.msra.mxu0 %v10339
        %10383 = vmatprep.subr.mxu0 0.0
        %10384 = vmatpush1.msra.mxu0 %v10340
        %10385 = vmatprep.subr.mxu0 0.0
        %10386 = vmatpush1.msra.mxu0 %v10341
        %10387 = vmatprep.subr.mxu0 0.0
        %10388 = vmatpush1.msra.mxu0 %v10342
        %10389 = vmatprep.subr.mxu0 0.0
        %10390 = vmatpush1.msra.mxu0 0.0
        %10391 = vmatprep.subr.mxu0 0.0
        %10392 = vmatpush1.msra.mxu0 0.0
        %10393 = vmatprep.subr.mxu0 0.0
        %10394 = vmatpush1.msra.mxu0 0.0
        %10395 = vmatprep.subr.mxu0 0.0
        %10396 = vmatpush1.msra.mxu0 0.0
        %10397 = vmatprep.subr.mxu0 0.0
        %10398 = vmatpush1.msra.mxu0 0.0
        %10399 = vmatprep.subr.mxu0 0.0
        %10400 = vmatpush1.msra.mxu0 0.0
        %10401 = vmatprep.subr.mxu0 0.0
        %10402 = vmatpush1.msra.mxu0 0.0
        %10403 = vmatprep.subr.mxu0 0.0
        %10404 = vmatpush1.msra.mxu0 0.0
        %10405 = vmatprep.subr.mxu0 0.0
        %10406 = vmatpush1.msra.mxu0 0.0
        %10407 = vmatprep.subr.mxu0 0.0
        %10408 = vmatpush1.msra.mxu0 0.0
        %10409 = vmatprep.subr.mxu0 0.0
        %10410 = vmatpush1.msra.mxu0 0.0
        %10411 = vmatprep.subr.mxu0 0.0
        %10412 = vmatpush1.msra.mxu0 0.0
        %10413 = vmatprep.mubr.f32.mxu0 %v9499
        %10414 = vmatmul.mubr.f32.gmra.mrb[0].mxu0 %v9411
        %v10415 = vpop.f32.mrb[0].mxu0
        %v10416 = vadd.f32 0.0, %v10415
        %v10417 = vpop.f32.mrb[0].mxu0
        %10418 = vmatprep.mubr.f32.mxu0 %v9502
        %10419 = vmatmul.mubr.f32.gmra.mrb[0].mxu0 %v9412
        %v10420 = vpop.f32.mrb[0].mxu0
        %v10421 = vadd.f32 0.0, %v10420
        %v10422 = vpop.f32.mrb[0].mxu0
        %10423 = vmatprep.mubr.f32.mxu0 %v9505
        %10424 = vmatmul.mubr.f32.gmra.mrb[0].mxu0 %v9413
        %v10425 = vpop.f32.mrb[0].mxu0
        %v10426 = vadd.f32 0.0, %v10425
        %v10427 = vpop.f32.mrb[0].mxu0
        %10428 = vmatprep.mubr.f32.mxu0 %v9508
        %10429 = vmatmul.mubr.f32.gmra.mrb[0].mxu0 %v9414
        %v10430 = vpop.f32.mrb[0].mxu0
        %v10431 = vadd.f32 0.0, %v10430
        %v10432 = vpop.f32.mrb[0].mxu0
        %10433 = vmatprep.mubr.f32.mxu0 %v9511
        %10434 = vmatmul.mubr.f32.gmra.mrb[0].mxu0 %v9415
        %v10435 = vpop.f32.mrb[0].mxu0
        %v10436 = vadd.f32 0.0, %v10435
        %v10437 = vpop.f32.mrb[0].mxu0
        %10438 = vmatprep.mubr.f32.mxu0 %v9514
        %10439 = vmatmul.mubr.f32.gmra.mrb[0].mxu0 %v9416
        %v10440 = vpop.f32.mrb[0].mxu0
        %v10441 = vadd.f32 0.0, %v10440
        %v10442 = vpop.f32.mrb[0].mxu0
        %10443 = vmatprep.mubr.f32.mxu0 %v9517
        %10444 = vmatmul.mubr.f32.gmra.mrb[0].mxu0 %v9417
        %v10445 = vpop.f32.mrb[0].mxu0
        %v10446 = vadd.f32 0.0, %v10445
        %v10447 = vpop.f32.mrb[0].mxu0
        %10448 = vmatprep.mubr.f32.mxu0 %v9520
        %10449 = vmatmul.mubr.f32.gmra.mrb[0].mxu0 %v9418
        %v10450 = vpop.f32.mrb[0].mxu0
        %v10451 = vadd.f32 0.0, %v10450
        %v10452 = vpop.f32.mrb[0].mxu0
        %10453 = vmatprep.mubr.f32.mxu0 %v9523
        %10454 = vmatmul.mubr.f32.gmra.mrb[0].mxu0 %v9419
        %v10455 = vpop.f32.mrb[0].mxu0
        %v10456 = vadd.f32 0.0, %v10455
        %v10457 = vpop.f32.mrb[0].mxu0
        %10458 = vmatprep.mubr.f32.mxu0 %v9526
        %10459 = vmatmul.mubr.f32.gmra.mrb[0].mxu0 %v9420
        %v10460 = vpop.f32.mrb[0].mxu0
        %v10461 = vadd.f32 0.0, %v10460
        %v10462 = vpop.f32.mrb[0].mxu0
        %10463 = vmatprep.mubr.f32.mxu0 %v9529
        %10464 = vmatmul.mubr.f32.gmra.mrb[0].mxu0 %v9421
        %v10465 = vpop.f32.mrb[0].mxu0
        %v10466 = vadd.f32 0.0, %v10465
        %v10467 = vpop.f32.mrb[0].mxu0
        %10468 = vmatprep.mubr.f32.mxu0 %v9532
        %10469 = vmatmul.mubr.f32.gmra.mrb[0].mxu0 %v9422
        %v10470 = vpop.f32.mrb[0].mxu0
        %v10471 = vadd.f32 0.0, %v10470
        %v10472 = vpop.f32.mrb[0].mxu0
        %10473 = vmatprep.mubr.f32.mxu0 %v9535
        %10474 = vmatmul.mubr.f32.gmra.mrb[0].mxu0 %v9423
        %v10475 = vpop.f32.mrb[0].mxu0
        %v10476 = vadd.f32 0.0, %v10475
        %v10477 = vpop.f32.mrb[0].mxu0
        %10478 = vmatprep.mubr.f32.mxu0 %v9538
        %10479 = vmatmul.mubr.f32.gmra.mrb[0].mxu0 %v9424
        %v10480 = vpop.f32.mrb[0].mxu0
        %v10481 = vadd.f32 0.0, %v10480
        %v10482 = vpop.f32.mrb[0].mxu0
        %10483 = vmatprep.mubr.f32.mxu0 %v9541
        %10484 = vmatmul.mubr.f32.gmra.mrb[0].mxu0 %v9425
        %v10485 = vpop.f32.mrb[0].mxu0
        %v10486 = vadd.f32 0.0, %v10485
        %v10487 = vpop.f32.mrb[0].mxu0
        %10488 = vmatprep.mubr.f32.mxu0 %v9544
        %10489 = vmatmul.mubr.f32.gmra.mrb[0].mxu0 %v9426
        %v10490 = vpop.f32.mrb[0].mxu0
        %v10491 = vadd.f32 0.0, %v10490
        %v10492 = vpop.f32.mrb[0].mxu0
        %10493 = vmatprep.mubr.f32.mxu0 %v9547
        %10494 = vmatmul.mubr.f32.gmra.mrb[0].mxu0 %v9427
        %v10495 = vpop.f32.mrb[0].mxu0
        %v10496 = vadd.f32 0.0, %v10495
        %v10497 = vpop.f32.mrb[0].mxu0
        %10498 = vmatprep.mubr.f32.mxu0 %v9550
        %10499 = vmatmul.mubr.f32.gmra.mrb[0].mxu0 %v9428
        %v10500 = vpop.f32.mrb[0].mxu0
        %v10501 = vadd.f32 0.0, %v10500
        %v10502 = vpop.f32.mrb[0].mxu0
        %10503 = vmatprep.mubr.f32.mxu0 %v9553
        %10504 = vmatmul.mubr.f32.gmra.mrb[0].mxu0 %v9429
        %v10505 = vpop.f32.mrb[0].mxu0
        %v10506 = vadd.f32 0.0, %v10505
        %v10507 = vpop.f32.mrb[0].mxu0
        %10508 = vmatprep.mubr.f32.mxu0 %v9556
        %10509 = vmatmul.mubr.f32.gmra.mrb[0].mxu0 %v9430
        %v10510 = vpop.f32.mrb[0].mxu0
        %v10511 = vadd.f32 0.0, %v10510
        %v10512 = vpop.f32.mrb[0].mxu0
        %10513 = vmatprep.mubr.f32.mxu0 %v9559
        %10514 = vmatmul.mubr.f32.gmra.mrb[0].mxu0 %v9431
        %v10515 = vpop.f32.mrb[0].mxu0
        %v10516 = vadd.f32 0.0, %v10515
        %v10517 = vpop.f32.mrb[0].mxu0
        %10518 = vmatprep.mubr.f32.mxu0 %v9562
        %10519 = vmatmul.mubr.f32.gmra.mrb[0].mxu0 %v9432
        %v10520 = vpop.f32.mrb[0].mxu0
        %v10521 = vadd.f32 0.0, %v10520
        %v10522 = vpop.f32.mrb[0].mxu0
        %10523 = vmatprep.mubr.f32.mxu0 %v9565
        %10524 = vmatmul.mubr.f32.gmra.mrb[0].mxu0 %v9433
        %v10525 = vpop.f32.mrb[0].mxu0
        %v10526 = vadd.f32 0.0, %v10525
        %v10527 = vpop.f32.mrb[0].mxu0
        %10528 = vmatprep.mubr.f32.mxu0 %v9568
        %10529 = vmatmul.mubr.f32.gmra.mrb[0].mxu0 %v9434
        %v10530 = vpop.f32.mrb[0].mxu0
        %v10531 = vadd.f32 0.0, %v10530
        %v10532 = vpop.f32.mrb[0].mxu0
        %10533 = vmatprep.mubr.f32.mxu0 %v9571
        %10534 = vmatmul.mubr.f32.gmra.mrb[0].mxu0 %v9435
        %v10535 = vpop.f32.mrb[0].mxu0
        %v10536 = vadd.f32 0.0, %v10535
        %v10537 = vpop.f32.mrb[0].mxu0
        %10538 = vmatprep.mubr.f32.mxu0 %v9574
        %10539 = vmatmul.mubr.f32.gmra.mrb[0].mxu0 %v9436
        %v10540 = vpop.f32.mrb[0].mxu0
        %v10541 = vadd.f32 0.0, %v10540
        %v10542 = vpop.f32.mrb[0].mxu0
        %10543 = vmatprep.mubr.f32.mxu0 %v9577
        %10544 = vmatmul.mubr.f32.gmra.mrb[0].mxu0 %v9437
        %v10545 = vpop.f32.mrb[0].mxu0
        %v10546 = vadd.f32 0.0, %v10545
        %v10547 = vpop.f32.mrb[0].mxu0
        %10548 = vmatprep.mubr.f32.mxu0 %v9580
        %10549 = vmatmul.mubr.f32.gmra.mrb[0].mxu0 %v9438
        %v10550 = vpop.f32.mrb[0].mxu0
        %v10551 = vadd.f32 0.0, %v10550
        %v10552 = vpop.f32.mrb[0].mxu0
        %10553 = vmatprep.mubr.f32.mxu0 %v10060
        %10554 = vmatmul.mubr.f32.gmra.mrb[0].mxu0 %v9439
        %v10555 = vpop.f32.mrb[0].mxu0
        %v10556 = vadd.f32 0.0, %v10555
        %v10557 = vpop.f32.mrb[0].mxu0
        %10558 = vmatprep.mubr.f32.mxu0 %v10063
        %10559 = vmatmul.mubr.f32.gmra.mrb[0].mxu0 %v9440
        %v10560 = vpop.f32.mrb[0].mxu0
        %v10561 = vadd.f32 0.0, %v10560
        %v10562 = vpop.f32.mrb[0].mxu0
        %10563 = vmatprep.mubr.f32.mxu0 %v10344
        %10564 = vmatmul.mubr.f32.gmra.mrb[0].mxu0 %v9441
        %v10565 = vpop.f32.mrb[0].mxu0
        %v10566 = vadd.f32 0.0, %v10565
        %v10567 = vpop.f32.mrb[0].mxu0
        %10568 = vmatprep.mubr.f32.mxu0 %v10347
        %10569 = vmatmul.mubr.f32.gmra.mrb[0].mxu0 %v9442
        %v10570 = vpop.f32.mrb[0].mxu0
        %v10571 = vadd.f32 0.0, %v10570
        %v10572 = vpop.f32.mrb[0].mxu0
        %10573 = vdwg.mxu0
        %v10574 = vadd.f32 %v10290, %v10416
        %v10575 = vadd.f32 %v10291, %v10421
        %v10576 = vadd.f32 %v10292, %v10426
        %v10577 = vadd.f32 %v10293, %v10431
        %v10578 = vadd.f32 %v10294, %v10436
        %v10579 = vadd.f32 %v10295, %v10441
        %v10580 = vadd.f32 %v10296, %v10446
        %v10581 = vadd.f32 %v10297, %v10451
        %v10582 = vadd.f32 %v10298, %v10456
        %v10583 = vadd.f32 %v10299, %v10461
        %v10584 = vadd.f32 %v10300, %v10466
        %v10585 = vadd.f32 %v10301, %v10471
        %v10586 = vadd.f32 %v10302, %v10476
        %v10587 = vadd.f32 %v10303, %v10481
        %v10588 = vadd.f32 %v10304, %v10486
        %v10589 = vadd.f32 %v10305, %v10491
        %v10590 = vadd.f32 %v10306, %v10496
        %v10591 = vadd.f32 %v10307, %v10501
        %v10592 = vadd.f32 %v10308, %v10506
        %v10593 = vadd.f32 %v10309, %v10511
        %v10594 = vadd.f32 %v10310, %v10516
        %v10595 = vadd.f32 %v10311, %v10521
        %v10596 = vadd.f32 %v10312, %v10526
        %v10597 = vadd.f32 %v10313, %v10531
        %v10598 = vadd.f32 %v10314, %v10536
        %v10599 = vadd.f32 %v10315, %v10541
        %v10600 = vadd.f32 %v10316, %v10546
        %v10601 = vadd.f32 %v10317, %v10551
        %v10602 = vadd.f32 %v10318, %v10556
        %v10603 = vadd.f32 %v10319, %v10561
        %v10604 = vadd.f32 %v10320, %v10566
        %v10605 = vadd.f32 %v10321, %v10571
        %s10606 = scalar_lea.vmem [#allocation20], 640
        %v10607 = vld [vmem:[%s10606] sm:$0xff]
        %v10608 = vld [vmem:[%s10606 + $0x8] sm:$0xff]
        %v10609 = vld [vmem:[%s10606 + $0x10] sm:$0xff]
        %v10610 = vld [vmem:[%s10606 + $0x18] sm:$0xff]
        %v10611 = vld [vmem:[%s10606 + $0x20] sm:$0xff]
        %v10612 = vld [vmem:[%s10606 + $0x28] sm:$0xff]
        %v10613 = vld [vmem:[%s10606 + $0x30] sm:$0xff]
        %v10614 = vld [vmem:[%s10606 + $0x38] sm:$0xff]
        %v10615 = vld [vmem:[%s10606 + $0x40] sm:$0xff]
        %v10616 = vld [vmem:[%s10606 + $0x48] sm:$0xff]
        %v10617 = vld [vmem:[%s10606 + $0x50] sm:$0xff]
        %v10618 = vld [vmem:[%s10606 + $0x58] sm:$0xff]
        %v10619 = vld [vmem:[%s10606 + $0x60] sm:$0xff]
        %v10620 = vld [vmem:[%s10606 + $0x68] sm:$0xff]
        %v10621 = vld [vmem:[%s10606 + $0x70] sm:$0xff]
        %v10622 = vld [vmem:[%s10606 + $0x78] sm:$0xff]
        %v10623 = vld [vmem:[%s10606 + $0x80] sm:$0xff]
        %v10624 = vld [vmem:[%s10606 + $0x88] sm:$0xff]
        %v10625 = vld [vmem:[%s10606 + $0x90] sm:$0xff]
        %v10626 = vld [vmem:[%s10606 + $0x98] sm:$0xff]
        %v10628 = vsel %vm649, %v8842, 0
        %v10631 = vsel %vm649, %v8843, 0
        %10633 = vmatprep.subr.mxu0 0.0
        %10634 = vmatpush1.msra.mxu0 %v10607
        %10635 = vmatprep.subr.mxu0 0.0
        %10636 = vmatpush1.msra.mxu0 %v10608
        %10637 = vmatprep.subr.mxu0 0.0
        %10638 = vmatpush1.msra.mxu0 %v10609
        %10639 = vmatprep.subr.mxu0 0.0
        %10640 = vmatpush1.msra.mxu0 %v10610
        %10641 = vmatprep.subr.mxu0 0.0
        %10642 = vmatpush1.msra.mxu0 %v10611
        %10643 = vmatprep.subr.mxu0 0.0
        %10644 = vmatpush1.msra.mxu0 %v10612
        %10645 = vmatprep.subr.mxu0 0.0
        %10646 = vmatpush1.msra.mxu0 %v10613
        %10647 = vmatprep.subr.mxu0 0.0
        %10648 = vmatpush1.msra.mxu0 %v10614
        %10649 = vmatprep.subr.mxu0 0.0
        %10650 = vmatpush1.msra.mxu0 %v10615
        %10651 = vmatprep.subr.mxu0 0.0
        %10652 = vmatpush1.msra.mxu0 %v10616
        %10653 = vmatprep.subr.mxu0 0.0
        %10654 = vmatpush1.msra.mxu0 %v10617
        %10655 = vmatprep.subr.mxu0 0.0
        %10656 = vmatpush1.msra.mxu0 %v10618
        %10657 = vmatprep.subr.mxu0 0.0
        %10658 = vmatpush1.msra.mxu0 %v10619
        %10659 = vmatprep.subr.mxu0 0.0
        %10660 = vmatpush1.msra.mxu0 %v10620
        %10661 = vmatprep.subr.mxu0 0.0
        %10662 = vmatpush1.msra.mxu0 %v10621
        %10663 = vmatprep.subr.mxu0 0.0
        %10664 = vmatpush1.msra.mxu0 %v10622
        %10665 = vmatprep.subr.mxu0 0.0
        %10666 = vmatpush1.msra.mxu0 %v10623
        %10667 = vmatprep.subr.mxu0 0.0
        %10668 = vmatpush1.msra.mxu0 %v10624
        %10669 = vmatprep.subr.mxu0 0.0
        %10670 = vmatpush1.msra.mxu0 %v10625
        %10671 = vmatprep.subr.mxu0 0.0
        %10672 = vmatpush1.msra.mxu0 %v10626
        %10673 = vmatprep.subr.mxu0 0.0
        %10674 = vmatpush1.msra.mxu0 0.0
        %10675 = vmatprep.subr.mxu0 0.0
        %10676 = vmatpush1.msra.mxu0 0.0
        %10677 = vmatprep.subr.mxu0 0.0
        %10678 = vmatpush1.msra.mxu0 0.0
        %10679 = vmatprep.subr.mxu0 0.0
        %10680 = vmatpush1.msra.mxu0 0.0
        %10681 = vmatprep.subr.mxu0 0.0
        %10682 = vmatpush1.msra.mxu0 0.0
        %10683 = vmatprep.subr.mxu0 0.0
        %10684 = vmatpush1.msra.mxu0 0.0
        %10685 = vmatprep.subr.mxu0 0.0
        %10686 = vmatpush1.msra.mxu0 0.0
        %10687 = vmatprep.subr.mxu0 0.0
        %10688 = vmatpush1.msra.mxu0 0.0
        %10689 = vmatprep.subr.mxu0 0.0
        %10690 = vmatpush1.msra.mxu0 0.0
        %10691 = vmatprep.subr.mxu0 0.0
        %10692 = vmatpush1.msra.mxu0 0.0
        %10693 = vmatprep.subr.mxu0 0.0
        %10694 = vmatpush1.msra.mxu0 0.0
        %10695 = vmatprep.subr.mxu0 0.0
        %10696 = vmatpush1.msra.mxu0 0.0
        %10697 = vmatprep.mubr.f32.mxu0 %v9505
        %10698 = vmatmul.mubr.f32.gmra.mrb[0].mxu0 %v9413
        %v10699 = vpop.f32.mrb[0].mxu0
        %v10700 = vadd.f32 0.0, %v10699
        %v10701 = vpop.f32.mrb[0].mxu0
        %10702 = vmatprep.mubr.f32.mxu0 %v9508
        %10703 = vmatmul.mubr.f32.gmra.mrb[0].mxu0 %v9414
        %v10704 = vpop.f32.mrb[0].mxu0
        %v10705 = vadd.f32 0.0, %v10704
        %v10706 = vpop.f32.mrb[0].mxu0
        %10707 = vmatprep.mubr.f32.mxu0 %v9511
        %10708 = vmatmul.mubr.f32.gmra.mrb[0].mxu0 %v9415
        %v10709 = vpop.f32.mrb[0].mxu0
        %v10710 = vadd.f32 0.0, %v10709
        %v10711 = vpop.f32.mrb[0].mxu0
        %10712 = vmatprep.mubr.f32.mxu0 %v9514
        %10713 = vmatmul.mubr.f32.gmra.mrb[0].mxu0 %v9416
        %v10714 = vpop.f32.mrb[0].mxu0
        %v10715 = vadd.f32 0.0, %v10714
        %v10716 = vpop.f32.mrb[0].mxu0
        %10717 = vmatprep.mubr.f32.mxu0 %v9517
        %10718 = vmatmul.mubr.f32.gmra.mrb[0].mxu0 %v9417
        %v10719 = vpop.f32.mrb[0].mxu0
        %v10720 = vadd.f32 0.0, %v10719
        %v10721 = vpop.f32.mrb[0].mxu0
        %10722 = vmatprep.mubr.f32.mxu0 %v9520
        %10723 = vmatmul.mubr.f32.gmra.mrb[0].mxu0 %v9418
        %v10724 = vpop.f32.mrb[0].mxu0
        %v10725 = vadd.f32 0.0, %v10724
        %v10726 = vpop.f32.mrb[0].mxu0
        %10727 = vmatprep.mubr.f32.mxu0 %v9523
        %10728 = vmatmul.mubr.f32.gmra.mrb[0].mxu0 %v9419
        %v10729 = vpop.f32.mrb[0].mxu0
        %v10730 = vadd.f32 0.0, %v10729
        %v10731 = vpop.f32.mrb[0].mxu0
        %10732 = vmatprep.mubr.f32.mxu0 %v9526
        %10733 = vmatmul.mubr.f32.gmra.mrb[0].mxu0 %v9420
        %v10734 = vpop.f32.mrb[0].mxu0
        %v10735 = vadd.f32 0.0, %v10734
        %v10736 = vpop.f32.mrb[0].mxu0
        %10737 = vmatprep.mubr.f32.mxu0 %v9529
        %10738 = vmatmul.mubr.f32.gmra.mrb[0].mxu0 %v9421
        %v10739 = vpop.f32.mrb[0].mxu0
        %v10740 = vadd.f32 0.0, %v10739
        %v10741 = vpop.f32.mrb[0].mxu0
        %10742 = vmatprep.mubr.f32.mxu0 %v9532
        %10743 = vmatmul.mubr.f32.gmra.mrb[0].mxu0 %v9422
        %v10744 = vpop.f32.mrb[0].mxu0
        %v10745 = vadd.f32 0.0, %v10744
        %v10746 = vpop.f32.mrb[0].mxu0
        %10747 = vmatprep.mubr.f32.mxu0 %v9535
        %10748 = vmatmul.mubr.f32.gmra.mrb[0].mxu0 %v9423
        %v10749 = vpop.f32.mrb[0].mxu0
        %v10750 = vadd.f32 0.0, %v10749
        %v10751 = vpop.f32.mrb[0].mxu0
        %10752 = vmatprep.mubr.f32.mxu0 %v9538
        %10753 = vmatmul.mubr.f32.gmra.mrb[0].mxu0 %v9424
        %v10754 = vpop.f32.mrb[0].mxu0
        %v10755 = vadd.f32 0.0, %v10754
        %v10756 = vpop.f32.mrb[0].mxu0
        %10757 = vmatprep.mubr.f32.mxu0 %v9541
        %10758 = vmatmul.mubr.f32.gmra.mrb[0].mxu0 %v9425
        %v10759 = vpop.f32.mrb[0].mxu0
        %v10760 = vadd.f32 0.0, %v10759
        %v10761 = vpop.f32.mrb[0].mxu0
        %10762 = vmatprep.mubr.f32.mxu0 %v9544
        %10763 = vmatmul.mubr.f32.gmra.mrb[0].mxu0 %v9426
        %v10764 = vpop.f32.mrb[0].mxu0
        %v10765 = vadd.f32 0.0, %v10764
        %v10766 = vpop.f32.mrb[0].mxu0
        %10767 = vmatprep.mubr.f32.mxu0 %v9547
        %10768 = vmatmul.mubr.f32.gmra.mrb[0].mxu0 %v9427
        %v10769 = vpop.f32.mrb[0].mxu0
        %v10770 = vadd.f32 0.0, %v10769
        %v10771 = vpop.f32.mrb[0].mxu0
        %10772 = vmatprep.mubr.f32.mxu0 %v9550
        %10773 = vmatmul.mubr.f32.gmra.mrb[0].mxu0 %v9428
        %v10774 = vpop.f32.mrb[0].mxu0
        %v10775 = vadd.f32 0.0, %v10774
        %v10776 = vpop.f32.mrb[0].mxu0
        %10777 = vmatprep.mubr.f32.mxu0 %v9553
        %10778 = vmatmul.mubr.f32.gmra.mrb[0].mxu0 %v9429
        %v10779 = vpop.f32.mrb[0].mxu0
        %v10780 = vadd.f32 0.0, %v10779
        %v10781 = vpop.f32.mrb[0].mxu0
        %10782 = vmatprep.mubr.f32.mxu0 %v9556
        %10783 = vmatmul.mubr.f32.gmra.mrb[0].mxu0 %v9430
        %v10784 = vpop.f32.mrb[0].mxu0
        %v10785 = vadd.f32 0.0, %v10784
        %v10786 = vpop.f32.mrb[0].mxu0
        %10787 = vmatprep.mubr.f32.mxu0 %v9559
        %10788 = vmatmul.mubr.f32.gmra.mrb[0].mxu0 %v9431
        %v10789 = vpop.f32.mrb[0].mxu0
        %v10790 = vadd.f32 0.0, %v10789
        %v10791 = vpop.f32.mrb[0].mxu0
        %10792 = vmatprep.mubr.f32.mxu0 %v9562
        %10793 = vmatmul.mubr.f32.gmra.mrb[0].mxu0 %v9432
        %v10794 = vpop.f32.mrb[0].mxu0
        %v10795 = vadd.f32 0.0, %v10794
        %v10796 = vpop.f32.mrb[0].mxu0
        %10797 = vmatprep.mubr.f32.mxu0 %v9565
        %10798 = vmatmul.mubr.f32.gmra.mrb[0].mxu0 %v9433
        %v10799 = vpop.f32.mrb[0].mxu0
        %v10800 = vadd.f32 0.0, %v10799
        %v10801 = vpop.f32.mrb[0].mxu0
        %10802 = vmatprep.mubr.f32.mxu0 %v9568
        %10803 = vmatmul.mubr.f32.gmra.mrb[0].mxu0 %v9434
        %v10804 = vpop.f32.mrb[0].mxu0
        %v10805 = vadd.f32 0.0, %v10804
        %v10806 = vpop.f32.mrb[0].mxu0
        %10807 = vmatprep.mubr.f32.mxu0 %v9571
        %10808 = vmatmul.mubr.f32.gmra.mrb[0].mxu0 %v9435
        %v10809 = vpop.f32.mrb[0].mxu0
        %v10810 = vadd.f32 0.0, %v10809
        %v10811 = vpop.f32.mrb[0].mxu0
        %10812 = vmatprep.mubr.f32.mxu0 %v9574
        %10813 = vmatmul.mubr.f32.gmra.mrb[0].mxu0 %v9436
        %v10814 = vpop.f32.mrb[0].mxu0
        %v10815 = vadd.f32 0.0, %v10814
        %v10816 = vpop.f32.mrb[0].mxu0
        %10817 = vmatprep.mubr.f32.mxu0 %v9577
        %10818 = vmatmul.mubr.f32.gmra.mrb[0].mxu0 %v9437
        %v10819 = vpop.f32.mrb[0].mxu0
        %v10820 = vadd.f32 0.0, %v10819
        %v10821 = vpop.f32.mrb[0].mxu0
        %10822 = vmatprep.mubr.f32.mxu0 %v9580
        %10823 = vmatmul.mubr.f32.gmra.mrb[0].mxu0 %v9438
        %v10824 = vpop.f32.mrb[0].mxu0
        %v10825 = vadd.f32 0.0, %v10824
        %v10826 = vpop.f32.mrb[0].mxu0
        %10827 = vmatprep.mubr.f32.mxu0 %v10060
        %10828 = vmatmul.mubr.f32.gmra.mrb[0].mxu0 %v9439
        %v10829 = vpop.f32.mrb[0].mxu0
        %v10830 = vadd.f32 0.0, %v10829
        %v10831 = vpop.f32.mrb[0].mxu0
        %10832 = vmatprep.mubr.f32.mxu0 %v10063
        %10833 = vmatmul.mubr.f32.gmra.mrb[0].mxu0 %v9440
        %v10834 = vpop.f32.mrb[0].mxu0
        %v10835 = vadd.f32 0.0, %v10834
        %v10836 = vpop.f32.mrb[0].mxu0
        %10837 = vmatprep.mubr.f32.mxu0 %v10344
        %10838 = vmatmul.mubr.f32.gmra.mrb[0].mxu0 %v9441
        %v10839 = vpop.f32.mrb[0].mxu0
        %v10840 = vadd.f32 0.0, %v10839
        %v10841 = vpop.f32.mrb[0].mxu0
        %10842 = vmatprep.mubr.f32.mxu0 %v10347
        %10843 = vmatmul.mubr.f32.gmra.mrb[0].mxu0 %v9442
        %v10844 = vpop.f32.mrb[0].mxu0
        %v10845 = vadd.f32 0.0, %v10844
        %v10846 = vpop.f32.mrb[0].mxu0
        %10847 = vmatprep.mubr.f32.mxu0 %v10628
        %10848 = vmatmul.mubr.f32.gmra.mrb[0].mxu0 %v9443
        %v10849 = vpop.f32.mrb[0].mxu0
        %v10850 = vadd.f32 0.0, %v10849
        %v10851 = vpop.f32.mrb[0].mxu0
        %10852 = vmatprep.mubr.f32.mxu0 %v10631
        %10853 = vmatmul.mubr.f32.gmra.mrb[0].mxu0 %v9444
        %v10854 = vpop.f32.mrb[0].mxu0
        %v10855 = vadd.f32 0.0, %v10854
        %v10856 = vpop.f32.mrb[0].mxu0
        %10857 = vdwg.mxu0
        %v10858 = vadd.f32 %v10574, %v10700
        %v10859 = vadd.f32 %v10575, %v10705
        %v10860 = vadd.f32 %v10576, %v10710
        %v10861 = vadd.f32 %v10577, %v10715
        %v10862 = vadd.f32 %v10578, %v10720
        %v10863 = vadd.f32 %v10579, %v10725
        %v10864 = vadd.f32 %v10580, %v10730
        %v10865 = vadd.f32 %v10581, %v10735
        %v10866 = vadd.f32 %v10582, %v10740
        %v10867 = vadd.f32 %v10583, %v10745
        %v10868 = vadd.f32 %v10584, %v10750
        %v10869 = vadd.f32 %v10585, %v10755
        %v10870 = vadd.f32 %v10586, %v10760
        %v10871 = vadd.f32 %v10587, %v10765
        %v10872 = vadd.f32 %v10588, %v10770
        %v10873 = vadd.f32 %v10589, %v10775
        %v10874 = vadd.f32 %v10590, %v10780
        %v10875 = vadd.f32 %v10591, %v10785
        %v10876 = vadd.f32 %v10592, %v10790
        %v10877 = vadd.f32 %v10593, %v10795
        %v10878 = vadd.f32 %v10594, %v10800
        %v10879 = vadd.f32 %v10595, %v10805
        %v10880 = vadd.f32 %v10596, %v10810
        %v10881 = vadd.f32 %v10597, %v10815
        %v10882 = vadd.f32 %v10598, %v10820
        %v10883 = vadd.f32 %v10599, %v10825
        %v10884 = vadd.f32 %v10600, %v10830
        %v10885 = vadd.f32 %v10601, %v10835
        %v10886 = vadd.f32 %v10602, %v10840
        %v10887 = vadd.f32 %v10603, %v10845
        %v10888 = vadd.f32 %v10604, %v10850
        %v10889 = vadd.f32 %v10605, %v10855
        %v10890 = vld [vmem:[#allocation22] sm:$0x1]
        %v10892 = vlaneseq
        %v10893 = vshrl.u32 %v10892, 7
        %v10894 = vsub.s32 0, %v10893
        %v10895 = vrot.slane %v10890, %v10894
        %v10897 = vadd.f32 %v10858, %v10895
        %v10898 = vadd.f32 %v10859, %v10895
        %v10899 = vadd.f32 %v10860, %v10895
        %v10900 = vadd.f32 %v10861, %v10895
        %v10901 = vadd.f32 %v10862, %v10895
        %v10902 = vadd.f32 %v10863, %v10895
        %v10903 = vadd.f32 %v10864, %v10895
        %v10904 = vadd.f32 %v10865, %v10895
        %v10905 = vadd.f32 %v10866, %v10895
        %v10906 = vadd.f32 %v10867, %v10895
        %v10907 = vadd.f32 %v10868, %v10895
        %v10908 = vadd.f32 %v10869, %v10895
        %v10909 = vadd.f32 %v10870, %v10895
        %v10910 = vadd.f32 %v10871, %v10895
        %v10911 = vadd.f32 %v10872, %v10895
        %v10912 = vadd.f32 %v10873, %v10895
        %v10913 = vadd.f32 %v10874, %v10895
        %v10914 = vadd.f32 %v10875, %v10895
        %v10915 = vadd.f32 %v10876, %v10895
        %v10916 = vadd.f32 %v10877, %v10895
        %v10917 = vadd.f32 %v10878, %v10895
        %v10918 = vadd.f32 %v10879, %v10895
        %v10919 = vadd.f32 %v10880, %v10895
        %v10920 = vadd.f32 %v10881, %v10895
        %v10921 = vadd.f32 %v10882, %v10895
        %v10922 = vadd.f32 %v10883, %v10895
        %v10923 = vadd.f32 %v10884, %v10895
        %v10924 = vadd.f32 %v10885, %v10895
        %v10925 = vadd.f32 %v10886, %v10895
        %v10926 = vadd.f32 %v10887, %v10895
        %v10927 = vadd.f32 %v10888, %v10895
        %v10928 = vadd.f32 %v10889, %v10895
        %10929 = vst.msk [vmem:[%s539] sm:$0xff] %vm540, %v10897
        %10930 = vst.msk [vmem:[%s539 + $0x8] sm:$0xff] %vm540, %v10898
        %10931 = vst.msk [vmem:[%s539 + $0x10] sm:$0xff] %vm540, %v10899
        %10932 = vst.msk [vmem:[%s539 + $0x18] sm:$0xff] %vm540, %v10900
        %10933 = vst.msk [vmem:[%s539 + $0x20] sm:$0xff] %vm540, %v10901
        %10934 = vst.msk [vmem:[%s539 + $0x28] sm:$0xff] %vm540, %v10902
        %10935 = vst.msk [vmem:[%s539 + $0x30] sm:$0xff] %vm540, %v10903
        %10936 = vst.msk [vmem:[%s539 + $0x38] sm:$0xff] %vm540, %v10904
        %10937 = vst.msk [vmem:[%s539 + $0x40] sm:$0xff] %vm540, %v10905
        %10938 = vst.msk [vmem:[%s539 + $0x48] sm:$0xff] %vm540, %v10906
        %10939 = vst.msk [vmem:[%s539 + $0x50] sm:$0xff] %vm540, %v10907
        %10940 = vst.msk [vmem:[%s539 + $0x58] sm:$0xff] %vm540, %v10908
        %10941 = vst.msk [vmem:[%s539 + $0x60] sm:$0xff] %vm540, %v10909
        %10942 = vst.msk [vmem:[%s539 + $0x68] sm:$0xff] %vm540, %v10910
        %10943 = vst.msk [vmem:[%s539 + $0x70] sm:$0xff] %vm540, %v10911
        %10944 = vst.msk [vmem:[%s539 + $0x78] sm:$0xff] %vm540, %v10912
        %10945 = vst.msk [vmem:[%s539 + $0x80] sm:$0xff] %vm540, %v10913
        %10946 = vst.msk [vmem:[%s539 + $0x88] sm:$0xff] %vm540, %v10914
        %10947 = vst.msk [vmem:[%s539 + $0x90] sm:$0xff] %vm540, %v10915
        %10948 = vst.msk [vmem:[%s539 + $0x98] sm:$0xff] %vm540, %v10916
        %10949 = vst.msk [vmem:[%s539 + $0xa0] sm:$0xff] %vm540, %v10917
        %10950 = vst.msk [vmem:[%s539 + $0xa8] sm:$0xff] %vm540, %v10918
        %10951 = vst.msk [vmem:[%s539 + $0xb0] sm:$0xff] %vm540, %v10919
        %10952 = vst.msk [vmem:[%s539 + $0xb8] sm:$0xff] %vm540, %v10920
        %10953 = vst.msk [vmem:[%s539 + $0xc0] sm:$0xff] %vm540, %v10921
        %10954 = vst.msk [vmem:[%s539 + $0xc8] sm:$0xff] %vm540, %v10922
        %10955 = vst.msk [vmem:[%s539 + $0xd0] sm:$0xff] %vm540, %v10923
        %10956 = vst.msk [vmem:[%s539 + $0xd8] sm:$0xff] %vm540, %v10924
        %10957 = vst.msk [vmem:[%s539 + $0xe0] sm:$0xff] %vm540, %v10925
        %10958 = vst.msk [vmem:[%s539 + $0xe8] sm:$0xff] %vm540, %v10926
        %10959 = vst.msk [vmem:[%s539 + $0xf0] sm:$0xff] %vm540, %v10927
        %10960 = vst.msk [vmem:[%s539 + $0xf8] sm:$0xff] %vm540, %v10928
        %s10961 = sand.u32 %s277, 1
        %s10962 = scalar_lea.sflag [#allocation7], %s10961
        %s10963 = sand.u32 %s277, 1
        %s10964 = smul.addr %s10963, 256
        %s10965 = scalar_lea.vmem [#allocation23], %s10964
        // Predicated region
        $region109: #{tpu_custom_call.1} parent=63 // pred_check
          %p10966 = pneg %p287
        $region110: #{tpu_custom_call.1} parent=63 // pred_check_branch
          %10968 = sbr.rel (%p10966) target = $region112
        $region111: #{tpu_custom_call.1} parent=63 // pred_region
          %s10970 = ssub.s32 4096, 4096
          %10971 = vsyncadd %s10962, %s10970
          %s10972 = smul.addr %s33, 32
          %s10973 = smul.addr %s10972, 128
          %s10974 = scalar_lea.hbm %s11, %s10973
          %s10975 = sshll.u32 %s10965, 4
          %s10976 = int_to_ptr.vmem [resolvable:$true] %s10975
          %10981 = dma.vmem_to_hbm [thread:$0]  %s10976, 4096, %s10974, %s10962, 128, 128, 8
        $region112: #{tpu_custom_call.1} parent=63 // pred_fallthru
          _
      $region64: #{tpu_custom_call.1} parent=5 // pred_fallthru
        _
      %p10982 = scmp.le.s32.totalorder 2, %s28
      // Predicated region
      $region113: #{tpu_custom_call.1} parent=5 // pred_check
        %p10983 = pneg %p10982
      $region114: #{tpu_custom_call.1} parent=5 // pred_check_branch
        %10985 = sbr.rel (%p10983) target = $region116
      $region115: #{tpu_custom_call.1} parent=5 // pred_region
        %s10986 = ssub.s32 %s28, 2
        // Predicated region
        $region117: #{tpu_custom_call.1} parent=115 // pred_check
          %p10987 = pneg %p293
        $region118: #{tpu_custom_call.1} parent=115 // pred_check_branch
          %10989 = sbr.rel (%p10987) target = $region120
        $region119: #{tpu_custom_call.1} parent=115 // pred_region
          %s10990 = sand.u32 %s278, 1
          %s10991 = scalar_lea.sflag [#allocation7], %s10990
          %s10992 = sand.u32 %s278, 1
          %s10993 = smul.addr %s10992, 256
          %s10994 = scalar_lea.vmem [#allocation23], %s10993
          %10995 = dma.done %s10991, 4096
        $region120: #{tpu_custom_call.1} parent=115 // pred_fallthru
          _
      $region116: #{tpu_custom_call.1} parent=5 // pred_fallthru
        _
    $region6: #{tpu_custom_call.1} parent=1 // loop_footer
      %s32 = sadd.s32 1, %s28
    $region7: #{tpu_custom_call.1} parent=1 // loop_footer_branch
      %27 = sbr.rel target = $region3
    $region8: #{tpu_custom_call.1} parent=1 // loop_exit
      _
    %10996 = vsyncpa [#allocation6], 1
    %s10997 = scalar_lea.sflag [#allocation6], 1
    %10998 = vsyncpa %s10997, 1
    %10999 = vsyncpa [#allocation9], 1
    %11000 = vsyncpa [#allocation12], 1
    %11001 = vsyncpa [#allocation15], 1
    %11002 = vsyncpa [#allocation18], 1
    %11003 = vsyncpa [#allocation21], 1
    %11004 = vsyncpa [#allocation7], 1
    %s11005 = scalar_lea.sflag [#allocation7], 1
    %11006 = vsyncpa %s11005, 1

</llo_original>
